<compile_context>
chip_gen: v7x
topology: tpu7x:2x2x1
jax: 0.10.0
libtpu: 0.0.40
codegen_flags: <defaults>
</compile_context>

<pallas_src>
import functools
import numpy as np
import jax
import jax.numpy as jnp
from jax.experimental import pallas as pl
from jax.experimental.pallas import tpu as pltpu  # noqa: F401  (TPU backend)


def _round_up(x, m):
    return (x + m - 1) // m * m


# --------------------------- fused forward-pass kernel -----------------------


def _context_kernel(x_flat_ref, idx_ref, w_ih_enc_ref, w_hh_enc_ref, b_enc_ref,
                    w_proj_ref, b_proj_ref, y_flat_ref, tgt_ref, mask_ref,
                    w_ih_dec_ref, w_hh_dec_ref, b_dec_ref, w_out_ref, b_out_ref,
                    loss_ref, *, t_in, t_dec, bp, batch, vocab, hp, vp):
    H2 = 2 * hp                      # fwd|bwd hidden stacked along lanes

    # ---- input-to-hidden gate projections: one big MXU matmul each ----------
    # (all timesteps at once; these have no sequential dependence)
    gx_enc = (jnp.dot(x_flat_ref[...], w_ih_enc_ref[...],
                      preferred_element_type=jnp.float32)
              + b_enc_ref[...])                       # (T_in*Bp, 8*hp)
    gx_dec = (jnp.dot(y_flat_ref[...], w_ih_dec_ref[...],
                      preferred_element_type=jnp.float32)
              + b_dec_ref[...])                       # (T_dec*Bp, 4*hp)

    # ---------- bidirectional encoder recurrence (fwd & bwd on lanes) --------
    lane2 = jax.lax.broadcasted_iota(jnp.int32, (bp, H2), 1)
    is_fwd = lane2 < hp
    idx_b = jnp.broadcast_to(idx_ref[...], (bp, H2))  # per-batch gather time

    w_hh_enc = w_hh_enc_ref[...]
    h = jnp.zeros((bp, H2), jnp.float32)
    c = jnp.zeros((bp, H2), jnp.float32)
    gath = jnp.zeros((bp, H2), jnp.float32)
    for s in range(t_in):                             # static, fully unrolled
        gates = gx_enc[s * bp:(s + 1) * bp, :] + jnp.dot(
            h, w_hh_enc, preferred_element_type=jnp.float32)
        i = jax.nn.sigmoid(gates[:, 0 * H2:1 * H2])
        f = jax.nn.sigmoid(gates[:, 1 * H2:2 * H2])
        g = jnp.tanh(gates[:, 2 * H2:3 * H2])
        o = jax.nn.sigmoid(gates[:, 3 * H2:4 * H2])
        c = f * c + i * g
        h = o * jnp.tanh(c)
        # enc.gather(0, idx): fwd half corresponds to original time s, bwd half
        # (processing the reversed sequence) to original time t_in - 1 - s.
        t_here = jnp.where(is_fwd, s, t_in - 1 - s)
        gath = jnp.where(idx_b == t_here, h, gath)

    # ---------- context projection -------------------------------------------
    rep = (jnp.dot(gath, w_proj_ref[...], preferred_element_type=jnp.float32)
           + b_proj_ref[...])                         # (Bp, hp)

    # ---------- teacher-forced decoder recurrence ----------------------------
    w_hh_dec = w_hh_dec_ref[...]
    h = rep
    c = jnp.zeros((bp, hp), jnp.float32)
    hs = []
    for s in range(t_dec):                            # static, fully unrolled
        gates = gx_dec[s * bp:(s + 1) * bp, :] + jnp.dot(
            h, w_hh_dec, preferred_element_type=jnp.float32)
        i = jax.nn.sigmoid(gates[:, 0 * hp:1 * hp])
        f = jax.nn.sigmoid(gates[:, 1 * hp:2 * hp])
        g = jnp.tanh(gates[:, 2 * hp:3 * hp])
        o = jax.nn.sigmoid(gates[:, 3 * hp:4 * hp])
        c = f * c + i * g
        h = o * jnp.tanh(c)
        hs.append(h)

    # ---------- batched vocab logits + masked mean cross-entropy -------------
    hs_all = jnp.concatenate(hs, axis=0)              # (T_dec*Bp, hp)
    logits = (jnp.dot(hs_all, w_out_ref[...],
                      preferred_element_type=jnp.float32)
              + b_out_ref[...])                       # (T_dec*Bp, vp)

    n = t_dec * bp
    col = jax.lax.broadcasted_iota(jnp.int32, (n, vp), 1)
    valid = col < vocab                               # mask padded vocab lanes
    neg = jnp.float32(-1e30)
    m = jnp.max(jnp.where(valid, logits, neg), axis=-1, keepdims=True)
    e = jnp.where(valid, jnp.exp(logits - m), 0.0)
    lse = jnp.log(jnp.sum(e, axis=-1, keepdims=True)) + m        # (n, 1)
    onehot = (col == tgt_ref[...]).astype(jnp.float32)
    tgt_logit = jnp.sum(logits * onehot, axis=-1, keepdims=True)  # (n, 1)
    per_row = (lse - tgt_logit) * mask_ref[...]       # mask padded batch rows
    loss_ref[...] = (jnp.sum(per_row, axis=0, keepdims=True)
                     * (1.0 / (t_dec * batch)))


# --------------------------- weight packing helpers --------------------------


def _pad_gate_cols(w, H, Hp):
    """(In, 4H) gate order i|f|g|o -> (In, 4, Hp), each gate zero-padded."""
    In = w.shape[0]
    return jnp.pad(w.reshape(In, 4, H), ((0, 0), (0, 0), (0, Hp - H)))


def _bidir_block_w(wf, wb, H, Hp, pad_rows_to=None):
    """Block-diagonal fwd/bwd gate weights -> (2*In_p, 8*Hp).

    Per gate, the 2*Hp lane block is [fwd Hp | bwd Hp]; fwd input rows on top,
    bwd input rows on the bottom (matches hidden layout [h_fwd | h_bwd])."""
    wf4 = _pad_gate_cols(wf, H, Hp)
    wb4 = _pad_gate_cols(wb, H, Hp)
    if pad_rows_to is not None:
        pr = pad_rows_to - wf4.shape[0]
        wf4 = jnp.pad(wf4, ((0, pr), (0, 0), (0, 0)))
        wb4 = jnp.pad(wb4, ((0, pr), (0, 0), (0, 0)))
    z = jnp.zeros_like(wf4)
    top = jnp.stack([wf4, z], axis=2)                 # (In_p, 4, 2, Hp)
    bot = jnp.stack([z, wb4], axis=2)
    blk = jnp.concatenate([top, bot], axis=0)         # (2*In_p, 4, 2, Hp)
    return blk.reshape(blk.shape[0], 8 * Hp)


def _bidir_bias(bf, bb, H, Hp):
    bf4 = jnp.pad(bf.reshape(1, 4, H), ((0, 0), (0, 0), (0, Hp - H)))
    bb4 = jnp.pad(bb.reshape(1, 4, H), ((0, 0), (0, 0), (0, Hp - H)))
    return jnp.stack([bf4, bb4], axis=2).reshape(1, 8 * Hp)


def _uni_gate_w(w, H, Hp, pad_rows_to=None):
    w4 = _pad_gate_cols(w, H, Hp)
    if pad_rows_to is not None:
        w4 = jnp.pad(w4, ((0, pad_rows_to - w4.shape[0]), (0, 0), (0, 0)))
    return w4.reshape(w4.shape[0], 4 * Hp)


def _uni_bias(b, H, Hp):
    return jnp.pad(b.reshape(1, 4, H), ((0, 0), (0, 0), (0, Hp - H))).reshape(1, 4 * Hp)


# ------------------------------ model wrapper --------------------------------


def init_params(key, vocab, n_emb, n_enc):
    def u(k, shape, scale=0.1):
        return jax.random.uniform(k, shape, jnp.float32, -scale, scale)

    ks = jax.random.split(key, 16)
    H, E = n_enc, n_emb
    return {
        "enc_emb": u(ks[0], (vocab, E)),
        "enc_f_w_ih": u(ks[1], (E, 4 * H)),
        "enc_f_w_hh": u(ks[2], (H, 4 * H)),
        "enc_f_b": u(ks[3], (1, 4 * H)),
        "enc_b_w_ih": u(ks[4], (E, 4 * H)),
        "enc_b_w_hh": u(ks[5], (H, 4 * H)),
        "enc_b_b": u(ks[6], (1, 4 * H)),
        "proj_w": u(ks[7], (2 * H, H)),
        "proj_b": u(ks[8], (1, H)),
        "dec_emb": u(ks[9], (vocab, E)),
        "dec_w_ih": u(ks[10], (E, 4 * H)),
        "dec_w_hh": u(ks[11], (H, 4 * H)),
        "dec_b": u(ks[12], (1, 4 * H)),
        "dec_out_w": u(ks[13], (H, vocab)),
        "dec_out_b": u(ks[14], (1, vocab)),
    }


@jax.jit
def context_model_loss(params, inp, out, idx):
    """inp: (T_in, B) int32, out: (T_out, B) int32, idx: (B,) int32 -> scalar."""
    H = params["proj_w"].shape[1]
    V, E = params["enc_emb"].shape
    T_in, B = inp.shape
    T_dec = out.shape[0] - 1
    Hp = _round_up(H, 128)
    Vp = _round_up(V, 128)
    Bp = _round_up(B, 8)          # pad batch to a full sublane tile

    # embeddings, batch padded to Bp; fwd and reversed sequence concatenated on
    # lanes; time x batch flattened so the kernel can do one big gate matmul.
    x = params["enc_emb"][inp]                                    # (T_in, B, E)
    x = jnp.pad(x, ((0, 0), (0, Bp - B), (0, 0)))
    x_pair = jnp.concatenate([x, x[::-1]], axis=-1)               # (T_in, Bp, 2E)
    x_flat = x_pair.reshape(T_in * Bp, 2 * E)

    y = params["dec_emb"][out[:-1, :]]                            # (T_dec, B, E)
    y = jnp.pad(y, ((0, 0), (0, Bp - B), (0, 0)))
    y_flat = y.reshape(T_dec * Bp, E)

    tgt = jnp.pad(out[1:, :].astype(jnp.int32), ((0, 0), (0, Bp - B)))
    tgt_flat = tgt.reshape(T_dec * Bp, 1)
    mask = jnp.broadcast_to((jnp.arange(Bp) < B).astype(jnp.float32)[None, :],
                            (T_dec, Bp)).reshape(T_dec * Bp, 1)
    idx2 = jnp.pad(idx.astype(jnp.int32), (0, Bp - B)).reshape(Bp, 1)

    # lane-padded / direction-stacked weights
    w_ih_enc = _bidir_block_w(params["enc_f_w_ih"], params["enc_b_w_ih"], H, Hp)
    w_hh_enc = _bidir_block_w(params["enc_f_w_hh"], params["enc_b_w_hh"],
                              H, Hp, pad_rows_to=Hp)
    b_enc = _bidir_bias(params["enc_f_b"], params["enc_b_b"], H, Hp)

    w_proj = jnp.pad(params["proj_w"].reshape(2, H, H),
                     ((0, 0), (0, Hp - H), (0, Hp - H))).reshape(2 * Hp, Hp)
    b_proj = jnp.pad(params["proj_b"], ((0, 0), (0, Hp - H)))

    w_ih_dec = _uni_gate_w(params["dec_w_ih"], H, Hp)
    w_hh_dec = _uni_gate_w(params["dec_w_hh"], H, Hp, pad_rows_to=Hp)
    b_dec = _uni_bias(params["dec_b"], H, Hp)

    w_out = jnp.pad(params["dec_out_w"], ((0, Hp - H), (0, Vp - V)))
    b_out = jnp.pad(params["dec_out_b"], ((0, 0), (0, Vp - V)))

    kernel = functools.partial(_context_kernel, t_in=T_in, t_dec=T_dec, bp=Bp,
                               batch=B, vocab=V, hp=Hp, vp=Vp)
    # Single launch, no grid: every operand is a whole-array VMEM block
    # (total < ~1 MiB at these sizes, well within scoped VMEM on v5e/v6e/v7x).
    loss = pl.pallas_call(
        kernel,
        out_shape=jax.ShapeDtypeStruct((1, 1), jnp.float32),
    )(x_flat, idx2, w_ih_enc, w_hh_enc, b_enc, w_proj, b_proj,
      y_flat, tgt_flat, mask, w_ih_dec, w_hh_dec, b_dec, w_out, b_out)
    return loss[0, 0]


# ------------------------------ pure-JAX reference ---------------------------


def _lstm_ref(x, h0, c0, w_ih, w_hh, b):
    def step(carry, x_t):
        h, c = carry
        gates = x_t @ w_ih + h @ w_hh + b[0]
        i, f, g, o = jnp.split(gates, 4, axis=-1)
        c = jax.nn.sigmoid(f) * c + jax.nn.sigmoid(i) * jnp.tanh(g)
        h = jax.nn.sigmoid(o) * jnp.tanh(c)
        return (h, c), h
    _, hs = jax.lax.scan(step, (h0, c0), x)
    return hs


def context_model_loss_ref(params, inp, out, idx):
    H = params["proj_w"].shape[1]
    T_in, B = inp.shape
    x = params["enc_emb"][inp]
    z = jnp.zeros((B, H), jnp.float32)
    h_fwd = _lstm_ref(x, z, z, params["enc_f_w_ih"],
                      params["enc_f_w_hh"], params["enc_f_b"])
    h_bwd = _lstm_ref(x[::-1], z, z, params["enc_b_w_ih"],
                      params["enc_b_w_hh"], params["enc_b_b"])[::-1]
    enc = jnp.concatenate([h_fwd, h_bwd], axis=-1)
    rep = enc[idx, jnp.arange(B), :] @ params["proj_w"] + params["proj_b"][0]
    y = params["dec_emb"][out[:-1, :]]
    h_dec = _lstm_ref(y, rep, jnp.zeros_like(rep), params["dec_w_ih"],
                      params["dec_w_hh"], params["dec_b"])
    logits = h_dec.reshape(-1, H) @ params["dec_out_w"] + params["dec_out_b"][0]
    tgt = out[1:, :].reshape(-1)
    logp = jax.nn.log_softmax(logits, axis=-1)
    return -jnp.mean(logp[jnp.arange(tgt.shape[0]), tgt])


# ----------------------------------- main -------------------------------------


if __name__ == "__main__":
    VOCAB, N_EMB, N_ENC = 32, 16, 32
    T_IN, T_OUT, B = 10, 7, 4

    key = jax.random.PRNGKey(0)
    k_param, k_inp, k_out = jax.random.split(key, 3)
    params = init_params(k_param, VOCAB, N_EMB, N_ENC)

    inp = jax.random.randint(k_inp, (T_IN, B), 0, VOCAB, dtype=jnp.int32)
    out = jax.random.randint(k_out, (T_OUT, B), 0, VOCAB, dtype=jnp.int32)
    idx = jnp.array([T_IN - 1, 3, 5, 0], dtype=jnp.int32)   # per-batch gather time

    loss = jax.block_until_ready(context_model_loss(params, inp, out, idx))
    loss_ref = jax.block_until_ready(context_model_loss_ref(params, inp, out, idx))
    np.testing.assert_allclose(np.asarray(loss), np.asarray(loss_ref),
                               rtol=2e-3, atol=2e-3)
    print("KERNEL_OK")
</pallas_src>

<mosaic_0001>
module attributes {stable_mosaic.version = 11 : i64} {
  func.func @_context_kernel(%arg0: memref<80x32xf32, #tpu.memory_space<vmem>>, %arg1: memref<8x1xi32, #tpu.memory_space<vmem>>, %arg2: memref<32x1024xf32, #tpu.memory_space<vmem>>, %arg3: memref<256x1024xf32, #tpu.memory_space<vmem>>, %arg4: memref<1x1024xf32, #tpu.memory_space<vmem>>, %arg5: memref<256x128xf32, #tpu.memory_space<vmem>>, %arg6: memref<1x128xf32, #tpu.memory_space<vmem>>, %arg7: memref<48x16xf32, #tpu.memory_space<vmem>>, %arg8: memref<48x1xi32, #tpu.memory_space<vmem>>, %arg9: memref<48x1xf32, #tpu.memory_space<vmem>>, %arg10: memref<16x512xf32, #tpu.memory_space<vmem>>, %arg11: memref<128x512xf32, #tpu.memory_space<vmem>>, %arg12: memref<1x512xf32, #tpu.memory_space<vmem>>, %arg13: memref<128x128xf32, #tpu.memory_space<vmem>>, %arg14: memref<1x128xf32, #tpu.memory_space<vmem>>, %arg15: memref<1x1xf32, #tpu.memory_space<vmem>>) attributes {dimension_semantics = [], scalar_prefetch = 0 : i64, scratch_operands = 0 : i64, tpu.core_type = #tpu.core_type<tc>} {
    %c0 = arith.constant 0 : index
    %c0_0 = arith.constant 0 : index
    %0 = vector.load %arg0[%c0, %c0_0] : memref<80x32xf32, #tpu.memory_space<vmem>>, vector<80x32xf32>
    %c0_1 = arith.constant 0 : index
    %c0_2 = arith.constant 0 : index
    %1 = vector.load %arg2[%c0_1, %c0_2] : memref<32x1024xf32, #tpu.memory_space<vmem>>, vector<32x1024xf32>
    %cst = arith.constant dense<0.000000e+00> : vector<80x1024xf32>
    %2 = tpu.matmul %0, %1, %cst {dimension_numbers = #tpu.dot_dimension_numbers<[1], [0], [0], [1], [0, 0, 1, 1], [], []>} : vector<80x32xf32>, vector<32x1024xf32>, vector<80x1024xf32> -> vector<80x1024xf32>
    %c0_3 = arith.constant 0 : index
    %c0_4 = arith.constant 0 : index
    %3 = vector.load %arg4[%c0_3, %c0_4] : memref<1x1024xf32, #tpu.memory_space<vmem>>, vector<1x1024xf32>
    %4 = vector.broadcast %3 : vector<1x1024xf32> to vector<80x1024xf32>
    %5 = arith.addf %2, %4 : vector<80x1024xf32>
    %c0_5 = arith.constant 0 : index
    %c0_6 = arith.constant 0 : index
    %6 = vector.load %arg7[%c0_5, %c0_6] : memref<48x16xf32, #tpu.memory_space<vmem>>, vector<48x16xf32>
    %c0_7 = arith.constant 0 : index
    %c0_8 = arith.constant 0 : index
    %7 = vector.load %arg10[%c0_7, %c0_8] : memref<16x512xf32, #tpu.memory_space<vmem>>, vector<16x512xf32>
    %cst_9 = arith.constant dense<0.000000e+00> : vector<48x512xf32>
    %8 = tpu.matmul %6, %7, %cst_9 {dimension_numbers = #tpu.dot_dimension_numbers<[1], [0], [0], [1], [0, 0, 1, 1], [], []>} : vector<48x16xf32>, vector<16x512xf32>, vector<48x512xf32> -> vector<48x512xf32>
    %c0_10 = arith.constant 0 : index
    %c0_11 = arith.constant 0 : index
    %9 = vector.load %arg12[%c0_10, %c0_11] : memref<1x512xf32, #tpu.memory_space<vmem>>, vector<1x512xf32>
    %10 = vector.broadcast %9 : vector<1x512xf32> to vector<48x512xf32>
    %11 = arith.addf %8, %10 : vector<48x512xf32>
    %12 = tpu.iota {dimensions = array<i32: 1>} : vector<8x256xi32>
    %c128_i32 = arith.constant 128 : i32
    %13 = vector.broadcast %c128_i32 : i32 to vector<8x256xi32>
    %14 = arith.cmpi slt, %12, %13 : vector<8x256xi32>
    %c0_12 = arith.constant 0 : index
    %c0_13 = arith.constant 0 : index
    %15 = vector.load %arg1[%c0_12, %c0_13] : memref<8x1xi32, #tpu.memory_space<vmem>>, vector<8x1xi32>
    %16 = vector.shape_cast %15 : vector<8x1xi32> to vector<8x1xi32>
    %17 = vector.broadcast %16 : vector<8x1xi32> to vector<8x256xi32>
    %c0_14 = arith.constant 0 : index
    %c0_15 = arith.constant 0 : index
    %18 = vector.load %arg3[%c0_14, %c0_15] : memref<256x1024xf32, #tpu.memory_space<vmem>>, vector<256x1024xf32>
    %cst_16 = arith.constant 0.000000e+00 : f32
    %19 = vector.broadcast %cst_16 : f32 to vector<8x256xf32>
    %cst_17 = arith.constant 0.000000e+00 : f32
    %20 = vector.broadcast %cst_17 : f32 to vector<8x256xf32>
    %cst_18 = arith.constant 0.000000e+00 : f32
    %21 = vector.broadcast %cst_18 : f32 to vector<8x256xf32>
    %22 = vector.extract_strided_slice %5 {offsets = [0, 0], sizes = [8, 1024], strides = [1, 1]} : vector<80x1024xf32> to vector<8x1024xf32>
    %cst_19 = arith.constant dense<0.000000e+00> : vector<8x1024xf32>
    %23 = tpu.matmul %19, %18, %cst_19 {dimension_numbers = #tpu.dot_dimension_numbers<[1], [0], [0], [1], [0, 0, 1, 1], [], []>} : vector<8x256xf32>, vector<256x1024xf32>, vector<8x1024xf32> -> vector<8x1024xf32>
    %24 = arith.addf %22, %23 : vector<8x1024xf32>
    %25 = vector.extract_strided_slice %24 {offsets = [0, 0], sizes = [8, 256], strides = [1, 1]} : vector<8x1024xf32> to vector<8x256xf32>
    %26 = arith.negf %25 : vector<8x256xf32>
    %27 = math.exp %26 : vector<8x256xf32>
    %cst_20 = arith.constant 1.000000e+00 : f32
    %28 = vector.broadcast %cst_20 : f32 to vector<8x256xf32>
    %29 = arith.addf %28, %27 : vector<8x256xf32>
    %30 = arith.divf %28, %29 : vector<8x256xf32>
    %31 = vector.extract_strided_slice %24 {offsets = [0, 256], sizes = [8, 256], strides = [1, 1]} : vector<8x1024xf32> to vector<8x256xf32>
    %32 = arith.negf %31 : vector<8x256xf32>
    %33 = math.exp %32 : vector<8x256xf32>
    %cst_21 = arith.constant 1.000000e+00 : f32
    %34 = vector.broadcast %cst_21 : f32 to vector<8x256xf32>
    %35 = arith.addf %34, %33 : vector<8x256xf32>
    %36 = arith.divf %34, %35 : vector<8x256xf32>
    %37 = vector.extract_strided_slice %24 {offsets = [0, 512], sizes = [8, 256], strides = [1, 1]} : vector<8x1024xf32> to vector<8x256xf32>
    %38 = math.tanh %37 : vector<8x256xf32>
    %39 = vector.extract_strided_slice %24 {offsets = [0, 768], sizes = [8, 256], strides = [1, 1]} : vector<8x1024xf32> to vector<8x256xf32>
    %40 = arith.negf %39 : vector<8x256xf32>
    %41 = math.exp %40 : vector<8x256xf32>
    %cst_22 = arith.constant 1.000000e+00 : f32
    %42 = vector.broadcast %cst_22 : f32 to vector<8x256xf32>
    %43 = arith.addf %42, %41 : vector<8x256xf32>
    %44 = arith.divf %42, %43 : vector<8x256xf32>
    %45 = arith.mulf %36, %20 : vector<8x256xf32>
    %46 = arith.mulf %30, %38 : vector<8x256xf32>
    %47 = arith.addf %45, %46 : vector<8x256xf32>
    %48 = math.tanh %47 : vector<8x256xf32>
    %49 = arith.mulf %44, %48 : vector<8x256xf32>
    %c0_i32 = arith.constant 0 : i32
    %c9_i32 = arith.constant 9 : i32
    %50 = vector.broadcast %c0_i32 : i32 to vector<8x256xi32>
    %51 = vector.broadcast %c9_i32 : i32 to vector<8x256xi32>
    %52 = arith.select %14, %50, %51 : vector<8x256xi1>, vector<8x256xi32>
    %53 = arith.cmpi eq, %17, %52 : vector<8x256xi32>
    %54 = arith.select %53, %49, %21 : vector<8x256xi1>, vector<8x256xf32>
    %55 = vector.extract_strided_slice %5 {offsets = [8, 0], sizes = [8, 1024], strides = [1, 1]} : vector<80x1024xf32> to vector<8x1024xf32>
    %cst_23 = arith.constant dense<0.000000e+00> : vector<8x1024xf32>
    %56 = tpu.matmul %49, %18, %cst_23 {dimension_numbers = #tpu.dot_dimension_numbers<[1], [0], [0], [1], [0, 0, 1, 1], [], []>} : vector<8x256xf32>, vector<256x1024xf32>, vector<8x1024xf32> -> vector<8x1024xf32>
    %57 = arith.addf %55, %56 : vector<8x1024xf32>
    %58 = vector.extract_strided_slice %57 {offsets = [0, 0], sizes = [8, 256], strides = [1, 1]} : vector<8x1024xf32> to vector<8x256xf32>
    %59 = arith.negf %58 : vector<8x256xf32>
    %60 = math.exp %59 : vector<8x256xf32>
    %cst_24 = arith.constant 1.000000e+00 : f32
    %61 = vector.broadcast %cst_24 : f32 to vector<8x256xf32>
    %62 = arith.addf %61, %60 : vector<8x256xf32>
    %63 = arith.divf %61, %62 : vector<8x256xf32>
    %64 = vector.extract_strided_slice %57 {offsets = [0, 256], sizes = [8, 256], strides = [1, 1]} : vector<8x1024xf32> to vector<8x256xf32>
    %65 = arith.negf %64 : vector<8x256xf32>
    %66 = math.exp %65 : vector<8x256xf32>
    %cst_25 = arith.constant 1.000000e+00 : f32
    %67 = vector.broadcast %cst_25 : f32 to vector<8x256xf32>
    %68 = arith.addf %67, %66 : vector<8x256xf32>
    %69 = arith.divf %67, %68 : vector<8x256xf32>
    %70 = vector.extract_strided_slice %57 {offsets = [0, 512], sizes = [8, 256], strides = [1, 1]} : vector<8x1024xf32> to vector<8x256xf32>
    %71 = math.tanh %70 : vector<8x256xf32>
    %72 = vector.extract_strided_slice %57 {offsets = [0, 768], sizes = [8, 256], strides = [1, 1]} : vector<8x1024xf32> to vector<8x256xf32>
    %73 = arith.negf %72 : vector<8x256xf32>
    %74 = math.exp %73 : vector<8x256xf32>
    %cst_26 = arith.constant 1.000000e+00 : f32
    %75 = vector.broadcast %cst_26 : f32 to vector<8x256xf32>
    %76 = arith.addf %75, %74 : vector<8x256xf32>
    %77 = arith.divf %75, %76 : vector<8x256xf32>
    %78 = arith.mulf %69, %47 : vector<8x256xf32>
    %79 = arith.mulf %63, %71 : vector<8x256xf32>
    %80 = arith.addf %78, %79 : vector<8x256xf32>
    %81 = math.tanh %80 : vector<8x256xf32>
    %82 = arith.mulf %77, %81 : vector<8x256xf32>
    %c1_i32 = arith.constant 1 : i32
    %c8_i32 = arith.constant 8 : i32
    %83 = vector.broadcast %c1_i32 : i32 to vector<8x256xi32>
    %84 = vector.broadcast %c8_i32 : i32 to vector<8x256xi32>
    %85 = arith.select %14, %83, %84 : vector<8x256xi1>, vector<8x256xi32>
    %86 = arith.cmpi eq, %17, %85 : vector<8x256xi32>
    %87 = arith.select %86, %82, %54 : vector<8x256xi1>, vector<8x256xf32>
    %88 = vector.extract_strided_slice %5 {offsets = [16, 0], sizes = [8, 1024], strides = [1, 1]} : vector<80x1024xf32> to vector<8x1024xf32>
    %cst_27 = arith.constant dense<0.000000e+00> : vector<8x1024xf32>
    %89 = tpu.matmul %82, %18, %cst_27 {dimension_numbers = #tpu.dot_dimension_numbers<[1], [0], [0], [1], [0, 0, 1, 1], [], []>} : vector<8x256xf32>, vector<256x1024xf32>, vector<8x1024xf32> -> vector<8x1024xf32>
    %90 = arith.addf %88, %89 : vector<8x1024xf32>
    %91 = vector.extract_strided_slice %90 {offsets = [0, 0], sizes = [8, 256], strides = [1, 1]} : vector<8x1024xf32> to vector<8x256xf32>
    %92 = arith.negf %91 : vector<8x256xf32>
    %93 = math.exp %92 : vector<8x256xf32>
    %cst_28 = arith.constant 1.000000e+00 : f32
    %94 = vector.broadcast %cst_28 : f32 to vector<8x256xf32>
    %95 = arith.addf %94, %93 : vector<8x256xf32>
    %96 = arith.divf %94, %95 : vector<8x256xf32>
    %97 = vector.extract_strided_slice %90 {offsets = [0, 256], sizes = [8, 256], strides = [1, 1]} : vector<8x1024xf32> to vector<8x256xf32>
    %98 = arith.negf %97 : vector<8x256xf32>
    %99 = math.exp %98 : vector<8x256xf32>
    %cst_29 = arith.constant 1.000000e+00 : f32
    %100 = vector.broadcast %cst_29 : f32 to vector<8x256xf32>
    %101 = arith.addf %100, %99 : vector<8x256xf32>
    %102 = arith.divf %100, %101 : vector<8x256xf32>
    %103 = vector.extract_strided_slice %90 {offsets = [0, 512], sizes = [8, 256], strides = [1, 1]} : vector<8x1024xf32> to vector<8x256xf32>
    %104 = math.tanh %103 : vector<8x256xf32>
    %105 = vector.extract_strided_slice %90 {offsets = [0, 768], sizes = [8, 256], strides = [1, 1]} : vector<8x1024xf32> to vector<8x256xf32>
    %106 = arith.negf %105 : vector<8x256xf32>
    %107 = math.exp %106 : vector<8x256xf32>
    %cst_30 = arith.constant 1.000000e+00 : f32
    %108 = vector.broadcast %cst_30 : f32 to vector<8x256xf32>
    %109 = arith.addf %108, %107 : vector<8x256xf32>
    %110 = arith.divf %108, %109 : vector<8x256xf32>
    %111 = arith.mulf %102, %80 : vector<8x256xf32>
    %112 = arith.mulf %96, %104 : vector<8x256xf32>
    %113 = arith.addf %111, %112 : vector<8x256xf32>
    %114 = math.tanh %113 : vector<8x256xf32>
    %115 = arith.mulf %110, %114 : vector<8x256xf32>
    %c2_i32 = arith.constant 2 : i32
    %c7_i32 = arith.constant 7 : i32
    %116 = vector.broadcast %c2_i32 : i32 to vector<8x256xi32>
    %117 = vector.broadcast %c7_i32 : i32 to vector<8x256xi32>
    %118 = arith.select %14, %116, %117 : vector<8x256xi1>, vector<8x256xi32>
    %119 = arith.cmpi eq, %17, %118 : vector<8x256xi32>
    %120 = arith.select %119, %115, %87 : vector<8x256xi1>, vector<8x256xf32>
    %121 = vector.extract_strided_slice %5 {offsets = [24, 0], sizes = [8, 1024], strides = [1, 1]} : vector<80x1024xf32> to vector<8x1024xf32>
    %cst_31 = arith.constant dense<0.000000e+00> : vector<8x1024xf32>
    %122 = tpu.matmul %115, %18, %cst_31 {dimension_numbers = #tpu.dot_dimension_numbers<[1], [0], [0], [1], [0, 0, 1, 1], [], []>} : vector<8x256xf32>, vector<256x1024xf32>, vector<8x1024xf32> -> vector<8x1024xf32>
    %123 = arith.addf %121, %122 : vector<8x1024xf32>
    %124 = vector.extract_strided_slice %123 {offsets = [0, 0], sizes = [8, 256], strides = [1, 1]} : vector<8x1024xf32> to vector<8x256xf32>
    %125 = arith.negf %124 : vector<8x256xf32>
    %126 = math.exp %125 : vector<8x256xf32>
    %cst_32 = arith.constant 1.000000e+00 : f32
    %127 = vector.broadcast %cst_32 : f32 to vector<8x256xf32>
    %128 = arith.addf %127, %126 : vector<8x256xf32>
    %129 = arith.divf %127, %128 : vector<8x256xf32>
    %130 = vector.extract_strided_slice %123 {offsets = [0, 256], sizes = [8, 256], strides = [1, 1]} : vector<8x1024xf32> to vector<8x256xf32>
    %131 = arith.negf %130 : vector<8x256xf32>
    %132 = math.exp %131 : vector<8x256xf32>
    %cst_33 = arith.constant 1.000000e+00 : f32
    %133 = vector.broadcast %cst_33 : f32 to vector<8x256xf32>
    %134 = arith.addf %133, %132 : vector<8x256xf32>
    %135 = arith.divf %133, %134 : vector<8x256xf32>
    %136 = vector.extract_strided_slice %123 {offsets = [0, 512], sizes = [8, 256], strides = [1, 1]} : vector<8x1024xf32> to vector<8x256xf32>
    %137 = math.tanh %136 : vector<8x256xf32>
    %138 = vector.extract_strided_slice %123 {offsets = [0, 768], sizes = [8, 256], strides = [1, 1]} : vector<8x1024xf32> to vector<8x256xf32>
    %139 = arith.negf %138 : vector<8x256xf32>
    %140 = math.exp %139 : vector<8x256xf32>
    %cst_34 = arith.constant 1.000000e+00 : f32
    %141 = vector.broadcast %cst_34 : f32 to vector<8x256xf32>
    %142 = arith.addf %141, %140 : vector<8x256xf32>
    %143 = arith.divf %141, %142 : vector<8x256xf32>
    %144 = arith.mulf %135, %113 : vector<8x256xf32>
    %145 = arith.mulf %129, %137 : vector<8x256xf32>
    %146 = arith.addf %144, %145 : vector<8x256xf32>
    %147 = math.tanh %146 : vector<8x256xf32>
    %148 = arith.mulf %143, %147 : vector<8x256xf32>
    %c3_i32 = arith.constant 3 : i32
    %c6_i32 = arith.constant 6 : i32
    %149 = vector.broadcast %c3_i32 : i32 to vector<8x256xi32>
    %150 = vector.broadcast %c6_i32 : i32 to vector<8x256xi32>
    %151 = arith.select %14, %149, %150 : vector<8x256xi1>, vector<8x256xi32>
    %152 = arith.cmpi eq, %17, %151 : vector<8x256xi32>
    %153 = arith.select %152, %148, %120 : vector<8x256xi1>, vector<8x256xf32>
    %154 = vector.extract_strided_slice %5 {offsets = [32, 0], sizes = [8, 1024], strides = [1, 1]} : vector<80x1024xf32> to vector<8x1024xf32>
    %cst_35 = arith.constant dense<0.000000e+00> : vector<8x1024xf32>
    %155 = tpu.matmul %148, %18, %cst_35 {dimension_numbers = #tpu.dot_dimension_numbers<[1], [0], [0], [1], [0, 0, 1, 1], [], []>} : vector<8x256xf32>, vector<256x1024xf32>, vector<8x1024xf32> -> vector<8x1024xf32>
    %156 = arith.addf %154, %155 : vector<8x1024xf32>
    %157 = vector.extract_strided_slice %156 {offsets = [0, 0], sizes = [8, 256], strides = [1, 1]} : vector<8x1024xf32> to vector<8x256xf32>
    %158 = arith.negf %157 : vector<8x256xf32>
    %159 = math.exp %158 : vector<8x256xf32>
    %cst_36 = arith.constant 1.000000e+00 : f32
    %160 = vector.broadcast %cst_36 : f32 to vector<8x256xf32>
    %161 = arith.addf %160, %159 : vector<8x256xf32>
    %162 = arith.divf %160, %161 : vector<8x256xf32>
    %163 = vector.extract_strided_slice %156 {offsets = [0, 256], sizes = [8, 256], strides = [1, 1]} : vector<8x1024xf32> to vector<8x256xf32>
    %164 = arith.negf %163 : vector<8x256xf32>
    %165 = math.exp %164 : vector<8x256xf32>
    %cst_37 = arith.constant 1.000000e+00 : f32
    %166 = vector.broadcast %cst_37 : f32 to vector<8x256xf32>
    %167 = arith.addf %166, %165 : vector<8x256xf32>
    %168 = arith.divf %166, %167 : vector<8x256xf32>
    %169 = vector.extract_strided_slice %156 {offsets = [0, 512], sizes = [8, 256], strides = [1, 1]} : vector<8x1024xf32> to vector<8x256xf32>
    %170 = math.tanh %169 : vector<8x256xf32>
    %171 = vector.extract_strided_slice %156 {offsets = [0, 768], sizes = [8, 256], strides = [1, 1]} : vector<8x1024xf32> to vector<8x256xf32>
    %172 = arith.negf %171 : vector<8x256xf32>
    %173 = math.exp %172 : vector<8x256xf32>
    %cst_38 = arith.constant 1.000000e+00 : f32
    %174 = vector.broadcast %cst_38 : f32 to vector<8x256xf32>
    %175 = arith.addf %174, %173 : vector<8x256xf32>
    %176 = arith.divf %174, %175 : vector<8x256xf32>
    %177 = arith.mulf %168, %146 : vector<8x256xf32>
    %178 = arith.mulf %162, %170 : vector<8x256xf32>
    %179 = arith.addf %177, %178 : vector<8x256xf32>
    %180 = math.tanh %179 : vector<8x256xf32>
    %181 = arith.mulf %176, %180 : vector<8x256xf32>
    %c4_i32 = arith.constant 4 : i32
    %c5_i32 = arith.constant 5 : i32
    %182 = vector.broadcast %c4_i32 : i32 to vector<8x256xi32>
    %183 = vector.broadcast %c5_i32 : i32 to vector<8x256xi32>
    %184 = arith.select %14, %182, %183 : vector<8x256xi1>, vector<8x256xi32>
    %185 = arith.cmpi eq, %17, %184 : vector<8x256xi32>
    %186 = arith.select %185, %181, %153 : vector<8x256xi1>, vector<8x256xf32>
    %187 = vector.extract_strided_slice %5 {offsets = [40, 0], sizes = [8, 1024], strides = [1, 1]} : vector<80x1024xf32> to vector<8x1024xf32>
    %cst_39 = arith.constant dense<0.000000e+00> : vector<8x1024xf32>
    %188 = tpu.matmul %181, %18, %cst_39 {dimension_numbers = #tpu.dot_dimension_numbers<[1], [0], [0], [1], [0, 0, 1, 1], [], []>} : vector<8x256xf32>, vector<256x1024xf32>, vector<8x1024xf32> -> vector<8x1024xf32>
    %189 = arith.addf %187, %188 : vector<8x1024xf32>
    %190 = vector.extract_strided_slice %189 {offsets = [0, 0], sizes = [8, 256], strides = [1, 1]} : vector<8x1024xf32> to vector<8x256xf32>
    %191 = arith.negf %190 : vector<8x256xf32>
    %192 = math.exp %191 : vector<8x256xf32>
    %cst_40 = arith.constant 1.000000e+00 : f32
    %193 = vector.broadcast %cst_40 : f32 to vector<8x256xf32>
    %194 = arith.addf %193, %192 : vector<8x256xf32>
    %195 = arith.divf %193, %194 : vector<8x256xf32>
    %196 = vector.extract_strided_slice %189 {offsets = [0, 256], sizes = [8, 256], strides = [1, 1]} : vector<8x1024xf32> to vector<8x256xf32>
    %197 = arith.negf %196 : vector<8x256xf32>
    %198 = math.exp %197 : vector<8x256xf32>
    %cst_41 = arith.constant 1.000000e+00 : f32
    %199 = vector.broadcast %cst_41 : f32 to vector<8x256xf32>
    %200 = arith.addf %199, %198 : vector<8x256xf32>
    %201 = arith.divf %199, %200 : vector<8x256xf32>
    %202 = vector.extract_strided_slice %189 {offsets = [0, 512], sizes = [8, 256], strides = [1, 1]} : vector<8x1024xf32> to vector<8x256xf32>
    %203 = math.tanh %202 : vector<8x256xf32>
    %204 = vector.extract_strided_slice %189 {offsets = [0, 768], sizes = [8, 256], strides = [1, 1]} : vector<8x1024xf32> to vector<8x256xf32>
    %205 = arith.negf %204 : vector<8x256xf32>
    %206 = math.exp %205 : vector<8x256xf32>
    %cst_42 = arith.constant 1.000000e+00 : f32
    %207 = vector.broadcast %cst_42 : f32 to vector<8x256xf32>
    %208 = arith.addf %207, %206 : vector<8x256xf32>
    %209 = arith.divf %207, %208 : vector<8x256xf32>
    %210 = arith.mulf %201, %179 : vector<8x256xf32>
    %211 = arith.mulf %195, %203 : vector<8x256xf32>
    %212 = arith.addf %210, %211 : vector<8x256xf32>
    %213 = math.tanh %212 : vector<8x256xf32>
    %214 = arith.mulf %209, %213 : vector<8x256xf32>
    %c5_i32_43 = arith.constant 5 : i32
    %c4_i32_44 = arith.constant 4 : i32
    %215 = vector.broadcast %c5_i32_43 : i32 to vector<8x256xi32>
    %216 = vector.broadcast %c4_i32_44 : i32 to vector<8x256xi32>
    %217 = arith.select %14, %215, %216 : vector<8x256xi1>, vector<8x256xi32>
    %218 = arith.cmpi eq, %17, %217 : vector<8x256xi32>
    %219 = arith.select %218, %214, %186 : vector<8x256xi1>, vector<8x256xf32>
    %220 = vector.extract_strided_slice %5 {offsets = [48, 0], sizes = [8, 1024], strides = [1, 1]} : vector<80x1024xf32> to vector<8x1024xf32>
    %cst_45 = arith.constant dense<0.000000e+00> : vector<8x1024xf32>
    %221 = tpu.matmul %214, %18, %cst_45 {dimension_numbers = #tpu.dot_dimension_numbers<[1], [0], [0], [1], [0, 0, 1, 1], [], []>} : vector<8x256xf32>, vector<256x1024xf32>, vector<8x1024xf32> -> vector<8x1024xf32>
    %222 = arith.addf %220, %221 : vector<8x1024xf32>
    %223 = vector.extract_strided_slice %222 {offsets = [0, 0], sizes = [8, 256], strides = [1, 1]} : vector<8x1024xf32> to vector<8x256xf32>
    %224 = arith.negf %223 : vector<8x256xf32>
    %225 = math.exp %224 : vector<8x256xf32>
    %cst_46 = arith.constant 1.000000e+00 : f32
    %226 = vector.broadcast %cst_46 : f32 to vector<8x256xf32>
    %227 = arith.addf %226, %225 : vector<8x256xf32>
    %228 = arith.divf %226, %227 : vector<8x256xf32>
    %229 = vector.extract_strided_slice %222 {offsets = [0, 256], sizes = [8, 256], strides = [1, 1]} : vector<8x1024xf32> to vector<8x256xf32>
    %230 = arith.negf %229 : vector<8x256xf32>
    %231 = math.exp %230 : vector<8x256xf32>
    %cst_47 = arith.constant 1.000000e+00 : f32
    %232 = vector.broadcast %cst_47 : f32 to vector<8x256xf32>
    %233 = arith.addf %232, %231 : vector<8x256xf32>
    %234 = arith.divf %232, %233 : vector<8x256xf32>
    %235 = vector.extract_strided_slice %222 {offsets = [0, 512], sizes = [8, 256], strides = [1, 1]} : vector<8x1024xf32> to vector<8x256xf32>
    %236 = math.tanh %235 : vector<8x256xf32>
    %237 = vector.extract_strided_slice %222 {offsets = [0, 768], sizes = [8, 256], strides = [1, 1]} : vector<8x1024xf32> to vector<8x256xf32>
    %238 = arith.negf %237 : vector<8x256xf32>
    %239 = math.exp %238 : vector<8x256xf32>
    %cst_48 = arith.constant 1.000000e+00 : f32
    %240 = vector.broadcast %cst_48 : f32 to vector<8x256xf32>
    %241 = arith.addf %240, %239 : vector<8x256xf32>
    %242 = arith.divf %240, %241 : vector<8x256xf32>
    %243 = arith.mulf %234, %212 : vector<8x256xf32>
    %244 = arith.mulf %228, %236 : vector<8x256xf32>
    %245 = arith.addf %243, %244 : vector<8x256xf32>
    %246 = math.tanh %245 : vector<8x256xf32>
    %247 = arith.mulf %242, %246 : vector<8x256xf32>
    %c6_i32_49 = arith.constant 6 : i32
    %c3_i32_50 = arith.constant 3 : i32
    %248 = vector.broadcast %c6_i32_49 : i32 to vector<8x256xi32>
    %249 = vector.broadcast %c3_i32_50 : i32 to vector<8x256xi32>
    %250 = arith.select %14, %248, %249 : vector<8x256xi1>, vector<8x256xi32>
    %251 = arith.cmpi eq, %17, %250 : vector<8x256xi32>
    %252 = arith.select %251, %247, %219 : vector<8x256xi1>, vector<8x256xf32>
    %253 = vector.extract_strided_slice %5 {offsets = [56, 0], sizes = [8, 1024], strides = [1, 1]} : vector<80x1024xf32> to vector<8x1024xf32>
    %cst_51 = arith.constant dense<0.000000e+00> : vector<8x1024xf32>
    %254 = tpu.matmul %247, %18, %cst_51 {dimension_numbers = #tpu.dot_dimension_numbers<[1], [0], [0], [1], [0, 0, 1, 1], [], []>} : vector<8x256xf32>, vector<256x1024xf32>, vector<8x1024xf32> -> vector<8x1024xf32>
    %255 = arith.addf %253, %254 : vector<8x1024xf32>
    %256 = vector.extract_strided_slice %255 {offsets = [0, 0], sizes = [8, 256], strides = [1, 1]} : vector<8x1024xf32> to vector<8x256xf32>
    %257 = arith.negf %256 : vector<8x256xf32>
    %258 = math.exp %257 : vector<8x256xf32>
    %cst_52 = arith.constant 1.000000e+00 : f32
    %259 = vector.broadcast %cst_52 : f32 to vector<8x256xf32>
    %260 = arith.addf %259, %258 : vector<8x256xf32>
    %261 = arith.divf %259, %260 : vector<8x256xf32>
    %262 = vector.extract_strided_slice %255 {offsets = [0, 256], sizes = [8, 256], strides = [1, 1]} : vector<8x1024xf32> to vector<8x256xf32>
    %263 = arith.negf %262 : vector<8x256xf32>
    %264 = math.exp %263 : vector<8x256xf32>
    %cst_53 = arith.constant 1.000000e+00 : f32
    %265 = vector.broadcast %cst_53 : f32 to vector<8x256xf32>
    %266 = arith.addf %265, %264 : vector<8x256xf32>
    %267 = arith.divf %265, %266 : vector<8x256xf32>
    %268 = vector.extract_strided_slice %255 {offsets = [0, 512], sizes = [8, 256], strides = [1, 1]} : vector<8x1024xf32> to vector<8x256xf32>
    %269 = math.tanh %268 : vector<8x256xf32>
    %270 = vector.extract_strided_slice %255 {offsets = [0, 768], sizes = [8, 256], strides = [1, 1]} : vector<8x1024xf32> to vector<8x256xf32>
    %271 = arith.negf %270 : vector<8x256xf32>
    %272 = math.exp %271 : vector<8x256xf32>
    %cst_54 = arith.constant 1.000000e+00 : f32
    %273 = vector.broadcast %cst_54 : f32 to vector<8x256xf32>
    %274 = arith.addf %273, %272 : vector<8x256xf32>
    %275 = arith.divf %273, %274 : vector<8x256xf32>
    %276 = arith.mulf %267, %245 : vector<8x256xf32>
    %277 = arith.mulf %261, %269 : vector<8x256xf32>
    %278 = arith.addf %276, %277 : vector<8x256xf32>
    %279 = math.tanh %278 : vector<8x256xf32>
    %280 = arith.mulf %275, %279 : vector<8x256xf32>
    %c7_i32_55 = arith.constant 7 : i32
    %c2_i32_56 = arith.constant 2 : i32
    %281 = vector.broadcast %c7_i32_55 : i32 to vector<8x256xi32>
    %282 = vector.broadcast %c2_i32_56 : i32 to vector<8x256xi32>
    %283 = arith.select %14, %281, %282 : vector<8x256xi1>, vector<8x256xi32>
    %284 = arith.cmpi eq, %17, %283 : vector<8x256xi32>
    %285 = arith.select %284, %280, %252 : vector<8x256xi1>, vector<8x256xf32>
    %286 = vector.extract_strided_slice %5 {offsets = [64, 0], sizes = [8, 1024], strides = [1, 1]} : vector<80x1024xf32> to vector<8x1024xf32>
    %cst_57 = arith.constant dense<0.000000e+00> : vector<8x1024xf32>
    %287 = tpu.matmul %280, %18, %cst_57 {dimension_numbers = #tpu.dot_dimension_numbers<[1], [0], [0], [1], [0, 0, 1, 1], [], []>} : vector<8x256xf32>, vector<256x1024xf32>, vector<8x1024xf32> -> vector<8x1024xf32>
    %288 = arith.addf %286, %287 : vector<8x1024xf32>
    %289 = vector.extract_strided_slice %288 {offsets = [0, 0], sizes = [8, 256], strides = [1, 1]} : vector<8x1024xf32> to vector<8x256xf32>
    %290 = arith.negf %289 : vector<8x256xf32>
    %291 = math.exp %290 : vector<8x256xf32>
    %cst_58 = arith.constant 1.000000e+00 : f32
    %292 = vector.broadcast %cst_58 : f32 to vector<8x256xf32>
    %293 = arith.addf %292, %291 : vector<8x256xf32>
    %294 = arith.divf %292, %293 : vector<8x256xf32>
    %295 = vector.extract_strided_slice %288 {offsets = [0, 256], sizes = [8, 256], strides = [1, 1]} : vector<8x1024xf32> to vector<8x256xf32>
    %296 = arith.negf %295 : vector<8x256xf32>
    %297 = math.exp %296 : vector<8x256xf32>
    %cst_59 = arith.constant 1.000000e+00 : f32
    %298 = vector.broadcast %cst_59 : f32 to vector<8x256xf32>
    %299 = arith.addf %298, %297 : vector<8x256xf32>
    %300 = arith.divf %298, %299 : vector<8x256xf32>
    %301 = vector.extract_strided_slice %288 {offsets = [0, 512], sizes = [8, 256], strides = [1, 1]} : vector<8x1024xf32> to vector<8x256xf32>
    %302 = math.tanh %301 : vector<8x256xf32>
    %303 = vector.extract_strided_slice %288 {offsets = [0, 768], sizes = [8, 256], strides = [1, 1]} : vector<8x1024xf32> to vector<8x256xf32>
    %304 = arith.negf %303 : vector<8x256xf32>
    %305 = math.exp %304 : vector<8x256xf32>
    %cst_60 = arith.constant 1.000000e+00 : f32
    %306 = vector.broadcast %cst_60 : f32 to vector<8x256xf32>
    %307 = arith.addf %306, %305 : vector<8x256xf32>
    %308 = arith.divf %306, %307 : vector<8x256xf32>
    %309 = arith.mulf %300, %278 : vector<8x256xf32>
    %310 = arith.mulf %294, %302 : vector<8x256xf32>
    %311 = arith.addf %309, %310 : vector<8x256xf32>
    %312 = math.tanh %311 : vector<8x256xf32>
    %313 = arith.mulf %308, %312 : vector<8x256xf32>
    %c8_i32_61 = arith.constant 8 : i32
    %c1_i32_62 = arith.constant 1 : i32
    %314 = vector.broadcast %c8_i32_61 : i32 to vector<8x256xi32>
    %315 = vector.broadcast %c1_i32_62 : i32 to vector<8x256xi32>
    %316 = arith.select %14, %314, %315 : vector<8x256xi1>, vector<8x256xi32>
    %317 = arith.cmpi eq, %17, %316 : vector<8x256xi32>
    %318 = arith.select %317, %313, %285 : vector<8x256xi1>, vector<8x256xf32>
    %319 = vector.extract_strided_slice %5 {offsets = [72, 0], sizes = [8, 1024], strides = [1, 1]} : vector<80x1024xf32> to vector<8x1024xf32>
    %cst_63 = arith.constant dense<0.000000e+00> : vector<8x1024xf32>
    %320 = tpu.matmul %313, %18, %cst_63 {dimension_numbers = #tpu.dot_dimension_numbers<[1], [0], [0], [1], [0, 0, 1, 1], [], []>} : vector<8x256xf32>, vector<256x1024xf32>, vector<8x1024xf32> -> vector<8x1024xf32>
    %321 = arith.addf %319, %320 : vector<8x1024xf32>
    %322 = vector.extract_strided_slice %321 {offsets = [0, 0], sizes = [8, 256], strides = [1, 1]} : vector<8x1024xf32> to vector<8x256xf32>
    %323 = arith.negf %322 : vector<8x256xf32>
    %324 = math.exp %323 : vector<8x256xf32>
    %cst_64 = arith.constant 1.000000e+00 : f32
    %325 = vector.broadcast %cst_64 : f32 to vector<8x256xf32>
    %326 = arith.addf %325, %324 : vector<8x256xf32>
    %327 = arith.divf %325, %326 : vector<8x256xf32>
    %328 = vector.extract_strided_slice %321 {offsets = [0, 256], sizes = [8, 256], strides = [1, 1]} : vector<8x1024xf32> to vector<8x256xf32>
    %329 = arith.negf %328 : vector<8x256xf32>
    %330 = math.exp %329 : vector<8x256xf32>
    %cst_65 = arith.constant 1.000000e+00 : f32
    %331 = vector.broadcast %cst_65 : f32 to vector<8x256xf32>
    %332 = arith.addf %331, %330 : vector<8x256xf32>
    %333 = arith.divf %331, %332 : vector<8x256xf32>
    %334 = vector.extract_strided_slice %321 {offsets = [0, 512], sizes = [8, 256], strides = [1, 1]} : vector<8x1024xf32> to vector<8x256xf32>
    %335 = math.tanh %334 : vector<8x256xf32>
    %336 = vector.extract_strided_slice %321 {offsets = [0, 768], sizes = [8, 256], strides = [1, 1]} : vector<8x1024xf32> to vector<8x256xf32>
    %337 = arith.negf %336 : vector<8x256xf32>
    %338 = math.exp %337 : vector<8x256xf32>
    %cst_66 = arith.constant 1.000000e+00 : f32
    %339 = vector.broadcast %cst_66 : f32 to vector<8x256xf32>
    %340 = arith.addf %339, %338 : vector<8x256xf32>
    %341 = arith.divf %339, %340 : vector<8x256xf32>
    %342 = arith.mulf %333, %311 : vector<8x256xf32>
    %343 = arith.mulf %327, %335 : vector<8x256xf32>
    %344 = arith.addf %342, %343 : vector<8x256xf32>
    %345 = math.tanh %344 : vector<8x256xf32>
    %346 = arith.mulf %341, %345 : vector<8x256xf32>
    %c9_i32_67 = arith.constant 9 : i32
    %c0_i32_68 = arith.constant 0 : i32
    %347 = vector.broadcast %c9_i32_67 : i32 to vector<8x256xi32>
    %348 = vector.broadcast %c0_i32_68 : i32 to vector<8x256xi32>
    %349 = arith.select %14, %347, %348 : vector<8x256xi1>, vector<8x256xi32>
    %350 = arith.cmpi eq, %17, %349 : vector<8x256xi32>
    %351 = arith.select %350, %346, %318 : vector<8x256xi1>, vector<8x256xf32>
    %c0_69 = arith.constant 0 : index
    %c0_70 = arith.constant 0 : index
    %352 = vector.load %arg5[%c0_69, %c0_70] : memref<256x128xf32, #tpu.memory_space<vmem>>, vector<256x128xf32>
    %cst_71 = arith.constant dense<0.000000e+00> : vector<8x128xf32>
    %353 = tpu.matmul %351, %352, %cst_71 {dimension_numbers = #tpu.dot_dimension_numbers<[1], [0], [0], [1], [0, 0, 1, 1], [], []>} : vector<8x256xf32>, vector<256x128xf32>, vector<8x128xf32> -> vector<8x128xf32>
    %c0_72 = arith.constant 0 : index
    %c0_73 = arith.constant 0 : index
    %354 = vector.load %arg6[%c0_72, %c0_73] : memref<1x128xf32, #tpu.memory_space<vmem>>, vector<1x128xf32>
    %355 = vector.broadcast %354 : vector<1x128xf32> to vector<8x128xf32>
    %356 = arith.addf %353, %355 : vector<8x128xf32>
    %c0_74 = arith.constant 0 : index
    %c0_75 = arith.constant 0 : index
    %357 = vector.load %arg11[%c0_74, %c0_75] : memref<128x512xf32, #tpu.memory_space<vmem>>, vector<128x512xf32>
    %cst_76 = arith.constant 0.000000e+00 : f32
    %358 = vector.broadcast %cst_76 : f32 to vector<8x128xf32>
    %359 = vector.extract_strided_slice %11 {offsets = [0, 0], sizes = [8, 512], strides = [1, 1]} : vector<48x512xf32> to vector<8x512xf32>
    %cst_77 = arith.constant dense<0.000000e+00> : vector<8x512xf32>
    %360 = tpu.matmul %356, %357, %cst_77 {dimension_numbers = #tpu.dot_dimension_numbers<[1], [0], [0], [1], [0, 0, 1, 1], [], []>} : vector<8x128xf32>, vector<128x512xf32>, vector<8x512xf32> -> vector<8x512xf32>
    %361 = arith.addf %359, %360 : vector<8x512xf32>
    %362 = vector.extract_strided_slice %361 {offsets = [0, 0], sizes = [8, 128], strides = [1, 1]} : vector<8x512xf32> to vector<8x128xf32>
    %363 = arith.negf %362 : vector<8x128xf32>
    %364 = math.exp %363 : vector<8x128xf32>
    %cst_78 = arith.constant 1.000000e+00 : f32
    %365 = vector.broadcast %cst_78 : f32 to vector<8x128xf32>
    %366 = arith.addf %365, %364 : vector<8x128xf32>
    %367 = arith.divf %365, %366 : vector<8x128xf32>
    %368 = vector.extract_strided_slice %361 {offsets = [0, 128], sizes = [8, 128], strides = [1, 1]} : vector<8x512xf32> to vector<8x128xf32>
    %369 = arith.negf %368 : vector<8x128xf32>
    %370 = math.exp %369 : vector<8x128xf32>
    %cst_79 = arith.constant 1.000000e+00 : f32
    %371 = vector.broadcast %cst_79 : f32 to vector<8x128xf32>
    %372 = arith.addf %371, %370 : vector<8x128xf32>
    %373 = arith.divf %371, %372 : vector<8x128xf32>
    %374 = vector.extract_strided_slice %361 {offsets = [0, 256], sizes = [8, 128], strides = [1, 1]} : vector<8x512xf32> to vector<8x128xf32>
    %375 = math.tanh %374 : vector<8x128xf32>
    %376 = vector.extract_strided_slice %361 {offsets = [0, 384], sizes = [8, 128], strides = [1, 1]} : vector<8x512xf32> to vector<8x128xf32>
    %377 = arith.negf %376 : vector<8x128xf32>
    %378 = math.exp %377 : vector<8x128xf32>
    %cst_80 = arith.constant 1.000000e+00 : f32
    %379 = vector.broadcast %cst_80 : f32 to vector<8x128xf32>
    %380 = arith.addf %379, %378 : vector<8x128xf32>
    %381 = arith.divf %379, %380 : vector<8x128xf32>
    %382 = arith.mulf %373, %358 : vector<8x128xf32>
    %383 = arith.mulf %367, %375 : vector<8x128xf32>
    %384 = arith.addf %382, %383 : vector<8x128xf32>
    %385 = math.tanh %384 : vector<8x128xf32>
    %386 = arith.mulf %381, %385 : vector<8x128xf32>
    %387 = vector.extract_strided_slice %11 {offsets = [8, 0], sizes = [8, 512], strides = [1, 1]} : vector<48x512xf32> to vector<8x512xf32>
    %cst_81 = arith.constant dense<0.000000e+00> : vector<8x512xf32>
    %388 = tpu.matmul %386, %357, %cst_81 {dimension_numbers = #tpu.dot_dimension_numbers<[1], [0], [0], [1], [0, 0, 1, 1], [], []>} : vector<8x128xf32>, vector<128x512xf32>, vector<8x512xf32> -> vector<8x512xf32>
    %389 = arith.addf %387, %388 : vector<8x512xf32>
    %390 = vector.extract_strided_slice %389 {offsets = [0, 0], sizes = [8, 128], strides = [1, 1]} : vector<8x512xf32> to vector<8x128xf32>
    %391 = arith.negf %390 : vector<8x128xf32>
    %392 = math.exp %391 : vector<8x128xf32>
    %cst_82 = arith.constant 1.000000e+00 : f32
    %393 = vector.broadcast %cst_82 : f32 to vector<8x128xf32>
    %394 = arith.addf %393, %392 : vector<8x128xf32>
    %395 = arith.divf %393, %394 : vector<8x128xf32>
    %396 = vector.extract_strided_slice %389 {offsets = [0, 128], sizes = [8, 128], strides = [1, 1]} : vector<8x512xf32> to vector<8x128xf32>
    %397 = arith.negf %396 : vector<8x128xf32>
    %398 = math.exp %397 : vector<8x128xf32>
    %cst_83 = arith.constant 1.000000e+00 : f32
    %399 = vector.broadcast %cst_83 : f32 to vector<8x128xf32>
    %400 = arith.addf %399, %398 : vector<8x128xf32>
    %401 = arith.divf %399, %400 : vector<8x128xf32>
    %402 = vector.extract_strided_slice %389 {offsets = [0, 256], sizes = [8, 128], strides = [1, 1]} : vector<8x512xf32> to vector<8x128xf32>
    %403 = math.tanh %402 : vector<8x128xf32>
    %404 = vector.extract_strided_slice %389 {offsets = [0, 384], sizes = [8, 128], strides = [1, 1]} : vector<8x512xf32> to vector<8x128xf32>
    %405 = arith.negf %404 : vector<8x128xf32>
    %406 = math.exp %405 : vector<8x128xf32>
    %cst_84 = arith.constant 1.000000e+00 : f32
    %407 = vector.broadcast %cst_84 : f32 to vector<8x128xf32>
    %408 = arith.addf %407, %406 : vector<8x128xf32>
    %409 = arith.divf %407, %408 : vector<8x128xf32>
    %410 = arith.mulf %401, %384 : vector<8x128xf32>
    %411 = arith.mulf %395, %403 : vector<8x128xf32>
    %412 = arith.addf %410, %411 : vector<8x128xf32>
    %413 = math.tanh %412 : vector<8x128xf32>
    %414 = arith.mulf %409, %413 : vector<8x128xf32>
    %415 = vector.extract_strided_slice %11 {offsets = [16, 0], sizes = [8, 512], strides = [1, 1]} : vector<48x512xf32> to vector<8x512xf32>
    %cst_85 = arith.constant dense<0.000000e+00> : vector<8x512xf32>
    %416 = tpu.matmul %414, %357, %cst_85 {dimension_numbers = #tpu.dot_dimension_numbers<[1], [0], [0], [1], [0, 0, 1, 1], [], []>} : vector<8x128xf32>, vector<128x512xf32>, vector<8x512xf32> -> vector<8x512xf32>
    %417 = arith.addf %415, %416 : vector<8x512xf32>
    %418 = vector.extract_strided_slice %417 {offsets = [0, 0], sizes = [8, 128], strides = [1, 1]} : vector<8x512xf32> to vector<8x128xf32>
    %419 = arith.negf %418 : vector<8x128xf32>
    %420 = math.exp %419 : vector<8x128xf32>
    %cst_86 = arith.constant 1.000000e+00 : f32
    %421 = vector.broadcast %cst_86 : f32 to vector<8x128xf32>
    %422 = arith.addf %421, %420 : vector<8x128xf32>
    %423 = arith.divf %421, %422 : vector<8x128xf32>
    %424 = vector.extract_strided_slice %417 {offsets = [0, 128], sizes = [8, 128], strides = [1, 1]} : vector<8x512xf32> to vector<8x128xf32>
    %425 = arith.negf %424 : vector<8x128xf32>
    %426 = math.exp %425 : vector<8x128xf32>
    %cst_87 = arith.constant 1.000000e+00 : f32
    %427 = vector.broadcast %cst_87 : f32 to vector<8x128xf32>
    %428 = arith.addf %427, %426 : vector<8x128xf32>
    %429 = arith.divf %427, %428 : vector<8x128xf32>
    %430 = vector.extract_strided_slice %417 {offsets = [0, 256], sizes = [8, 128], strides = [1, 1]} : vector<8x512xf32> to vector<8x128xf32>
    %431 = math.tanh %430 : vector<8x128xf32>
    %432 = vector.extract_strided_slice %417 {offsets = [0, 384], sizes = [8, 128], strides = [1, 1]} : vector<8x512xf32> to vector<8x128xf32>
    %433 = arith.negf %432 : vector<8x128xf32>
    %434 = math.exp %433 : vector<8x128xf32>
    %cst_88 = arith.constant 1.000000e+00 : f32
    %435 = vector.broadcast %cst_88 : f32 to vector<8x128xf32>
    %436 = arith.addf %435, %434 : vector<8x128xf32>
    %437 = arith.divf %435, %436 : vector<8x128xf32>
    %438 = arith.mulf %429, %412 : vector<8x128xf32>
    %439 = arith.mulf %423, %431 : vector<8x128xf32>
    %440 = arith.addf %438, %439 : vector<8x128xf32>
    %441 = math.tanh %440 : vector<8x128xf32>
    %442 = arith.mulf %437, %441 : vector<8x128xf32>
    %443 = vector.extract_strided_slice %11 {offsets = [24, 0], sizes = [8, 512], strides = [1, 1]} : vector<48x512xf32> to vector<8x512xf32>
    %cst_89 = arith.constant dense<0.000000e+00> : vector<8x512xf32>
    %444 = tpu.matmul %442, %357, %cst_89 {dimension_numbers = #tpu.dot_dimension_numbers<[1], [0], [0], [1], [0, 0, 1, 1], [], []>} : vector<8x128xf32>, vector<128x512xf32>, vector<8x512xf32> -> vector<8x512xf32>
    %445 = arith.addf %443, %444 : vector<8x512xf32>
    %446 = vector.extract_strided_slice %445 {offsets = [0, 0], sizes = [8, 128], strides = [1, 1]} : vector<8x512xf32> to vector<8x128xf32>
    %447 = arith.negf %446 : vector<8x128xf32>
    %448 = math.exp %447 : vector<8x128xf32>
    %cst_90 = arith.constant 1.000000e+00 : f32
    %449 = vector.broadcast %cst_90 : f32 to vector<8x128xf32>
    %450 = arith.addf %449, %448 : vector<8x128xf32>
    %451 = arith.divf %449, %450 : vector<8x128xf32>
    %452 = vector.extract_strided_slice %445 {offsets = [0, 128], sizes = [8, 128], strides = [1, 1]} : vector<8x512xf32> to vector<8x128xf32>
    %453 = arith.negf %452 : vector<8x128xf32>
    %454 = math.exp %453 : vector<8x128xf32>
    %cst_91 = arith.constant 1.000000e+00 : f32
    %455 = vector.broadcast %cst_91 : f32 to vector<8x128xf32>
    %456 = arith.addf %455, %454 : vector<8x128xf32>
    %457 = arith.divf %455, %456 : vector<8x128xf32>
    %458 = vector.extract_strided_slice %445 {offsets = [0, 256], sizes = [8, 128], strides = [1, 1]} : vector<8x512xf32> to vector<8x128xf32>
    %459 = math.tanh %458 : vector<8x128xf32>
    %460 = vector.extract_strided_slice %445 {offsets = [0, 384], sizes = [8, 128], strides = [1, 1]} : vector<8x512xf32> to vector<8x128xf32>
    %461 = arith.negf %460 : vector<8x128xf32>
    %462 = math.exp %461 : vector<8x128xf32>
    %cst_92 = arith.constant 1.000000e+00 : f32
    %463 = vector.broadcast %cst_92 : f32 to vector<8x128xf32>
    %464 = arith.addf %463, %462 : vector<8x128xf32>
    %465 = arith.divf %463, %464 : vector<8x128xf32>
    %466 = arith.mulf %457, %440 : vector<8x128xf32>
    %467 = arith.mulf %451, %459 : vector<8x128xf32>
    %468 = arith.addf %466, %467 : vector<8x128xf32>
    %469 = math.tanh %468 : vector<8x128xf32>
    %470 = arith.mulf %465, %469 : vector<8x128xf32>
    %471 = vector.extract_strided_slice %11 {offsets = [32, 0], sizes = [8, 512], strides = [1, 1]} : vector<48x512xf32> to vector<8x512xf32>
    %cst_93 = arith.constant dense<0.000000e+00> : vector<8x512xf32>
    %472 = tpu.matmul %470, %357, %cst_93 {dimension_numbers = #tpu.dot_dimension_numbers<[1], [0], [0], [1], [0, 0, 1, 1], [], []>} : vector<8x128xf32>, vector<128x512xf32>, vector<8x512xf32> -> vector<8x512xf32>
    %473 = arith.addf %471, %472 : vector<8x512xf32>
    %474 = vector.extract_strided_slice %473 {offsets = [0, 0], sizes = [8, 128], strides = [1, 1]} : vector<8x512xf32> to vector<8x128xf32>
    %475 = arith.negf %474 : vector<8x128xf32>
    %476 = math.exp %475 : vector<8x128xf32>
    %cst_94 = arith.constant 1.000000e+00 : f32
    %477 = vector.broadcast %cst_94 : f32 to vector<8x128xf32>
    %478 = arith.addf %477, %476 : vector<8x128xf32>
    %479 = arith.divf %477, %478 : vector<8x128xf32>
    %480 = vector.extract_strided_slice %473 {offsets = [0, 128], sizes = [8, 128], strides = [1, 1]} : vector<8x512xf32> to vector<8x128xf32>
    %481 = arith.negf %480 : vector<8x128xf32>
    %482 = math.exp %481 : vector<8x128xf32>
    %cst_95 = arith.constant 1.000000e+00 : f32
    %483 = vector.broadcast %cst_95 : f32 to vector<8x128xf32>
    %484 = arith.addf %483, %482 : vector<8x128xf32>
    %485 = arith.divf %483, %484 : vector<8x128xf32>
    %486 = vector.extract_strided_slice %473 {offsets = [0, 256], sizes = [8, 128], strides = [1, 1]} : vector<8x512xf32> to vector<8x128xf32>
    %487 = math.tanh %486 : vector<8x128xf32>
    %488 = vector.extract_strided_slice %473 {offsets = [0, 384], sizes = [8, 128], strides = [1, 1]} : vector<8x512xf32> to vector<8x128xf32>
    %489 = arith.negf %488 : vector<8x128xf32>
    %490 = math.exp %489 : vector<8x128xf32>
    %cst_96 = arith.constant 1.000000e+00 : f32
    %491 = vector.broadcast %cst_96 : f32 to vector<8x128xf32>
    %492 = arith.addf %491, %490 : vector<8x128xf32>
    %493 = arith.divf %491, %492 : vector<8x128xf32>
    %494 = arith.mulf %485, %468 : vector<8x128xf32>
    %495 = arith.mulf %479, %487 : vector<8x128xf32>
    %496 = arith.addf %494, %495 : vector<8x128xf32>
    %497 = math.tanh %496 : vector<8x128xf32>
    %498 = arith.mulf %493, %497 : vector<8x128xf32>
    %499 = vector.extract_strided_slice %11 {offsets = [40, 0], sizes = [8, 512], strides = [1, 1]} : vector<48x512xf32> to vector<8x512xf32>
    %cst_97 = arith.constant dense<0.000000e+00> : vector<8x512xf32>
    %500 = tpu.matmul %498, %357, %cst_97 {dimension_numbers = #tpu.dot_dimension_numbers<[1], [0], [0], [1], [0, 0, 1, 1], [], []>} : vector<8x128xf32>, vector<128x512xf32>, vector<8x512xf32> -> vector<8x512xf32>
    %501 = arith.addf %499, %500 : vector<8x512xf32>
    %502 = vector.extract_strided_slice %501 {offsets = [0, 0], sizes = [8, 128], strides = [1, 1]} : vector<8x512xf32> to vector<8x128xf32>
    %503 = arith.negf %502 : vector<8x128xf32>
    %504 = math.exp %503 : vector<8x128xf32>
    %cst_98 = arith.constant 1.000000e+00 : f32
    %505 = vector.broadcast %cst_98 : f32 to vector<8x128xf32>
    %506 = arith.addf %505, %504 : vector<8x128xf32>
    %507 = arith.divf %505, %506 : vector<8x128xf32>
    %508 = vector.extract_strided_slice %501 {offsets = [0, 128], sizes = [8, 128], strides = [1, 1]} : vector<8x512xf32> to vector<8x128xf32>
    %509 = arith.negf %508 : vector<8x128xf32>
    %510 = math.exp %509 : vector<8x128xf32>
    %cst_99 = arith.constant 1.000000e+00 : f32
    %511 = vector.broadcast %cst_99 : f32 to vector<8x128xf32>
    %512 = arith.addf %511, %510 : vector<8x128xf32>
    %513 = arith.divf %511, %512 : vector<8x128xf32>
    %514 = vector.extract_strided_slice %501 {offsets = [0, 256], sizes = [8, 128], strides = [1, 1]} : vector<8x512xf32> to vector<8x128xf32>
    %515 = math.tanh %514 : vector<8x128xf32>
    %516 = vector.extract_strided_slice %501 {offsets = [0, 384], sizes = [8, 128], strides = [1, 1]} : vector<8x512xf32> to vector<8x128xf32>
    %517 = arith.negf %516 : vector<8x128xf32>
    %518 = math.exp %517 : vector<8x128xf32>
    %cst_100 = arith.constant 1.000000e+00 : f32
    %519 = vector.broadcast %cst_100 : f32 to vector<8x128xf32>
    %520 = arith.addf %519, %518 : vector<8x128xf32>
    %521 = arith.divf %519, %520 : vector<8x128xf32>
    %522 = arith.mulf %513, %496 : vector<8x128xf32>
    %523 = arith.mulf %507, %515 : vector<8x128xf32>
    %524 = arith.addf %522, %523 : vector<8x128xf32>
    %525 = math.tanh %524 : vector<8x128xf32>
    %526 = arith.mulf %521, %525 : vector<8x128xf32>
    %527 = tpu.concatenate %386, %414, %442, %470, %498, %526 in 0 : vector<8x128xf32>, vector<8x128xf32>, vector<8x128xf32>, vector<8x128xf32>, vector<8x128xf32>, vector<8x128xf32> -> vector<48x128xf32>
    %c0_101 = arith.constant 0 : index
    %c0_102 = arith.constant 0 : index
    %528 = vector.load %arg13[%c0_101, %c0_102] : memref<128x128xf32, #tpu.memory_space<vmem>>, vector<128x128xf32>
    %cst_103 = arith.constant dense<0.000000e+00> : vector<48x128xf32>
    %529 = tpu.matmul %527, %528, %cst_103 {dimension_numbers = #tpu.dot_dimension_numbers<[1], [0], [0], [1], [0, 0, 1, 1], [], []>} : vector<48x128xf32>, vector<128x128xf32>, vector<48x128xf32> -> vector<48x128xf32>
    %c0_104 = arith.constant 0 : index
    %c0_105 = arith.constant 0 : index
    %530 = vector.load %arg14[%c0_104, %c0_105] : memref<1x128xf32, #tpu.memory_space<vmem>>, vector<1x128xf32>
    %531 = vector.broadcast %530 : vector<1x128xf32> to vector<48x128xf32>
    %532 = arith.addf %529, %531 : vector<48x128xf32>
    %533 = tpu.iota {dimensions = array<i32: 1>} : vector<48x128xi32>
    %c32_i32 = arith.constant 32 : i32
    %534 = vector.broadcast %c32_i32 : i32 to vector<48x128xi32>
    %535 = arith.cmpi slt, %533, %534 : vector<48x128xi32>
    %cst_106 = arith.constant -1.000000e+30 : f32
    %536 = vector.broadcast %cst_106 : f32 to vector<48x128xf32>
    %537 = arith.select %535, %532, %536 : vector<48x128xi1>, vector<48x128xf32>
    %cst_107 = arith.constant dense<0xFF800000> : vector<48xf32>
    %538 = vector.multi_reduction <maximumf>, %537, %cst_107 [1] : vector<48x128xf32> to vector<48xf32>
    %539 = vector.shape_cast %538 : vector<48xf32> to vector<48x1xf32>
    %540 = vector.broadcast %539 : vector<48x1xf32> to vector<48x128xf32>
    %541 = arith.subf %532, %540 : vector<48x128xf32>
    %542 = math.exp %541 : vector<48x128xf32>
    %cst_108 = arith.constant 0.000000e+00 : f32
    %543 = vector.broadcast %cst_108 : f32 to vector<48x128xf32>
    %544 = arith.select %535, %542, %543 : vector<48x128xi1>, vector<48x128xf32>
    %cst_109 = arith.constant dense<0.000000e+00> : vector<48xf32>
    %545 = vector.multi_reduction <add>, %544, %cst_109 [1] : vector<48x128xf32> to vector<48xf32>
    %546 = vector.shape_cast %545 : vector<48xf32> to vector<48x1xf32>
    %547 = math.log %546 : vector<48x1xf32>
    %548 = arith.addf %547, %539 : vector<48x1xf32>
    %c0_110 = arith.constant 0 : index
    %c0_111 = arith.constant 0 : index
    %549 = vector.load %arg8[%c0_110, %c0_111] : memref<48x1xi32, #tpu.memory_space<vmem>>, vector<48x1xi32>
    %550 = vector.broadcast %549 : vector<48x1xi32> to vector<48x128xi32>
    %551 = arith.cmpi eq, %533, %550 : vector<48x128xi32>
    %552 = arith.extui %551 : vector<48x128xi1> to vector<48x128xi32>
    %553 = arith.sitofp %552 : vector<48x128xi32> to vector<48x128xf32>
    %554 = arith.mulf %532, %553 : vector<48x128xf32>
    %cst_112 = arith.constant dense<0.000000e+00> : vector<48xf32>
    %555 = vector.multi_reduction <add>, %554, %cst_112 [1] : vector<48x128xf32> to vector<48xf32>
    %556 = vector.shape_cast %555 : vector<48xf32> to vector<48x1xf32>
    %557 = arith.subf %548, %556 : vector<48x1xf32>
    %c0_113 = arith.constant 0 : index
    %c0_114 = arith.constant 0 : index
    %558 = vector.load %arg9[%c0_113, %c0_114] : memref<48x1xf32, #tpu.memory_space<vmem>>, vector<48x1xf32>
    %559 = arith.mulf %557, %558 : vector<48x1xf32>
    %cst_115 = arith.constant dense<0.000000e+00> : vector<1xf32>
    %560 = vector.multi_reduction <add>, %559, %cst_115 [0] : vector<48x1xf32> to vector<1xf32>
    %561 = vector.shape_cast %560 : vector<1xf32> to vector<1x1xf32>
    %cst_116 = arith.constant 0.0416666679 : f32
    %562 = vector.broadcast %cst_116 : f32 to vector<1x1xf32>
    %563 = arith.mulf %561, %562 : vector<1x1xf32>
    %c0_117 = arith.constant 0 : index
    %c0_118 = arith.constant 0 : index
    %564 = vector.load %arg15[%c0_117, %c0_118] : memref<1x1xf32, #tpu.memory_space<vmem>>, vector<1x1xf32>
    tpu.vector_store %arg15[%c0_117, %c0_118], %563 {strides = array<i32>} : memref<1x1xf32, #tpu.memory_space<vmem>>, vector<1x1xf32>,
    return
  }
}

</mosaic_0001>

<llo_original>
// kernel: context_model_loss.1
$region0: #{context_model_loss.1}
  #allocation0 [shape = 'u32[]', space=smem, size = 0x4, offset = 0x4, fixed_abs, tag = 'smem constant byte address 0x4 - core index']
  #allocation1 [shape = 'u32[144,128]{1,0:T(1,128)}', space=vmem, size = 0x12000, scoped, tag = 'internal scratch']
  %s0 = inlined_call_operand.vmem [shape: f32[80,32], index: 0, kind: input, shape index: {}]
  %s1 = inlined_call_operand.vmem [shape: s32[8,1], index: 1, kind: input, shape index: {}]
  %s2 = inlined_call_operand.vmem [shape: f32[32,1024], index: 2, kind: input, shape index: {}]
  %s3 = inlined_call_operand.vmem [shape: f32[256,1024], index: 3, kind: input, shape index: {}]
  %s4 = inlined_call_operand.vmem [shape: f32[1,1024], index: 4, kind: input, shape index: {}]
  %s5 = inlined_call_operand.vmem [shape: f32[256,128], index: 5, kind: input, shape index: {}]
  %s6 = inlined_call_operand.vmem [shape: f32[1,128], index: 6, kind: input, shape index: {}]
  %s7 = inlined_call_operand.vmem [shape: f32[48,16], index: 7, kind: input, shape index: {}]
  %s8 = inlined_call_operand.vmem [shape: s32[48,1], index: 8, kind: input, shape index: {}]
  %s9 = inlined_call_operand.vmem [shape: f32[48,1], index: 9, kind: input, shape index: {}]
  %s10 = inlined_call_operand.vmem [shape: f32[16,512], index: 10, kind: input, shape index: {}]
  %s11 = inlined_call_operand.vmem [shape: f32[128,512], index: 11, kind: input, shape index: {}]
  %s12 = inlined_call_operand.vmem [shape: f32[1,512], index: 12, kind: input, shape index: {}]
  %s13 = inlined_call_operand.vmem [shape: f32[128,128], index: 13, kind: input, shape index: {}]
  %s14 = inlined_call_operand.vmem [shape: f32[1,128], index: 14, kind: input, shape index: {}]
  %s15 = inlined_call_operand.hbm [shape: f32[1,1], index: 15, kind: output, shape index: {}]
  %s16 = sld [smem:[#allocation0]]
  $region70: #{context_model_loss.1} parent=0
    _
  %s18 = ssub.s32 1, %s16
  %s19 = scalar_select 0, %s18, %s16
  $region1: #{context_model_loss.1} parent=0
    #allocation2 [shape = 'u8[512]{0}', space=vmem, size = 0x400, scoped, tag = 'output window, operand 0, single buffered']
    #allocation3 [shape = 's32[1]{0}', space=sflag, size = 0x4, scoped, tag = 'scoped memory for context_model_loss.1']
    %20 = vsyncpa [#allocation3], 0
    // Predicated region
    $region2: #{context_model_loss.1} parent=1 // pred_check
      _
    $region3: #{context_model_loss.1} parent=1 // pred_check_branch
      %22 = sbr.rel (0) target = $region5
    $region4: #{context_model_loss.1} parent=1 // pred_region
      _
    $region5: #{context_model_loss.1} parent=1 // pred_fallthru
      _
    // Predicated region
    $region6: #{context_model_loss.1} parent=1 // pred_check
      _
    $region7: #{context_model_loss.1} parent=1 // pred_check_branch
      %24 = sbr.rel (0) target = $region9
    $region8: #{context_model_loss.1} parent=1 // pred_region
      _
    $region9: #{context_model_loss.1} parent=1 // pred_fallthru
      _
    // Predicated region
    $region10: #{context_model_loss.1} parent=1 // pred_check
      _
    $region11: #{context_model_loss.1} parent=1 // pred_check_branch
      %26 = sbr.rel (0) target = $region13
    $region12: #{context_model_loss.1} parent=1 // pred_region
      _
    $region13: #{context_model_loss.1} parent=1 // pred_fallthru
      _
    // Predicated region
    $region14: #{context_model_loss.1} parent=1 // pred_check
      _
    $region15: #{context_model_loss.1} parent=1 // pred_check_branch
      %28 = sbr.rel (0) target = $region17
    $region16: #{context_model_loss.1} parent=1 // pred_region
      _
    $region17: #{context_model_loss.1} parent=1 // pred_fallthru
      _
    // Predicated region
    $region18: #{context_model_loss.1} parent=1 // pred_check
      _
    $region19: #{context_model_loss.1} parent=1 // pred_check_branch
      %30 = sbr.rel (0) target = $region21
    $region20: #{context_model_loss.1} parent=1 // pred_region
      _
    $region21: #{context_model_loss.1} parent=1 // pred_fallthru
      _
    // Predicated region
    $region22: #{context_model_loss.1} parent=1 // pred_check
      _
    $region23: #{context_model_loss.1} parent=1 // pred_check_branch
      %32 = sbr.rel (0) target = $region25
    $region24: #{context_model_loss.1} parent=1 // pred_region
      _
    $region25: #{context_model_loss.1} parent=1 // pred_fallthru
      _
    // Predicated region
    $region26: #{context_model_loss.1} parent=1 // pred_check
      _
    $region27: #{context_model_loss.1} parent=1 // pred_check_branch
      %34 = sbr.rel (0) target = $region29
    $region28: #{context_model_loss.1} parent=1 // pred_region
      _
    $region29: #{context_model_loss.1} parent=1 // pred_fallthru
      _
    // Predicated region
    $region30: #{context_model_loss.1} parent=1 // pred_check
      _
    $region31: #{context_model_loss.1} parent=1 // pred_check_branch
      %36 = sbr.rel (0) target = $region33
    $region32: #{context_model_loss.1} parent=1 // pred_region
      _
    $region33: #{context_model_loss.1} parent=1 // pred_fallthru
      _
    // Predicated region
    $region34: #{context_model_loss.1} parent=1 // pred_check
      _
    $region35: #{context_model_loss.1} parent=1 // pred_check_branch
      %38 = sbr.rel (0) target = $region37
    $region36: #{context_model_loss.1} parent=1 // pred_region
      _
    $region37: #{context_model_loss.1} parent=1 // pred_fallthru
      _
    // Predicated region
    $region38: #{context_model_loss.1} parent=1 // pred_check
      _
    $region39: #{context_model_loss.1} parent=1 // pred_check_branch
      %40 = sbr.rel (0) target = $region41
    $region40: #{context_model_loss.1} parent=1 // pred_region
      _
    $region41: #{context_model_loss.1} parent=1 // pred_fallthru
      _
    // Predicated region
    $region42: #{context_model_loss.1} parent=1 // pred_check
      _
    $region43: #{context_model_loss.1} parent=1 // pred_check_branch
      %42 = sbr.rel (0) target = $region45
    $region44: #{context_model_loss.1} parent=1 // pred_region
      _
    $region45: #{context_model_loss.1} parent=1 // pred_fallthru
      _
    // Predicated region
    $region46: #{context_model_loss.1} parent=1 // pred_check
      _
    $region47: #{context_model_loss.1} parent=1 // pred_check_branch
      %44 = sbr.rel (0) target = $region49
    $region48: #{context_model_loss.1} parent=1 // pred_region
      _
    $region49: #{context_model_loss.1} parent=1 // pred_fallthru
      _
    // Predicated region
    $region50: #{context_model_loss.1} parent=1 // pred_check
      _
    $region51: #{context_model_loss.1} parent=1 // pred_check_branch
      %46 = sbr.rel (0) target = $region53
    $region52: #{context_model_loss.1} parent=1 // pred_region
      _
    $region53: #{context_model_loss.1} parent=1 // pred_fallthru
      _
    // Predicated region
    $region54: #{context_model_loss.1} parent=1 // pred_check
      _
    $region55: #{context_model_loss.1} parent=1 // pred_check_branch
      %48 = sbr.rel (0) target = $region57
    $region56: #{context_model_loss.1} parent=1 // pred_region
      _
    $region57: #{context_model_loss.1} parent=1 // pred_fallthru
      _
    // Predicated region
    $region58: #{context_model_loss.1} parent=1 // pred_check
      _
    $region59: #{context_model_loss.1} parent=1 // pred_check_branch
      %50 = sbr.rel (0) target = $region61
    $region60: #{context_model_loss.1} parent=1 // pred_region
      _
    $region61: #{context_model_loss.1} parent=1 // pred_fallthru
      _
    %v51 = vld [vmem:[%s0] sm:$0xff]
    %v52 = vld [vmem:[%s0 + $0x8] sm:$0xff]
    %v53 = vld [vmem:[%s0 + $0x10] sm:$0xff]
    %v54 = vld [vmem:[%s0 + $0x18] sm:$0xff]
    %v55 = vld [vmem:[%s0 + $0x20] sm:$0xff]
    %v56 = vld [vmem:[%s0 + $0x28] sm:$0xff]
    %v57 = vld [vmem:[%s0 + $0x30] sm:$0xff]
    %v58 = vld [vmem:[%s0 + $0x38] sm:$0xff]
    %v59 = vld [vmem:[%s0 + $0x40] sm:$0xff]
    %v60 = vld [vmem:[%s0 + $0x48] sm:$0xff]
    %v61 = vld [vmem:[%s2] sm:$0xff]
    %v62 = vld [vmem:[%s2 + $0x8] sm:$0xff]
    %v63 = vld [vmem:[%s2 + $0x10] sm:$0xff]
    %v64 = vld [vmem:[%s2 + $0x18] sm:$0xff]
    %v65 = vld [vmem:[%s2 + $0x20] sm:$0xff]
    %v66 = vld [vmem:[%s2 + $0x28] sm:$0xff]
    %v67 = vld [vmem:[%s2 + $0x30] sm:$0xff]
    %v68 = vld [vmem:[%s2 + $0x38] sm:$0xff]
    %v69 = vld [vmem:[%s2 + $0x40] sm:$0xff]
    %v70 = vld [vmem:[%s2 + $0x48] sm:$0xff]
    %v71 = vld [vmem:[%s2 + $0x50] sm:$0xff]
    %v72 = vld [vmem:[%s2 + $0x58] sm:$0xff]
    %v73 = vld [vmem:[%s2 + $0x60] sm:$0xff]
    %v74 = vld [vmem:[%s2 + $0x68] sm:$0xff]
    %v75 = vld [vmem:[%s2 + $0x70] sm:$0xff]
    %v76 = vld [vmem:[%s2 + $0x78] sm:$0xff]
    %v77 = vld [vmem:[%s2 + $0x80] sm:$0xff]
    %v78 = vld [vmem:[%s2 + $0x88] sm:$0xff]
    %v79 = vld [vmem:[%s2 + $0x90] sm:$0xff]
    %v80 = vld [vmem:[%s2 + $0x98] sm:$0xff]
    %v81 = vld [vmem:[%s2 + $0xa0] sm:$0xff]
    %v82 = vld [vmem:[%s2 + $0xa8] sm:$0xff]
    %v83 = vld [vmem:[%s2 + $0xb0] sm:$0xff]
    %v84 = vld [vmem:[%s2 + $0xb8] sm:$0xff]
    %v85 = vld [vmem:[%s2 + $0xc0] sm:$0xff]
    %v86 = vld [vmem:[%s2 + $0xc8] sm:$0xff]
    %v87 = vld [vmem:[%s2 + $0xd0] sm:$0xff]
    %v88 = vld [vmem:[%s2 + $0xd8] sm:$0xff]
    %v89 = vld [vmem:[%s2 + $0xe0] sm:$0xff]
    %v90 = vld [vmem:[%s2 + $0xe8] sm:$0xff]
    %v91 = vld [vmem:[%s2 + $0xf0] sm:$0xff]
    %v92 = vld [vmem:[%s2 + $0xf8] sm:$0xff]
    %v93 = vld [vmem:[%s4] sm:$0xff]
    %v95 = vlaneseq
    %v96 = vshrl.u32 %v95, 7
    %v97 = vsub.s32 0, %v96
    %v98 = vrot.slane %v93, %v97
    %v99 = vlaneseq
    %v100 = vshrl.u32 %v99, 7
    %v101 = vsub.s32 1, %v100
    %v102 = vrot.slane %v93, %v101
    %v103 = vlaneseq
    %v104 = vshrl.u32 %v103, 7
    %v105 = vsub.s32 2, %v104
    %v106 = vrot.slane %v93, %v105
    %v107 = vlaneseq
    %v108 = vshrl.u32 %v107, 7
    %v109 = vsub.s32 3, %v108
    %v110 = vrot.slane %v93, %v109
    %v111 = vlaneseq
    %v112 = vshrl.u32 %v111, 7
    %v113 = vsub.s32 4, %v112
    %v114 = vrot.slane %v93, %v113
    %v115 = vlaneseq
    %v116 = vshrl.u32 %v115, 7
    %v117 = vsub.s32 5, %v116
    %v118 = vrot.slane %v93, %v117
    %v119 = vlaneseq
    %v120 = vshrl.u32 %v119, 7
    %v121 = vsub.s32 6, %v120
    %v122 = vrot.slane %v93, %v121
    %v123 = vlaneseq
    %v124 = vshrl.u32 %v123, 7
    %v125 = vsub.s32 7, %v124
    %v126 = vrot.slane %v93, %v125
    %vm135 = vcmask 261120
    %v137 = vsel %vm135, %v51, 0
    %v140 = vsel %vm135, %v52, 0
    %v143 = vsel %vm135, %v53, 0
    %v146 = vsel %vm135, %v54, 0
    %v149 = vsel %vm135, %v55, 0
    %v152 = vsel %vm135, %v56, 0
    %v155 = vsel %vm135, %v57, 0
    %v158 = vsel %vm135, %v58, 0
    %v161 = vsel %vm135, %v59, 0
    %v164 = vsel %vm135, %v60, 0
    %166 = vmatprep.subr.mxu0 %v62
    %167 = vmatpush1.msra.mxu0 %v61
    %168 = vmatprep.subr.mxu0 %v70
    %169 = vmatpush1.msra.mxu0 %v69
    %170 = vmatprep.subr.mxu0 %v78
    %171 = vmatpush1.msra.mxu0 %v77
    %172 = vmatprep.subr.mxu0 %v86
    %173 = vmatpush1.msra.mxu0 %v85
    %174 = vmatprep.subr.mxu0 0.0
    %175 = vmatpush1.msra.mxu0 0.0
    %176 = vmatprep.subr.mxu0 0.0
    %177 = vmatpush1.msra.mxu0 0.0
    %178 = vmatprep.subr.mxu0 0.0
    %179 = vmatpush1.msra.mxu0 0.0
    %180 = vmatprep.subr.mxu0 0.0
    %181 = vmatpush1.msra.mxu0 0.0
    %182 = vmatprep.subr.mxu0 0.0
    %183 = vmatpush1.msra.mxu0 0.0
    %184 = vmatprep.subr.mxu0 0.0
    %185 = vmatpush1.msra.mxu0 0.0
    %186 = vmatprep.subr.mxu0 0.0
    %187 = vmatpush1.msra.mxu0 0.0
    %188 = vmatprep.subr.mxu0 0.0
    %189 = vmatpush1.msra.mxu0 0.0
    %190 = vmatprep.subr.mxu0 0.0
    %191 = vmatpush1.msra.mxu0 0.0
    %192 = vmatprep.subr.mxu0 0.0
    %193 = vmatpush1.msra.mxu0 0.0
    %194 = vmatprep.subr.mxu0 0.0
    %195 = vmatpush1.msra.mxu0 0.0
    %196 = vmatprep.subr.mxu0 0.0
    %197 = vmatpush1.msra.mxu0 0.0
    %198 = vmatprep.subr.mxu0 0.0
    %199 = vmatpush1.msra.mxu0 0.0
    %200 = vmatprep.subr.mxu0 0.0
    %201 = vmatpush1.msra.mxu0 0.0
    %202 = vmatprep.subr.mxu0 0.0
    %203 = vmatpush1.msra.mxu0 0.0
    %204 = vmatprep.subr.mxu0 0.0
    %205 = vmatpush1.msra.mxu0 0.0
    %206 = vmatprep.subr.mxu0 0.0
    %207 = vmatpush1.msra.mxu0 0.0
    %208 = vmatprep.subr.mxu0 0.0
    %209 = vmatpush1.msra.mxu0 0.0
    %210 = vmatprep.subr.mxu0 0.0
    %211 = vmatpush1.msra.mxu0 0.0
    %212 = vmatprep.subr.mxu0 0.0
    %213 = vmatpush1.msra.mxu0 0.0
    %214 = vmatprep.subr.mxu0 0.0
    %215 = vmatpush1.msra.mxu0 0.0
    %216 = vmatprep.subr.mxu0 0.0
    %217 = vmatpush1.msra.mxu0 0.0
    %218 = vmatprep.subr.mxu0 0.0
    %219 = vmatpush1.msra.mxu0 0.0
    %220 = vmatprep.subr.mxu0 0.0
    %221 = vmatpush1.msra.mxu0 0.0
    %222 = vmatprep.subr.mxu0 0.0
    %223 = vmatpush1.msra.mxu0 0.0
    %224 = vmatprep.subr.mxu0 0.0
    %225 = vmatpush1.msra.mxu0 0.0
    %226 = vmatprep.subr.mxu0 0.0
    %227 = vmatpush1.msra.mxu0 0.0
    %228 = vmatprep.subr.mxu0 0.0
    %229 = vmatpush1.msra.mxu0 0.0
    %230 = vmatprep.mubr.f32.mxu0 0.0
    %231 = vmatmul.mubr.f32.gmra.mrb[0].mxu0 %v137
    %v232 = vpop.f32.mrb[0].mxu0
    %v233 = vadd.f32 %v98, %v232
    %v234 = vpop.f32.mrb[0].mxu0
    %v235 = vadd.f32 %v102, %v234
    %236 = vmatprep.mubr.f32.mxu0 0.0
    %237 = vmatmul.mubr.f32.gmra.mrb[0].mxu0 %v140
    %v238 = vpop.f32.mrb[0].mxu0
    %v239 = vadd.f32 %v98, %v238
    %v240 = vpop.f32.mrb[0].mxu0
    %v241 = vadd.f32 %v102, %v240
    %242 = vmatprep.mubr.f32.mxu0 0.0
    %243 = vmatmul.mubr.f32.gmra.mrb[0].mxu0 %v143
    %v244 = vpop.f32.mrb[0].mxu0
    %v245 = vadd.f32 %v98, %v244
    %v246 = vpop.f32.mrb[0].mxu0
    %v247 = vadd.f32 %v102, %v246
    %248 = vmatprep.mubr.f32.mxu0 0.0
    %249 = vmatmul.mubr.f32.gmra.mrb[0].mxu0 %v146
    %v250 = vpop.f32.mrb[0].mxu0
    %v251 = vadd.f32 %v98, %v250
    %v252 = vpop.f32.mrb[0].mxu0
    %v253 = vadd.f32 %v102, %v252
    %254 = vmatprep.mubr.f32.mxu0 0.0
    %255 = vmatmul.mubr.f32.gmra.mrb[0].mxu0 %v149
    %v256 = vpop.f32.mrb[0].mxu0
    %v257 = vadd.f32 %v98, %v256
    %v258 = vpop.f32.mrb[0].mxu0
    %v259 = vadd.f32 %v102, %v258
    %260 = vmatprep.mubr.f32.mxu0 0.0
    %261 = vmatmul.mubr.f32.gmra.mrb[0].mxu0 %v152
    %v262 = vpop.f32.mrb[0].mxu0
    %v263 = vadd.f32 %v98, %v262
    %v264 = vpop.f32.mrb[0].mxu0
    %v265 = vadd.f32 %v102, %v264
    %266 = vmatprep.mubr.f32.mxu0 0.0
    %267 = vmatmul.mubr.f32.gmra.mrb[0].mxu0 %v155
    %v268 = vpop.f32.mrb[0].mxu0
    %v269 = vadd.f32 %v98, %v268
    %v270 = vpop.f32.mrb[0].mxu0
    %v271 = vadd.f32 %v102, %v270
    %272 = vmatprep.mubr.f32.mxu0 0.0
    %273 = vmatmul.mubr.f32.gmra.mrb[0].mxu0 %v158
    %v274 = vpop.f32.mrb[0].mxu0
    %v275 = vadd.f32 %v98, %v274
    %v276 = vpop.f32.mrb[0].mxu0
    %v277 = vadd.f32 %v102, %v276
    %278 = vmatprep.mubr.f32.mxu0 0.0
    %279 = vmatmul.mubr.f32.gmra.mrb[0].mxu0 %v161
    %v280 = vpop.f32.mrb[0].mxu0
    %v281 = vadd.f32 %v98, %v280
    %v282 = vpop.f32.mrb[0].mxu0
    %v283 = vadd.f32 %v102, %v282
    %284 = vmatprep.mubr.f32.mxu0 0.0
    %285 = vmatmul.mubr.f32.gmra.mrb[0].mxu0 %v164
    %v286 = vpop.f32.mrb[0].mxu0
    %v287 = vadd.f32 %v98, %v286
    %v288 = vpop.f32.mrb[0].mxu0
    %v289 = vadd.f32 %v102, %v288
    %290 = vdwg.mxu0
    %291 = vmatprep.subr.mxu0 %v64
    %292 = vmatpush1.msra.mxu0 %v63
    %293 = vmatprep.subr.mxu0 %v72
    %294 = vmatpush1.msra.mxu0 %v71
    %295 = vmatprep.subr.mxu0 %v80
    %296 = vmatpush1.msra.mxu0 %v79
    %297 = vmatprep.subr.mxu0 %v88
    %298 = vmatpush1.msra.mxu0 %v87
    %299 = vmatprep.subr.mxu0 0.0
    %300 = vmatpush1.msra.mxu0 0.0
    %301 = vmatprep.subr.mxu0 0.0
    %302 = vmatpush1.msra.mxu0 0.0
    %303 = vmatprep.subr.mxu0 0.0
    %304 = vmatpush1.msra.mxu0 0.0
    %305 = vmatprep.subr.mxu0 0.0
    %306 = vmatpush1.msra.mxu0 0.0
    %307 = vmatprep.subr.mxu0 0.0
    %308 = vmatpush1.msra.mxu0 0.0
    %309 = vmatprep.subr.mxu0 0.0
    %310 = vmatpush1.msra.mxu0 0.0
    %311 = vmatprep.subr.mxu0 0.0
    %312 = vmatpush1.msra.mxu0 0.0
    %313 = vmatprep.subr.mxu0 0.0
    %314 = vmatpush1.msra.mxu0 0.0
    %315 = vmatprep.subr.mxu0 0.0
    %316 = vmatpush1.msra.mxu0 0.0
    %317 = vmatprep.subr.mxu0 0.0
    %318 = vmatpush1.msra.mxu0 0.0
    %319 = vmatprep.subr.mxu0 0.0
    %320 = vmatpush1.msra.mxu0 0.0
    %321 = vmatprep.subr.mxu0 0.0
    %322 = vmatpush1.msra.mxu0 0.0
    %323 = vmatprep.subr.mxu0 0.0
    %324 = vmatpush1.msra.mxu0 0.0
    %325 = vmatprep.subr.mxu0 0.0
    %326 = vmatpush1.msra.mxu0 0.0
    %327 = vmatprep.subr.mxu0 0.0
    %328 = vmatpush1.msra.mxu0 0.0
    %329 = vmatprep.subr.mxu0 0.0
    %330 = vmatpush1.msra.mxu0 0.0
    %331 = vmatprep.subr.mxu0 0.0
    %332 = vmatpush1.msra.mxu0 0.0
    %333 = vmatprep.subr.mxu0 0.0
    %334 = vmatpush1.msra.mxu0 0.0
    %335 = vmatprep.subr.mxu0 0.0
    %336 = vmatpush1.msra.mxu0 0.0
    %337 = vmatprep.subr.mxu0 0.0
    %338 = vmatpush1.msra.mxu0 0.0
    %339 = vmatprep.subr.mxu0 0.0
    %340 = vmatpush1.msra.mxu0 0.0
    %341 = vmatprep.subr.mxu0 0.0
    %342 = vmatpush1.msra.mxu0 0.0
    %343 = vmatprep.subr.mxu0 0.0
    %344 = vmatpush1.msra.mxu0 0.0
    %345 = vmatprep.subr.mxu0 0.0
    %346 = vmatpush1.msra.mxu0 0.0
    %347 = vmatprep.subr.mxu0 0.0
    %348 = vmatpush1.msra.mxu0 0.0
    %349 = vmatprep.subr.mxu0 0.0
    %350 = vmatpush1.msra.mxu0 0.0
    %351 = vmatprep.subr.mxu0 0.0
    %352 = vmatpush1.msra.mxu0 0.0
    %353 = vmatprep.subr.mxu0 0.0
    %354 = vmatpush1.msra.mxu0 0.0
    %355 = vmatprep.mubr.f32.mxu0 0.0
    %356 = vmatmul.mubr.f32.gmra.mrb[0].mxu0 %v137
    %v357 = vpop.f32.mrb[0].mxu0
    %v358 = vadd.f32 %v106, %v357
    %v359 = vpop.f32.mrb[0].mxu0
    %v360 = vadd.f32 %v110, %v359
    %361 = vmatprep.mubr.f32.mxu0 0.0
    %362 = vmatmul.mubr.f32.gmra.mrb[0].mxu0 %v140
    %v363 = vpop.f32.mrb[0].mxu0
    %v364 = vadd.f32 %v106, %v363
    %v365 = vpop.f32.mrb[0].mxu0
    %v366 = vadd.f32 %v110, %v365
    %367 = vmatprep.mubr.f32.mxu0 0.0
    %368 = vmatmul.mubr.f32.gmra.mrb[0].mxu0 %v143
    %v369 = vpop.f32.mrb[0].mxu0
    %v370 = vadd.f32 %v106, %v369
    %v371 = vpop.f32.mrb[0].mxu0
    %v372 = vadd.f32 %v110, %v371
    %373 = vmatprep.mubr.f32.mxu0 0.0
    %374 = vmatmul.mubr.f32.gmra.mrb[0].mxu0 %v146
    %v375 = vpop.f32.mrb[0].mxu0
    %v376 = vadd.f32 %v106, %v375
    %v377 = vpop.f32.mrb[0].mxu0
    %v378 = vadd.f32 %v110, %v377
    %379 = vmatprep.mubr.f32.mxu0 0.0
    %380 = vmatmul.mubr.f32.gmra.mrb[0].mxu0 %v149
    %v381 = vpop.f32.mrb[0].mxu0
    %v382 = vadd.f32 %v106, %v381
    %v383 = vpop.f32.mrb[0].mxu0
    %v384 = vadd.f32 %v110, %v383
    %385 = vmatprep.mubr.f32.mxu0 0.0
    %386 = vmatmul.mubr.f32.gmra.mrb[0].mxu0 %v152
    %v387 = vpop.f32.mrb[0].mxu0
    %v388 = vadd.f32 %v106, %v387
    %v389 = vpop.f32.mrb[0].mxu0
    %v390 = vadd.f32 %v110, %v389
    %391 = vmatprep.mubr.f32.mxu0 0.0
    %392 = vmatmul.mubr.f32.gmra.mrb[0].mxu0 %v155
    %v393 = vpop.f32.mrb[0].mxu0
    %v394 = vadd.f32 %v106, %v393
    %v395 = vpop.f32.mrb[0].mxu0
    %v396 = vadd.f32 %v110, %v395
    %397 = vmatprep.mubr.f32.mxu0 0.0
    %398 = vmatmul.mubr.f32.gmra.mrb[0].mxu0 %v158
    %v399 = vpop.f32.mrb[0].mxu0
    %v400 = vadd.f32 %v106, %v399
    %v401 = vpop.f32.mrb[0].mxu0
    %v402 = vadd.f32 %v110, %v401
    %403 = vmatprep.mubr.f32.mxu0 0.0
    %404 = vmatmul.mubr.f32.gmra.mrb[0].mxu0 %v161
    %v405 = vpop.f32.mrb[0].mxu0
    %v406 = vadd.f32 %v106, %v405
    %v407 = vpop.f32.mrb[0].mxu0
    %v408 = vadd.f32 %v110, %v407
    %409 = vmatprep.mubr.f32.mxu0 0.0
    %410 = vmatmul.mubr.f32.gmra.mrb[0].mxu0 %v164
    %v411 = vpop.f32.mrb[0].mxu0
    %v412 = vadd.f32 %v106, %v411
    %v413 = vpop.f32.mrb[0].mxu0
    %v414 = vadd.f32 %v110, %v413
    %415 = vdwg.mxu0
    %416 = vmatprep.subr.mxu0 %v66
    %417 = vmatpush1.msra.mxu0 %v65
    %418 = vmatprep.subr.mxu0 %v74
    %419 = vmatpush1.msra.mxu0 %v73
    %420 = vmatprep.subr.mxu0 %v82
    %421 = vmatpush1.msra.mxu0 %v81
    %422 = vmatprep.subr.mxu0 %v90
    %423 = vmatpush1.msra.mxu0 %v89
    %424 = vmatprep.subr.mxu0 0.0
    %425 = vmatpush1.msra.mxu0 0.0
    %426 = vmatprep.subr.mxu0 0.0
    %427 = vmatpush1.msra.mxu0 0.0
    %428 = vmatprep.subr.mxu0 0.0
    %429 = vmatpush1.msra.mxu0 0.0
    %430 = vmatprep.subr.mxu0 0.0
    %431 = vmatpush1.msra.mxu0 0.0
    %432 = vmatprep.subr.mxu0 0.0
    %433 = vmatpush1.msra.mxu0 0.0
    %434 = vmatprep.subr.mxu0 0.0
    %435 = vmatpush1.msra.mxu0 0.0
    %436 = vmatprep.subr.mxu0 0.0
    %437 = vmatpush1.msra.mxu0 0.0
    %438 = vmatprep.subr.mxu0 0.0
    %439 = vmatpush1.msra.mxu0 0.0
    %440 = vmatprep.subr.mxu0 0.0
    %441 = vmatpush1.msra.mxu0 0.0
    %442 = vmatprep.subr.mxu0 0.0
    %443 = vmatpush1.msra.mxu0 0.0
    %444 = vmatprep.subr.mxu0 0.0
    %445 = vmatpush1.msra.mxu0 0.0
    %446 = vmatprep.subr.mxu0 0.0
    %447 = vmatpush1.msra.mxu0 0.0
    %448 = vmatprep.subr.mxu0 0.0
    %449 = vmatpush1.msra.mxu0 0.0
    %450 = vmatprep.subr.mxu0 0.0
    %451 = vmatpush1.msra.mxu0 0.0
    %452 = vmatprep.subr.mxu0 0.0
    %453 = vmatpush1.msra.mxu0 0.0
    %454 = vmatprep.subr.mxu0 0.0
    %455 = vmatpush1.msra.mxu0 0.0
    %456 = vmatprep.subr.mxu0 0.0
    %457 = vmatpush1.msra.mxu0 0.0
    %458 = vmatprep.subr.mxu0 0.0
    %459 = vmatpush1.msra.mxu0 0.0
    %460 = vmatprep.subr.mxu0 0.0
    %461 = vmatpush1.msra.mxu0 0.0
    %462 = vmatprep.subr.mxu0 0.0
    %463 = vmatpush1.msra.mxu0 0.0
    %464 = vmatprep.subr.mxu0 0.0
    %465 = vmatpush1.msra.mxu0 0.0
    %466 = vmatprep.subr.mxu0 0.0
    %467 = vmatpush1.msra.mxu0 0.0
    %468 = vmatprep.subr.mxu0 0.0
    %469 = vmatpush1.msra.mxu0 0.0
    %470 = vmatprep.subr.mxu0 0.0
    %471 = vmatpush1.msra.mxu0 0.0
    %472 = vmatprep.subr.mxu0 0.0
    %473 = vmatpush1.msra.mxu0 0.0
    %474 = vmatprep.subr.mxu0 0.0
    %475 = vmatpush1.msra.mxu0 0.0
    %476 = vmatprep.subr.mxu0 0.0
    %477 = vmatpush1.msra.mxu0 0.0
    %478 = vmatprep.subr.mxu0 0.0
    %479 = vmatpush1.msra.mxu0 0.0
    %480 = vmatprep.mubr.f32.mxu0 0.0
    %481 = vmatmul.mubr.f32.gmra.mrb[0].mxu0 %v137
    %v482 = vpop.f32.mrb[0].mxu0
    %v483 = vadd.f32 %v114, %v482
    %v484 = vpop.f32.mrb[0].mxu0
    %v485 = vadd.f32 %v118, %v484
    %486 = vmatprep.mubr.f32.mxu0 0.0
    %487 = vmatmul.mubr.f32.gmra.mrb[0].mxu0 %v140
    %v488 = vpop.f32.mrb[0].mxu0
    %v489 = vadd.f32 %v114, %v488
    %v490 = vpop.f32.mrb[0].mxu0
    %v491 = vadd.f32 %v118, %v490
    %492 = vmatprep.mubr.f32.mxu0 0.0
    %493 = vmatmul.mubr.f32.gmra.mrb[0].mxu0 %v143
    %v494 = vpop.f32.mrb[0].mxu0
    %v495 = vadd.f32 %v114, %v494
    %v496 = vpop.f32.mrb[0].mxu0
    %v497 = vadd.f32 %v118, %v496
    %498 = vmatprep.mubr.f32.mxu0 0.0
    %499 = vmatmul.mubr.f32.gmra.mrb[0].mxu0 %v146
    %v500 = vpop.f32.mrb[0].mxu0
    %v501 = vadd.f32 %v114, %v500
    %v502 = vpop.f32.mrb[0].mxu0
    %v503 = vadd.f32 %v118, %v502
    %504 = vmatprep.mubr.f32.mxu0 0.0
    %505 = vmatmul.mubr.f32.gmra.mrb[0].mxu0 %v149
    %v506 = vpop.f32.mrb[0].mxu0
    %v507 = vadd.f32 %v114, %v506
    %v508 = vpop.f32.mrb[0].mxu0
    %v509 = vadd.f32 %v118, %v508
    %510 = vmatprep.mubr.f32.mxu0 0.0
    %511 = vmatmul.mubr.f32.gmra.mrb[0].mxu0 %v152
    %v512 = vpop.f32.mrb[0].mxu0
    %v513 = vadd.f32 %v114, %v512
    %v514 = vpop.f32.mrb[0].mxu0
    %v515 = vadd.f32 %v118, %v514
    %516 = vmatprep.mubr.f32.mxu0 0.0
    %517 = vmatmul.mubr.f32.gmra.mrb[0].mxu0 %v155
    %v518 = vpop.f32.mrb[0].mxu0
    %v519 = vadd.f32 %v114, %v518
    %v520 = vpop.f32.mrb[0].mxu0
    %v521 = vadd.f32 %v118, %v520
    %522 = vmatprep.mubr.f32.mxu0 0.0
    %523 = vmatmul.mubr.f32.gmra.mrb[0].mxu0 %v158
    %v524 = vpop.f32.mrb[0].mxu0
    %v525 = vadd.f32 %v114, %v524
    %v526 = vpop.f32.mrb[0].mxu0
    %v527 = vadd.f32 %v118, %v526
    %528 = vmatprep.mubr.f32.mxu0 0.0
    %529 = vmatmul.mubr.f32.gmra.mrb[0].mxu0 %v161
    %v530 = vpop.f32.mrb[0].mxu0
    %v531 = vadd.f32 %v114, %v530
    %v532 = vpop.f32.mrb[0].mxu0
    %v533 = vadd.f32 %v118, %v532
    %534 = vmatprep.mubr.f32.mxu0 0.0
    %535 = vmatmul.mubr.f32.gmra.mrb[0].mxu0 %v164
    %v536 = vpop.f32.mrb[0].mxu0
    %v537 = vadd.f32 %v114, %v536
    %v538 = vpop.f32.mrb[0].mxu0
    %v539 = vadd.f32 %v118, %v538
    %540 = vdwg.mxu0
    %541 = vmatprep.subr.mxu0 %v68
    %542 = vmatpush1.msra.mxu0 %v67
    %543 = vmatprep.subr.mxu0 %v76
    %544 = vmatpush1.msra.mxu0 %v75
    %545 = vmatprep.subr.mxu0 %v84
    %546 = vmatpush1.msra.mxu0 %v83
    %547 = vmatprep.subr.mxu0 %v92
    %548 = vmatpush1.msra.mxu0 %v91
    %549 = vmatprep.subr.mxu0 0.0
    %550 = vmatpush1.msra.mxu0 0.0
    %551 = vmatprep.subr.mxu0 0.0
    %552 = vmatpush1.msra.mxu0 0.0
    %553 = vmatprep.subr.mxu0 0.0
    %554 = vmatpush1.msra.mxu0 0.0
    %555 = vmatprep.subr.mxu0 0.0
    %556 = vmatpush1.msra.mxu0 0.0
    %557 = vmatprep.subr.mxu0 0.0
    %558 = vmatpush1.msra.mxu0 0.0
    %559 = vmatprep.subr.mxu0 0.0
    %560 = vmatpush1.msra.mxu0 0.0
    %561 = vmatprep.subr.mxu0 0.0
    %562 = vmatpush1.msra.mxu0 0.0
    %563 = vmatprep.subr.mxu0 0.0
    %564 = vmatpush1.msra.mxu0 0.0
    %565 = vmatprep.subr.mxu0 0.0
    %566 = vmatpush1.msra.mxu0 0.0
    %567 = vmatprep.subr.mxu0 0.0
    %568 = vmatpush1.msra.mxu0 0.0
    %569 = vmatprep.subr.mxu0 0.0
    %570 = vmatpush1.msra.mxu0 0.0
    %571 = vmatprep.subr.mxu0 0.0
    %572 = vmatpush1.msra.mxu0 0.0
    %573 = vmatprep.subr.mxu0 0.0
    %574 = vmatpush1.msra.mxu0 0.0
    %575 = vmatprep.subr.mxu0 0.0
    %576 = vmatpush1.msra.mxu0 0.0
    %577 = vmatprep.subr.mxu0 0.0
    %578 = vmatpush1.msra.mxu0 0.0
    %579 = vmatprep.subr.mxu0 0.0
    %580 = vmatpush1.msra.mxu0 0.0
    %581 = vmatprep.subr.mxu0 0.0
    %582 = vmatpush1.msra.mxu0 0.0
    %583 = vmatprep.subr.mxu0 0.0
    %584 = vmatpush1.msra.mxu0 0.0
    %585 = vmatprep.subr.mxu0 0.0
    %586 = vmatpush1.msra.mxu0 0.0
    %587 = vmatprep.subr.mxu0 0.0
    %588 = vmatpush1.msra.mxu0 0.0
    %589 = vmatprep.subr.mxu0 0.0
    %590 = vmatpush1.msra.mxu0 0.0
    %591 = vmatprep.subr.mxu0 0.0
    %592 = vmatpush1.msra.mxu0 0.0
    %593 = vmatprep.subr.mxu0 0.0
    %594 = vmatpush1.msra.mxu0 0.0
    %595 = vmatprep.subr.mxu0 0.0
    %596 = vmatpush1.msra.mxu0 0.0
    %597 = vmatprep.subr.mxu0 0.0
    %598 = vmatpush1.msra.mxu0 0.0
    %599 = vmatprep.subr.mxu0 0.0
    %600 = vmatpush1.msra.mxu0 0.0
    %601 = vmatprep.subr.mxu0 0.0
    %602 = vmatpush1.msra.mxu0 0.0
    %603 = vmatprep.subr.mxu0 0.0
    %604 = vmatpush1.msra.mxu0 0.0
    %605 = vmatprep.mubr.f32.mxu0 0.0
    %606 = vmatmul.mubr.f32.gmra.mrb[0].mxu0 %v137
    %v607 = vpop.f32.mrb[0].mxu0
    %v608 = vadd.f32 %v122, %v607
    %v609 = vpop.f32.mrb[0].mxu0
    %v610 = vadd.f32 %v126, %v609
    %611 = vmatprep.mubr.f32.mxu0 0.0
    %612 = vmatmul.mubr.f32.gmra.mrb[0].mxu0 %v140
    %v613 = vpop.f32.mrb[0].mxu0
    %v614 = vadd.f32 %v122, %v613
    %v615 = vpop.f32.mrb[0].mxu0
    %v616 = vadd.f32 %v126, %v615
    %617 = vmatprep.mubr.f32.mxu0 0.0
    %618 = vmatmul.mubr.f32.gmra.mrb[0].mxu0 %v143
    %v619 = vpop.f32.mrb[0].mxu0
    %v620 = vadd.f32 %v122, %v619
    %v621 = vpop.f32.mrb[0].mxu0
    %v622 = vadd.f32 %v126, %v621
    %623 = vmatprep.mubr.f32.mxu0 0.0
    %624 = vmatmul.mubr.f32.gmra.mrb[0].mxu0 %v146
    %v625 = vpop.f32.mrb[0].mxu0
    %v626 = vadd.f32 %v122, %v625
    %v627 = vpop.f32.mrb[0].mxu0
    %v628 = vadd.f32 %v126, %v627
    %629 = vmatprep.mubr.f32.mxu0 0.0
    %630 = vmatmul.mubr.f32.gmra.mrb[0].mxu0 %v149
    %v631 = vpop.f32.mrb[0].mxu0
    %v632 = vadd.f32 %v122, %v631
    %v633 = vpop.f32.mrb[0].mxu0
    %v634 = vadd.f32 %v126, %v633
    %635 = vmatprep.mubr.f32.mxu0 0.0
    %636 = vmatmul.mubr.f32.gmra.mrb[0].mxu0 %v152
    %v637 = vpop.f32.mrb[0].mxu0
    %v638 = vadd.f32 %v122, %v637
    %v639 = vpop.f32.mrb[0].mxu0
    %v640 = vadd.f32 %v126, %v639
    %641 = vmatprep.mubr.f32.mxu0 0.0
    %642 = vmatmul.mubr.f32.gmra.mrb[0].mxu0 %v155
    %v643 = vpop.f32.mrb[0].mxu0
    %v644 = vadd.f32 %v122, %v643
    %v645 = vpop.f32.mrb[0].mxu0
    %v646 = vadd.f32 %v126, %v645
    %647 = vmatprep.mubr.f32.mxu0 0.0
    %648 = vmatmul.mubr.f32.gmra.mrb[0].mxu0 %v158
    %v649 = vpop.f32.mrb[0].mxu0
    %v650 = vadd.f32 %v122, %v649
    %v651 = vpop.f32.mrb[0].mxu0
    %v652 = vadd.f32 %v126, %v651
    %653 = vmatprep.mubr.f32.mxu0 0.0
    %654 = vmatmul.mubr.f32.gmra.mrb[0].mxu0 %v161
    %v655 = vpop.f32.mrb[0].mxu0
    %v656 = vadd.f32 %v122, %v655
    %v657 = vpop.f32.mrb[0].mxu0
    %v658 = vadd.f32 %v126, %v657
    %659 = vmatprep.mubr.f32.mxu0 0.0
    %660 = vmatmul.mubr.f32.gmra.mrb[0].mxu0 %v164
    %v661 = vpop.f32.mrb[0].mxu0
    %v662 = vadd.f32 %v122, %v661
    %v663 = vpop.f32.mrb[0].mxu0
    %v664 = vadd.f32 %v126, %v663
    %665 = vdwg.mxu0
    %v666 = vld [vmem:[%s7] sm:$0xff]
    %v667 = vld [vmem:[%s7 + $0x8] sm:$0xff]
    %v668 = vld [vmem:[%s7 + $0x10] sm:$0xff]
    %v669 = vld [vmem:[%s7 + $0x18] sm:$0xff]
    %v670 = vld [vmem:[%s7 + $0x20] sm:$0xff]
    %v671 = vld [vmem:[%s7 + $0x28] sm:$0xff]
    %v672 = vld [vmem:[%s10] sm:$0xff]
    %v673 = vld [vmem:[%s10 + $0x8] sm:$0xff]
    %v674 = vld [vmem:[%s10 + $0x10] sm:$0xff]
    %v675 = vld [vmem:[%s10 + $0x18] sm:$0xff]
    %v676 = vld [vmem:[%s10 + $0x20] sm:$0xff]
    %v677 = vld [vmem:[%s10 + $0x28] sm:$0xff]
    %v678 = vld [vmem:[%s10 + $0x30] sm:$0xff]
    %v679 = vld [vmem:[%s10 + $0x38] sm:$0xff]
    %v680 = vld [vmem:[%s12] sm:$0xf]
    %v682 = vlaneseq
    %v683 = vshrl.u32 %v682, 7
    %v684 = vsub.s32 0, %v683
    %v685 = vrot.slane %v680, %v684
    %v686 = vlaneseq
    %v687 = vshrl.u32 %v686, 7
    %v688 = vsub.s32 1, %v687
    %v689 = vrot.slane %v680, %v688
    %v690 = vlaneseq
    %v691 = vshrl.u32 %v690, 7
    %v692 = vsub.s32 2, %v691
    %v693 = vrot.slane %v680, %v692
    %v694 = vlaneseq
    %v695 = vshrl.u32 %v694, 7
    %v696 = vsub.s32 3, %v695
    %v697 = vrot.slane %v680, %v696
    %vm702 = vcmask 130048
    %v704 = vsel %vm702, %v666, 0
    %v707 = vsel %vm702, %v667, 0
    %v710 = vsel %vm702, %v668, 0
    %v713 = vsel %vm702, %v669, 0
    %v716 = vsel %vm702, %v670, 0
    %v719 = vsel %vm702, %v671, 0
    %721 = vmatprep.subr.mxu0 %v673
    %722 = vmatpush1.msra.mxu0 %v672
    %723 = vmatprep.subr.mxu0 %v677
    %724 = vmatpush1.msra.mxu0 %v676
    %725 = vmatprep.subr.mxu0 0.0
    %726 = vmatpush1.msra.mxu0 0.0
    %727 = vmatprep.subr.mxu0 0.0
    %728 = vmatpush1.msra.mxu0 0.0
    %729 = vmatprep.subr.mxu0 0.0
    %730 = vmatpush1.msra.mxu0 0.0
    %731 = vmatprep.subr.mxu0 0.0
    %732 = vmatpush1.msra.mxu0 0.0
    %733 = vmatprep.subr.mxu0 0.0
    %734 = vmatpush1.msra.mxu0 0.0
    %735 = vmatprep.subr.mxu0 0.0
    %736 = vmatpush1.msra.mxu0 0.0
    %737 = vmatprep.subr.mxu0 0.0
    %738 = vmatpush1.msra.mxu0 0.0
    %739 = vmatprep.subr.mxu0 0.0
    %740 = vmatpush1.msra.mxu0 0.0
    %741 = vmatprep.subr.mxu0 0.0
    %742 = vmatpush1.msra.mxu0 0.0
    %743 = vmatprep.subr.mxu0 0.0
    %744 = vmatpush1.msra.mxu0 0.0
    %745 = vmatprep.subr.mxu0 0.0
    %746 = vmatpush1.msra.mxu0 0.0
    %747 = vmatprep.subr.mxu0 0.0
    %748 = vmatpush1.msra.mxu0 0.0
    %749 = vmatprep.subr.mxu0 0.0
    %750 = vmatpush1.msra.mxu0 0.0
    %751 = vmatprep.subr.mxu0 0.0
    %752 = vmatpush1.msra.mxu0 0.0
    %753 = vmatprep.subr.mxu0 0.0
    %754 = vmatpush1.msra.mxu0 0.0
    %755 = vmatprep.subr.mxu0 0.0
    %756 = vmatpush1.msra.mxu0 0.0
    %757 = vmatprep.subr.mxu0 0.0
    %758 = vmatpush1.msra.mxu0 0.0
    %759 = vmatprep.subr.mxu0 0.0
    %760 = vmatpush1.msra.mxu0 0.0
    %761 = vmatprep.subr.mxu0 0.0
    %762 = vmatpush1.msra.mxu0 0.0
    %763 = vmatprep.subr.mxu0 0.0
    %764 = vmatpush1.msra.mxu0 0.0
    %765 = vmatprep.subr.mxu0 0.0
    %766 = vmatpush1.msra.mxu0 0.0
    %767 = vmatprep.subr.mxu0 0.0
    %768 = vmatpush1.msra.mxu0 0.0
    %769 = vmatprep.subr.mxu0 0.0
    %770 = vmatpush1.msra.mxu0 0.0
    %771 = vmatprep.subr.mxu0 0.0
    %772 = vmatpush1.msra.mxu0 0.0
    %773 = vmatprep.subr.mxu0 0.0
    %774 = vmatpush1.msra.mxu0 0.0
    %775 = vmatprep.subr.mxu0 0.0
    %776 = vmatpush1.msra.mxu0 0.0
    %777 = vmatprep.subr.mxu0 0.0
    %778 = vmatpush1.msra.mxu0 0.0
    %779 = vmatprep.subr.mxu0 0.0
    %780 = vmatpush1.msra.mxu0 0.0
    %781 = vmatprep.subr.mxu0 0.0
    %782 = vmatpush1.msra.mxu0 0.0
    %783 = vmatprep.subr.mxu0 0.0
    %784 = vmatpush1.msra.mxu0 0.0
    %785 = vmatprep.mubr.f32.mxu0 0.0
    %786 = vmatmul.mubr.f32.gmra.mrb[0].mxu0 %v704
    %v787 = vpop.f32.mrb[0].mxu0
    %v788 = vadd.f32 %v685, %v787
    %v789 = vpop.f32.mrb[0].mxu0
    %v790 = vadd.f32 %v689, %v789
    %791 = vmatprep.mubr.f32.mxu0 0.0
    %792 = vmatmul.mubr.f32.gmra.mrb[0].mxu0 %v707
    %v793 = vpop.f32.mrb[0].mxu0
    %v794 = vadd.f32 %v685, %v793
    %v795 = vpop.f32.mrb[0].mxu0
    %v796 = vadd.f32 %v689, %v795
    %797 = vmatprep.mubr.f32.mxu0 0.0
    %798 = vmatmul.mubr.f32.gmra.mrb[0].mxu0 %v710
    %v799 = vpop.f32.mrb[0].mxu0
    %v800 = vadd.f32 %v685, %v799
    %v801 = vpop.f32.mrb[0].mxu0
    %v802 = vadd.f32 %v689, %v801
    %803 = vmatprep.mubr.f32.mxu0 0.0
    %804 = vmatmul.mubr.f32.gmra.mrb[0].mxu0 %v713
    %v805 = vpop.f32.mrb[0].mxu0
    %v806 = vadd.f32 %v685, %v805
    %v807 = vpop.f32.mrb[0].mxu0
    %v808 = vadd.f32 %v689, %v807
    %809 = vmatprep.mubr.f32.mxu0 0.0
    %810 = vmatmul.mubr.f32.gmra.mrb[0].mxu0 %v716
    %v811 = vpop.f32.mrb[0].mxu0
    %v812 = vadd.f32 %v685, %v811
    %v813 = vpop.f32.mrb[0].mxu0
    %v814 = vadd.f32 %v689, %v813
    %815 = vmatprep.mubr.f32.mxu0 0.0
    %816 = vmatmul.mubr.f32.gmra.mrb[0].mxu0 %v719
    %v817 = vpop.f32.mrb[0].mxu0
    %v818 = vadd.f32 %v685, %v817
    %v819 = vpop.f32.mrb[0].mxu0
    %v820 = vadd.f32 %v689, %v819
    %821 = vdwg.mxu0
    %822 = vmatprep.subr.mxu0 %v675
    %823 = vmatpush1.msra.mxu0 %v674
    %824 = vmatprep.subr.mxu0 %v679
    %825 = vmatpush1.msra.mxu0 %v678
    %826 = vmatprep.subr.mxu0 0.0
    %827 = vmatpush1.msra.mxu0 0.0
    %828 = vmatprep.subr.mxu0 0.0
    %829 = vmatpush1.msra.mxu0 0.0
    %830 = vmatprep.subr.mxu0 0.0
    %831 = vmatpush1.msra.mxu0 0.0
    %832 = vmatprep.subr.mxu0 0.0
    %833 = vmatpush1.msra.mxu0 0.0
    %834 = vmatprep.subr.mxu0 0.0
    %835 = vmatpush1.msra.mxu0 0.0
    %836 = vmatprep.subr.mxu0 0.0
    %837 = vmatpush1.msra.mxu0 0.0
    %838 = vmatprep.subr.mxu0 0.0
    %839 = vmatpush1.msra.mxu0 0.0
    %840 = vmatprep.subr.mxu0 0.0
    %841 = vmatpush1.msra.mxu0 0.0
    %842 = vmatprep.subr.mxu0 0.0
    %843 = vmatpush1.msra.mxu0 0.0
    %844 = vmatprep.subr.mxu0 0.0
    %845 = vmatpush1.msra.mxu0 0.0
    %846 = vmatprep.subr.mxu0 0.0
    %847 = vmatpush1.msra.mxu0 0.0
    %848 = vmatprep.subr.mxu0 0.0
    %849 = vmatpush1.msra.mxu0 0.0
    %850 = vmatprep.subr.mxu0 0.0
    %851 = vmatpush1.msra.mxu0 0.0
    %852 = vmatprep.subr.mxu0 0.0
    %853 = vmatpush1.msra.mxu0 0.0
    %854 = vmatprep.subr.mxu0 0.0
    %855 = vmatpush1.msra.mxu0 0.0
    %856 = vmatprep.subr.mxu0 0.0
    %857 = vmatpush1.msra.mxu0 0.0
    %858 = vmatprep.subr.mxu0 0.0
    %859 = vmatpush1.msra.mxu0 0.0
    %860 = vmatprep.subr.mxu0 0.0
    %861 = vmatpush1.msra.mxu0 0.0
    %862 = vmatprep.subr.mxu0 0.0
    %863 = vmatpush1.msra.mxu0 0.0
    %864 = vmatprep.subr.mxu0 0.0
    %865 = vmatpush1.msra.mxu0 0.0
    %866 = vmatprep.subr.mxu0 0.0
    %867 = vmatpush1.msra.mxu0 0.0
    %868 = vmatprep.subr.mxu0 0.0
    %869 = vmatpush1.msra.mxu0 0.0
    %870 = vmatprep.subr.mxu0 0.0
    %871 = vmatpush1.msra.mxu0 0.0
    %872 = vmatprep.subr.mxu0 0.0
    %873 = vmatpush1.msra.mxu0 0.0
    %874 = vmatprep.subr.mxu0 0.0
    %875 = vmatpush1.msra.mxu0 0.0
    %876 = vmatprep.subr.mxu0 0.0
    %877 = vmatpush1.msra.mxu0 0.0
    %878 = vmatprep.subr.mxu0 0.0
    %879 = vmatpush1.msra.mxu0 0.0
    %880 = vmatprep.subr.mxu0 0.0
    %881 = vmatpush1.msra.mxu0 0.0
    %882 = vmatprep.subr.mxu0 0.0
    %883 = vmatpush1.msra.mxu0 0.0
    %884 = vmatprep.subr.mxu0 0.0
    %885 = vmatpush1.msra.mxu0 0.0
    %886 = vmatprep.mubr.f32.mxu0 0.0
    %887 = vmatmul.mubr.f32.gmra.mrb[0].mxu0 %v704
    %v888 = vpop.f32.mrb[0].mxu0
    %v889 = vadd.f32 %v693, %v888
    %v890 = vpop.f32.mrb[0].mxu0
    %v891 = vadd.f32 %v697, %v890
    %892 = vmatprep.mubr.f32.mxu0 0.0
    %893 = vmatmul.mubr.f32.gmra.mrb[0].mxu0 %v707
    %v894 = vpop.f32.mrb[0].mxu0
    %v895 = vadd.f32 %v693, %v894
    %v896 = vpop.f32.mrb[0].mxu0
    %v897 = vadd.f32 %v697, %v896
    %898 = vmatprep.mubr.f32.mxu0 0.0
    %899 = vmatmul.mubr.f32.gmra.mrb[0].mxu0 %v710
    %v900 = vpop.f32.mrb[0].mxu0
    %v901 = vadd.f32 %v693, %v900
    %v902 = vpop.f32.mrb[0].mxu0
    %v903 = vadd.f32 %v697, %v902
    %904 = vmatprep.mubr.f32.mxu0 0.0
    %905 = vmatmul.mubr.f32.gmra.mrb[0].mxu0 %v713
    %v906 = vpop.f32.mrb[0].mxu0
    %v907 = vadd.f32 %v693, %v906
    %v908 = vpop.f32.mrb[0].mxu0
    %v909 = vadd.f32 %v697, %v908
    %910 = vmatprep.mubr.f32.mxu0 0.0
    %911 = vmatmul.mubr.f32.gmra.mrb[0].mxu0 %v716
    %v912 = vpop.f32.mrb[0].mxu0
    %v913 = vadd.f32 %v693, %v912
    %v914 = vpop.f32.mrb[0].mxu0
    %v915 = vadd.f32 %v697, %v914
    %916 = vmatprep.mubr.f32.mxu0 0.0
    %917 = vmatmul.mubr.f32.gmra.mrb[0].mxu0 %v719
    %v918 = vpop.f32.mrb[0].mxu0
    %v919 = vadd.f32 %v693, %v918
    %v920 = vpop.f32.mrb[0].mxu0
    %v921 = vadd.f32 %v697, %v920
    %922 = vdwg.mxu0
    %v923 = vlaneseq
    %v924 = vand.u32 %v923, 127
    %v925 = vadd.s32 %v924, 128
    %vm926 = vcmp.lt.s32.totalorder %v924, 128
    %vm927 = vcmp.lt.s32.totalorder %v925, 128
    %v928 = vld [vmem:[%s1] sm:$0xff]
    %929 = vset.pattern.permute.xlu0 0
    %930 = vperm.xlu0 %929, %v928
    %v931 = vpop.permute.xlu0 %930
    %v932 = vld [vmem:[%s3] sm:$0xff]
    %v933 = vld [vmem:[%s3 + $0x8] sm:$0xff]
    %v934 = vld [vmem:[%s3 + $0x10] sm:$0xff]
    %v935 = vld [vmem:[%s3 + $0x18] sm:$0xff]
    %v936 = vld [vmem:[%s3 + $0x20] sm:$0xff]
    %v937 = vld [vmem:[%s3 + $0x28] sm:$0xff]
    %v938 = vld [vmem:[%s3 + $0x30] sm:$0xff]
    %v939 = vld [vmem:[%s3 + $0x38] sm:$0xff]
    %v940 = vld [vmem:[%s3 + $0x40] sm:$0xff]
    %v941 = vld [vmem:[%s3 + $0x48] sm:$0xff]
    %v942 = vld [vmem:[%s3 + $0x50] sm:$0xff]
    %v943 = vld [vmem:[%s3 + $0x58] sm:$0xff]
    %v944 = vld [vmem:[%s3 + $0x60] sm:$0xff]
    %v945 = vld [vmem:[%s3 + $0x68] sm:$0xff]
    %v946 = vld [vmem:[%s3 + $0x70] sm:$0xff]
    %v947 = vld [vmem:[%s3 + $0x78] sm:$0xff]
    %v948 = vld [vmem:[%s3 + $0x80] sm:$0xff]
    %v949 = vld [vmem:[%s3 + $0x88] sm:$0xff]
    %v950 = vld [vmem:[%s3 + $0x90] sm:$0xff]
    %v951 = vld [vmem:[%s3 + $0x98] sm:$0xff]
    %v952 = vld [vmem:[%s3 + $0xa0] sm:$0xff]
    %v953 = vld [vmem:[%s3 + $0xa8] sm:$0xff]
    %v954 = vld [vmem:[%s3 + $0xb0] sm:$0xff]
    %v955 = vld [vmem:[%s3 + $0xb8] sm:$0xff]
    %v956 = vld [vmem:[%s3 + $0xc0] sm:$0xff]
    %v957 = vld [vmem:[%s3 + $0xc8] sm:$0xff]
    %v958 = vld [vmem:[%s3 + $0xd0] sm:$0xff]
    %v959 = vld [vmem:[%s3 + $0xd8] sm:$0xff]
    %v960 = vld [vmem:[%s3 + $0xe0] sm:$0xff]
    %v961 = vld [vmem:[%s3 + $0xe8] sm:$0xff]
    %v962 = vld [vmem:[%s3 + $0xf0] sm:$0xff]
    %v963 = vld [vmem:[%s3 + $0xf8] sm:$0xff]
    %v964 = vld [vmem:[%s3 + $0x100] sm:$0xff]
    %v965 = vld [vmem:[%s3 + $0x108] sm:$0xff]
    %v966 = vld [vmem:[%s3 + $0x110] sm:$0xff]
    %v967 = vld [vmem:[%s3 + $0x118] sm:$0xff]
    %v968 = vld [vmem:[%s3 + $0x120] sm:$0xff]
    %v969 = vld [vmem:[%s3 + $0x128] sm:$0xff]
    %v970 = vld [vmem:[%s3 + $0x130] sm:$0xff]
    %v971 = vld [vmem:[%s3 + $0x138] sm:$0xff]
    %v972 = vld [vmem:[%s3 + $0x140] sm:$0xff]
    %v973 = vld [vmem:[%s3 + $0x148] sm:$0xff]
    %v974 = vld [vmem:[%s3 + $0x150] sm:$0xff]
    %v975 = vld [vmem:[%s3 + $0x158] sm:$0xff]
    %v976 = vld [vmem:[%s3 + $0x160] sm:$0xff]
    %v977 = vld [vmem:[%s3 + $0x168] sm:$0xff]
    %v978 = vld [vmem:[%s3 + $0x170] sm:$0xff]
    %v979 = vld [vmem:[%s3 + $0x178] sm:$0xff]
    %v980 = vld [vmem:[%s3 + $0x180] sm:$0xff]
    %v981 = vld [vmem:[%s3 + $0x188] sm:$0xff]
    %v982 = vld [vmem:[%s3 + $0x190] sm:$0xff]
    %v983 = vld [vmem:[%s3 + $0x198] sm:$0xff]
    %v984 = vld [vmem:[%s3 + $0x1a0] sm:$0xff]
    %v985 = vld [vmem:[%s3 + $0x1a8] sm:$0xff]
    %v986 = vld [vmem:[%s3 + $0x1b0] sm:$0xff]
    %v987 = vld [vmem:[%s3 + $0x1b8] sm:$0xff]
    %v988 = vld [vmem:[%s3 + $0x1c0] sm:$0xff]
    %v989 = vld [vmem:[%s3 + $0x1c8] sm:$0xff]
    %v990 = vld [vmem:[%s3 + $0x1d0] sm:$0xff]
    %v991 = vld [vmem:[%s3 + $0x1d8] sm:$0xff]
    %v992 = vld [vmem:[%s3 + $0x1e0] sm:$0xff]
    %v993 = vld [vmem:[%s3 + $0x1e8] sm:$0xff]
    %v994 = vld [vmem:[%s3 + $0x1f0] sm:$0xff]
    %v995 = vld [vmem:[%s3 + $0x1f8] sm:$0xff]
    %v996 = vld [vmem:[%s3 + $0x200] sm:$0xff]
    %v997 = vld [vmem:[%s3 + $0x208] sm:$0xff]
    %v998 = vld [vmem:[%s3 + $0x210] sm:$0xff]
    %v999 = vld [vmem:[%s3 + $0x218] sm:$0xff]
    %v1000 = vld [vmem:[%s3 + $0x220] sm:$0xff]
    %v1001 = vld [vmem:[%s3 + $0x228] sm:$0xff]
    %v1002 = vld [vmem:[%s3 + $0x230] sm:$0xff]
    %v1003 = vld [vmem:[%s3 + $0x238] sm:$0xff]
    %v1004 = vld [vmem:[%s3 + $0x240] sm:$0xff]
    %v1005 = vld [vmem:[%s3 + $0x248] sm:$0xff]
    %v1006 = vld [vmem:[%s3 + $0x250] sm:$0xff]
    %v1007 = vld [vmem:[%s3 + $0x258] sm:$0xff]
    %v1008 = vld [vmem:[%s3 + $0x260] sm:$0xff]
    %v1009 = vld [vmem:[%s3 + $0x268] sm:$0xff]
    %v1010 = vld [vmem:[%s3 + $0x270] sm:$0xff]
    %v1011 = vld [vmem:[%s3 + $0x278] sm:$0xff]
    %v1012 = vld [vmem:[%s3 + $0x280] sm:$0xff]
    %v1013 = vld [vmem:[%s3 + $0x288] sm:$0xff]
    %v1014 = vld [vmem:[%s3 + $0x290] sm:$0xff]
    %v1015 = vld [vmem:[%s3 + $0x298] sm:$0xff]
    %v1016 = vld [vmem:[%s3 + $0x2a0] sm:$0xff]
    %v1017 = vld [vmem:[%s3 + $0x2a8] sm:$0xff]
    %v1018 = vld [vmem:[%s3 + $0x2b0] sm:$0xff]
    %v1019 = vld [vmem:[%s3 + $0x2b8] sm:$0xff]
    %v1020 = vld [vmem:[%s3 + $0x2c0] sm:$0xff]
    %v1021 = vld [vmem:[%s3 + $0x2c8] sm:$0xff]
    %v1022 = vld [vmem:[%s3 + $0x2d0] sm:$0xff]
    %v1023 = vld [vmem:[%s3 + $0x2d8] sm:$0xff]
    %v1024 = vld [vmem:[%s3 + $0x2e0] sm:$0xff]
    %v1025 = vld [vmem:[%s3 + $0x2e8] sm:$0xff]
    %v1026 = vld [vmem:[%s3 + $0x2f0] sm:$0xff]
    %v1027 = vld [vmem:[%s3 + $0x2f8] sm:$0xff]
    %v1028 = vld [vmem:[%s3 + $0x300] sm:$0xff]
    %v1029 = vld [vmem:[%s3 + $0x308] sm:$0xff]
    %v1030 = vld [vmem:[%s3 + $0x310] sm:$0xff]
    %v1031 = vld [vmem:[%s3 + $0x318] sm:$0xff]
    %v1032 = vld [vmem:[%s3 + $0x320] sm:$0xff]
    %v1033 = vld [vmem:[%s3 + $0x328] sm:$0xff]
    %v1034 = vld [vmem:[%s3 + $0x330] sm:$0xff]
    %v1035 = vld [vmem:[%s3 + $0x338] sm:$0xff]
    %v1036 = vld [vmem:[%s3 + $0x340] sm:$0xff]
    %v1037 = vld [vmem:[%s3 + $0x348] sm:$0xff]
    %v1038 = vld [vmem:[%s3 + $0x350] sm:$0xff]
    %v1039 = vld [vmem:[%s3 + $0x358] sm:$0xff]
    %v1040 = vld [vmem:[%s3 + $0x360] sm:$0xff]
    %v1041 = vld [vmem:[%s3 + $0x368] sm:$0xff]
    %v1042 = vld [vmem:[%s3 + $0x370] sm:$0xff]
    %v1043 = vld [vmem:[%s3 + $0x378] sm:$0xff]
    %v1044 = vld [vmem:[%s3 + $0x380] sm:$0xff]
    %v1045 = vld [vmem:[%s3 + $0x388] sm:$0xff]
    %v1046 = vld [vmem:[%s3 + $0x390] sm:$0xff]
    %v1047 = vld [vmem:[%s3 + $0x398] sm:$0xff]
    %v1048 = vld [vmem:[%s3 + $0x3a0] sm:$0xff]
    %v1049 = vld [vmem:[%s3 + $0x3a8] sm:$0xff]
    %v1050 = vld [vmem:[%s3 + $0x3b0] sm:$0xff]
    %v1051 = vld [vmem:[%s3 + $0x3b8] sm:$0xff]
    %v1052 = vld [vmem:[%s3 + $0x3c0] sm:$0xff]
    %v1053 = vld [vmem:[%s3 + $0x3c8] sm:$0xff]
    %v1054 = vld [vmem:[%s3 + $0x3d0] sm:$0xff]
    %v1055 = vld [vmem:[%s3 + $0x3d8] sm:$0xff]
    %v1056 = vld [vmem:[%s3 + $0x3e0] sm:$0xff]
    %v1057 = vld [vmem:[%s3 + $0x3e8] sm:$0xff]
    %v1058 = vld [vmem:[%s3 + $0x3f0] sm:$0xff]
    %v1059 = vld [vmem:[%s3 + $0x3f8] sm:$0xff]
    %v1060 = vld [vmem:[%s3 + $0x400] sm:$0xff]
    %v1061 = vld [vmem:[%s3 + $0x408] sm:$0xff]
    %v1062 = vld [vmem:[%s3 + $0x410] sm:$0xff]
    %v1063 = vld [vmem:[%s3 + $0x418] sm:$0xff]
    %v1064 = vld [vmem:[%s3 + $0x420] sm:$0xff]
    %v1065 = vld [vmem:[%s3 + $0x428] sm:$0xff]
    %v1066 = vld [vmem:[%s3 + $0x430] sm:$0xff]
    %v1067 = vld [vmem:[%s3 + $0x438] sm:$0xff]
    %v1068 = vld [vmem:[%s3 + $0x440] sm:$0xff]
    %v1069 = vld [vmem:[%s3 + $0x448] sm:$0xff]
    %v1070 = vld [vmem:[%s3 + $0x450] sm:$0xff]
    %v1071 = vld [vmem:[%s3 + $0x458] sm:$0xff]
    %v1072 = vld [vmem:[%s3 + $0x460] sm:$0xff]
    %v1073 = vld [vmem:[%s3 + $0x468] sm:$0xff]
    %v1074 = vld [vmem:[%s3 + $0x470] sm:$0xff]
    %v1075 = vld [vmem:[%s3 + $0x478] sm:$0xff]
    %v1076 = vld [vmem:[%s3 + $0x480] sm:$0xff]
    %v1077 = vld [vmem:[%s3 + $0x488] sm:$0xff]
    %v1078 = vld [vmem:[%s3 + $0x490] sm:$0xff]
    %v1079 = vld [vmem:[%s3 + $0x498] sm:$0xff]
    %v1080 = vld [vmem:[%s3 + $0x4a0] sm:$0xff]
    %v1081 = vld [vmem:[%s3 + $0x4a8] sm:$0xff]
    %v1082 = vld [vmem:[%s3 + $0x4b0] sm:$0xff]
    %v1083 = vld [vmem:[%s3 + $0x4b8] sm:$0xff]
    %v1084 = vld [vmem:[%s3 + $0x4c0] sm:$0xff]
    %v1085 = vld [vmem:[%s3 + $0x4c8] sm:$0xff]
    %v1086 = vld [vmem:[%s3 + $0x4d0] sm:$0xff]
    %v1087 = vld [vmem:[%s3 + $0x4d8] sm:$0xff]
    %v1088 = vld [vmem:[%s3 + $0x4e0] sm:$0xff]
    %v1089 = vld [vmem:[%s3 + $0x4e8] sm:$0xff]
    %v1090 = vld [vmem:[%s3 + $0x4f0] sm:$0xff]
    %v1091 = vld [vmem:[%s3 + $0x4f8] sm:$0xff]
    %v1092 = vld [vmem:[%s3 + $0x500] sm:$0xff]
    %v1093 = vld [vmem:[%s3 + $0x508] sm:$0xff]
    %v1094 = vld [vmem:[%s3 + $0x510] sm:$0xff]
    %v1095 = vld [vmem:[%s3 + $0x518] sm:$0xff]
    %v1096 = vld [vmem:[%s3 + $0x520] sm:$0xff]
    %v1097 = vld [vmem:[%s3 + $0x528] sm:$0xff]
    %v1098 = vld [vmem:[%s3 + $0x530] sm:$0xff]
    %v1099 = vld [vmem:[%s3 + $0x538] sm:$0xff]
    %v1100 = vld [vmem:[%s3 + $0x540] sm:$0xff]
    %v1101 = vld [vmem:[%s3 + $0x548] sm:$0xff]
    %v1102 = vld [vmem:[%s3 + $0x550] sm:$0xff]
    %v1103 = vld [vmem:[%s3 + $0x558] sm:$0xff]
    %v1104 = vld [vmem:[%s3 + $0x560] sm:$0xff]
    %v1105 = vld [vmem:[%s3 + $0x568] sm:$0xff]
    %v1106 = vld [vmem:[%s3 + $0x570] sm:$0xff]
    %v1107 = vld [vmem:[%s3 + $0x578] sm:$0xff]
    %v1108 = vld [vmem:[%s3 + $0x580] sm:$0xff]
    %v1109 = vld [vmem:[%s3 + $0x588] sm:$0xff]
    %v1110 = vld [vmem:[%s3 + $0x590] sm:$0xff]
    %v1111 = vld [vmem:[%s3 + $0x598] sm:$0xff]
    %v1112 = vld [vmem:[%s3 + $0x5a0] sm:$0xff]
    %v1113 = vld [vmem:[%s3 + $0x5a8] sm:$0xff]
    %v1114 = vld [vmem:[%s3 + $0x5b0] sm:$0xff]
    %v1115 = vld [vmem:[%s3 + $0x5b8] sm:$0xff]
    %v1116 = vld [vmem:[%s3 + $0x5c0] sm:$0xff]
    %v1117 = vld [vmem:[%s3 + $0x5c8] sm:$0xff]
    %v1118 = vld [vmem:[%s3 + $0x5d0] sm:$0xff]
    %v1119 = vld [vmem:[%s3 + $0x5d8] sm:$0xff]
    %v1120 = vld [vmem:[%s3 + $0x5e0] sm:$0xff]
    %v1121 = vld [vmem:[%s3 + $0x5e8] sm:$0xff]
    %v1122 = vld [vmem:[%s3 + $0x5f0] sm:$0xff]
    %v1123 = vld [vmem:[%s3 + $0x5f8] sm:$0xff]
    %v1124 = vld [vmem:[%s3 + $0x600] sm:$0xff]
    %v1125 = vld [vmem:[%s3 + $0x608] sm:$0xff]
    %v1126 = vld [vmem:[%s3 + $0x610] sm:$0xff]
    %v1127 = vld [vmem:[%s3 + $0x618] sm:$0xff]
    %v1128 = vld [vmem:[%s3 + $0x620] sm:$0xff]
    %v1129 = vld [vmem:[%s3 + $0x628] sm:$0xff]
    %v1130 = vld [vmem:[%s3 + $0x630] sm:$0xff]
    %v1131 = vld [vmem:[%s3 + $0x638] sm:$0xff]
    %v1132 = vld [vmem:[%s3 + $0x640] sm:$0xff]
    %v1133 = vld [vmem:[%s3 + $0x648] sm:$0xff]
    %v1134 = vld [vmem:[%s3 + $0x650] sm:$0xff]
    %v1135 = vld [vmem:[%s3 + $0x658] sm:$0xff]
    %v1136 = vld [vmem:[%s3 + $0x660] sm:$0xff]
    %v1137 = vld [vmem:[%s3 + $0x668] sm:$0xff]
    %v1138 = vld [vmem:[%s3 + $0x670] sm:$0xff]
    %v1139 = vld [vmem:[%s3 + $0x678] sm:$0xff]
    %v1140 = vld [vmem:[%s3 + $0x680] sm:$0xff]
    %v1141 = vld [vmem:[%s3 + $0x688] sm:$0xff]
    %v1142 = vld [vmem:[%s3 + $0x690] sm:$0xff]
    %v1143 = vld [vmem:[%s3 + $0x698] sm:$0xff]
    %v1144 = vld [vmem:[%s3 + $0x6a0] sm:$0xff]
    %v1145 = vld [vmem:[%s3 + $0x6a8] sm:$0xff]
    %v1146 = vld [vmem:[%s3 + $0x6b0] sm:$0xff]
    %v1147 = vld [vmem:[%s3 + $0x6b8] sm:$0xff]
    %v1148 = vld [vmem:[%s3 + $0x6c0] sm:$0xff]
    %v1149 = vld [vmem:[%s3 + $0x6c8] sm:$0xff]
    %v1150 = vld [vmem:[%s3 + $0x6d0] sm:$0xff]
    %v1151 = vld [vmem:[%s3 + $0x6d8] sm:$0xff]
    %v1152 = vld [vmem:[%s3 + $0x6e0] sm:$0xff]
    %v1153 = vld [vmem:[%s3 + $0x6e8] sm:$0xff]
    %v1154 = vld [vmem:[%s3 + $0x6f0] sm:$0xff]
    %v1155 = vld [vmem:[%s3 + $0x6f8] sm:$0xff]
    %v1156 = vld [vmem:[%s3 + $0x700] sm:$0xff]
    %v1157 = vld [vmem:[%s3 + $0x708] sm:$0xff]
    %v1158 = vld [vmem:[%s3 + $0x710] sm:$0xff]
    %v1159 = vld [vmem:[%s3 + $0x718] sm:$0xff]
    %v1160 = vld [vmem:[%s3 + $0x720] sm:$0xff]
    %v1161 = vld [vmem:[%s3 + $0x728] sm:$0xff]
    %v1162 = vld [vmem:[%s3 + $0x730] sm:$0xff]
    %v1163 = vld [vmem:[%s3 + $0x738] sm:$0xff]
    %v1164 = vld [vmem:[%s3 + $0x740] sm:$0xff]
    %v1165 = vld [vmem:[%s3 + $0x748] sm:$0xff]
    %v1166 = vld [vmem:[%s3 + $0x750] sm:$0xff]
    %v1167 = vld [vmem:[%s3 + $0x758] sm:$0xff]
    %v1168 = vld [vmem:[%s3 + $0x760] sm:$0xff]
    %v1169 = vld [vmem:[%s3 + $0x768] sm:$0xff]
    %v1170 = vld [vmem:[%s3 + $0x770] sm:$0xff]
    %v1171 = vld [vmem:[%s3 + $0x778] sm:$0xff]
    %v1172 = vld [vmem:[%s3 + $0x780] sm:$0xff]
    %v1173 = vld [vmem:[%s3 + $0x788] sm:$0xff]
    %v1174 = vld [vmem:[%s3 + $0x790] sm:$0xff]
    %v1175 = vld [vmem:[%s3 + $0x798] sm:$0xff]
    %v1176 = vld [vmem:[%s3 + $0x7a0] sm:$0xff]
    %v1177 = vld [vmem:[%s3 + $0x7a8] sm:$0xff]
    %v1178 = vld [vmem:[%s3 + $0x7b0] sm:$0xff]
    %v1179 = vld [vmem:[%s3 + $0x7b8] sm:$0xff]
    %v1180 = vld [vmem:[%s3 + $0x7c0] sm:$0xff]
    %v1181 = vld [vmem:[%s3 + $0x7c8] sm:$0xff]
    %v1182 = vld [vmem:[%s3 + $0x7d0] sm:$0xff]
    %v1183 = vld [vmem:[%s3 + $0x7d8] sm:$0xff]
    %v1184 = vld [vmem:[%s3 + $0x7e0] sm:$0xff]
    %v1185 = vld [vmem:[%s3 + $0x7e8] sm:$0xff]
    %v1186 = vld [vmem:[%s3 + $0x7f0] sm:$0xff]
    %v1187 = vld [vmem:[%s3 + $0x7f8] sm:$0xff]
    %1188 = vmatprep.subr.mxu0 %v933
    %1189 = vmatpush1.msra.mxu0 %v932
    %1190 = vmatprep.subr.mxu0 %v941
    %1191 = vmatpush1.msra.mxu0 %v940
    %1192 = vmatprep.subr.mxu0 %v949
    %1193 = vmatpush1.msra.mxu0 %v948
    %1194 = vmatprep.subr.mxu0 %v957
    %1195 = vmatpush1.msra.mxu0 %v956
    %1196 = vmatprep.subr.mxu0 %v965
    %1197 = vmatpush1.msra.mxu0 %v964
    %1198 = vmatprep.subr.mxu0 %v973
    %1199 = vmatpush1.msra.mxu0 %v972
    %1200 = vmatprep.subr.mxu0 %v981
    %1201 = vmatpush1.msra.mxu0 %v980
    %1202 = vmatprep.subr.mxu0 %v989
    %1203 = vmatpush1.msra.mxu0 %v988
    %1204 = vmatprep.subr.mxu0 %v997
    %1205 = vmatpush1.msra.mxu0 %v996
    %1206 = vmatprep.subr.mxu0 %v1005
    %1207 = vmatpush1.msra.mxu0 %v1004
    %1208 = vmatprep.subr.mxu0 %v1013
    %1209 = vmatpush1.msra.mxu0 %v1012
    %1210 = vmatprep.subr.mxu0 %v1021
    %1211 = vmatpush1.msra.mxu0 %v1020
    %1212 = vmatprep.subr.mxu0 %v1029
    %1213 = vmatpush1.msra.mxu0 %v1028
    %1214 = vmatprep.subr.mxu0 %v1037
    %1215 = vmatpush1.msra.mxu0 %v1036
    %1216 = vmatprep.subr.mxu0 %v1045
    %1217 = vmatpush1.msra.mxu0 %v1044
    %1218 = vmatprep.subr.mxu0 %v1053
    %1219 = vmatpush1.msra.mxu0 %v1052
    %1220 = vmatprep.subr.mxu0 %v1061
    %1221 = vmatpush1.msra.mxu0 %v1060
    %1222 = vmatprep.subr.mxu0 %v1069
    %1223 = vmatpush1.msra.mxu0 %v1068
    %1224 = vmatprep.subr.mxu0 %v1077
    %1225 = vmatpush1.msra.mxu0 %v1076
    %1226 = vmatprep.subr.mxu0 %v1085
    %1227 = vmatpush1.msra.mxu0 %v1084
    %1228 = vmatprep.subr.mxu0 %v1093
    %1229 = vmatpush1.msra.mxu0 %v1092
    %1230 = vmatprep.subr.mxu0 %v1101
    %1231 = vmatpush1.msra.mxu0 %v1100
    %1232 = vmatprep.subr.mxu0 %v1109
    %1233 = vmatpush1.msra.mxu0 %v1108
    %1234 = vmatprep.subr.mxu0 %v1117
    %1235 = vmatpush1.msra.mxu0 %v1116
    %1236 = vmatprep.subr.mxu0 %v1125
    %1237 = vmatpush1.msra.mxu0 %v1124
    %1238 = vmatprep.subr.mxu0 %v1133
    %1239 = vmatpush1.msra.mxu0 %v1132
    %1240 = vmatprep.subr.mxu0 %v1141
    %1241 = vmatpush1.msra.mxu0 %v1140
    %1242 = vmatprep.subr.mxu0 %v1149
    %1243 = vmatpush1.msra.mxu0 %v1148
    %1244 = vmatprep.subr.mxu0 %v1157
    %1245 = vmatpush1.msra.mxu0 %v1156
    %1246 = vmatprep.subr.mxu0 %v1165
    %1247 = vmatpush1.msra.mxu0 %v1164
    %1248 = vmatprep.subr.mxu0 %v1173
    %1249 = vmatpush1.msra.mxu0 %v1172
    %1250 = vmatprep.subr.mxu0 %v1181
    %1251 = vmatpush1.msra.mxu0 %v1180
    %1252 = vmatprep.mubr.f32.mxu0 0.0
    %1253 = vmatmul.mubr.f32.gmra.mrb[0].mxu0 0.0
    %v1254 = vpop.f32.mrb[0].mxu0
    %v1255 = vadd.f32 0.0, %v1254
    %v1256 = vpop.f32.mrb[0].mxu0
    %v1257 = vadd.f32 0.0, %v1256
    %1258 = vdwg.mxu0
    %1259 = vmatprep.subr.mxu0 %v935
    %1260 = vmatpush1.msra.mxu0 %v934
    %1261 = vmatprep.subr.mxu0 %v943
    %1262 = vmatpush1.msra.mxu0 %v942
    %1263 = vmatprep.subr.mxu0 %v951
    %1264 = vmatpush1.msra.mxu0 %v950
    %1265 = vmatprep.subr.mxu0 %v959
    %1266 = vmatpush1.msra.mxu0 %v958
    %1267 = vmatprep.subr.mxu0 %v967
    %1268 = vmatpush1.msra.mxu0 %v966
    %1269 = vmatprep.subr.mxu0 %v975
    %1270 = vmatpush1.msra.mxu0 %v974
    %1271 = vmatprep.subr.mxu0 %v983
    %1272 = vmatpush1.msra.mxu0 %v982
    %1273 = vmatprep.subr.mxu0 %v991
    %1274 = vmatpush1.msra.mxu0 %v990
    %1275 = vmatprep.subr.mxu0 %v999
    %1276 = vmatpush1.msra.mxu0 %v998
    %1277 = vmatprep.subr.mxu0 %v1007
    %1278 = vmatpush1.msra.mxu0 %v1006
    %1279 = vmatprep.subr.mxu0 %v1015
    %1280 = vmatpush1.msra.mxu0 %v1014
    %1281 = vmatprep.subr.mxu0 %v1023
    %1282 = vmatpush1.msra.mxu0 %v1022
    %1283 = vmatprep.subr.mxu0 %v1031
    %1284 = vmatpush1.msra.mxu0 %v1030
    %1285 = vmatprep.subr.mxu0 %v1039
    %1286 = vmatpush1.msra.mxu0 %v1038
    %1287 = vmatprep.subr.mxu0 %v1047
    %1288 = vmatpush1.msra.mxu0 %v1046
    %1289 = vmatprep.subr.mxu0 %v1055
    %1290 = vmatpush1.msra.mxu0 %v1054
    %1291 = vmatprep.subr.mxu0 %v1063
    %1292 = vmatpush1.msra.mxu0 %v1062
    %1293 = vmatprep.subr.mxu0 %v1071
    %1294 = vmatpush1.msra.mxu0 %v1070
    %1295 = vmatprep.subr.mxu0 %v1079
    %1296 = vmatpush1.msra.mxu0 %v1078
    %1297 = vmatprep.subr.mxu0 %v1087
    %1298 = vmatpush1.msra.mxu0 %v1086
    %1299 = vmatprep.subr.mxu0 %v1095
    %1300 = vmatpush1.msra.mxu0 %v1094
    %1301 = vmatprep.subr.mxu0 %v1103
    %1302 = vmatpush1.msra.mxu0 %v1102
    %1303 = vmatprep.subr.mxu0 %v1111
    %1304 = vmatpush1.msra.mxu0 %v1110
    %1305 = vmatprep.subr.mxu0 %v1119
    %1306 = vmatpush1.msra.mxu0 %v1118
    %1307 = vmatprep.subr.mxu0 %v1127
    %1308 = vmatpush1.msra.mxu0 %v1126
    %1309 = vmatprep.subr.mxu0 %v1135
    %1310 = vmatpush1.msra.mxu0 %v1134
    %1311 = vmatprep.subr.mxu0 %v1143
    %1312 = vmatpush1.msra.mxu0 %v1142
    %1313 = vmatprep.subr.mxu0 %v1151
    %1314 = vmatpush1.msra.mxu0 %v1150
    %1315 = vmatprep.subr.mxu0 %v1159
    %1316 = vmatpush1.msra.mxu0 %v1158
    %1317 = vmatprep.subr.mxu0 %v1167
    %1318 = vmatpush1.msra.mxu0 %v1166
    %1319 = vmatprep.subr.mxu0 %v1175
    %1320 = vmatpush1.msra.mxu0 %v1174
    %1321 = vmatprep.subr.mxu0 %v1183
    %1322 = vmatpush1.msra.mxu0 %v1182
    %1323 = vmatprep.mubr.f32.mxu0 0.0
    %1324 = vmatmul.mubr.f32.gmra.mrb[0].mxu0 0.0
    %v1325 = vpop.f32.mrb[0].mxu0
    %v1326 = vadd.f32 0.0, %v1325
    %v1327 = vpop.f32.mrb[0].mxu0
    %v1328 = vadd.f32 0.0, %v1327
    %1329 = vdwg.mxu0
    %1330 = vmatprep.subr.mxu0 %v937
    %1331 = vmatpush1.msra.mxu0 %v936
    %1332 = vmatprep.subr.mxu0 %v945
    %1333 = vmatpush1.msra.mxu0 %v944
    %1334 = vmatprep.subr.mxu0 %v953
    %1335 = vmatpush1.msra.mxu0 %v952
    %1336 = vmatprep.subr.mxu0 %v961
    %1337 = vmatpush1.msra.mxu0 %v960
    %1338 = vmatprep.subr.mxu0 %v969
    %1339 = vmatpush1.msra.mxu0 %v968
    %1340 = vmatprep.subr.mxu0 %v977
    %1341 = vmatpush1.msra.mxu0 %v976
    %1342 = vmatprep.subr.mxu0 %v985
    %1343 = vmatpush1.msra.mxu0 %v984
    %1344 = vmatprep.subr.mxu0 %v993
    %1345 = vmatpush1.msra.mxu0 %v992
    %1346 = vmatprep.subr.mxu0 %v1001
    %1347 = vmatpush1.msra.mxu0 %v1000
    %1348 = vmatprep.subr.mxu0 %v1009
    %1349 = vmatpush1.msra.mxu0 %v1008
    %1350 = vmatprep.subr.mxu0 %v1017
    %1351 = vmatpush1.msra.mxu0 %v1016
    %1352 = vmatprep.subr.mxu0 %v1025
    %1353 = vmatpush1.msra.mxu0 %v1024
    %1354 = vmatprep.subr.mxu0 %v1033
    %1355 = vmatpush1.msra.mxu0 %v1032
    %1356 = vmatprep.subr.mxu0 %v1041
    %1357 = vmatpush1.msra.mxu0 %v1040
    %1358 = vmatprep.subr.mxu0 %v1049
    %1359 = vmatpush1.msra.mxu0 %v1048
    %1360 = vmatprep.subr.mxu0 %v1057
    %1361 = vmatpush1.msra.mxu0 %v1056
    %1362 = vmatprep.subr.mxu0 %v1065
    %1363 = vmatpush1.msra.mxu0 %v1064
    %1364 = vmatprep.subr.mxu0 %v1073
    %1365 = vmatpush1.msra.mxu0 %v1072
    %1366 = vmatprep.subr.mxu0 %v1081
    %1367 = vmatpush1.msra.mxu0 %v1080
    %1368 = vmatprep.subr.mxu0 %v1089
    %1369 = vmatpush1.msra.mxu0 %v1088
    %1370 = vmatprep.subr.mxu0 %v1097
    %1371 = vmatpush1.msra.mxu0 %v1096
    %1372 = vmatprep.subr.mxu0 %v1105
    %1373 = vmatpush1.msra.mxu0 %v1104
    %1374 = vmatprep.subr.mxu0 %v1113
    %1375 = vmatpush1.msra.mxu0 %v1112
    %1376 = vmatprep.subr.mxu0 %v1121
    %1377 = vmatpush1.msra.mxu0 %v1120
    %1378 = vmatprep.subr.mxu0 %v1129
    %1379 = vmatpush1.msra.mxu0 %v1128
    %1380 = vmatprep.subr.mxu0 %v1137
    %1381 = vmatpush1.msra.mxu0 %v1136
    %1382 = vmatprep.subr.mxu0 %v1145
    %1383 = vmatpush1.msra.mxu0 %v1144
    %1384 = vmatprep.subr.mxu0 %v1153
    %1385 = vmatpush1.msra.mxu0 %v1152
    %1386 = vmatprep.subr.mxu0 %v1161
    %1387 = vmatpush1.msra.mxu0 %v1160
    %1388 = vmatprep.subr.mxu0 %v1169
    %1389 = vmatpush1.msra.mxu0 %v1168
    %1390 = vmatprep.subr.mxu0 %v1177
    %1391 = vmatpush1.msra.mxu0 %v1176
    %1392 = vmatprep.subr.mxu0 %v1185
    %1393 = vmatpush1.msra.mxu0 %v1184
    %1394 = vmatprep.mubr.f32.mxu0 0.0
    %1395 = vmatmul.mubr.f32.gmra.mrb[0].mxu0 0.0
    %v1396 = vpop.f32.mrb[0].mxu0
    %v1397 = vadd.f32 0.0, %v1396
    %v1398 = vpop.f32.mrb[0].mxu0
    %v1399 = vadd.f32 0.0, %v1398
    %1400 = vdwg.mxu0
    %1401 = vmatprep.subr.mxu0 %v939
    %1402 = vmatpush1.msra.mxu0 %v938
    %1403 = vmatprep.subr.mxu0 %v947
    %1404 = vmatpush1.msra.mxu0 %v946
    %1405 = vmatprep.subr.mxu0 %v955
    %1406 = vmatpush1.msra.mxu0 %v954
    %1407 = vmatprep.subr.mxu0 %v963
    %1408 = vmatpush1.msra.mxu0 %v962
    %1409 = vmatprep.subr.mxu0 %v971
    %1410 = vmatpush1.msra.mxu0 %v970
    %1411 = vmatprep.subr.mxu0 %v979
    %1412 = vmatpush1.msra.mxu0 %v978
    %1413 = vmatprep.subr.mxu0 %v987
    %1414 = vmatpush1.msra.mxu0 %v986
    %1415 = vmatprep.subr.mxu0 %v995
    %1416 = vmatpush1.msra.mxu0 %v994
    %1417 = vmatprep.subr.mxu0 %v1003
    %1418 = vmatpush1.msra.mxu0 %v1002
    %1419 = vmatprep.subr.mxu0 %v1011
    %1420 = vmatpush1.msra.mxu0 %v1010
    %1421 = vmatprep.subr.mxu0 %v1019
    %1422 = vmatpush1.msra.mxu0 %v1018
    %1423 = vmatprep.subr.mxu0 %v1027
    %1424 = vmatpush1.msra.mxu0 %v1026
    %1425 = vmatprep.subr.mxu0 %v1035
    %1426 = vmatpush1.msra.mxu0 %v1034
    %1427 = vmatprep.subr.mxu0 %v1043
    %1428 = vmatpush1.msra.mxu0 %v1042
    %1429 = vmatprep.subr.mxu0 %v1051
    %1430 = vmatpush1.msra.mxu0 %v1050
    %1431 = vmatprep.subr.mxu0 %v1059
    %1432 = vmatpush1.msra.mxu0 %v1058
    %1433 = vmatprep.subr.mxu0 %v1067
    %1434 = vmatpush1.msra.mxu0 %v1066
    %1435 = vmatprep.subr.mxu0 %v1075
    %1436 = vmatpush1.msra.mxu0 %v1074
    %1437 = vmatprep.subr.mxu0 %v1083
    %1438 = vmatpush1.msra.mxu0 %v1082
    %1439 = vmatprep.subr.mxu0 %v1091
    %1440 = vmatpush1.msra.mxu0 %v1090
    %1441 = vmatprep.subr.mxu0 %v1099
    %1442 = vmatpush1.msra.mxu0 %v1098
    %1443 = vmatprep.subr.mxu0 %v1107
    %1444 = vmatpush1.msra.mxu0 %v1106
    %1445 = vmatprep.subr.mxu0 %v1115
    %1446 = vmatpush1.msra.mxu0 %v1114
    %1447 = vmatprep.subr.mxu0 %v1123
    %1448 = vmatpush1.msra.mxu0 %v1122
    %1449 = vmatprep.subr.mxu0 %v1131
    %1450 = vmatpush1.msra.mxu0 %v1130
    %1451 = vmatprep.subr.mxu0 %v1139
    %1452 = vmatpush1.msra.mxu0 %v1138
    %1453 = vmatprep.subr.mxu0 %v1147
    %1454 = vmatpush1.msra.mxu0 %v1146
    %1455 = vmatprep.subr.mxu0 %v1155
    %1456 = vmatpush1.msra.mxu0 %v1154
    %1457 = vmatprep.subr.mxu0 %v1163
    %1458 = vmatpush1.msra.mxu0 %v1162
    %1459 = vmatprep.subr.mxu0 %v1171
    %1460 = vmatpush1.msra.mxu0 %v1170
    %1461 = vmatprep.subr.mxu0 %v1179
    %1462 = vmatpush1.msra.mxu0 %v1178
    %1463 = vmatprep.subr.mxu0 %v1187
    %1464 = vmatpush1.msra.mxu0 %v1186
    %1465 = vmatprep.mubr.f32.mxu0 0.0
    %1466 = vmatmul.mubr.f32.gmra.mrb[0].mxu0 0.0
    %v1467 = vpop.f32.mrb[0].mxu0
    %v1468 = vadd.f32 0.0, %v1467
    %v1469 = vpop.f32.mrb[0].mxu0
    %v1470 = vadd.f32 0.0, %v1469
    %1471 = vdwg.mxu0
    %v1472 = vadd.f32 %v233, %v1255
    %v1473 = vadd.f32 %v235, %v1257
    %v1474 = vadd.f32 %v358, %v1326
    %v1475 = vadd.f32 %v360, %v1328
    %v1476 = vadd.f32 %v483, %v1397
    %v1477 = vadd.f32 %v485, %v1399
    %v1478 = vadd.f32 %v608, %v1468
    %v1479 = vadd.f32 %v610, %v1470
    %v1480 = vxor.u32 %v1472, 2147483648
    %v1481 = vxor.u32 %v1473, 2147483648
    %v1482 = vmul.f32 %v1480, 1.442695
    %v1483 = vpow.pop %v1482
    %v1484 = vmul.f32 %v1481, 1.442695
    %v1485 = vpow.pop %v1484
    %v1486 = vadd.f32 %v1483, 1.0
    %v1487 = vadd.f32 %v1485, 1.0
    %v1488 = vrcp.pop %v1486
    %v1489 = vmul.f32 1.0, %v1488
    %v1490 = vrcp.pop %v1487
    %v1491 = vmul.f32 1.0, %v1490
    %v1492 = vxor.u32 %v1474, 2147483648
    %v1493 = vxor.u32 %v1475, 2147483648
    %v1494 = vmul.f32 %v1492, 1.442695
    %v1495 = vpow.pop %v1494
    %v1496 = vmul.f32 %v1493, 1.442695
    %v1497 = vpow.pop %v1496
    %v1498 = vadd.f32 %v1495, 1.0
    %v1499 = vadd.f32 %v1497, 1.0
    %v1500 = vrcp.pop %v1498
    %v1501 = vmul.f32 1.0, %v1500
    %v1502 = vrcp.pop %v1499
    %v1503 = vmul.f32 1.0, %v1502
    %v1504 = vtanh.pop %v1476
    %v1505 = vtanh.pop %v1477
    %v1506 = vxor.u32 %v1478, 2147483648
    %v1507 = vxor.u32 %v1479, 2147483648
    %v1508 = vmul.f32 %v1506, 1.442695
    %v1509 = vpow.pop %v1508
    %v1510 = vmul.f32 %v1507, 1.442695
    %v1511 = vpow.pop %v1510
    %v1512 = vadd.f32 %v1509, 1.0
    %v1513 = vadd.f32 %v1511, 1.0
    %v1514 = vrcp.pop %v1512
    %v1515 = vmul.f32 1.0, %v1514
    %v1516 = vrcp.pop %v1513
    %v1517 = vmul.f32 1.0, %v1516
    %v1518 = vmul.f32 %v1501, 0.0
    %v1519 = vmul.f32 %v1503, 0.0
    %v1520 = vmul.f32 %v1489, %v1504
    %v1521 = vmul.f32 %v1491, %v1505
    %v1522 = vadd.f32 %v1518, %v1520
    %v1523 = vadd.f32 %v1519, %v1521
    %v1524 = vtanh.pop %v1522
    %v1525 = vtanh.pop %v1523
    %v1526 = vmul.f32 %v1515, %v1524
    %v1527 = vmul.f32 %v1517, %v1525
    %v1528 = vsel %vm926, 0, 9
    %v1529 = vsel %vm927, 0, 9
    %vm1530 = vcmp.eq.s32.totalorder %v931, %v1528
    %vm1531 = vcmp.eq.s32.totalorder %v931, %v1529
    %v1532 = vsel %vm1530, %v1526, 0.0
    %v1533 = vsel %vm1531, %v1527, 0.0
    %1534 = vmatprep.subr.mxu0 %v933
    %1535 = vmatpush1.msra.mxu0 %v932
    %1536 = vmatprep.subr.mxu0 %v941
    %1537 = vmatpush1.msra.mxu0 %v940
    %1538 = vmatprep.subr.mxu0 %v949
    %1539 = vmatpush1.msra.mxu0 %v948
    %1540 = vmatprep.subr.mxu0 %v957
    %1541 = vmatpush1.msra.mxu0 %v956
    %1542 = vmatprep.subr.mxu0 %v965
    %1543 = vmatpush1.msra.mxu0 %v964
    %1544 = vmatprep.subr.mxu0 %v973
    %1545 = vmatpush1.msra.mxu0 %v972
    %1546 = vmatprep.subr.mxu0 %v981
    %1547 = vmatpush1.msra.mxu0 %v980
    %1548 = vmatprep.subr.mxu0 %v989
    %1549 = vmatpush1.msra.mxu0 %v988
    %1550 = vmatprep.subr.mxu0 %v997
    %1551 = vmatpush1.msra.mxu0 %v996
    %1552 = vmatprep.subr.mxu0 %v1005
    %1553 = vmatpush1.msra.mxu0 %v1004
    %1554 = vmatprep.subr.mxu0 %v1013
    %1555 = vmatpush1.msra.mxu0 %v1012
    %1556 = vmatprep.subr.mxu0 %v1021
    %1557 = vmatpush1.msra.mxu0 %v1020
    %1558 = vmatprep.subr.mxu0 %v1029
    %1559 = vmatpush1.msra.mxu0 %v1028
    %1560 = vmatprep.subr.mxu0 %v1037
    %1561 = vmatpush1.msra.mxu0 %v1036
    %1562 = vmatprep.subr.mxu0 %v1045
    %1563 = vmatpush1.msra.mxu0 %v1044
    %1564 = vmatprep.subr.mxu0 %v1053
    %1565 = vmatpush1.msra.mxu0 %v1052
    %1566 = vmatprep.subr.mxu0 %v1061
    %1567 = vmatpush1.msra.mxu0 %v1060
    %1568 = vmatprep.subr.mxu0 %v1069
    %1569 = vmatpush1.msra.mxu0 %v1068
    %1570 = vmatprep.subr.mxu0 %v1077
    %1571 = vmatpush1.msra.mxu0 %v1076
    %1572 = vmatprep.subr.mxu0 %v1085
    %1573 = vmatpush1.msra.mxu0 %v1084
    %1574 = vmatprep.subr.mxu0 %v1093
    %1575 = vmatpush1.msra.mxu0 %v1092
    %1576 = vmatprep.subr.mxu0 %v1101
    %1577 = vmatpush1.msra.mxu0 %v1100
    %1578 = vmatprep.subr.mxu0 %v1109
    %1579 = vmatpush1.msra.mxu0 %v1108
    %1580 = vmatprep.subr.mxu0 %v1117
    %1581 = vmatpush1.msra.mxu0 %v1116
    %1582 = vmatprep.subr.mxu0 %v1125
    %1583 = vmatpush1.msra.mxu0 %v1124
    %1584 = vmatprep.subr.mxu0 %v1133
    %1585 = vmatpush1.msra.mxu0 %v1132
    %1586 = vmatprep.subr.mxu0 %v1141
    %1587 = vmatpush1.msra.mxu0 %v1140
    %1588 = vmatprep.subr.mxu0 %v1149
    %1589 = vmatpush1.msra.mxu0 %v1148
    %1590 = vmatprep.subr.mxu0 %v1157
    %1591 = vmatpush1.msra.mxu0 %v1156
    %1592 = vmatprep.subr.mxu0 %v1165
    %1593 = vmatpush1.msra.mxu0 %v1164
    %1594 = vmatprep.subr.mxu0 %v1173
    %1595 = vmatpush1.msra.mxu0 %v1172
    %1596 = vmatprep.subr.mxu0 %v1181
    %1597 = vmatpush1.msra.mxu0 %v1180
    %1598 = vmatprep.mubr.f32.mxu0 %v1527
    %1599 = vmatmul.mubr.f32.gmra.mrb[0].mxu0 %v1526
    %v1600 = vpop.f32.mrb[0].mxu0
    %v1601 = vadd.f32 0.0, %v1600
    %v1602 = vpop.f32.mrb[0].mxu0
    %v1603 = vadd.f32 0.0, %v1602
    %1604 = vdwg.mxu0
    %1605 = vmatprep.subr.mxu0 %v935
    %1606 = vmatpush1.msra.mxu0 %v934
    %1607 = vmatprep.subr.mxu0 %v943
    %1608 = vmatpush1.msra.mxu0 %v942
    %1609 = vmatprep.subr.mxu0 %v951
    %1610 = vmatpush1.msra.mxu0 %v950
    %1611 = vmatprep.subr.mxu0 %v959
    %1612 = vmatpush1.msra.mxu0 %v958
    %1613 = vmatprep.subr.mxu0 %v967
    %1614 = vmatpush1.msra.mxu0 %v966
    %1615 = vmatprep.subr.mxu0 %v975
    %1616 = vmatpush1.msra.mxu0 %v974
    %1617 = vmatprep.subr.mxu0 %v983
    %1618 = vmatpush1.msra.mxu0 %v982
    %1619 = vmatprep.subr.mxu0 %v991
    %1620 = vmatpush1.msra.mxu0 %v990
    %1621 = vmatprep.subr.mxu0 %v999
    %1622 = vmatpush1.msra.mxu0 %v998
    %1623 = vmatprep.subr.mxu0 %v1007
    %1624 = vmatpush1.msra.mxu0 %v1006
    %1625 = vmatprep.subr.mxu0 %v1015
    %1626 = vmatpush1.msra.mxu0 %v1014
    %1627 = vmatprep.subr.mxu0 %v1023
    %1628 = vmatpush1.msra.mxu0 %v1022
    %1629 = vmatprep.subr.mxu0 %v1031
    %1630 = vmatpush1.msra.mxu0 %v1030
    %1631 = vmatprep.subr.mxu0 %v1039
    %1632 = vmatpush1.msra.mxu0 %v1038
    %1633 = vmatprep.subr.mxu0 %v1047
    %1634 = vmatpush1.msra.mxu0 %v1046
    %1635 = vmatprep.subr.mxu0 %v1055
    %1636 = vmatpush1.msra.mxu0 %v1054
    %1637 = vmatprep.subr.mxu0 %v1063
    %1638 = vmatpush1.msra.mxu0 %v1062
    %1639 = vmatprep.subr.mxu0 %v1071
    %1640 = vmatpush1.msra.mxu0 %v1070
    %1641 = vmatprep.subr.mxu0 %v1079
    %1642 = vmatpush1.msra.mxu0 %v1078
    %1643 = vmatprep.subr.mxu0 %v1087
    %1644 = vmatpush1.msra.mxu0 %v1086
    %1645 = vmatprep.subr.mxu0 %v1095
    %1646 = vmatpush1.msra.mxu0 %v1094
    %1647 = vmatprep.subr.mxu0 %v1103
    %1648 = vmatpush1.msra.mxu0 %v1102
    %1649 = vmatprep.subr.mxu0 %v1111
    %1650 = vmatpush1.msra.mxu0 %v1110
    %1651 = vmatprep.subr.mxu0 %v1119
    %1652 = vmatpush1.msra.mxu0 %v1118
    %1653 = vmatprep.subr.mxu0 %v1127
    %1654 = vmatpush1.msra.mxu0 %v1126
    %1655 = vmatprep.subr.mxu0 %v1135
    %1656 = vmatpush1.msra.mxu0 %v1134
    %1657 = vmatprep.subr.mxu0 %v1143
    %1658 = vmatpush1.msra.mxu0 %v1142
    %1659 = vmatprep.subr.mxu0 %v1151
    %1660 = vmatpush1.msra.mxu0 %v1150
    %1661 = vmatprep.subr.mxu0 %v1159
    %1662 = vmatpush1.msra.mxu0 %v1158
    %1663 = vmatprep.subr.mxu0 %v1167
    %1664 = vmatpush1.msra.mxu0 %v1166
    %1665 = vmatprep.subr.mxu0 %v1175
    %1666 = vmatpush1.msra.mxu0 %v1174
    %1667 = vmatprep.subr.mxu0 %v1183
    %1668 = vmatpush1.msra.mxu0 %v1182
    %1669 = vmatprep.mubr.f32.mxu0 %v1527
    %1670 = vmatmul.mubr.f32.gmra.mrb[0].mxu0 %v1526
    %v1671 = vpop.f32.mrb[0].mxu0
    %v1672 = vadd.f32 0.0, %v1671
    %v1673 = vpop.f32.mrb[0].mxu0
    %v1674 = vadd.f32 0.0, %v1673
    %1675 = vdwg.mxu0
    %1676 = vmatprep.subr.mxu0 %v937
    %1677 = vmatpush1.msra.mxu0 %v936
    %1678 = vmatprep.subr.mxu0 %v945
    %1679 = vmatpush1.msra.mxu0 %v944
    %1680 = vmatprep.subr.mxu0 %v953
    %1681 = vmatpush1.msra.mxu0 %v952
    %1682 = vmatprep.subr.mxu0 %v961
    %1683 = vmatpush1.msra.mxu0 %v960
    %1684 = vmatprep.subr.mxu0 %v969
    %1685 = vmatpush1.msra.mxu0 %v968
    %1686 = vmatprep.subr.mxu0 %v977
    %1687 = vmatpush1.msra.mxu0 %v976
    %1688 = vmatprep.subr.mxu0 %v985
    %1689 = vmatpush1.msra.mxu0 %v984
    %1690 = vmatprep.subr.mxu0 %v993
    %1691 = vmatpush1.msra.mxu0 %v992
    %1692 = vmatprep.subr.mxu0 %v1001
    %1693 = vmatpush1.msra.mxu0 %v1000
    %1694 = vmatprep.subr.mxu0 %v1009
    %1695 = vmatpush1.msra.mxu0 %v1008
    %1696 = vmatprep.subr.mxu0 %v1017
    %1697 = vmatpush1.msra.mxu0 %v1016
    %1698 = vmatprep.subr.mxu0 %v1025
    %1699 = vmatpush1.msra.mxu0 %v1024
    %1700 = vmatprep.subr.mxu0 %v1033
    %1701 = vmatpush1.msra.mxu0 %v1032
    %1702 = vmatprep.subr.mxu0 %v1041
    %1703 = vmatpush1.msra.mxu0 %v1040
    %1704 = vmatprep.subr.mxu0 %v1049
    %1705 = vmatpush1.msra.mxu0 %v1048
    %1706 = vmatprep.subr.mxu0 %v1057
    %1707 = vmatpush1.msra.mxu0 %v1056
    %1708 = vmatprep.subr.mxu0 %v1065
    %1709 = vmatpush1.msra.mxu0 %v1064
    %1710 = vmatprep.subr.mxu0 %v1073
    %1711 = vmatpush1.msra.mxu0 %v1072
    %1712 = vmatprep.subr.mxu0 %v1081
    %1713 = vmatpush1.msra.mxu0 %v1080
    %1714 = vmatprep.subr.mxu0 %v1089
    %1715 = vmatpush1.msra.mxu0 %v1088
    %1716 = vmatprep.subr.mxu0 %v1097
    %1717 = vmatpush1.msra.mxu0 %v1096
    %1718 = vmatprep.subr.mxu0 %v1105
    %1719 = vmatpush1.msra.mxu0 %v1104
    %1720 = vmatprep.subr.mxu0 %v1113
    %1721 = vmatpush1.msra.mxu0 %v1112
    %1722 = vmatprep.subr.mxu0 %v1121
    %1723 = vmatpush1.msra.mxu0 %v1120
    %1724 = vmatprep.subr.mxu0 %v1129
    %1725 = vmatpush1.msra.mxu0 %v1128
    %1726 = vmatprep.subr.mxu0 %v1137
    %1727 = vmatpush1.msra.mxu0 %v1136
    %1728 = vmatprep.subr.mxu0 %v1145
    %1729 = vmatpush1.msra.mxu0 %v1144
    %1730 = vmatprep.subr.mxu0 %v1153
    %1731 = vmatpush1.msra.mxu0 %v1152
    %1732 = vmatprep.subr.mxu0 %v1161
    %1733 = vmatpush1.msra.mxu0 %v1160
    %1734 = vmatprep.subr.mxu0 %v1169
    %1735 = vmatpush1.msra.mxu0 %v1168
    %1736 = vmatprep.subr.mxu0 %v1177
    %1737 = vmatpush1.msra.mxu0 %v1176
    %1738 = vmatprep.subr.mxu0 %v1185
    %1739 = vmatpush1.msra.mxu0 %v1184
    %1740 = vmatprep.mubr.f32.mxu0 %v1527
    %1741 = vmatmul.mubr.f32.gmra.mrb[0].mxu0 %v1526
    %v1742 = vpop.f32.mrb[0].mxu0
    %v1743 = vadd.f32 0.0, %v1742
    %v1744 = vpop.f32.mrb[0].mxu0
    %v1745 = vadd.f32 0.0, %v1744
    %1746 = vdwg.mxu0
    %1747 = vmatprep.subr.mxu0 %v939
    %1748 = vmatpush1.msra.mxu0 %v938
    %1749 = vmatprep.subr.mxu0 %v947
    %1750 = vmatpush1.msra.mxu0 %v946
    %1751 = vmatprep.subr.mxu0 %v955
    %1752 = vmatpush1.msra.mxu0 %v954
    %1753 = vmatprep.subr.mxu0 %v963
    %1754 = vmatpush1.msra.mxu0 %v962
    %1755 = vmatprep.subr.mxu0 %v971
    %1756 = vmatpush1.msra.mxu0 %v970
    %1757 = vmatprep.subr.mxu0 %v979
    %1758 = vmatpush1.msra.mxu0 %v978
    %1759 = vmatprep.subr.mxu0 %v987
    %1760 = vmatpush1.msra.mxu0 %v986
    %1761 = vmatprep.subr.mxu0 %v995
    %1762 = vmatpush1.msra.mxu0 %v994
    %1763 = vmatprep.subr.mxu0 %v1003
    %1764 = vmatpush1.msra.mxu0 %v1002
    %1765 = vmatprep.subr.mxu0 %v1011
    %1766 = vmatpush1.msra.mxu0 %v1010
    %1767 = vmatprep.subr.mxu0 %v1019
    %1768 = vmatpush1.msra.mxu0 %v1018
    %1769 = vmatprep.subr.mxu0 %v1027
    %1770 = vmatpush1.msra.mxu0 %v1026
    %1771 = vmatprep.subr.mxu0 %v1035
    %1772 = vmatpush1.msra.mxu0 %v1034
    %1773 = vmatprep.subr.mxu0 %v1043
    %1774 = vmatpush1.msra.mxu0 %v1042
    %1775 = vmatprep.subr.mxu0 %v1051
    %1776 = vmatpush1.msra.mxu0 %v1050
    %1777 = vmatprep.subr.mxu0 %v1059
    %1778 = vmatpush1.msra.mxu0 %v1058
    %1779 = vmatprep.subr.mxu0 %v1067
    %1780 = vmatpush1.msra.mxu0 %v1066
    %1781 = vmatprep.subr.mxu0 %v1075
    %1782 = vmatpush1.msra.mxu0 %v1074
    %1783 = vmatprep.subr.mxu0 %v1083
    %1784 = vmatpush1.msra.mxu0 %v1082
    %1785 = vmatprep.subr.mxu0 %v1091
    %1786 = vmatpush1.msra.mxu0 %v1090
    %1787 = vmatprep.subr.mxu0 %v1099
    %1788 = vmatpush1.msra.mxu0 %v1098
    %1789 = vmatprep.subr.mxu0 %v1107
    %1790 = vmatpush1.msra.mxu0 %v1106
    %1791 = vmatprep.subr.mxu0 %v1115
    %1792 = vmatpush1.msra.mxu0 %v1114
    %1793 = vmatprep.subr.mxu0 %v1123
    %1794 = vmatpush1.msra.mxu0 %v1122
    %1795 = vmatprep.subr.mxu0 %v1131
    %1796 = vmatpush1.msra.mxu0 %v1130
    %1797 = vmatprep.subr.mxu0 %v1139
    %1798 = vmatpush1.msra.mxu0 %v1138
    %1799 = vmatprep.subr.mxu0 %v1147
    %1800 = vmatpush1.msra.mxu0 %v1146
    %1801 = vmatprep.subr.mxu0 %v1155
    %1802 = vmatpush1.msra.mxu0 %v1154
    %1803 = vmatprep.subr.mxu0 %v1163
    %1804 = vmatpush1.msra.mxu0 %v1162
    %1805 = vmatprep.subr.mxu0 %v1171
    %1806 = vmatpush1.msra.mxu0 %v1170
    %1807 = vmatprep.subr.mxu0 %v1179
    %1808 = vmatpush1.msra.mxu0 %v1178
    %1809 = vmatprep.subr.mxu0 %v1187
    %1810 = vmatpush1.msra.mxu0 %v1186
    %1811 = vmatprep.mubr.f32.mxu0 %v1527
    %1812 = vmatmul.mubr.f32.gmra.mrb[0].mxu0 %v1526
    %v1813 = vpop.f32.mrb[0].mxu0
    %v1814 = vadd.f32 0.0, %v1813
    %v1815 = vpop.f32.mrb[0].mxu0
    %v1816 = vadd.f32 0.0, %v1815
    %1817 = vdwg.mxu0
    %v1818 = vadd.f32 %v239, %v1601
    %v1819 = vadd.f32 %v241, %v1603
    %v1820 = vadd.f32 %v364, %v1672
    %v1821 = vadd.f32 %v366, %v1674
    %v1822 = vadd.f32 %v489, %v1743
    %v1823 = vadd.f32 %v491, %v1745
    %v1824 = vadd.f32 %v614, %v1814
    %v1825 = vadd.f32 %v616, %v1816
    %v1826 = vxor.u32 %v1818, 2147483648
    %v1827 = vxor.u32 %v1819, 2147483648
    %v1828 = vmul.f32 %v1826, 1.442695
    %v1829 = vpow.pop %v1828
    %v1830 = vmul.f32 %v1827, 1.442695
    %v1831 = vpow.pop %v1830
    %v1832 = vadd.f32 %v1829, 1.0
    %v1833 = vadd.f32 %v1831, 1.0
    %v1834 = vrcp.pop %v1832
    %v1835 = vmul.f32 1.0, %v1834
    %v1836 = vrcp.pop %v1833
    %v1837 = vmul.f32 1.0, %v1836
    %v1838 = vxor.u32 %v1820, 2147483648
    %v1839 = vxor.u32 %v1821, 2147483648
    %v1840 = vmul.f32 %v1838, 1.442695
    %v1841 = vpow.pop %v1840
    %v1842 = vmul.f32 %v1839, 1.442695
    %v1843 = vpow.pop %v1842
    %v1844 = vadd.f32 %v1841, 1.0
    %v1845 = vadd.f32 %v1843, 1.0
    %v1846 = vrcp.pop %v1844
    %v1847 = vmul.f32 1.0, %v1846
    %v1848 = vrcp.pop %v1845
    %v1849 = vmul.f32 1.0, %v1848
    %v1850 = vtanh.pop %v1822
    %v1851 = vtanh.pop %v1823
    %v1852 = vxor.u32 %v1824, 2147483648
    %v1853 = vxor.u32 %v1825, 2147483648
    %v1854 = vmul.f32 %v1852, 1.442695
    %v1855 = vpow.pop %v1854
    %v1856 = vmul.f32 %v1853, 1.442695
    %v1857 = vpow.pop %v1856
    %v1858 = vadd.f32 %v1855, 1.0
    %v1859 = vadd.f32 %v1857, 1.0
    %v1860 = vrcp.pop %v1858
    %v1861 = vmul.f32 1.0, %v1860
    %v1862 = vrcp.pop %v1859
    %v1863 = vmul.f32 1.0, %v1862
    %v1864 = vmul.f32 %v1847, %v1522
    %v1865 = vmul.f32 %v1849, %v1523
    %v1866 = vmul.f32 %v1835, %v1850
    %v1867 = vmul.f32 %v1837, %v1851
    %v1868 = vadd.f32 %v1864, %v1866
    %v1869 = vadd.f32 %v1865, %v1867
    %v1870 = vtanh.pop %v1868
    %v1871 = vtanh.pop %v1869
    %v1872 = vmul.f32 %v1861, %v1870
    %v1873 = vmul.f32 %v1863, %v1871
    %v1874 = vsel %vm926, 1, 8
    %v1875 = vsel %vm927, 1, 8
    %vm1876 = vcmp.eq.s32.totalorder %v931, %v1874
    %vm1877 = vcmp.eq.s32.totalorder %v931, %v1875
    %v1878 = vsel %vm1876, %v1872, %v1532
    %v1879 = vsel %vm1877, %v1873, %v1533
    %1880 = vmatprep.subr.mxu0 %v933
    %1881 = vmatpush1.msra.mxu0 %v932
    %1882 = vmatprep.subr.mxu0 %v941
    %1883 = vmatpush1.msra.mxu0 %v940
    %1884 = vmatprep.subr.mxu0 %v949
    %1885 = vmatpush1.msra.mxu0 %v948
    %1886 = vmatprep.subr.mxu0 %v957
    %1887 = vmatpush1.msra.mxu0 %v956
    %1888 = vmatprep.subr.mxu0 %v965
    %1889 = vmatpush1.msra.mxu0 %v964
    %1890 = vmatprep.subr.mxu0 %v973
    %1891 = vmatpush1.msra.mxu0 %v972
    %1892 = vmatprep.subr.mxu0 %v981
    %1893 = vmatpush1.msra.mxu0 %v980
    %1894 = vmatprep.subr.mxu0 %v989
    %1895 = vmatpush1.msra.mxu0 %v988
    %1896 = vmatprep.subr.mxu0 %v997
    %1897 = vmatpush1.msra.mxu0 %v996
    %1898 = vmatprep.subr.mxu0 %v1005
    %1899 = vmatpush1.msra.mxu0 %v1004
    %1900 = vmatprep.subr.mxu0 %v1013
    %1901 = vmatpush1.msra.mxu0 %v1012
    %1902 = vmatprep.subr.mxu0 %v1021
    %1903 = vmatpush1.msra.mxu0 %v1020
    %1904 = vmatprep.subr.mxu0 %v1029
    %1905 = vmatpush1.msra.mxu0 %v1028
    %1906 = vmatprep.subr.mxu0 %v1037
    %1907 = vmatpush1.msra.mxu0 %v1036
    %1908 = vmatprep.subr.mxu0 %v1045
    %1909 = vmatpush1.msra.mxu0 %v1044
    %1910 = vmatprep.subr.mxu0 %v1053
    %1911 = vmatpush1.msra.mxu0 %v1052
    %1912 = vmatprep.subr.mxu0 %v1061
    %1913 = vmatpush1.msra.mxu0 %v1060
    %1914 = vmatprep.subr.mxu0 %v1069
    %1915 = vmatpush1.msra.mxu0 %v1068
    %1916 = vmatprep.subr.mxu0 %v1077
    %1917 = vmatpush1.msra.mxu0 %v1076
    %1918 = vmatprep.subr.mxu0 %v1085
    %1919 = vmatpush1.msra.mxu0 %v1084
    %1920 = vmatprep.subr.mxu0 %v1093
    %1921 = vmatpush1.msra.mxu0 %v1092
    %1922 = vmatprep.subr.mxu0 %v1101
    %1923 = vmatpush1.msra.mxu0 %v1100
    %1924 = vmatprep.subr.mxu0 %v1109
    %1925 = vmatpush1.msra.mxu0 %v1108
    %1926 = vmatprep.subr.mxu0 %v1117
    %1927 = vmatpush1.msra.mxu0 %v1116
    %1928 = vmatprep.subr.mxu0 %v1125
    %1929 = vmatpush1.msra.mxu0 %v1124
    %1930 = vmatprep.subr.mxu0 %v1133
    %1931 = vmatpush1.msra.mxu0 %v1132
    %1932 = vmatprep.subr.mxu0 %v1141
    %1933 = vmatpush1.msra.mxu0 %v1140
    %1934 = vmatprep.subr.mxu0 %v1149
    %1935 = vmatpush1.msra.mxu0 %v1148
    %1936 = vmatprep.subr.mxu0 %v1157
    %1937 = vmatpush1.msra.mxu0 %v1156
    %1938 = vmatprep.subr.mxu0 %v1165
    %1939 = vmatpush1.msra.mxu0 %v1164
    %1940 = vmatprep.subr.mxu0 %v1173
    %1941 = vmatpush1.msra.mxu0 %v1172
    %1942 = vmatprep.subr.mxu0 %v1181
    %1943 = vmatpush1.msra.mxu0 %v1180
    %1944 = vmatprep.mubr.f32.mxu0 %v1873
    %1945 = vmatmul.mubr.f32.gmra.mrb[0].mxu0 %v1872
    %v1946 = vpop.f32.mrb[0].mxu0
    %v1947 = vadd.f32 0.0, %v1946
    %v1948 = vpop.f32.mrb[0].mxu0
    %v1949 = vadd.f32 0.0, %v1948
    %1950 = vdwg.mxu0
    %1951 = vmatprep.subr.mxu0 %v935
    %1952 = vmatpush1.msra.mxu0 %v934
    %1953 = vmatprep.subr.mxu0 %v943
    %1954 = vmatpush1.msra.mxu0 %v942
    %1955 = vmatprep.subr.mxu0 %v951
    %1956 = vmatpush1.msra.mxu0 %v950
    %1957 = vmatprep.subr.mxu0 %v959
    %1958 = vmatpush1.msra.mxu0 %v958
    %1959 = vmatprep.subr.mxu0 %v967
    %1960 = vmatpush1.msra.mxu0 %v966
    %1961 = vmatprep.subr.mxu0 %v975
    %1962 = vmatpush1.msra.mxu0 %v974
    %1963 = vmatprep.subr.mxu0 %v983
    %1964 = vmatpush1.msra.mxu0 %v982
    %1965 = vmatprep.subr.mxu0 %v991
    %1966 = vmatpush1.msra.mxu0 %v990
    %1967 = vmatprep.subr.mxu0 %v999
    %1968 = vmatpush1.msra.mxu0 %v998
    %1969 = vmatprep.subr.mxu0 %v1007
    %1970 = vmatpush1.msra.mxu0 %v1006
    %1971 = vmatprep.subr.mxu0 %v1015
    %1972 = vmatpush1.msra.mxu0 %v1014
    %1973 = vmatprep.subr.mxu0 %v1023
    %1974 = vmatpush1.msra.mxu0 %v1022
    %1975 = vmatprep.subr.mxu0 %v1031
    %1976 = vmatpush1.msra.mxu0 %v1030
    %1977 = vmatprep.subr.mxu0 %v1039
    %1978 = vmatpush1.msra.mxu0 %v1038
    %1979 = vmatprep.subr.mxu0 %v1047
    %1980 = vmatpush1.msra.mxu0 %v1046
    %1981 = vmatprep.subr.mxu0 %v1055
    %1982 = vmatpush1.msra.mxu0 %v1054
    %1983 = vmatprep.subr.mxu0 %v1063
    %1984 = vmatpush1.msra.mxu0 %v1062
    %1985 = vmatprep.subr.mxu0 %v1071
    %1986 = vmatpush1.msra.mxu0 %v1070
    %1987 = vmatprep.subr.mxu0 %v1079
    %1988 = vmatpush1.msra.mxu0 %v1078
    %1989 = vmatprep.subr.mxu0 %v1087
    %1990 = vmatpush1.msra.mxu0 %v1086
    %1991 = vmatprep.subr.mxu0 %v1095
    %1992 = vmatpush1.msra.mxu0 %v1094
    %1993 = vmatprep.subr.mxu0 %v1103
    %1994 = vmatpush1.msra.mxu0 %v1102
    %1995 = vmatprep.subr.mxu0 %v1111
    %1996 = vmatpush1.msra.mxu0 %v1110
    %1997 = vmatprep.subr.mxu0 %v1119
    %1998 = vmatpush1.msra.mxu0 %v1118
    %1999 = vmatprep.subr.mxu0 %v1127
    %2000 = vmatpush1.msra.mxu0 %v1126
    %2001 = vmatprep.subr.mxu0 %v1135
    %2002 = vmatpush1.msra.mxu0 %v1134
    %2003 = vmatprep.subr.mxu0 %v1143
    %2004 = vmatpush1.msra.mxu0 %v1142
    %2005 = vmatprep.subr.mxu0 %v1151
    %2006 = vmatpush1.msra.mxu0 %v1150
    %2007 = vmatprep.subr.mxu0 %v1159
    %2008 = vmatpush1.msra.mxu0 %v1158
    %2009 = vmatprep.subr.mxu0 %v1167
    %2010 = vmatpush1.msra.mxu0 %v1166
    %2011 = vmatprep.subr.mxu0 %v1175
    %2012 = vmatpush1.msra.mxu0 %v1174
    %2013 = vmatprep.subr.mxu0 %v1183
    %2014 = vmatpush1.msra.mxu0 %v1182
    %2015 = vmatprep.mubr.f32.mxu0 %v1873
    %2016 = vmatmul.mubr.f32.gmra.mrb[0].mxu0 %v1872
    %v2017 = vpop.f32.mrb[0].mxu0
    %v2018 = vadd.f32 0.0, %v2017
    %v2019 = vpop.f32.mrb[0].mxu0
    %v2020 = vadd.f32 0.0, %v2019
    %2021 = vdwg.mxu0
    %2022 = vmatprep.subr.mxu0 %v937
    %2023 = vmatpush1.msra.mxu0 %v936
    %2024 = vmatprep.subr.mxu0 %v945
    %2025 = vmatpush1.msra.mxu0 %v944
    %2026 = vmatprep.subr.mxu0 %v953
    %2027 = vmatpush1.msra.mxu0 %v952
    %2028 = vmatprep.subr.mxu0 %v961
    %2029 = vmatpush1.msra.mxu0 %v960
    %2030 = vmatprep.subr.mxu0 %v969
    %2031 = vmatpush1.msra.mxu0 %v968
    %2032 = vmatprep.subr.mxu0 %v977
    %2033 = vmatpush1.msra.mxu0 %v976
    %2034 = vmatprep.subr.mxu0 %v985
    %2035 = vmatpush1.msra.mxu0 %v984
    %2036 = vmatprep.subr.mxu0 %v993
    %2037 = vmatpush1.msra.mxu0 %v992
    %2038 = vmatprep.subr.mxu0 %v1001
    %2039 = vmatpush1.msra.mxu0 %v1000
    %2040 = vmatprep.subr.mxu0 %v1009
    %2041 = vmatpush1.msra.mxu0 %v1008
    %2042 = vmatprep.subr.mxu0 %v1017
    %2043 = vmatpush1.msra.mxu0 %v1016
    %2044 = vmatprep.subr.mxu0 %v1025
    %2045 = vmatpush1.msra.mxu0 %v1024
    %2046 = vmatprep.subr.mxu0 %v1033
    %2047 = vmatpush1.msra.mxu0 %v1032
    %2048 = vmatprep.subr.mxu0 %v1041
    %2049 = vmatpush1.msra.mxu0 %v1040
    %2050 = vmatprep.subr.mxu0 %v1049
    %2051 = vmatpush1.msra.mxu0 %v1048
    %2052 = vmatprep.subr.mxu0 %v1057
    %2053 = vmatpush1.msra.mxu0 %v1056
    %2054 = vmatprep.subr.mxu0 %v1065
    %2055 = vmatpush1.msra.mxu0 %v1064
    %2056 = vmatprep.subr.mxu0 %v1073
    %2057 = vmatpush1.msra.mxu0 %v1072
    %2058 = vmatprep.subr.mxu0 %v1081
    %2059 = vmatpush1.msra.mxu0 %v1080
    %2060 = vmatprep.subr.mxu0 %v1089
    %2061 = vmatpush1.msra.mxu0 %v1088
    %2062 = vmatprep.subr.mxu0 %v1097
    %2063 = vmatpush1.msra.mxu0 %v1096
    %2064 = vmatprep.subr.mxu0 %v1105
    %2065 = vmatpush1.msra.mxu0 %v1104
    %2066 = vmatprep.subr.mxu0 %v1113
    %2067 = vmatpush1.msra.mxu0 %v1112
    %2068 = vmatprep.subr.mxu0 %v1121
    %2069 = vmatpush1.msra.mxu0 %v1120
    %2070 = vmatprep.subr.mxu0 %v1129
    %2071 = vmatpush1.msra.mxu0 %v1128
    %2072 = vmatprep.subr.mxu0 %v1137
    %2073 = vmatpush1.msra.mxu0 %v1136
    %2074 = vmatprep.subr.mxu0 %v1145
    %2075 = vmatpush1.msra.mxu0 %v1144
    %2076 = vmatprep.subr.mxu0 %v1153
    %2077 = vmatpush1.msra.mxu0 %v1152
    %2078 = vmatprep.subr.mxu0 %v1161
    %2079 = vmatpush1.msra.mxu0 %v1160
    %2080 = vmatprep.subr.mxu0 %v1169
    %2081 = vmatpush1.msra.mxu0 %v1168
    %2082 = vmatprep.subr.mxu0 %v1177
    %2083 = vmatpush1.msra.mxu0 %v1176
    %2084 = vmatprep.subr.mxu0 %v1185
    %2085 = vmatpush1.msra.mxu0 %v1184
    %2086 = vmatprep.mubr.f32.mxu0 %v1873
    %2087 = vmatmul.mubr.f32.gmra.mrb[0].mxu0 %v1872
    %v2088 = vpop.f32.mrb[0].mxu0
    %v2089 = vadd.f32 0.0, %v2088
    %v2090 = vpop.f32.mrb[0].mxu0
    %v2091 = vadd.f32 0.0, %v2090
    %2092 = vdwg.mxu0
    %2093 = vmatprep.subr.mxu0 %v939
    %2094 = vmatpush1.msra.mxu0 %v938
    %2095 = vmatprep.subr.mxu0 %v947
    %2096 = vmatpush1.msra.mxu0 %v946
    %2097 = vmatprep.subr.mxu0 %v955
    %2098 = vmatpush1.msra.mxu0 %v954
    %2099 = vmatprep.subr.mxu0 %v963
    %2100 = vmatpush1.msra.mxu0 %v962
    %2101 = vmatprep.subr.mxu0 %v971
    %2102 = vmatpush1.msra.mxu0 %v970
    %2103 = vmatprep.subr.mxu0 %v979
    %2104 = vmatpush1.msra.mxu0 %v978
    %2105 = vmatprep.subr.mxu0 %v987
    %2106 = vmatpush1.msra.mxu0 %v986
    %2107 = vmatprep.subr.mxu0 %v995
    %2108 = vmatpush1.msra.mxu0 %v994
    %2109 = vmatprep.subr.mxu0 %v1003
    %2110 = vmatpush1.msra.mxu0 %v1002
    %2111 = vmatprep.subr.mxu0 %v1011
    %2112 = vmatpush1.msra.mxu0 %v1010
    %2113 = vmatprep.subr.mxu0 %v1019
    %2114 = vmatpush1.msra.mxu0 %v1018
    %2115 = vmatprep.subr.mxu0 %v1027
    %2116 = vmatpush1.msra.mxu0 %v1026
    %2117 = vmatprep.subr.mxu0 %v1035
    %2118 = vmatpush1.msra.mxu0 %v1034
    %2119 = vmatprep.subr.mxu0 %v1043
    %2120 = vmatpush1.msra.mxu0 %v1042
    %2121 = vmatprep.subr.mxu0 %v1051
    %2122 = vmatpush1.msra.mxu0 %v1050
    %2123 = vmatprep.subr.mxu0 %v1059
    %2124 = vmatpush1.msra.mxu0 %v1058
    %2125 = vmatprep.subr.mxu0 %v1067
    %2126 = vmatpush1.msra.mxu0 %v1066
    %2127 = vmatprep.subr.mxu0 %v1075
    %2128 = vmatpush1.msra.mxu0 %v1074
    %2129 = vmatprep.subr.mxu0 %v1083
    %2130 = vmatpush1.msra.mxu0 %v1082
    %2131 = vmatprep.subr.mxu0 %v1091
    %2132 = vmatpush1.msra.mxu0 %v1090
    %2133 = vmatprep.subr.mxu0 %v1099
    %2134 = vmatpush1.msra.mxu0 %v1098
    %2135 = vmatprep.subr.mxu0 %v1107
    %2136 = vmatpush1.msra.mxu0 %v1106
    %2137 = vmatprep.subr.mxu0 %v1115
    %2138 = vmatpush1.msra.mxu0 %v1114
    %2139 = vmatprep.subr.mxu0 %v1123
    %2140 = vmatpush1.msra.mxu0 %v1122
    %2141 = vmatprep.subr.mxu0 %v1131
    %2142 = vmatpush1.msra.mxu0 %v1130
    %2143 = vmatprep.subr.mxu0 %v1139
    %2144 = vmatpush1.msra.mxu0 %v1138
    %2145 = vmatprep.subr.mxu0 %v1147
    %2146 = vmatpush1.msra.mxu0 %v1146
    %2147 = vmatprep.subr.mxu0 %v1155
    %2148 = vmatpush1.msra.mxu0 %v1154
    %2149 = vmatprep.subr.mxu0 %v1163
    %2150 = vmatpush1.msra.mxu0 %v1162
    %2151 = vmatprep.subr.mxu0 %v1171
    %2152 = vmatpush1.msra.mxu0 %v1170
    %2153 = vmatprep.subr.mxu0 %v1179
    %2154 = vmatpush1.msra.mxu0 %v1178
    %2155 = vmatprep.subr.mxu0 %v1187
    %2156 = vmatpush1.msra.mxu0 %v1186
    %2157 = vmatprep.mubr.f32.mxu0 %v1873
    %2158 = vmatmul.mubr.f32.gmra.mrb[0].mxu0 %v1872
    %v2159 = vpop.f32.mrb[0].mxu0
    %v2160 = vadd.f32 0.0, %v2159
    %v2161 = vpop.f32.mrb[0].mxu0
    %v2162 = vadd.f32 0.0, %v2161
    %2163 = vdwg.mxu0
    %v2164 = vadd.f32 %v245, %v1947
    %v2165 = vadd.f32 %v247, %v1949
    %v2166 = vadd.f32 %v370, %v2018
    %v2167 = vadd.f32 %v372, %v2020
    %v2168 = vadd.f32 %v495, %v2089
    %v2169 = vadd.f32 %v497, %v2091
    %v2170 = vadd.f32 %v620, %v2160
    %v2171 = vadd.f32 %v622, %v2162
    %v2172 = vxor.u32 %v2164, 2147483648
    %v2173 = vxor.u32 %v2165, 2147483648
    %v2174 = vmul.f32 %v2172, 1.442695
    %v2175 = vpow.pop %v2174
    %v2176 = vmul.f32 %v2173, 1.442695
    %v2177 = vpow.pop %v2176
    %v2178 = vadd.f32 %v2175, 1.0
    %v2179 = vadd.f32 %v2177, 1.0
    %v2180 = vrcp.pop %v2178
    %v2181 = vmul.f32 1.0, %v2180
    %v2182 = vrcp.pop %v2179
    %v2183 = vmul.f32 1.0, %v2182
    %v2184 = vxor.u32 %v2166, 2147483648
    %v2185 = vxor.u32 %v2167, 2147483648
    %v2186 = vmul.f32 %v2184, 1.442695
    %v2187 = vpow.pop %v2186
    %v2188 = vmul.f32 %v2185, 1.442695
    %v2189 = vpow.pop %v2188
    %v2190 = vadd.f32 %v2187, 1.0
    %v2191 = vadd.f32 %v2189, 1.0
    %v2192 = vrcp.pop %v2190
    %v2193 = vmul.f32 1.0, %v2192
    %v2194 = vrcp.pop %v2191
    %v2195 = vmul.f32 1.0, %v2194
    %v2196 = vtanh.pop %v2168
    %v2197 = vtanh.pop %v2169
    %v2198 = vxor.u32 %v2170, 2147483648
    %v2199 = vxor.u32 %v2171, 2147483648
    %v2200 = vmul.f32 %v2198, 1.442695
    %v2201 = vpow.pop %v2200
    %v2202 = vmul.f32 %v2199, 1.442695
    %v2203 = vpow.pop %v2202
    %v2204 = vadd.f32 %v2201, 1.0
    %v2205 = vadd.f32 %v2203, 1.0
    %v2206 = vrcp.pop %v2204
    %v2207 = vmul.f32 1.0, %v2206
    %v2208 = vrcp.pop %v2205
    %v2209 = vmul.f32 1.0, %v2208
    %v2210 = vmul.f32 %v2193, %v1868
    %v2211 = vmul.f32 %v2195, %v1869
    %v2212 = vmul.f32 %v2181, %v2196
    %v2213 = vmul.f32 %v2183, %v2197
    %v2214 = vadd.f32 %v2210, %v2212
    %v2215 = vadd.f32 %v2211, %v2213
    %v2216 = vtanh.pop %v2214
    %v2217 = vtanh.pop %v2215
    %v2218 = vmul.f32 %v2207, %v2216
    %v2219 = vmul.f32 %v2209, %v2217
    %v2220 = vsel %vm926, 2, 7
    %v2221 = vsel %vm927, 2, 7
    %vm2222 = vcmp.eq.s32.totalorder %v931, %v2220
    %vm2223 = vcmp.eq.s32.totalorder %v931, %v2221
    %v2224 = vsel %vm2222, %v2218, %v1878
    %v2225 = vsel %vm2223, %v2219, %v1879
    %2226 = vmatprep.subr.mxu0 %v933
    %2227 = vmatpush1.msra.mxu0 %v932
    %2228 = vmatprep.subr.mxu0 %v941
    %2229 = vmatpush1.msra.mxu0 %v940
    %2230 = vmatprep.subr.mxu0 %v949
    %2231 = vmatpush1.msra.mxu0 %v948
    %2232 = vmatprep.subr.mxu0 %v957
    %2233 = vmatpush1.msra.mxu0 %v956
    %2234 = vmatprep.subr.mxu0 %v965
    %2235 = vmatpush1.msra.mxu0 %v964
    %2236 = vmatprep.subr.mxu0 %v973
    %2237 = vmatpush1.msra.mxu0 %v972
    %2238 = vmatprep.subr.mxu0 %v981
    %2239 = vmatpush1.msra.mxu0 %v980
    %2240 = vmatprep.subr.mxu0 %v989
    %2241 = vmatpush1.msra.mxu0 %v988
    %2242 = vmatprep.subr.mxu0 %v997
    %2243 = vmatpush1.msra.mxu0 %v996
    %2244 = vmatprep.subr.mxu0 %v1005
    %2245 = vmatpush1.msra.mxu0 %v1004
    %2246 = vmatprep.subr.mxu0 %v1013
    %2247 = vmatpush1.msra.mxu0 %v1012
    %2248 = vmatprep.subr.mxu0 %v1021
    %2249 = vmatpush1.msra.mxu0 %v1020
    %2250 = vmatprep.subr.mxu0 %v1029
    %2251 = vmatpush1.msra.mxu0 %v1028
    %2252 = vmatprep.subr.mxu0 %v1037
    %2253 = vmatpush1.msra.mxu0 %v1036
    %2254 = vmatprep.subr.mxu0 %v1045
    %2255 = vmatpush1.msra.mxu0 %v1044
    %2256 = vmatprep.subr.mxu0 %v1053
    %2257 = vmatpush1.msra.mxu0 %v1052
    %2258 = vmatprep.subr.mxu0 %v1061
    %2259 = vmatpush1.msra.mxu0 %v1060
    %2260 = vmatprep.subr.mxu0 %v1069
    %2261 = vmatpush1.msra.mxu0 %v1068
    %2262 = vmatprep.subr.mxu0 %v1077
    %2263 = vmatpush1.msra.mxu0 %v1076
    %2264 = vmatprep.subr.mxu0 %v1085
    %2265 = vmatpush1.msra.mxu0 %v1084
    %2266 = vmatprep.subr.mxu0 %v1093
    %2267 = vmatpush1.msra.mxu0 %v1092
    %2268 = vmatprep.subr.mxu0 %v1101
    %2269 = vmatpush1.msra.mxu0 %v1100
    %2270 = vmatprep.subr.mxu0 %v1109
    %2271 = vmatpush1.msra.mxu0 %v1108
    %2272 = vmatprep.subr.mxu0 %v1117
    %2273 = vmatpush1.msra.mxu0 %v1116
    %2274 = vmatprep.subr.mxu0 %v1125
    %2275 = vmatpush1.msra.mxu0 %v1124
    %2276 = vmatprep.subr.mxu0 %v1133
    %2277 = vmatpush1.msra.mxu0 %v1132
    %2278 = vmatprep.subr.mxu0 %v1141
    %2279 = vmatpush1.msra.mxu0 %v1140
    %2280 = vmatprep.subr.mxu0 %v1149
    %2281 = vmatpush1.msra.mxu0 %v1148
    %2282 = vmatprep.subr.mxu0 %v1157
    %2283 = vmatpush1.msra.mxu0 %v1156
    %2284 = vmatprep.subr.mxu0 %v1165
    %2285 = vmatpush1.msra.mxu0 %v1164
    %2286 = vmatprep.subr.mxu0 %v1173
    %2287 = vmatpush1.msra.mxu0 %v1172
    %2288 = vmatprep.subr.mxu0 %v1181
    %2289 = vmatpush1.msra.mxu0 %v1180
    %2290 = vmatprep.mubr.f32.mxu0 %v2219
    %2291 = vmatmul.mubr.f32.gmra.mrb[0].mxu0 %v2218
    %v2292 = vpop.f32.mrb[0].mxu0
    %v2293 = vadd.f32 0.0, %v2292
    %v2294 = vpop.f32.mrb[0].mxu0
    %v2295 = vadd.f32 0.0, %v2294
    %2296 = vdwg.mxu0
    %2297 = vmatprep.subr.mxu0 %v935
    %2298 = vmatpush1.msra.mxu0 %v934
    %2299 = vmatprep.subr.mxu0 %v943
    %2300 = vmatpush1.msra.mxu0 %v942
    %2301 = vmatprep.subr.mxu0 %v951
    %2302 = vmatpush1.msra.mxu0 %v950
    %2303 = vmatprep.subr.mxu0 %v959
    %2304 = vmatpush1.msra.mxu0 %v958
    %2305 = vmatprep.subr.mxu0 %v967
    %2306 = vmatpush1.msra.mxu0 %v966
    %2307 = vmatprep.subr.mxu0 %v975
    %2308 = vmatpush1.msra.mxu0 %v974
    %2309 = vmatprep.subr.mxu0 %v983
    %2310 = vmatpush1.msra.mxu0 %v982
    %2311 = vmatprep.subr.mxu0 %v991
    %2312 = vmatpush1.msra.mxu0 %v990
    %2313 = vmatprep.subr.mxu0 %v999
    %2314 = vmatpush1.msra.mxu0 %v998
    %2315 = vmatprep.subr.mxu0 %v1007
    %2316 = vmatpush1.msra.mxu0 %v1006
    %2317 = vmatprep.subr.mxu0 %v1015
    %2318 = vmatpush1.msra.mxu0 %v1014
    %2319 = vmatprep.subr.mxu0 %v1023
    %2320 = vmatpush1.msra.mxu0 %v1022
    %2321 = vmatprep.subr.mxu0 %v1031
    %2322 = vmatpush1.msra.mxu0 %v1030
    %2323 = vmatprep.subr.mxu0 %v1039
    %2324 = vmatpush1.msra.mxu0 %v1038
    %2325 = vmatprep.subr.mxu0 %v1047
    %2326 = vmatpush1.msra.mxu0 %v1046
    %2327 = vmatprep.subr.mxu0 %v1055
    %2328 = vmatpush1.msra.mxu0 %v1054
    %2329 = vmatprep.subr.mxu0 %v1063
    %2330 = vmatpush1.msra.mxu0 %v1062
    %2331 = vmatprep.subr.mxu0 %v1071
    %2332 = vmatpush1.msra.mxu0 %v1070
    %2333 = vmatprep.subr.mxu0 %v1079
    %2334 = vmatpush1.msra.mxu0 %v1078
    %2335 = vmatprep.subr.mxu0 %v1087
    %2336 = vmatpush1.msra.mxu0 %v1086
    %2337 = vmatprep.subr.mxu0 %v1095
    %2338 = vmatpush1.msra.mxu0 %v1094
    %2339 = vmatprep.subr.mxu0 %v1103
    %2340 = vmatpush1.msra.mxu0 %v1102
    %2341 = vmatprep.subr.mxu0 %v1111
    %2342 = vmatpush1.msra.mxu0 %v1110
    %2343 = vmatprep.subr.mxu0 %v1119
    %2344 = vmatpush1.msra.mxu0 %v1118
    %2345 = vmatprep.subr.mxu0 %v1127
    %2346 = vmatpush1.msra.mxu0 %v1126
    %2347 = vmatprep.subr.mxu0 %v1135
    %2348 = vmatpush1.msra.mxu0 %v1134
    %2349 = vmatprep.subr.mxu0 %v1143
    %2350 = vmatpush1.msra.mxu0 %v1142
    %2351 = vmatprep.subr.mxu0 %v1151
    %2352 = vmatpush1.msra.mxu0 %v1150
    %2353 = vmatprep.subr.mxu0 %v1159
    %2354 = vmatpush1.msra.mxu0 %v1158
    %2355 = vmatprep.subr.mxu0 %v1167
    %2356 = vmatpush1.msra.mxu0 %v1166
    %2357 = vmatprep.subr.mxu0 %v1175
    %2358 = vmatpush1.msra.mxu0 %v1174
    %2359 = vmatprep.subr.mxu0 %v1183
    %2360 = vmatpush1.msra.mxu0 %v1182
    %2361 = vmatprep.mubr.f32.mxu0 %v2219
    %2362 = vmatmul.mubr.f32.gmra.mrb[0].mxu0 %v2218
    %v2363 = vpop.f32.mrb[0].mxu0
    %v2364 = vadd.f32 0.0, %v2363
    %v2365 = vpop.f32.mrb[0].mxu0
    %v2366 = vadd.f32 0.0, %v2365
    %2367 = vdwg.mxu0
    %2368 = vmatprep.subr.mxu0 %v937
    %2369 = vmatpush1.msra.mxu0 %v936
    %2370 = vmatprep.subr.mxu0 %v945
    %2371 = vmatpush1.msra.mxu0 %v944
    %2372 = vmatprep.subr.mxu0 %v953
    %2373 = vmatpush1.msra.mxu0 %v952
    %2374 = vmatprep.subr.mxu0 %v961
    %2375 = vmatpush1.msra.mxu0 %v960
    %2376 = vmatprep.subr.mxu0 %v969
    %2377 = vmatpush1.msra.mxu0 %v968
    %2378 = vmatprep.subr.mxu0 %v977
    %2379 = vmatpush1.msra.mxu0 %v976
    %2380 = vmatprep.subr.mxu0 %v985
    %2381 = vmatpush1.msra.mxu0 %v984
    %2382 = vmatprep.subr.mxu0 %v993
    %2383 = vmatpush1.msra.mxu0 %v992
    %2384 = vmatprep.subr.mxu0 %v1001
    %2385 = vmatpush1.msra.mxu0 %v1000
    %2386 = vmatprep.subr.mxu0 %v1009
    %2387 = vmatpush1.msra.mxu0 %v1008
    %2388 = vmatprep.subr.mxu0 %v1017
    %2389 = vmatpush1.msra.mxu0 %v1016
    %2390 = vmatprep.subr.mxu0 %v1025
    %2391 = vmatpush1.msra.mxu0 %v1024
    %2392 = vmatprep.subr.mxu0 %v1033
    %2393 = vmatpush1.msra.mxu0 %v1032
    %2394 = vmatprep.subr.mxu0 %v1041
    %2395 = vmatpush1.msra.mxu0 %v1040
    %2396 = vmatprep.subr.mxu0 %v1049
    %2397 = vmatpush1.msra.mxu0 %v1048
    %2398 = vmatprep.subr.mxu0 %v1057
    %2399 = vmatpush1.msra.mxu0 %v1056
    %2400 = vmatprep.subr.mxu0 %v1065
    %2401 = vmatpush1.msra.mxu0 %v1064
    %2402 = vmatprep.subr.mxu0 %v1073
    %2403 = vmatpush1.msra.mxu0 %v1072
    %2404 = vmatprep.subr.mxu0 %v1081
    %2405 = vmatpush1.msra.mxu0 %v1080
    %2406 = vmatprep.subr.mxu0 %v1089
    %2407 = vmatpush1.msra.mxu0 %v1088
    %2408 = vmatprep.subr.mxu0 %v1097
    %2409 = vmatpush1.msra.mxu0 %v1096
    %2410 = vmatprep.subr.mxu0 %v1105
    %2411 = vmatpush1.msra.mxu0 %v1104
    %2412 = vmatprep.subr.mxu0 %v1113
    %2413 = vmatpush1.msra.mxu0 %v1112
    %2414 = vmatprep.subr.mxu0 %v1121
    %2415 = vmatpush1.msra.mxu0 %v1120
    %2416 = vmatprep.subr.mxu0 %v1129
    %2417 = vmatpush1.msra.mxu0 %v1128
    %2418 = vmatprep.subr.mxu0 %v1137
    %2419 = vmatpush1.msra.mxu0 %v1136
    %2420 = vmatprep.subr.mxu0 %v1145
    %2421 = vmatpush1.msra.mxu0 %v1144
    %2422 = vmatprep.subr.mxu0 %v1153
    %2423 = vmatpush1.msra.mxu0 %v1152
    %2424 = vmatprep.subr.mxu0 %v1161
    %2425 = vmatpush1.msra.mxu0 %v1160
    %2426 = vmatprep.subr.mxu0 %v1169
    %2427 = vmatpush1.msra.mxu0 %v1168
    %2428 = vmatprep.subr.mxu0 %v1177
    %2429 = vmatpush1.msra.mxu0 %v1176
    %2430 = vmatprep.subr.mxu0 %v1185
    %2431 = vmatpush1.msra.mxu0 %v1184
    %2432 = vmatprep.mubr.f32.mxu0 %v2219
    %2433 = vmatmul.mubr.f32.gmra.mrb[0].mxu0 %v2218
    %v2434 = vpop.f32.mrb[0].mxu0
    %v2435 = vadd.f32 0.0, %v2434
    %v2436 = vpop.f32.mrb[0].mxu0
    %v2437 = vadd.f32 0.0, %v2436
    %2438 = vdwg.mxu0
    %2439 = vmatprep.subr.mxu0 %v939
    %2440 = vmatpush1.msra.mxu0 %v938
    %2441 = vmatprep.subr.mxu0 %v947
    %2442 = vmatpush1.msra.mxu0 %v946
    %2443 = vmatprep.subr.mxu0 %v955
    %2444 = vmatpush1.msra.mxu0 %v954
    %2445 = vmatprep.subr.mxu0 %v963
    %2446 = vmatpush1.msra.mxu0 %v962
    %2447 = vmatprep.subr.mxu0 %v971
    %2448 = vmatpush1.msra.mxu0 %v970
    %2449 = vmatprep.subr.mxu0 %v979
    %2450 = vmatpush1.msra.mxu0 %v978
    %2451 = vmatprep.subr.mxu0 %v987
    %2452 = vmatpush1.msra.mxu0 %v986
    %2453 = vmatprep.subr.mxu0 %v995
    %2454 = vmatpush1.msra.mxu0 %v994
    %2455 = vmatprep.subr.mxu0 %v1003
    %2456 = vmatpush1.msra.mxu0 %v1002
    %2457 = vmatprep.subr.mxu0 %v1011
    %2458 = vmatpush1.msra.mxu0 %v1010
    %2459 = vmatprep.subr.mxu0 %v1019
    %2460 = vmatpush1.msra.mxu0 %v1018
    %2461 = vmatprep.subr.mxu0 %v1027
    %2462 = vmatpush1.msra.mxu0 %v1026
    %2463 = vmatprep.subr.mxu0 %v1035
    %2464 = vmatpush1.msra.mxu0 %v1034
    %2465 = vmatprep.subr.mxu0 %v1043
    %2466 = vmatpush1.msra.mxu0 %v1042
    %2467 = vmatprep.subr.mxu0 %v1051
    %2468 = vmatpush1.msra.mxu0 %v1050
    %2469 = vmatprep.subr.mxu0 %v1059
    %2470 = vmatpush1.msra.mxu0 %v1058
    %2471 = vmatprep.subr.mxu0 %v1067
    %2472 = vmatpush1.msra.mxu0 %v1066
    %2473 = vmatprep.subr.mxu0 %v1075
    %2474 = vmatpush1.msra.mxu0 %v1074
    %2475 = vmatprep.subr.mxu0 %v1083
    %2476 = vmatpush1.msra.mxu0 %v1082
    %2477 = vmatprep.subr.mxu0 %v1091
    %2478 = vmatpush1.msra.mxu0 %v1090
    %2479 = vmatprep.subr.mxu0 %v1099
    %2480 = vmatpush1.msra.mxu0 %v1098
    %2481 = vmatprep.subr.mxu0 %v1107
    %2482 = vmatpush1.msra.mxu0 %v1106
    %2483 = vmatprep.subr.mxu0 %v1115
    %2484 = vmatpush1.msra.mxu0 %v1114
    %2485 = vmatprep.subr.mxu0 %v1123
    %2486 = vmatpush1.msra.mxu0 %v1122
    %2487 = vmatprep.subr.mxu0 %v1131
    %2488 = vmatpush1.msra.mxu0 %v1130
    %2489 = vmatprep.subr.mxu0 %v1139
    %2490 = vmatpush1.msra.mxu0 %v1138
    %2491 = vmatprep.subr.mxu0 %v1147
    %2492 = vmatpush1.msra.mxu0 %v1146
    %2493 = vmatprep.subr.mxu0 %v1155
    %2494 = vmatpush1.msra.mxu0 %v1154
    %2495 = vmatprep.subr.mxu0 %v1163
    %2496 = vmatpush1.msra.mxu0 %v1162
    %2497 = vmatprep.subr.mxu0 %v1171
    %2498 = vmatpush1.msra.mxu0 %v1170
    %2499 = vmatprep.subr.mxu0 %v1179
    %2500 = vmatpush1.msra.mxu0 %v1178
    %2501 = vmatprep.subr.mxu0 %v1187
    %2502 = vmatpush1.msra.mxu0 %v1186
    %2503 = vmatprep.mubr.f32.mxu0 %v2219
    %2504 = vmatmul.mubr.f32.gmra.mrb[0].mxu0 %v2218
    %v2505 = vpop.f32.mrb[0].mxu0
    %v2506 = vadd.f32 0.0, %v2505
    %v2507 = vpop.f32.mrb[0].mxu0
    %v2508 = vadd.f32 0.0, %v2507
    %2509 = vdwg.mxu0
    %v2510 = vadd.f32 %v251, %v2293
    %v2511 = vadd.f32 %v253, %v2295
    %v2512 = vadd.f32 %v376, %v2364
    %v2513 = vadd.f32 %v378, %v2366
    %v2514 = vadd.f32 %v501, %v2435
    %v2515 = vadd.f32 %v503, %v2437
    %v2516 = vadd.f32 %v626, %v2506
    %v2517 = vadd.f32 %v628, %v2508
    %v2518 = vxor.u32 %v2510, 2147483648
    %v2519 = vxor.u32 %v2511, 2147483648
    %v2520 = vmul.f32 %v2518, 1.442695
    %v2521 = vpow.pop %v2520
    %v2522 = vmul.f32 %v2519, 1.442695
    %v2523 = vpow.pop %v2522
    %v2524 = vadd.f32 %v2521, 1.0
    %v2525 = vadd.f32 %v2523, 1.0
    %v2526 = vrcp.pop %v2524
    %v2527 = vmul.f32 1.0, %v2526
    %v2528 = vrcp.pop %v2525
    %v2529 = vmul.f32 1.0, %v2528
    %v2530 = vxor.u32 %v2512, 2147483648
    %v2531 = vxor.u32 %v2513, 2147483648
    %v2532 = vmul.f32 %v2530, 1.442695
    %v2533 = vpow.pop %v2532
    %v2534 = vmul.f32 %v2531, 1.442695
    %v2535 = vpow.pop %v2534
    %v2536 = vadd.f32 %v2533, 1.0
    %v2537 = vadd.f32 %v2535, 1.0
    %v2538 = vrcp.pop %v2536
    %v2539 = vmul.f32 1.0, %v2538
    %v2540 = vrcp.pop %v2537
    %v2541 = vmul.f32 1.0, %v2540
    %v2542 = vtanh.pop %v2514
    %v2543 = vtanh.pop %v2515
    %v2544 = vxor.u32 %v2516, 2147483648
    %v2545 = vxor.u32 %v2517, 2147483648
    %v2546 = vmul.f32 %v2544, 1.442695
    %v2547 = vpow.pop %v2546
    %v2548 = vmul.f32 %v2545, 1.442695
    %v2549 = vpow.pop %v2548
    %v2550 = vadd.f32 %v2547, 1.0
    %v2551 = vadd.f32 %v2549, 1.0
    %v2552 = vrcp.pop %v2550
    %v2553 = vmul.f32 1.0, %v2552
    %v2554 = vrcp.pop %v2551
    %v2555 = vmul.f32 1.0, %v2554
    %v2556 = vmul.f32 %v2539, %v2214
    %v2557 = vmul.f32 %v2541, %v2215
    %v2558 = vmul.f32 %v2527, %v2542
    %v2559 = vmul.f32 %v2529, %v2543
    %v2560 = vadd.f32 %v2556, %v2558
    %v2561 = vadd.f32 %v2557, %v2559
    %v2562 = vtanh.pop %v2560
    %v2563 = vtanh.pop %v2561
    %v2564 = vmul.f32 %v2553, %v2562
    %v2565 = vmul.f32 %v2555, %v2563
    %v2566 = vsel %vm926, 3, 6
    %v2567 = vsel %vm927, 3, 6
    %vm2568 = vcmp.eq.s32.totalorder %v931, %v2566
    %vm2569 = vcmp.eq.s32.totalorder %v931, %v2567
    %v2570 = vsel %vm2568, %v2564, %v2224
    %v2571 = vsel %vm2569, %v2565, %v2225
    %2572 = vmatprep.subr.mxu0 %v933
    %2573 = vmatpush1.msra.mxu0 %v932
    %2574 = vmatprep.subr.mxu0 %v941
    %2575 = vmatpush1.msra.mxu0 %v940
    %2576 = vmatprep.subr.mxu0 %v949
    %2577 = vmatpush1.msra.mxu0 %v948
    %2578 = vmatprep.subr.mxu0 %v957
    %2579 = vmatpush1.msra.mxu0 %v956
    %2580 = vmatprep.subr.mxu0 %v965
    %2581 = vmatpush1.msra.mxu0 %v964
    %2582 = vmatprep.subr.mxu0 %v973
    %2583 = vmatpush1.msra.mxu0 %v972
    %2584 = vmatprep.subr.mxu0 %v981
    %2585 = vmatpush1.msra.mxu0 %v980
    %2586 = vmatprep.subr.mxu0 %v989
    %2587 = vmatpush1.msra.mxu0 %v988
    %2588 = vmatprep.subr.mxu0 %v997
    %2589 = vmatpush1.msra.mxu0 %v996
    %2590 = vmatprep.subr.mxu0 %v1005
    %2591 = vmatpush1.msra.mxu0 %v1004
    %2592 = vmatprep.subr.mxu0 %v1013
    %2593 = vmatpush1.msra.mxu0 %v1012
    %2594 = vmatprep.subr.mxu0 %v1021
    %2595 = vmatpush1.msra.mxu0 %v1020
    %2596 = vmatprep.subr.mxu0 %v1029
    %2597 = vmatpush1.msra.mxu0 %v1028
    %2598 = vmatprep.subr.mxu0 %v1037
    %2599 = vmatpush1.msra.mxu0 %v1036
    %2600 = vmatprep.subr.mxu0 %v1045
    %2601 = vmatpush1.msra.mxu0 %v1044
    %2602 = vmatprep.subr.mxu0 %v1053
    %2603 = vmatpush1.msra.mxu0 %v1052
    %2604 = vmatprep.subr.mxu0 %v1061
    %2605 = vmatpush1.msra.mxu0 %v1060
    %2606 = vmatprep.subr.mxu0 %v1069
    %2607 = vmatpush1.msra.mxu0 %v1068
    %2608 = vmatprep.subr.mxu0 %v1077
    %2609 = vmatpush1.msra.mxu0 %v1076
    %2610 = vmatprep.subr.mxu0 %v1085
    %2611 = vmatpush1.msra.mxu0 %v1084
    %2612 = vmatprep.subr.mxu0 %v1093
    %2613 = vmatpush1.msra.mxu0 %v1092
    %2614 = vmatprep.subr.mxu0 %v1101
    %2615 = vmatpush1.msra.mxu0 %v1100
    %2616 = vmatprep.subr.mxu0 %v1109
    %2617 = vmatpush1.msra.mxu0 %v1108
    %2618 = vmatprep.subr.mxu0 %v1117
    %2619 = vmatpush1.msra.mxu0 %v1116
    %2620 = vmatprep.subr.mxu0 %v1125
    %2621 = vmatpush1.msra.mxu0 %v1124
    %2622 = vmatprep.subr.mxu0 %v1133
    %2623 = vmatpush1.msra.mxu0 %v1132
    %2624 = vmatprep.subr.mxu0 %v1141
    %2625 = vmatpush1.msra.mxu0 %v1140
    %2626 = vmatprep.subr.mxu0 %v1149
    %2627 = vmatpush1.msra.mxu0 %v1148
    %2628 = vmatprep.subr.mxu0 %v1157
    %2629 = vmatpush1.msra.mxu0 %v1156
    %2630 = vmatprep.subr.mxu0 %v1165
    %2631 = vmatpush1.msra.mxu0 %v1164
    %2632 = vmatprep.subr.mxu0 %v1173
    %2633 = vmatpush1.msra.mxu0 %v1172
    %2634 = vmatprep.subr.mxu0 %v1181
    %2635 = vmatpush1.msra.mxu0 %v1180
    %2636 = vmatprep.mubr.f32.mxu0 %v2565
    %2637 = vmatmul.mubr.f32.gmra.mrb[0].mxu0 %v2564
    %v2638 = vpop.f32.mrb[0].mxu0
    %v2639 = vadd.f32 0.0, %v2638
    %v2640 = vpop.f32.mrb[0].mxu0
    %v2641 = vadd.f32 0.0, %v2640
    %2642 = vdwg.mxu0
    %2643 = vmatprep.subr.mxu0 %v935
    %2644 = vmatpush1.msra.mxu0 %v934
    %2645 = vmatprep.subr.mxu0 %v943
    %2646 = vmatpush1.msra.mxu0 %v942
    %2647 = vmatprep.subr.mxu0 %v951
    %2648 = vmatpush1.msra.mxu0 %v950
    %2649 = vmatprep.subr.mxu0 %v959
    %2650 = vmatpush1.msra.mxu0 %v958
    %2651 = vmatprep.subr.mxu0 %v967
    %2652 = vmatpush1.msra.mxu0 %v966
    %2653 = vmatprep.subr.mxu0 %v975
    %2654 = vmatpush1.msra.mxu0 %v974
    %2655 = vmatprep.subr.mxu0 %v983
    %2656 = vmatpush1.msra.mxu0 %v982
    %2657 = vmatprep.subr.mxu0 %v991
    %2658 = vmatpush1.msra.mxu0 %v990
    %2659 = vmatprep.subr.mxu0 %v999
    %2660 = vmatpush1.msra.mxu0 %v998
    %2661 = vmatprep.subr.mxu0 %v1007
    %2662 = vmatpush1.msra.mxu0 %v1006
    %2663 = vmatprep.subr.mxu0 %v1015
    %2664 = vmatpush1.msra.mxu0 %v1014
    %2665 = vmatprep.subr.mxu0 %v1023
    %2666 = vmatpush1.msra.mxu0 %v1022
    %2667 = vmatprep.subr.mxu0 %v1031
    %2668 = vmatpush1.msra.mxu0 %v1030
    %2669 = vmatprep.subr.mxu0 %v1039
    %2670 = vmatpush1.msra.mxu0 %v1038
    %2671 = vmatprep.subr.mxu0 %v1047
    %2672 = vmatpush1.msra.mxu0 %v1046
    %2673 = vmatprep.subr.mxu0 %v1055
    %2674 = vmatpush1.msra.mxu0 %v1054
    %2675 = vmatprep.subr.mxu0 %v1063
    %2676 = vmatpush1.msra.mxu0 %v1062
    %2677 = vmatprep.subr.mxu0 %v1071
    %2678 = vmatpush1.msra.mxu0 %v1070
    %2679 = vmatprep.subr.mxu0 %v1079
    %2680 = vmatpush1.msra.mxu0 %v1078
    %2681 = vmatprep.subr.mxu0 %v1087
    %2682 = vmatpush1.msra.mxu0 %v1086
    %2683 = vmatprep.subr.mxu0 %v1095
    %2684 = vmatpush1.msra.mxu0 %v1094
    %2685 = vmatprep.subr.mxu0 %v1103
    %2686 = vmatpush1.msra.mxu0 %v1102
    %2687 = vmatprep.subr.mxu0 %v1111
    %2688 = vmatpush1.msra.mxu0 %v1110
    %2689 = vmatprep.subr.mxu0 %v1119
    %2690 = vmatpush1.msra.mxu0 %v1118
    %2691 = vmatprep.subr.mxu0 %v1127
    %2692 = vmatpush1.msra.mxu0 %v1126
    %2693 = vmatprep.subr.mxu0 %v1135
    %2694 = vmatpush1.msra.mxu0 %v1134
    %2695 = vmatprep.subr.mxu0 %v1143
    %2696 = vmatpush1.msra.mxu0 %v1142
    %2697 = vmatprep.subr.mxu0 %v1151
    %2698 = vmatpush1.msra.mxu0 %v1150
    %2699 = vmatprep.subr.mxu0 %v1159
    %2700 = vmatpush1.msra.mxu0 %v1158
    %2701 = vmatprep.subr.mxu0 %v1167
    %2702 = vmatpush1.msra.mxu0 %v1166
    %2703 = vmatprep.subr.mxu0 %v1175
    %2704 = vmatpush1.msra.mxu0 %v1174
    %2705 = vmatprep.subr.mxu0 %v1183
    %2706 = vmatpush1.msra.mxu0 %v1182
    %2707 = vmatprep.mubr.f32.mxu0 %v2565
    %2708 = vmatmul.mubr.f32.gmra.mrb[0].mxu0 %v2564
    %v2709 = vpop.f32.mrb[0].mxu0
    %v2710 = vadd.f32 0.0, %v2709
    %v2711 = vpop.f32.mrb[0].mxu0
    %v2712 = vadd.f32 0.0, %v2711
    %2713 = vdwg.mxu0
    %2714 = vmatprep.subr.mxu0 %v937
    %2715 = vmatpush1.msra.mxu0 %v936
    %2716 = vmatprep.subr.mxu0 %v945
    %2717 = vmatpush1.msra.mxu0 %v944
    %2718 = vmatprep.subr.mxu0 %v953
    %2719 = vmatpush1.msra.mxu0 %v952
    %2720 = vmatprep.subr.mxu0 %v961
    %2721 = vmatpush1.msra.mxu0 %v960
    %2722 = vmatprep.subr.mxu0 %v969
    %2723 = vmatpush1.msra.mxu0 %v968
    %2724 = vmatprep.subr.mxu0 %v977
    %2725 = vmatpush1.msra.mxu0 %v976
    %2726 = vmatprep.subr.mxu0 %v985
    %2727 = vmatpush1.msra.mxu0 %v984
    %2728 = vmatprep.subr.mxu0 %v993
    %2729 = vmatpush1.msra.mxu0 %v992
    %2730 = vmatprep.subr.mxu0 %v1001
    %2731 = vmatpush1.msra.mxu0 %v1000
    %2732 = vmatprep.subr.mxu0 %v1009
    %2733 = vmatpush1.msra.mxu0 %v1008
    %2734 = vmatprep.subr.mxu0 %v1017
    %2735 = vmatpush1.msra.mxu0 %v1016
    %2736 = vmatprep.subr.mxu0 %v1025
    %2737 = vmatpush1.msra.mxu0 %v1024
    %2738 = vmatprep.subr.mxu0 %v1033
    %2739 = vmatpush1.msra.mxu0 %v1032
    %2740 = vmatprep.subr.mxu0 %v1041
    %2741 = vmatpush1.msra.mxu0 %v1040
    %2742 = vmatprep.subr.mxu0 %v1049
    %2743 = vmatpush1.msra.mxu0 %v1048
    %2744 = vmatprep.subr.mxu0 %v1057
    %2745 = vmatpush1.msra.mxu0 %v1056
    %2746 = vmatprep.subr.mxu0 %v1065
    %2747 = vmatpush1.msra.mxu0 %v1064
    %2748 = vmatprep.subr.mxu0 %v1073
    %2749 = vmatpush1.msra.mxu0 %v1072
    %2750 = vmatprep.subr.mxu0 %v1081
    %2751 = vmatpush1.msra.mxu0 %v1080
    %2752 = vmatprep.subr.mxu0 %v1089
    %2753 = vmatpush1.msra.mxu0 %v1088
    %2754 = vmatprep.subr.mxu0 %v1097
    %2755 = vmatpush1.msra.mxu0 %v1096
    %2756 = vmatprep.subr.mxu0 %v1105
    %2757 = vmatpush1.msra.mxu0 %v1104
    %2758 = vmatprep.subr.mxu0 %v1113
    %2759 = vmatpush1.msra.mxu0 %v1112
    %2760 = vmatprep.subr.mxu0 %v1121
    %2761 = vmatpush1.msra.mxu0 %v1120
    %2762 = vmatprep.subr.mxu0 %v1129
    %2763 = vmatpush1.msra.mxu0 %v1128
    %2764 = vmatprep.subr.mxu0 %v1137
    %2765 = vmatpush1.msra.mxu0 %v1136
    %2766 = vmatprep.subr.mxu0 %v1145
    %2767 = vmatpush1.msra.mxu0 %v1144
    %2768 = vmatprep.subr.mxu0 %v1153
    %2769 = vmatpush1.msra.mxu0 %v1152
    %2770 = vmatprep.subr.mxu0 %v1161
    %2771 = vmatpush1.msra.mxu0 %v1160
    %2772 = vmatprep.subr.mxu0 %v1169
    %2773 = vmatpush1.msra.mxu0 %v1168
    %2774 = vmatprep.subr.mxu0 %v1177
    %2775 = vmatpush1.msra.mxu0 %v1176
    %2776 = vmatprep.subr.mxu0 %v1185
    %2777 = vmatpush1.msra.mxu0 %v1184
    %2778 = vmatprep.mubr.f32.mxu0 %v2565
    %2779 = vmatmul.mubr.f32.gmra.mrb[0].mxu0 %v2564
    %v2780 = vpop.f32.mrb[0].mxu0
    %v2781 = vadd.f32 0.0, %v2780
    %v2782 = vpop.f32.mrb[0].mxu0
    %v2783 = vadd.f32 0.0, %v2782
    %2784 = vdwg.mxu0
    %2785 = vmatprep.subr.mxu0 %v939
    %2786 = vmatpush1.msra.mxu0 %v938
    %2787 = vmatprep.subr.mxu0 %v947
    %2788 = vmatpush1.msra.mxu0 %v946
    %2789 = vmatprep.subr.mxu0 %v955
    %2790 = vmatpush1.msra.mxu0 %v954
    %2791 = vmatprep.subr.mxu0 %v963
    %2792 = vmatpush1.msra.mxu0 %v962
    %2793 = vmatprep.subr.mxu0 %v971
    %2794 = vmatpush1.msra.mxu0 %v970
    %2795 = vmatprep.subr.mxu0 %v979
    %2796 = vmatpush1.msra.mxu0 %v978
    %2797 = vmatprep.subr.mxu0 %v987
    %2798 = vmatpush1.msra.mxu0 %v986
    %2799 = vmatprep.subr.mxu0 %v995
    %2800 = vmatpush1.msra.mxu0 %v994
    %2801 = vmatprep.subr.mxu0 %v1003
    %2802 = vmatpush1.msra.mxu0 %v1002
    %2803 = vmatprep.subr.mxu0 %v1011
    %2804 = vmatpush1.msra.mxu0 %v1010
    %2805 = vmatprep.subr.mxu0 %v1019
    %2806 = vmatpush1.msra.mxu0 %v1018
    %2807 = vmatprep.subr.mxu0 %v1027
    %2808 = vmatpush1.msra.mxu0 %v1026
    %2809 = vmatprep.subr.mxu0 %v1035
    %2810 = vmatpush1.msra.mxu0 %v1034
    %2811 = vmatprep.subr.mxu0 %v1043
    %2812 = vmatpush1.msra.mxu0 %v1042
    %2813 = vmatprep.subr.mxu0 %v1051
    %2814 = vmatpush1.msra.mxu0 %v1050
    %2815 = vmatprep.subr.mxu0 %v1059
    %2816 = vmatpush1.msra.mxu0 %v1058
    %2817 = vmatprep.subr.mxu0 %v1067
    %2818 = vmatpush1.msra.mxu0 %v1066
    %2819 = vmatprep.subr.mxu0 %v1075
    %2820 = vmatpush1.msra.mxu0 %v1074
    %2821 = vmatprep.subr.mxu0 %v1083
    %2822 = vmatpush1.msra.mxu0 %v1082
    %2823 = vmatprep.subr.mxu0 %v1091
    %2824 = vmatpush1.msra.mxu0 %v1090
    %2825 = vmatprep.subr.mxu0 %v1099
    %2826 = vmatpush1.msra.mxu0 %v1098
    %2827 = vmatprep.subr.mxu0 %v1107
    %2828 = vmatpush1.msra.mxu0 %v1106
    %2829 = vmatprep.subr.mxu0 %v1115
    %2830 = vmatpush1.msra.mxu0 %v1114
    %2831 = vmatprep.subr.mxu0 %v1123
    %2832 = vmatpush1.msra.mxu0 %v1122
    %2833 = vmatprep.subr.mxu0 %v1131
    %2834 = vmatpush1.msra.mxu0 %v1130
    %2835 = vmatprep.subr.mxu0 %v1139
    %2836 = vmatpush1.msra.mxu0 %v1138
    %2837 = vmatprep.subr.mxu0 %v1147
    %2838 = vmatpush1.msra.mxu0 %v1146
    %2839 = vmatprep.subr.mxu0 %v1155
    %2840 = vmatpush1.msra.mxu0 %v1154
    %2841 = vmatprep.subr.mxu0 %v1163
    %2842 = vmatpush1.msra.mxu0 %v1162
    %2843 = vmatprep.subr.mxu0 %v1171
    %2844 = vmatpush1.msra.mxu0 %v1170
    %2845 = vmatprep.subr.mxu0 %v1179
    %2846 = vmatpush1.msra.mxu0 %v1178
    %2847 = vmatprep.subr.mxu0 %v1187
    %2848 = vmatpush1.msra.mxu0 %v1186
    %2849 = vmatprep.mubr.f32.mxu0 %v2565
    %2850 = vmatmul.mubr.f32.gmra.mrb[0].mxu0 %v2564
    %v2851 = vpop.f32.mrb[0].mxu0
    %v2852 = vadd.f32 0.0, %v2851
    %v2853 = vpop.f32.mrb[0].mxu0
    %v2854 = vadd.f32 0.0, %v2853
    %2855 = vdwg.mxu0
    %v2856 = vadd.f32 %v257, %v2639
    %v2857 = vadd.f32 %v259, %v2641
    %v2858 = vadd.f32 %v382, %v2710
    %v2859 = vadd.f32 %v384, %v2712
    %v2860 = vadd.f32 %v507, %v2781
    %v2861 = vadd.f32 %v509, %v2783
    %v2862 = vadd.f32 %v632, %v2852
    %v2863 = vadd.f32 %v634, %v2854
    %v2864 = vxor.u32 %v2856, 2147483648
    %v2865 = vxor.u32 %v2857, 2147483648
    %v2866 = vmul.f32 %v2864, 1.442695
    %v2867 = vpow.pop %v2866
    %v2868 = vmul.f32 %v2865, 1.442695
    %v2869 = vpow.pop %v2868
    %v2870 = vadd.f32 %v2867, 1.0
    %v2871 = vadd.f32 %v2869, 1.0
    %v2872 = vrcp.pop %v2870
    %v2873 = vmul.f32 1.0, %v2872
    %v2874 = vrcp.pop %v2871
    %v2875 = vmul.f32 1.0, %v2874
    %v2876 = vxor.u32 %v2858, 2147483648
    %v2877 = vxor.u32 %v2859, 2147483648
    %v2878 = vmul.f32 %v2876, 1.442695
    %v2879 = vpow.pop %v2878
    %v2880 = vmul.f32 %v2877, 1.442695
    %v2881 = vpow.pop %v2880
    %v2882 = vadd.f32 %v2879, 1.0
    %v2883 = vadd.f32 %v2881, 1.0
    %v2884 = vrcp.pop %v2882
    %v2885 = vmul.f32 1.0, %v2884
    %v2886 = vrcp.pop %v2883
    %v2887 = vmul.f32 1.0, %v2886
    %v2888 = vtanh.pop %v2860
    %v2889 = vtanh.pop %v2861
    %v2890 = vxor.u32 %v2862, 2147483648
    %v2891 = vxor.u32 %v2863, 2147483648
    %v2892 = vmul.f32 %v2890, 1.442695
    %v2893 = vpow.pop %v2892
    %v2894 = vmul.f32 %v2891, 1.442695
    %v2895 = vpow.pop %v2894
    %v2896 = vadd.f32 %v2893, 1.0
    %v2897 = vadd.f32 %v2895, 1.0
    %v2898 = vrcp.pop %v2896
    %v2899 = vmul.f32 1.0, %v2898
    %v2900 = vrcp.pop %v2897
    %v2901 = vmul.f32 1.0, %v2900
    %v2902 = vmul.f32 %v2885, %v2560
    %v2903 = vmul.f32 %v2887, %v2561
    %v2904 = vmul.f32 %v2873, %v2888
    %v2905 = vmul.f32 %v2875, %v2889
    %v2906 = vadd.f32 %v2902, %v2904
    %v2907 = vadd.f32 %v2903, %v2905
    %v2908 = vtanh.pop %v2906
    %v2909 = vtanh.pop %v2907
    %v2910 = vmul.f32 %v2899, %v2908
    %v2911 = vmul.f32 %v2901, %v2909
    %v2912 = vsel %vm926, 4, 5
    %v2913 = vsel %vm927, 4, 5
    %vm2914 = vcmp.eq.s32.totalorder %v931, %v2912
    %vm2915 = vcmp.eq.s32.totalorder %v931, %v2913
    %v2916 = vsel %vm2914, %v2910, %v2570
    %v2917 = vsel %vm2915, %v2911, %v2571
    %2918 = vmatprep.subr.mxu0 %v933
    %2919 = vmatpush1.msra.mxu0 %v932
    %2920 = vmatprep.subr.mxu0 %v941
    %2921 = vmatpush1.msra.mxu0 %v940
    %2922 = vmatprep.subr.mxu0 %v949
    %2923 = vmatpush1.msra.mxu0 %v948
    %2924 = vmatprep.subr.mxu0 %v957
    %2925 = vmatpush1.msra.mxu0 %v956
    %2926 = vmatprep.subr.mxu0 %v965
    %2927 = vmatpush1.msra.mxu0 %v964
    %2928 = vmatprep.subr.mxu0 %v973
    %2929 = vmatpush1.msra.mxu0 %v972
    %2930 = vmatprep.subr.mxu0 %v981
    %2931 = vmatpush1.msra.mxu0 %v980
    %2932 = vmatprep.subr.mxu0 %v989
    %2933 = vmatpush1.msra.mxu0 %v988
    %2934 = vmatprep.subr.mxu0 %v997
    %2935 = vmatpush1.msra.mxu0 %v996
    %2936 = vmatprep.subr.mxu0 %v1005
    %2937 = vmatpush1.msra.mxu0 %v1004
    %2938 = vmatprep.subr.mxu0 %v1013
    %2939 = vmatpush1.msra.mxu0 %v1012
    %2940 = vmatprep.subr.mxu0 %v1021
    %2941 = vmatpush1.msra.mxu0 %v1020
    %2942 = vmatprep.subr.mxu0 %v1029
    %2943 = vmatpush1.msra.mxu0 %v1028
    %2944 = vmatprep.subr.mxu0 %v1037
    %2945 = vmatpush1.msra.mxu0 %v1036
    %2946 = vmatprep.subr.mxu0 %v1045
    %2947 = vmatpush1.msra.mxu0 %v1044
    %2948 = vmatprep.subr.mxu0 %v1053
    %2949 = vmatpush1.msra.mxu0 %v1052
    %2950 = vmatprep.subr.mxu0 %v1061
    %2951 = vmatpush1.msra.mxu0 %v1060
    %2952 = vmatprep.subr.mxu0 %v1069
    %2953 = vmatpush1.msra.mxu0 %v1068
    %2954 = vmatprep.subr.mxu0 %v1077
    %2955 = vmatpush1.msra.mxu0 %v1076
    %2956 = vmatprep.subr.mxu0 %v1085
    %2957 = vmatpush1.msra.mxu0 %v1084
    %2958 = vmatprep.subr.mxu0 %v1093
    %2959 = vmatpush1.msra.mxu0 %v1092
    %2960 = vmatprep.subr.mxu0 %v1101
    %2961 = vmatpush1.msra.mxu0 %v1100
    %2962 = vmatprep.subr.mxu0 %v1109
    %2963 = vmatpush1.msra.mxu0 %v1108
    %2964 = vmatprep.subr.mxu0 %v1117
    %2965 = vmatpush1.msra.mxu0 %v1116
    %2966 = vmatprep.subr.mxu0 %v1125
    %2967 = vmatpush1.msra.mxu0 %v1124
    %2968 = vmatprep.subr.mxu0 %v1133
    %2969 = vmatpush1.msra.mxu0 %v1132
    %2970 = vmatprep.subr.mxu0 %v1141
    %2971 = vmatpush1.msra.mxu0 %v1140
    %2972 = vmatprep.subr.mxu0 %v1149
    %2973 = vmatpush1.msra.mxu0 %v1148
    %2974 = vmatprep.subr.mxu0 %v1157
    %2975 = vmatpush1.msra.mxu0 %v1156
    %2976 = vmatprep.subr.mxu0 %v1165
    %2977 = vmatpush1.msra.mxu0 %v1164
    %2978 = vmatprep.subr.mxu0 %v1173
    %2979 = vmatpush1.msra.mxu0 %v1172
    %2980 = vmatprep.subr.mxu0 %v1181
    %2981 = vmatpush1.msra.mxu0 %v1180
    %2982 = vmatprep.mubr.f32.mxu0 %v2911
    %2983 = vmatmul.mubr.f32.gmra.mrb[0].mxu0 %v2910
    %v2984 = vpop.f32.mrb[0].mxu0
    %v2985 = vadd.f32 0.0, %v2984
    %v2986 = vpop.f32.mrb[0].mxu0
    %v2987 = vadd.f32 0.0, %v2986
    %2988 = vdwg.mxu0
    %2989 = vmatprep.subr.mxu0 %v935
    %2990 = vmatpush1.msra.mxu0 %v934
    %2991 = vmatprep.subr.mxu0 %v943
    %2992 = vmatpush1.msra.mxu0 %v942
    %2993 = vmatprep.subr.mxu0 %v951
    %2994 = vmatpush1.msra.mxu0 %v950
    %2995 = vmatprep.subr.mxu0 %v959
    %2996 = vmatpush1.msra.mxu0 %v958
    %2997 = vmatprep.subr.mxu0 %v967
    %2998 = vmatpush1.msra.mxu0 %v966
    %2999 = vmatprep.subr.mxu0 %v975
    %3000 = vmatpush1.msra.mxu0 %v974
    %3001 = vmatprep.subr.mxu0 %v983
    %3002 = vmatpush1.msra.mxu0 %v982
    %3003 = vmatprep.subr.mxu0 %v991
    %3004 = vmatpush1.msra.mxu0 %v990
    %3005 = vmatprep.subr.mxu0 %v999
    %3006 = vmatpush1.msra.mxu0 %v998
    %3007 = vmatprep.subr.mxu0 %v1007
    %3008 = vmatpush1.msra.mxu0 %v1006
    %3009 = vmatprep.subr.mxu0 %v1015
    %3010 = vmatpush1.msra.mxu0 %v1014
    %3011 = vmatprep.subr.mxu0 %v1023
    %3012 = vmatpush1.msra.mxu0 %v1022
    %3013 = vmatprep.subr.mxu0 %v1031
    %3014 = vmatpush1.msra.mxu0 %v1030
    %3015 = vmatprep.subr.mxu0 %v1039
    %3016 = vmatpush1.msra.mxu0 %v1038
    %3017 = vmatprep.subr.mxu0 %v1047
    %3018 = vmatpush1.msra.mxu0 %v1046
    %3019 = vmatprep.subr.mxu0 %v1055
    %3020 = vmatpush1.msra.mxu0 %v1054
    %3021 = vmatprep.subr.mxu0 %v1063
    %3022 = vmatpush1.msra.mxu0 %v1062
    %3023 = vmatprep.subr.mxu0 %v1071
    %3024 = vmatpush1.msra.mxu0 %v1070
    %3025 = vmatprep.subr.mxu0 %v1079
    %3026 = vmatpush1.msra.mxu0 %v1078
    %3027 = vmatprep.subr.mxu0 %v1087
    %3028 = vmatpush1.msra.mxu0 %v1086
    %3029 = vmatprep.subr.mxu0 %v1095
    %3030 = vmatpush1.msra.mxu0 %v1094
    %3031 = vmatprep.subr.mxu0 %v1103
    %3032 = vmatpush1.msra.mxu0 %v1102
    %3033 = vmatprep.subr.mxu0 %v1111
    %3034 = vmatpush1.msra.mxu0 %v1110
    %3035 = vmatprep.subr.mxu0 %v1119
    %3036 = vmatpush1.msra.mxu0 %v1118
    %3037 = vmatprep.subr.mxu0 %v1127
    %3038 = vmatpush1.msra.mxu0 %v1126
    %3039 = vmatprep.subr.mxu0 %v1135
    %3040 = vmatpush1.msra.mxu0 %v1134
    %3041 = vmatprep.subr.mxu0 %v1143
    %3042 = vmatpush1.msra.mxu0 %v1142
    %3043 = vmatprep.subr.mxu0 %v1151
    %3044 = vmatpush1.msra.mxu0 %v1150
    %3045 = vmatprep.subr.mxu0 %v1159
    %3046 = vmatpush1.msra.mxu0 %v1158
    %3047 = vmatprep.subr.mxu0 %v1167
    %3048 = vmatpush1.msra.mxu0 %v1166
    %3049 = vmatprep.subr.mxu0 %v1175
    %3050 = vmatpush1.msra.mxu0 %v1174
    %3051 = vmatprep.subr.mxu0 %v1183
    %3052 = vmatpush1.msra.mxu0 %v1182
    %3053 = vmatprep.mubr.f32.mxu0 %v2911
    %3054 = vmatmul.mubr.f32.gmra.mrb[0].mxu0 %v2910
    %v3055 = vpop.f32.mrb[0].mxu0
    %v3056 = vadd.f32 0.0, %v3055
    %v3057 = vpop.f32.mrb[0].mxu0
    %v3058 = vadd.f32 0.0, %v3057
    %3059 = vdwg.mxu0
    %3060 = vmatprep.subr.mxu0 %v937
    %3061 = vmatpush1.msra.mxu0 %v936
    %3062 = vmatprep.subr.mxu0 %v945
    %3063 = vmatpush1.msra.mxu0 %v944
    %3064 = vmatprep.subr.mxu0 %v953
    %3065 = vmatpush1.msra.mxu0 %v952
    %3066 = vmatprep.subr.mxu0 %v961
    %3067 = vmatpush1.msra.mxu0 %v960
    %3068 = vmatprep.subr.mxu0 %v969
    %3069 = vmatpush1.msra.mxu0 %v968
    %3070 = vmatprep.subr.mxu0 %v977
    %3071 = vmatpush1.msra.mxu0 %v976
    %3072 = vmatprep.subr.mxu0 %v985
    %3073 = vmatpush1.msra.mxu0 %v984
    %3074 = vmatprep.subr.mxu0 %v993
    %3075 = vmatpush1.msra.mxu0 %v992
    %3076 = vmatprep.subr.mxu0 %v1001
    %3077 = vmatpush1.msra.mxu0 %v1000
    %3078 = vmatprep.subr.mxu0 %v1009
    %3079 = vmatpush1.msra.mxu0 %v1008
    %3080 = vmatprep.subr.mxu0 %v1017
    %3081 = vmatpush1.msra.mxu0 %v1016
    %3082 = vmatprep.subr.mxu0 %v1025
    %3083 = vmatpush1.msra.mxu0 %v1024
    %3084 = vmatprep.subr.mxu0 %v1033
    %3085 = vmatpush1.msra.mxu0 %v1032
    %3086 = vmatprep.subr.mxu0 %v1041
    %3087 = vmatpush1.msra.mxu0 %v1040
    %3088 = vmatprep.subr.mxu0 %v1049
    %3089 = vmatpush1.msra.mxu0 %v1048
    %3090 = vmatprep.subr.mxu0 %v1057
    %3091 = vmatpush1.msra.mxu0 %v1056
    %3092 = vmatprep.subr.mxu0 %v1065
    %3093 = vmatpush1.msra.mxu0 %v1064
    %3094 = vmatprep.subr.mxu0 %v1073
    %3095 = vmatpush1.msra.mxu0 %v1072
    %3096 = vmatprep.subr.mxu0 %v1081
    %3097 = vmatpush1.msra.mxu0 %v1080
    %3098 = vmatprep.subr.mxu0 %v1089
    %3099 = vmatpush1.msra.mxu0 %v1088
    %3100 = vmatprep.subr.mxu0 %v1097
    %3101 = vmatpush1.msra.mxu0 %v1096
    %3102 = vmatprep.subr.mxu0 %v1105
    %3103 = vmatpush1.msra.mxu0 %v1104
    %3104 = vmatprep.subr.mxu0 %v1113
    %3105 = vmatpush1.msra.mxu0 %v1112
    %3106 = vmatprep.subr.mxu0 %v1121
    %3107 = vmatpush1.msra.mxu0 %v1120
    %3108 = vmatprep.subr.mxu0 %v1129
    %3109 = vmatpush1.msra.mxu0 %v1128
    %3110 = vmatprep.subr.mxu0 %v1137
    %3111 = vmatpush1.msra.mxu0 %v1136
    %3112 = vmatprep.subr.mxu0 %v1145
    %3113 = vmatpush1.msra.mxu0 %v1144
    %3114 = vmatprep.subr.mxu0 %v1153
    %3115 = vmatpush1.msra.mxu0 %v1152
    %3116 = vmatprep.subr.mxu0 %v1161
    %3117 = vmatpush1.msra.mxu0 %v1160
    %3118 = vmatprep.subr.mxu0 %v1169
    %3119 = vmatpush1.msra.mxu0 %v1168
    %3120 = vmatprep.subr.mxu0 %v1177
    %3121 = vmatpush1.msra.mxu0 %v1176
    %3122 = vmatprep.subr.mxu0 %v1185
    %3123 = vmatpush1.msra.mxu0 %v1184
    %3124 = vmatprep.mubr.f32.mxu0 %v2911
    %3125 = vmatmul.mubr.f32.gmra.mrb[0].mxu0 %v2910
    %v3126 = vpop.f32.mrb[0].mxu0
    %v3127 = vadd.f32 0.0, %v3126
    %v3128 = vpop.f32.mrb[0].mxu0
    %v3129 = vadd.f32 0.0, %v3128
    %3130 = vdwg.mxu0
    %3131 = vmatprep.subr.mxu0 %v939
    %3132 = vmatpush1.msra.mxu0 %v938
    %3133 = vmatprep.subr.mxu0 %v947
    %3134 = vmatpush1.msra.mxu0 %v946
    %3135 = vmatprep.subr.mxu0 %v955
    %3136 = vmatpush1.msra.mxu0 %v954
    %3137 = vmatprep.subr.mxu0 %v963
    %3138 = vmatpush1.msra.mxu0 %v962
    %3139 = vmatprep.subr.mxu0 %v971
    %3140 = vmatpush1.msra.mxu0 %v970
    %3141 = vmatprep.subr.mxu0 %v979
    %3142 = vmatpush1.msra.mxu0 %v978
    %3143 = vmatprep.subr.mxu0 %v987
    %3144 = vmatpush1.msra.mxu0 %v986
    %3145 = vmatprep.subr.mxu0 %v995
    %3146 = vmatpush1.msra.mxu0 %v994
    %3147 = vmatprep.subr.mxu0 %v1003
    %3148 = vmatpush1.msra.mxu0 %v1002
    %3149 = vmatprep.subr.mxu0 %v1011
    %3150 = vmatpush1.msra.mxu0 %v1010
    %3151 = vmatprep.subr.mxu0 %v1019
    %3152 = vmatpush1.msra.mxu0 %v1018
    %3153 = vmatprep.subr.mxu0 %v1027
    %3154 = vmatpush1.msra.mxu0 %v1026
    %3155 = vmatprep.subr.mxu0 %v1035
    %3156 = vmatpush1.msra.mxu0 %v1034
    %3157 = vmatprep.subr.mxu0 %v1043
    %3158 = vmatpush1.msra.mxu0 %v1042
    %3159 = vmatprep.subr.mxu0 %v1051
    %3160 = vmatpush1.msra.mxu0 %v1050
    %3161 = vmatprep.subr.mxu0 %v1059
    %3162 = vmatpush1.msra.mxu0 %v1058
    %3163 = vmatprep.subr.mxu0 %v1067
    %3164 = vmatpush1.msra.mxu0 %v1066
    %3165 = vmatprep.subr.mxu0 %v1075
    %3166 = vmatpush1.msra.mxu0 %v1074
    %3167 = vmatprep.subr.mxu0 %v1083
    %3168 = vmatpush1.msra.mxu0 %v1082
    %3169 = vmatprep.subr.mxu0 %v1091
    %3170 = vmatpush1.msra.mxu0 %v1090
    %3171 = vmatprep.subr.mxu0 %v1099
    %3172 = vmatpush1.msra.mxu0 %v1098
    %3173 = vmatprep.subr.mxu0 %v1107
    %3174 = vmatpush1.msra.mxu0 %v1106
    %3175 = vmatprep.subr.mxu0 %v1115
    %3176 = vmatpush1.msra.mxu0 %v1114
    %3177 = vmatprep.subr.mxu0 %v1123
    %3178 = vmatpush1.msra.mxu0 %v1122
    %3179 = vmatprep.subr.mxu0 %v1131
    %3180 = vmatpush1.msra.mxu0 %v1130
    %3181 = vmatprep.subr.mxu0 %v1139
    %3182 = vmatpush1.msra.mxu0 %v1138
    %3183 = vmatprep.subr.mxu0 %v1147
    %3184 = vmatpush1.msra.mxu0 %v1146
    %3185 = vmatprep.subr.mxu0 %v1155
    %3186 = vmatpush1.msra.mxu0 %v1154
    %3187 = vmatprep.subr.mxu0 %v1163
    %3188 = vmatpush1.msra.mxu0 %v1162
    %3189 = vmatprep.subr.mxu0 %v1171
    %3190 = vmatpush1.msra.mxu0 %v1170
    %3191 = vmatprep.subr.mxu0 %v1179
    %3192 = vmatpush1.msra.mxu0 %v1178
    %3193 = vmatprep.subr.mxu0 %v1187
    %3194 = vmatpush1.msra.mxu0 %v1186
    %3195 = vmatprep.mubr.f32.mxu0 %v2911
    %3196 = vmatmul.mubr.f32.gmra.mrb[0].mxu0 %v2910
    %v3197 = vpop.f32.mrb[0].mxu0
    %v3198 = vadd.f32 0.0, %v3197
    %v3199 = vpop.f32.mrb[0].mxu0
    %v3200 = vadd.f32 0.0, %v3199
    %3201 = vdwg.mxu0
    %v3202 = vadd.f32 %v263, %v2985
    %v3203 = vadd.f32 %v265, %v2987
    %v3204 = vadd.f32 %v388, %v3056
    %v3205 = vadd.f32 %v390, %v3058
    %v3206 = vadd.f32 %v513, %v3127
    %v3207 = vadd.f32 %v515, %v3129
    %v3208 = vadd.f32 %v638, %v3198
    %v3209 = vadd.f32 %v640, %v3200
    %v3210 = vxor.u32 %v3202, 2147483648
    %v3211 = vxor.u32 %v3203, 2147483648
    %v3212 = vmul.f32 %v3210, 1.442695
    %v3213 = vpow.pop %v3212
    %v3214 = vmul.f32 %v3211, 1.442695
    %v3215 = vpow.pop %v3214
    %v3216 = vadd.f32 %v3213, 1.0
    %v3217 = vadd.f32 %v3215, 1.0
    %v3218 = vrcp.pop %v3216
    %v3219 = vmul.f32 1.0, %v3218
    %v3220 = vrcp.pop %v3217
    %v3221 = vmul.f32 1.0, %v3220
    %v3222 = vxor.u32 %v3204, 2147483648
    %v3223 = vxor.u32 %v3205, 2147483648
    %v3224 = vmul.f32 %v3222, 1.442695
    %v3225 = vpow.pop %v3224
    %v3226 = vmul.f32 %v3223, 1.442695
    %v3227 = vpow.pop %v3226
    %v3228 = vadd.f32 %v3225, 1.0
    %v3229 = vadd.f32 %v3227, 1.0
    %v3230 = vrcp.pop %v3228
    %v3231 = vmul.f32 1.0, %v3230
    %v3232 = vrcp.pop %v3229
    %v3233 = vmul.f32 1.0, %v3232
    %v3234 = vtanh.pop %v3206
    %v3235 = vtanh.pop %v3207
    %v3236 = vxor.u32 %v3208, 2147483648
    %v3237 = vxor.u32 %v3209, 2147483648
    %v3238 = vmul.f32 %v3236, 1.442695
    %v3239 = vpow.pop %v3238
    %v3240 = vmul.f32 %v3237, 1.442695
    %v3241 = vpow.pop %v3240
    %v3242 = vadd.f32 %v3239, 1.0
    %v3243 = vadd.f32 %v3241, 1.0
    %v3244 = vrcp.pop %v3242
    %v3245 = vmul.f32 1.0, %v3244
    %v3246 = vrcp.pop %v3243
    %v3247 = vmul.f32 1.0, %v3246
    %v3248 = vmul.f32 %v3231, %v2906
    %v3249 = vmul.f32 %v3233, %v2907
    %v3250 = vmul.f32 %v3219, %v3234
    %v3251 = vmul.f32 %v3221, %v3235
    %v3252 = vadd.f32 %v3248, %v3250
    %v3253 = vadd.f32 %v3249, %v3251
    %v3254 = vtanh.pop %v3252
    %v3255 = vtanh.pop %v3253
    %v3256 = vmul.f32 %v3245, %v3254
    %v3257 = vmul.f32 %v3247, %v3255
    %v3258 = vsel %vm926, 5, 4
    %v3259 = vsel %vm927, 5, 4
    %vm3260 = vcmp.eq.s32.totalorder %v931, %v3258
    %vm3261 = vcmp.eq.s32.totalorder %v931, %v3259
    %v3262 = vsel %vm3260, %v3256, %v2916
    %v3263 = vsel %vm3261, %v3257, %v2917
    %3264 = vmatprep.subr.mxu0 %v933
    %3265 = vmatpush1.msra.mxu0 %v932
    %3266 = vmatprep.subr.mxu0 %v941
    %3267 = vmatpush1.msra.mxu0 %v940
    %3268 = vmatprep.subr.mxu0 %v949
    %3269 = vmatpush1.msra.mxu0 %v948
    %3270 = vmatprep.subr.mxu0 %v957
    %3271 = vmatpush1.msra.mxu0 %v956
    %3272 = vmatprep.subr.mxu0 %v965
    %3273 = vmatpush1.msra.mxu0 %v964
    %3274 = vmatprep.subr.mxu0 %v973
    %3275 = vmatpush1.msra.mxu0 %v972
    %3276 = vmatprep.subr.mxu0 %v981
    %3277 = vmatpush1.msra.mxu0 %v980
    %3278 = vmatprep.subr.mxu0 %v989
    %3279 = vmatpush1.msra.mxu0 %v988
    %3280 = vmatprep.subr.mxu0 %v997
    %3281 = vmatpush1.msra.mxu0 %v996
    %3282 = vmatprep.subr.mxu0 %v1005
    %3283 = vmatpush1.msra.mxu0 %v1004
    %3284 = vmatprep.subr.mxu0 %v1013
    %3285 = vmatpush1.msra.mxu0 %v1012
    %3286 = vmatprep.subr.mxu0 %v1021
    %3287 = vmatpush1.msra.mxu0 %v1020
    %3288 = vmatprep.subr.mxu0 %v1029
    %3289 = vmatpush1.msra.mxu0 %v1028
    %3290 = vmatprep.subr.mxu0 %v1037
    %3291 = vmatpush1.msra.mxu0 %v1036
    %3292 = vmatprep.subr.mxu0 %v1045
    %3293 = vmatpush1.msra.mxu0 %v1044
    %3294 = vmatprep.subr.mxu0 %v1053
    %3295 = vmatpush1.msra.mxu0 %v1052
    %3296 = vmatprep.subr.mxu0 %v1061
    %3297 = vmatpush1.msra.mxu0 %v1060
    %3298 = vmatprep.subr.mxu0 %v1069
    %3299 = vmatpush1.msra.mxu0 %v1068
    %3300 = vmatprep.subr.mxu0 %v1077
    %3301 = vmatpush1.msra.mxu0 %v1076
    %3302 = vmatprep.subr.mxu0 %v1085
    %3303 = vmatpush1.msra.mxu0 %v1084
    %3304 = vmatprep.subr.mxu0 %v1093
    %3305 = vmatpush1.msra.mxu0 %v1092
    %3306 = vmatprep.subr.mxu0 %v1101
    %3307 = vmatpush1.msra.mxu0 %v1100
    %3308 = vmatprep.subr.mxu0 %v1109
    %3309 = vmatpush1.msra.mxu0 %v1108
    %3310 = vmatprep.subr.mxu0 %v1117
    %3311 = vmatpush1.msra.mxu0 %v1116
    %3312 = vmatprep.subr.mxu0 %v1125
    %3313 = vmatpush1.msra.mxu0 %v1124
    %3314 = vmatprep.subr.mxu0 %v1133
    %3315 = vmatpush1.msra.mxu0 %v1132
    %3316 = vmatprep.subr.mxu0 %v1141
    %3317 = vmatpush1.msra.mxu0 %v1140
    %3318 = vmatprep.subr.mxu0 %v1149
    %3319 = vmatpush1.msra.mxu0 %v1148
    %3320 = vmatprep.subr.mxu0 %v1157
    %3321 = vmatpush1.msra.mxu0 %v1156
    %3322 = vmatprep.subr.mxu0 %v1165
    %3323 = vmatpush1.msra.mxu0 %v1164
    %3324 = vmatprep.subr.mxu0 %v1173
    %3325 = vmatpush1.msra.mxu0 %v1172
    %3326 = vmatprep.subr.mxu0 %v1181
    %3327 = vmatpush1.msra.mxu0 %v1180
    %3328 = vmatprep.mubr.f32.mxu0 %v3257
    %3329 = vmatmul.mubr.f32.gmra.mrb[0].mxu0 %v3256
    %v3330 = vpop.f32.mrb[0].mxu0
    %v3331 = vadd.f32 0.0, %v3330
    %v3332 = vpop.f32.mrb[0].mxu0
    %v3333 = vadd.f32 0.0, %v3332
    %3334 = vdwg.mxu0
    %3335 = vmatprep.subr.mxu0 %v935
    %3336 = vmatpush1.msra.mxu0 %v934
    %3337 = vmatprep.subr.mxu0 %v943
    %3338 = vmatpush1.msra.mxu0 %v942
    %3339 = vmatprep.subr.mxu0 %v951
    %3340 = vmatpush1.msra.mxu0 %v950
    %3341 = vmatprep.subr.mxu0 %v959
    %3342 = vmatpush1.msra.mxu0 %v958
    %3343 = vmatprep.subr.mxu0 %v967
    %3344 = vmatpush1.msra.mxu0 %v966
    %3345 = vmatprep.subr.mxu0 %v975
    %3346 = vmatpush1.msra.mxu0 %v974
    %3347 = vmatprep.subr.mxu0 %v983
    %3348 = vmatpush1.msra.mxu0 %v982
    %3349 = vmatprep.subr.mxu0 %v991
    %3350 = vmatpush1.msra.mxu0 %v990
    %3351 = vmatprep.subr.mxu0 %v999
    %3352 = vmatpush1.msra.mxu0 %v998
    %3353 = vmatprep.subr.mxu0 %v1007
    %3354 = vmatpush1.msra.mxu0 %v1006
    %3355 = vmatprep.subr.mxu0 %v1015
    %3356 = vmatpush1.msra.mxu0 %v1014
    %3357 = vmatprep.subr.mxu0 %v1023
    %3358 = vmatpush1.msra.mxu0 %v1022
    %3359 = vmatprep.subr.mxu0 %v1031
    %3360 = vmatpush1.msra.mxu0 %v1030
    %3361 = vmatprep.subr.mxu0 %v1039
    %3362 = vmatpush1.msra.mxu0 %v1038
    %3363 = vmatprep.subr.mxu0 %v1047
    %3364 = vmatpush1.msra.mxu0 %v1046
    %3365 = vmatprep.subr.mxu0 %v1055
    %3366 = vmatpush1.msra.mxu0 %v1054
    %3367 = vmatprep.subr.mxu0 %v1063
    %3368 = vmatpush1.msra.mxu0 %v1062
    %3369 = vmatprep.subr.mxu0 %v1071
    %3370 = vmatpush1.msra.mxu0 %v1070
    %3371 = vmatprep.subr.mxu0 %v1079
    %3372 = vmatpush1.msra.mxu0 %v1078
    %3373 = vmatprep.subr.mxu0 %v1087
    %3374 = vmatpush1.msra.mxu0 %v1086
    %3375 = vmatprep.subr.mxu0 %v1095
    %3376 = vmatpush1.msra.mxu0 %v1094
    %3377 = vmatprep.subr.mxu0 %v1103
    %3378 = vmatpush1.msra.mxu0 %v1102
    %3379 = vmatprep.subr.mxu0 %v1111
    %3380 = vmatpush1.msra.mxu0 %v1110
    %3381 = vmatprep.subr.mxu0 %v1119
    %3382 = vmatpush1.msra.mxu0 %v1118
    %3383 = vmatprep.subr.mxu0 %v1127
    %3384 = vmatpush1.msra.mxu0 %v1126
    %3385 = vmatprep.subr.mxu0 %v1135
    %3386 = vmatpush1.msra.mxu0 %v1134
    %3387 = vmatprep.subr.mxu0 %v1143
    %3388 = vmatpush1.msra.mxu0 %v1142
    %3389 = vmatprep.subr.mxu0 %v1151
    %3390 = vmatpush1.msra.mxu0 %v1150
    %3391 = vmatprep.subr.mxu0 %v1159
    %3392 = vmatpush1.msra.mxu0 %v1158
    %3393 = vmatprep.subr.mxu0 %v1167
    %3394 = vmatpush1.msra.mxu0 %v1166
    %3395 = vmatprep.subr.mxu0 %v1175
    %3396 = vmatpush1.msra.mxu0 %v1174
    %3397 = vmatprep.subr.mxu0 %v1183
    %3398 = vmatpush1.msra.mxu0 %v1182
    %3399 = vmatprep.mubr.f32.mxu0 %v3257
    %3400 = vmatmul.mubr.f32.gmra.mrb[0].mxu0 %v3256
    %v3401 = vpop.f32.mrb[0].mxu0
    %v3402 = vadd.f32 0.0, %v3401
    %v3403 = vpop.f32.mrb[0].mxu0
    %v3404 = vadd.f32 0.0, %v3403
    %3405 = vdwg.mxu0
    %3406 = vmatprep.subr.mxu0 %v937
    %3407 = vmatpush1.msra.mxu0 %v936
    %3408 = vmatprep.subr.mxu0 %v945
    %3409 = vmatpush1.msra.mxu0 %v944
    %3410 = vmatprep.subr.mxu0 %v953
    %3411 = vmatpush1.msra.mxu0 %v952
    %3412 = vmatprep.subr.mxu0 %v961
    %3413 = vmatpush1.msra.mxu0 %v960
    %3414 = vmatprep.subr.mxu0 %v969
    %3415 = vmatpush1.msra.mxu0 %v968
    %3416 = vmatprep.subr.mxu0 %v977
    %3417 = vmatpush1.msra.mxu0 %v976
    %3418 = vmatprep.subr.mxu0 %v985
    %3419 = vmatpush1.msra.mxu0 %v984
    %3420 = vmatprep.subr.mxu0 %v993
    %3421 = vmatpush1.msra.mxu0 %v992
    %3422 = vmatprep.subr.mxu0 %v1001
    %3423 = vmatpush1.msra.mxu0 %v1000
    %3424 = vmatprep.subr.mxu0 %v1009
    %3425 = vmatpush1.msra.mxu0 %v1008
    %3426 = vmatprep.subr.mxu0 %v1017
    %3427 = vmatpush1.msra.mxu0 %v1016
    %3428 = vmatprep.subr.mxu0 %v1025
    %3429 = vmatpush1.msra.mxu0 %v1024
    %3430 = vmatprep.subr.mxu0 %v1033
    %3431 = vmatpush1.msra.mxu0 %v1032
    %3432 = vmatprep.subr.mxu0 %v1041
    %3433 = vmatpush1.msra.mxu0 %v1040
    %3434 = vmatprep.subr.mxu0 %v1049
    %3435 = vmatpush1.msra.mxu0 %v1048
    %3436 = vmatprep.subr.mxu0 %v1057
    %3437 = vmatpush1.msra.mxu0 %v1056
    %3438 = vmatprep.subr.mxu0 %v1065
    %3439 = vmatpush1.msra.mxu0 %v1064
    %3440 = vmatprep.subr.mxu0 %v1073
    %3441 = vmatpush1.msra.mxu0 %v1072
    %3442 = vmatprep.subr.mxu0 %v1081
    %3443 = vmatpush1.msra.mxu0 %v1080
    %3444 = vmatprep.subr.mxu0 %v1089
    %3445 = vmatpush1.msra.mxu0 %v1088
    %3446 = vmatprep.subr.mxu0 %v1097
    %3447 = vmatpush1.msra.mxu0 %v1096
    %3448 = vmatprep.subr.mxu0 %v1105
    %3449 = vmatpush1.msra.mxu0 %v1104
    %3450 = vmatprep.subr.mxu0 %v1113
    %3451 = vmatpush1.msra.mxu0 %v1112
    %3452 = vmatprep.subr.mxu0 %v1121
    %3453 = vmatpush1.msra.mxu0 %v1120
    %3454 = vmatprep.subr.mxu0 %v1129
    %3455 = vmatpush1.msra.mxu0 %v1128
    %3456 = vmatprep.subr.mxu0 %v1137
    %3457 = vmatpush1.msra.mxu0 %v1136
    %3458 = vmatprep.subr.mxu0 %v1145
    %3459 = vmatpush1.msra.mxu0 %v1144
    %3460 = vmatprep.subr.mxu0 %v1153
    %3461 = vmatpush1.msra.mxu0 %v1152
    %3462 = vmatprep.subr.mxu0 %v1161
    %3463 = vmatpush1.msra.mxu0 %v1160
    %3464 = vmatprep.subr.mxu0 %v1169
    %3465 = vmatpush1.msra.mxu0 %v1168
    %3466 = vmatprep.subr.mxu0 %v1177
    %3467 = vmatpush1.msra.mxu0 %v1176
    %3468 = vmatprep.subr.mxu0 %v1185
    %3469 = vmatpush1.msra.mxu0 %v1184
    %3470 = vmatprep.mubr.f32.mxu0 %v3257
    %3471 = vmatmul.mubr.f32.gmra.mrb[0].mxu0 %v3256
    %v3472 = vpop.f32.mrb[0].mxu0
    %v3473 = vadd.f32 0.0, %v3472
    %v3474 = vpop.f32.mrb[0].mxu0
    %v3475 = vadd.f32 0.0, %v3474
    %3476 = vdwg.mxu0
    %3477 = vmatprep.subr.mxu0 %v939
    %3478 = vmatpush1.msra.mxu0 %v938
    %3479 = vmatprep.subr.mxu0 %v947
    %3480 = vmatpush1.msra.mxu0 %v946
    %3481 = vmatprep.subr.mxu0 %v955
    %3482 = vmatpush1.msra.mxu0 %v954
    %3483 = vmatprep.subr.mxu0 %v963
    %3484 = vmatpush1.msra.mxu0 %v962
    %3485 = vmatprep.subr.mxu0 %v971
    %3486 = vmatpush1.msra.mxu0 %v970
    %3487 = vmatprep.subr.mxu0 %v979
    %3488 = vmatpush1.msra.mxu0 %v978
    %3489 = vmatprep.subr.mxu0 %v987
    %3490 = vmatpush1.msra.mxu0 %v986
    %3491 = vmatprep.subr.mxu0 %v995
    %3492 = vmatpush1.msra.mxu0 %v994
    %3493 = vmatprep.subr.mxu0 %v1003
    %3494 = vmatpush1.msra.mxu0 %v1002
    %3495 = vmatprep.subr.mxu0 %v1011
    %3496 = vmatpush1.msra.mxu0 %v1010
    %3497 = vmatprep.subr.mxu0 %v1019
    %3498 = vmatpush1.msra.mxu0 %v1018
    %3499 = vmatprep.subr.mxu0 %v1027
    %3500 = vmatpush1.msra.mxu0 %v1026
    %3501 = vmatprep.subr.mxu0 %v1035
    %3502 = vmatpush1.msra.mxu0 %v1034
    %3503 = vmatprep.subr.mxu0 %v1043
    %3504 = vmatpush1.msra.mxu0 %v1042
    %3505 = vmatprep.subr.mxu0 %v1051
    %3506 = vmatpush1.msra.mxu0 %v1050
    %3507 = vmatprep.subr.mxu0 %v1059
    %3508 = vmatpush1.msra.mxu0 %v1058
    %3509 = vmatprep.subr.mxu0 %v1067
    %3510 = vmatpush1.msra.mxu0 %v1066
    %3511 = vmatprep.subr.mxu0 %v1075
    %3512 = vmatpush1.msra.mxu0 %v1074
    %3513 = vmatprep.subr.mxu0 %v1083
    %3514 = vmatpush1.msra.mxu0 %v1082
    %3515 = vmatprep.subr.mxu0 %v1091
    %3516 = vmatpush1.msra.mxu0 %v1090
    %3517 = vmatprep.subr.mxu0 %v1099
    %3518 = vmatpush1.msra.mxu0 %v1098
    %3519 = vmatprep.subr.mxu0 %v1107
    %3520 = vmatpush1.msra.mxu0 %v1106
    %3521 = vmatprep.subr.mxu0 %v1115
    %3522 = vmatpush1.msra.mxu0 %v1114
    %3523 = vmatprep.subr.mxu0 %v1123
    %3524 = vmatpush1.msra.mxu0 %v1122
    %3525 = vmatprep.subr.mxu0 %v1131
    %3526 = vmatpush1.msra.mxu0 %v1130
    %3527 = vmatprep.subr.mxu0 %v1139
    %3528 = vmatpush1.msra.mxu0 %v1138
    %3529 = vmatprep.subr.mxu0 %v1147
    %3530 = vmatpush1.msra.mxu0 %v1146
    %3531 = vmatprep.subr.mxu0 %v1155
    %3532 = vmatpush1.msra.mxu0 %v1154
    %3533 = vmatprep.subr.mxu0 %v1163
    %3534 = vmatpush1.msra.mxu0 %v1162
    %3535 = vmatprep.subr.mxu0 %v1171
    %3536 = vmatpush1.msra.mxu0 %v1170
    %3537 = vmatprep.subr.mxu0 %v1179
    %3538 = vmatpush1.msra.mxu0 %v1178
    %3539 = vmatprep.subr.mxu0 %v1187
    %3540 = vmatpush1.msra.mxu0 %v1186
    %3541 = vmatprep.mubr.f32.mxu0 %v3257
    %3542 = vmatmul.mubr.f32.gmra.mrb[0].mxu0 %v3256
    %v3543 = vpop.f32.mrb[0].mxu0
    %v3544 = vadd.f32 0.0, %v3543
    %v3545 = vpop.f32.mrb[0].mxu0
    %v3546 = vadd.f32 0.0, %v3545
    %3547 = vdwg.mxu0
    %v3548 = vadd.f32 %v269, %v3331
    %v3549 = vadd.f32 %v271, %v3333
    %v3550 = vadd.f32 %v394, %v3402
    %v3551 = vadd.f32 %v396, %v3404
    %v3552 = vadd.f32 %v519, %v3473
    %v3553 = vadd.f32 %v521, %v3475
    %v3554 = vadd.f32 %v644, %v3544
    %v3555 = vadd.f32 %v646, %v3546
    %v3556 = vxor.u32 %v3548, 2147483648
    %v3557 = vxor.u32 %v3549, 2147483648
    %v3558 = vmul.f32 %v3556, 1.442695
    %v3559 = vpow.pop %v3558
    %v3560 = vmul.f32 %v3557, 1.442695
    %v3561 = vpow.pop %v3560
    %v3562 = vadd.f32 %v3559, 1.0
    %v3563 = vadd.f32 %v3561, 1.0
    %v3564 = vrcp.pop %v3562
    %v3565 = vmul.f32 1.0, %v3564
    %v3566 = vrcp.pop %v3563
    %v3567 = vmul.f32 1.0, %v3566
    %v3568 = vxor.u32 %v3550, 2147483648
    %v3569 = vxor.u32 %v3551, 2147483648
    %v3570 = vmul.f32 %v3568, 1.442695
    %v3571 = vpow.pop %v3570
    %v3572 = vmul.f32 %v3569, 1.442695
    %v3573 = vpow.pop %v3572
    %v3574 = vadd.f32 %v3571, 1.0
    %v3575 = vadd.f32 %v3573, 1.0
    %v3576 = vrcp.pop %v3574
    %v3577 = vmul.f32 1.0, %v3576
    %v3578 = vrcp.pop %v3575
    %v3579 = vmul.f32 1.0, %v3578
    %v3580 = vtanh.pop %v3552
    %v3581 = vtanh.pop %v3553
    %v3582 = vxor.u32 %v3554, 2147483648
    %v3583 = vxor.u32 %v3555, 2147483648
    %v3584 = vmul.f32 %v3582, 1.442695
    %v3585 = vpow.pop %v3584
    %v3586 = vmul.f32 %v3583, 1.442695
    %v3587 = vpow.pop %v3586
    %v3588 = vadd.f32 %v3585, 1.0
    %v3589 = vadd.f32 %v3587, 1.0
    %v3590 = vrcp.pop %v3588
    %v3591 = vmul.f32 1.0, %v3590
    %v3592 = vrcp.pop %v3589
    %v3593 = vmul.f32 1.0, %v3592
    %v3594 = vmul.f32 %v3577, %v3252
    %v3595 = vmul.f32 %v3579, %v3253
    %v3596 = vmul.f32 %v3565, %v3580
    %v3597 = vmul.f32 %v3567, %v3581
    %v3598 = vadd.f32 %v3594, %v3596
    %v3599 = vadd.f32 %v3595, %v3597
    %v3600 = vtanh.pop %v3598
    %v3601 = vtanh.pop %v3599
    %v3602 = vmul.f32 %v3591, %v3600
    %v3603 = vmul.f32 %v3593, %v3601
    %v3604 = vsel %vm926, 6, 3
    %v3605 = vsel %vm927, 6, 3
    %vm3606 = vcmp.eq.s32.totalorder %v931, %v3604
    %vm3607 = vcmp.eq.s32.totalorder %v931, %v3605
    %v3608 = vsel %vm3606, %v3602, %v3262
    %v3609 = vsel %vm3607, %v3603, %v3263
    %3610 = vmatprep.subr.mxu0 %v933
    %3611 = vmatpush1.msra.mxu0 %v932
    %3612 = vmatprep.subr.mxu0 %v941
    %3613 = vmatpush1.msra.mxu0 %v940
    %3614 = vmatprep.subr.mxu0 %v949
    %3615 = vmatpush1.msra.mxu0 %v948
    %3616 = vmatprep.subr.mxu0 %v957
    %3617 = vmatpush1.msra.mxu0 %v956
    %3618 = vmatprep.subr.mxu0 %v965
    %3619 = vmatpush1.msra.mxu0 %v964
    %3620 = vmatprep.subr.mxu0 %v973
    %3621 = vmatpush1.msra.mxu0 %v972
    %3622 = vmatprep.subr.mxu0 %v981
    %3623 = vmatpush1.msra.mxu0 %v980
    %3624 = vmatprep.subr.mxu0 %v989
    %3625 = vmatpush1.msra.mxu0 %v988
    %3626 = vmatprep.subr.mxu0 %v997
    %3627 = vmatpush1.msra.mxu0 %v996
    %3628 = vmatprep.subr.mxu0 %v1005
    %3629 = vmatpush1.msra.mxu0 %v1004
    %3630 = vmatprep.subr.mxu0 %v1013
    %3631 = vmatpush1.msra.mxu0 %v1012
    %3632 = vmatprep.subr.mxu0 %v1021
    %3633 = vmatpush1.msra.mxu0 %v1020
    %3634 = vmatprep.subr.mxu0 %v1029
    %3635 = vmatpush1.msra.mxu0 %v1028
    %3636 = vmatprep.subr.mxu0 %v1037
    %3637 = vmatpush1.msra.mxu0 %v1036
    %3638 = vmatprep.subr.mxu0 %v1045
    %3639 = vmatpush1.msra.mxu0 %v1044
    %3640 = vmatprep.subr.mxu0 %v1053
    %3641 = vmatpush1.msra.mxu0 %v1052
    %3642 = vmatprep.subr.mxu0 %v1061
    %3643 = vmatpush1.msra.mxu0 %v1060
    %3644 = vmatprep.subr.mxu0 %v1069
    %3645 = vmatpush1.msra.mxu0 %v1068
    %3646 = vmatprep.subr.mxu0 %v1077
    %3647 = vmatpush1.msra.mxu0 %v1076
    %3648 = vmatprep.subr.mxu0 %v1085
    %3649 = vmatpush1.msra.mxu0 %v1084
    %3650 = vmatprep.subr.mxu0 %v1093
    %3651 = vmatpush1.msra.mxu0 %v1092
    %3652 = vmatprep.subr.mxu0 %v1101
    %3653 = vmatpush1.msra.mxu0 %v1100
    %3654 = vmatprep.subr.mxu0 %v1109
    %3655 = vmatpush1.msra.mxu0 %v1108
    %3656 = vmatprep.subr.mxu0 %v1117
    %3657 = vmatpush1.msra.mxu0 %v1116
    %3658 = vmatprep.subr.mxu0 %v1125
    %3659 = vmatpush1.msra.mxu0 %v1124
    %3660 = vmatprep.subr.mxu0 %v1133
    %3661 = vmatpush1.msra.mxu0 %v1132
    %3662 = vmatprep.subr.mxu0 %v1141
    %3663 = vmatpush1.msra.mxu0 %v1140
    %3664 = vmatprep.subr.mxu0 %v1149
    %3665 = vmatpush1.msra.mxu0 %v1148
    %3666 = vmatprep.subr.mxu0 %v1157
    %3667 = vmatpush1.msra.mxu0 %v1156
    %3668 = vmatprep.subr.mxu0 %v1165
    %3669 = vmatpush1.msra.mxu0 %v1164
    %3670 = vmatprep.subr.mxu0 %v1173
    %3671 = vmatpush1.msra.mxu0 %v1172
    %3672 = vmatprep.subr.mxu0 %v1181
    %3673 = vmatpush1.msra.mxu0 %v1180
    %3674 = vmatprep.mubr.f32.mxu0 %v3603
    %3675 = vmatmul.mubr.f32.gmra.mrb[0].mxu0 %v3602
    %v3676 = vpop.f32.mrb[0].mxu0
    %v3677 = vadd.f32 0.0, %v3676
    %v3678 = vpop.f32.mrb[0].mxu0
    %v3679 = vadd.f32 0.0, %v3678
    %3680 = vdwg.mxu0
    %3681 = vmatprep.subr.mxu0 %v935
    %3682 = vmatpush1.msra.mxu0 %v934
    %3683 = vmatprep.subr.mxu0 %v943
    %3684 = vmatpush1.msra.mxu0 %v942
    %3685 = vmatprep.subr.mxu0 %v951
    %3686 = vmatpush1.msra.mxu0 %v950
    %3687 = vmatprep.subr.mxu0 %v959
    %3688 = vmatpush1.msra.mxu0 %v958
    %3689 = vmatprep.subr.mxu0 %v967
    %3690 = vmatpush1.msra.mxu0 %v966
    %3691 = vmatprep.subr.mxu0 %v975
    %3692 = vmatpush1.msra.mxu0 %v974
    %3693 = vmatprep.subr.mxu0 %v983
    %3694 = vmatpush1.msra.mxu0 %v982
    %3695 = vmatprep.subr.mxu0 %v991
    %3696 = vmatpush1.msra.mxu0 %v990
    %3697 = vmatprep.subr.mxu0 %v999
    %3698 = vmatpush1.msra.mxu0 %v998
    %3699 = vmatprep.subr.mxu0 %v1007
    %3700 = vmatpush1.msra.mxu0 %v1006
    %3701 = vmatprep.subr.mxu0 %v1015
    %3702 = vmatpush1.msra.mxu0 %v1014
    %3703 = vmatprep.subr.mxu0 %v1023
    %3704 = vmatpush1.msra.mxu0 %v1022
    %3705 = vmatprep.subr.mxu0 %v1031
    %3706 = vmatpush1.msra.mxu0 %v1030
    %3707 = vmatprep.subr.mxu0 %v1039
    %3708 = vmatpush1.msra.mxu0 %v1038
    %3709 = vmatprep.subr.mxu0 %v1047
    %3710 = vmatpush1.msra.mxu0 %v1046
    %3711 = vmatprep.subr.mxu0 %v1055
    %3712 = vmatpush1.msra.mxu0 %v1054
    %3713 = vmatprep.subr.mxu0 %v1063
    %3714 = vmatpush1.msra.mxu0 %v1062
    %3715 = vmatprep.subr.mxu0 %v1071
    %3716 = vmatpush1.msra.mxu0 %v1070
    %3717 = vmatprep.subr.mxu0 %v1079
    %3718 = vmatpush1.msra.mxu0 %v1078
    %3719 = vmatprep.subr.mxu0 %v1087
    %3720 = vmatpush1.msra.mxu0 %v1086
    %3721 = vmatprep.subr.mxu0 %v1095
    %3722 = vmatpush1.msra.mxu0 %v1094
    %3723 = vmatprep.subr.mxu0 %v1103
    %3724 = vmatpush1.msra.mxu0 %v1102
    %3725 = vmatprep.subr.mxu0 %v1111
    %3726 = vmatpush1.msra.mxu0 %v1110
    %3727 = vmatprep.subr.mxu0 %v1119
    %3728 = vmatpush1.msra.mxu0 %v1118
    %3729 = vmatprep.subr.mxu0 %v1127
    %3730 = vmatpush1.msra.mxu0 %v1126
    %3731 = vmatprep.subr.mxu0 %v1135
    %3732 = vmatpush1.msra.mxu0 %v1134
    %3733 = vmatprep.subr.mxu0 %v1143
    %3734 = vmatpush1.msra.mxu0 %v1142
    %3735 = vmatprep.subr.mxu0 %v1151
    %3736 = vmatpush1.msra.mxu0 %v1150
    %3737 = vmatprep.subr.mxu0 %v1159
    %3738 = vmatpush1.msra.mxu0 %v1158
    %3739 = vmatprep.subr.mxu0 %v1167
    %3740 = vmatpush1.msra.mxu0 %v1166
    %3741 = vmatprep.subr.mxu0 %v1175
    %3742 = vmatpush1.msra.mxu0 %v1174
    %3743 = vmatprep.subr.mxu0 %v1183
    %3744 = vmatpush1.msra.mxu0 %v1182
    %3745 = vmatprep.mubr.f32.mxu0 %v3603
    %3746 = vmatmul.mubr.f32.gmra.mrb[0].mxu0 %v3602
    %v3747 = vpop.f32.mrb[0].mxu0
    %v3748 = vadd.f32 0.0, %v3747
    %v3749 = vpop.f32.mrb[0].mxu0
    %v3750 = vadd.f32 0.0, %v3749
    %3751 = vdwg.mxu0
    %3752 = vmatprep.subr.mxu0 %v937
    %3753 = vmatpush1.msra.mxu0 %v936
    %3754 = vmatprep.subr.mxu0 %v945
    %3755 = vmatpush1.msra.mxu0 %v944
    %3756 = vmatprep.subr.mxu0 %v953
    %3757 = vmatpush1.msra.mxu0 %v952
    %3758 = vmatprep.subr.mxu0 %v961
    %3759 = vmatpush1.msra.mxu0 %v960
    %3760 = vmatprep.subr.mxu0 %v969
    %3761 = vmatpush1.msra.mxu0 %v968
    %3762 = vmatprep.subr.mxu0 %v977
    %3763 = vmatpush1.msra.mxu0 %v976
    %3764 = vmatprep.subr.mxu0 %v985
    %3765 = vmatpush1.msra.mxu0 %v984
    %3766 = vmatprep.subr.mxu0 %v993
    %3767 = vmatpush1.msra.mxu0 %v992
    %3768 = vmatprep.subr.mxu0 %v1001
    %3769 = vmatpush1.msra.mxu0 %v1000
    %3770 = vmatprep.subr.mxu0 %v1009
    %3771 = vmatpush1.msra.mxu0 %v1008
    %3772 = vmatprep.subr.mxu0 %v1017
    %3773 = vmatpush1.msra.mxu0 %v1016
    %3774 = vmatprep.subr.mxu0 %v1025
    %3775 = vmatpush1.msra.mxu0 %v1024
    %3776 = vmatprep.subr.mxu0 %v1033
    %3777 = vmatpush1.msra.mxu0 %v1032
    %3778 = vmatprep.subr.mxu0 %v1041
    %3779 = vmatpush1.msra.mxu0 %v1040
    %3780 = vmatprep.subr.mxu0 %v1049
    %3781 = vmatpush1.msra.mxu0 %v1048
    %3782 = vmatprep.subr.mxu0 %v1057
    %3783 = vmatpush1.msra.mxu0 %v1056
    %3784 = vmatprep.subr.mxu0 %v1065
    %3785 = vmatpush1.msra.mxu0 %v1064
    %3786 = vmatprep.subr.mxu0 %v1073
    %3787 = vmatpush1.msra.mxu0 %v1072
    %3788 = vmatprep.subr.mxu0 %v1081
    %3789 = vmatpush1.msra.mxu0 %v1080
    %3790 = vmatprep.subr.mxu0 %v1089
    %3791 = vmatpush1.msra.mxu0 %v1088
    %3792 = vmatprep.subr.mxu0 %v1097
    %3793 = vmatpush1.msra.mxu0 %v1096
    %3794 = vmatprep.subr.mxu0 %v1105
    %3795 = vmatpush1.msra.mxu0 %v1104
    %3796 = vmatprep.subr.mxu0 %v1113
    %3797 = vmatpush1.msra.mxu0 %v1112
    %3798 = vmatprep.subr.mxu0 %v1121
    %3799 = vmatpush1.msra.mxu0 %v1120
    %3800 = vmatprep.subr.mxu0 %v1129
    %3801 = vmatpush1.msra.mxu0 %v1128
    %3802 = vmatprep.subr.mxu0 %v1137
    %3803 = vmatpush1.msra.mxu0 %v1136
    %3804 = vmatprep.subr.mxu0 %v1145
    %3805 = vmatpush1.msra.mxu0 %v1144
    %3806 = vmatprep.subr.mxu0 %v1153
    %3807 = vmatpush1.msra.mxu0 %v1152
    %3808 = vmatprep.subr.mxu0 %v1161
    %3809 = vmatpush1.msra.mxu0 %v1160
    %3810 = vmatprep.subr.mxu0 %v1169
    %3811 = vmatpush1.msra.mxu0 %v1168
    %3812 = vmatprep.subr.mxu0 %v1177
    %3813 = vmatpush1.msra.mxu0 %v1176
    %3814 = vmatprep.subr.mxu0 %v1185
    %3815 = vmatpush1.msra.mxu0 %v1184
    %3816 = vmatprep.mubr.f32.mxu0 %v3603
    %3817 = vmatmul.mubr.f32.gmra.mrb[0].mxu0 %v3602
    %v3818 = vpop.f32.mrb[0].mxu0
    %v3819 = vadd.f32 0.0, %v3818
    %v3820 = vpop.f32.mrb[0].mxu0
    %v3821 = vadd.f32 0.0, %v3820
    %3822 = vdwg.mxu0
    %3823 = vmatprep.subr.mxu0 %v939
    %3824 = vmatpush1.msra.mxu0 %v938
    %3825 = vmatprep.subr.mxu0 %v947
    %3826 = vmatpush1.msra.mxu0 %v946
    %3827 = vmatprep.subr.mxu0 %v955
    %3828 = vmatpush1.msra.mxu0 %v954
    %3829 = vmatprep.subr.mxu0 %v963
    %3830 = vmatpush1.msra.mxu0 %v962
    %3831 = vmatprep.subr.mxu0 %v971
    %3832 = vmatpush1.msra.mxu0 %v970
    %3833 = vmatprep.subr.mxu0 %v979
    %3834 = vmatpush1.msra.mxu0 %v978
    %3835 = vmatprep.subr.mxu0 %v987
    %3836 = vmatpush1.msra.mxu0 %v986
    %3837 = vmatprep.subr.mxu0 %v995
    %3838 = vmatpush1.msra.mxu0 %v994
    %3839 = vmatprep.subr.mxu0 %v1003
    %3840 = vmatpush1.msra.mxu0 %v1002
    %3841 = vmatprep.subr.mxu0 %v1011
    %3842 = vmatpush1.msra.mxu0 %v1010
    %3843 = vmatprep.subr.mxu0 %v1019
    %3844 = vmatpush1.msra.mxu0 %v1018
    %3845 = vmatprep.subr.mxu0 %v1027
    %3846 = vmatpush1.msra.mxu0 %v1026
    %3847 = vmatprep.subr.mxu0 %v1035
    %3848 = vmatpush1.msra.mxu0 %v1034
    %3849 = vmatprep.subr.mxu0 %v1043
    %3850 = vmatpush1.msra.mxu0 %v1042
    %3851 = vmatprep.subr.mxu0 %v1051
    %3852 = vmatpush1.msra.mxu0 %v1050
    %3853 = vmatprep.subr.mxu0 %v1059
    %3854 = vmatpush1.msra.mxu0 %v1058
    %3855 = vmatprep.subr.mxu0 %v1067
    %3856 = vmatpush1.msra.mxu0 %v1066
    %3857 = vmatprep.subr.mxu0 %v1075
    %3858 = vmatpush1.msra.mxu0 %v1074
    %3859 = vmatprep.subr.mxu0 %v1083
    %3860 = vmatpush1.msra.mxu0 %v1082
    %3861 = vmatprep.subr.mxu0 %v1091
    %3862 = vmatpush1.msra.mxu0 %v1090
    %3863 = vmatprep.subr.mxu0 %v1099
    %3864 = vmatpush1.msra.mxu0 %v1098
    %3865 = vmatprep.subr.mxu0 %v1107
    %3866 = vmatpush1.msra.mxu0 %v1106
    %3867 = vmatprep.subr.mxu0 %v1115
    %3868 = vmatpush1.msra.mxu0 %v1114
    %3869 = vmatprep.subr.mxu0 %v1123
    %3870 = vmatpush1.msra.mxu0 %v1122
    %3871 = vmatprep.subr.mxu0 %v1131
    %3872 = vmatpush1.msra.mxu0 %v1130
    %3873 = vmatprep.subr.mxu0 %v1139
    %3874 = vmatpush1.msra.mxu0 %v1138
    %3875 = vmatprep.subr.mxu0 %v1147
    %3876 = vmatpush1.msra.mxu0 %v1146
    %3877 = vmatprep.subr.mxu0 %v1155
    %3878 = vmatpush1.msra.mxu0 %v1154
    %3879 = vmatprep.subr.mxu0 %v1163
    %3880 = vmatpush1.msra.mxu0 %v1162
    %3881 = vmatprep.subr.mxu0 %v1171
    %3882 = vmatpush1.msra.mxu0 %v1170
    %3883 = vmatprep.subr.mxu0 %v1179
    %3884 = vmatpush1.msra.mxu0 %v1178
    %3885 = vmatprep.subr.mxu0 %v1187
    %3886 = vmatpush1.msra.mxu0 %v1186
    %3887 = vmatprep.mubr.f32.mxu0 %v3603
    %3888 = vmatmul.mubr.f32.gmra.mrb[0].mxu0 %v3602
    %v3889 = vpop.f32.mrb[0].mxu0
    %v3890 = vadd.f32 0.0, %v3889
    %v3891 = vpop.f32.mrb[0].mxu0
    %v3892 = vadd.f32 0.0, %v3891
    %3893 = vdwg.mxu0
    %v3894 = vadd.f32 %v275, %v3677
    %v3895 = vadd.f32 %v277, %v3679
    %v3896 = vadd.f32 %v400, %v3748
    %v3897 = vadd.f32 %v402, %v3750
    %v3898 = vadd.f32 %v525, %v3819
    %v3899 = vadd.f32 %v527, %v3821
    %v3900 = vadd.f32 %v650, %v3890
    %v3901 = vadd.f32 %v652, %v3892
    %v3902 = vxor.u32 %v3894, 2147483648
    %v3903 = vxor.u32 %v3895, 2147483648
    %v3904 = vmul.f32 %v3902, 1.442695
    %v3905 = vpow.pop %v3904
    %v3906 = vmul.f32 %v3903, 1.442695
    %v3907 = vpow.pop %v3906
    %v3908 = vadd.f32 %v3905, 1.0
    %v3909 = vadd.f32 %v3907, 1.0
    %v3910 = vrcp.pop %v3908
    %v3911 = vmul.f32 1.0, %v3910
    %v3912 = vrcp.pop %v3909
    %v3913 = vmul.f32 1.0, %v3912
    %v3914 = vxor.u32 %v3896, 2147483648
    %v3915 = vxor.u32 %v3897, 2147483648
    %v3916 = vmul.f32 %v3914, 1.442695
    %v3917 = vpow.pop %v3916
    %v3918 = vmul.f32 %v3915, 1.442695
    %v3919 = vpow.pop %v3918
    %v3920 = vadd.f32 %v3917, 1.0
    %v3921 = vadd.f32 %v3919, 1.0
    %v3922 = vrcp.pop %v3920
    %v3923 = vmul.f32 1.0, %v3922
    %v3924 = vrcp.pop %v3921
    %v3925 = vmul.f32 1.0, %v3924
    %v3926 = vtanh.pop %v3898
    %v3927 = vtanh.pop %v3899
    %v3928 = vxor.u32 %v3900, 2147483648
    %v3929 = vxor.u32 %v3901, 2147483648
    %v3930 = vmul.f32 %v3928, 1.442695
    %v3931 = vpow.pop %v3930
    %v3932 = vmul.f32 %v3929, 1.442695
    %v3933 = vpow.pop %v3932
    %v3934 = vadd.f32 %v3931, 1.0
    %v3935 = vadd.f32 %v3933, 1.0
    %v3936 = vrcp.pop %v3934
    %v3937 = vmul.f32 1.0, %v3936
    %v3938 = vrcp.pop %v3935
    %v3939 = vmul.f32 1.0, %v3938
    %v3940 = vmul.f32 %v3923, %v3598
    %v3941 = vmul.f32 %v3925, %v3599
    %v3942 = vmul.f32 %v3911, %v3926
    %v3943 = vmul.f32 %v3913, %v3927
    %v3944 = vadd.f32 %v3940, %v3942
    %v3945 = vadd.f32 %v3941, %v3943
    %v3946 = vtanh.pop %v3944
    %v3947 = vtanh.pop %v3945
    %v3948 = vmul.f32 %v3937, %v3946
    %v3949 = vmul.f32 %v3939, %v3947
    %v3950 = vsel %vm926, 7, 2
    %v3951 = vsel %vm927, 7, 2
    %vm3952 = vcmp.eq.s32.totalorder %v931, %v3950
    %vm3953 = vcmp.eq.s32.totalorder %v931, %v3951
    %v3954 = vsel %vm3952, %v3948, %v3608
    %v3955 = vsel %vm3953, %v3949, %v3609
    %3956 = vmatprep.subr.mxu0 %v933
    %3957 = vmatpush1.msra.mxu0 %v932
    %3958 = vmatprep.subr.mxu0 %v941
    %3959 = vmatpush1.msra.mxu0 %v940
    %3960 = vmatprep.subr.mxu0 %v949
    %3961 = vmatpush1.msra.mxu0 %v948
    %3962 = vmatprep.subr.mxu0 %v957
    %3963 = vmatpush1.msra.mxu0 %v956
    %3964 = vmatprep.subr.mxu0 %v965
    %3965 = vmatpush1.msra.mxu0 %v964
    %3966 = vmatprep.subr.mxu0 %v973
    %3967 = vmatpush1.msra.mxu0 %v972
    %3968 = vmatprep.subr.mxu0 %v981
    %3969 = vmatpush1.msra.mxu0 %v980
    %3970 = vmatprep.subr.mxu0 %v989
    %3971 = vmatpush1.msra.mxu0 %v988
    %3972 = vmatprep.subr.mxu0 %v997
    %3973 = vmatpush1.msra.mxu0 %v996
    %3974 = vmatprep.subr.mxu0 %v1005
    %3975 = vmatpush1.msra.mxu0 %v1004
    %3976 = vmatprep.subr.mxu0 %v1013
    %3977 = vmatpush1.msra.mxu0 %v1012
    %3978 = vmatprep.subr.mxu0 %v1021
    %3979 = vmatpush1.msra.mxu0 %v1020
    %3980 = vmatprep.subr.mxu0 %v1029
    %3981 = vmatpush1.msra.mxu0 %v1028
    %3982 = vmatprep.subr.mxu0 %v1037
    %3983 = vmatpush1.msra.mxu0 %v1036
    %3984 = vmatprep.subr.mxu0 %v1045
    %3985 = vmatpush1.msra.mxu0 %v1044
    %3986 = vmatprep.subr.mxu0 %v1053
    %3987 = vmatpush1.msra.mxu0 %v1052
    %3988 = vmatprep.subr.mxu0 %v1061
    %3989 = vmatpush1.msra.mxu0 %v1060
    %3990 = vmatprep.subr.mxu0 %v1069
    %3991 = vmatpush1.msra.mxu0 %v1068
    %3992 = vmatprep.subr.mxu0 %v1077
    %3993 = vmatpush1.msra.mxu0 %v1076
    %3994 = vmatprep.subr.mxu0 %v1085
    %3995 = vmatpush1.msra.mxu0 %v1084
    %3996 = vmatprep.subr.mxu0 %v1093
    %3997 = vmatpush1.msra.mxu0 %v1092
    %3998 = vmatprep.subr.mxu0 %v1101
    %3999 = vmatpush1.msra.mxu0 %v1100
    %4000 = vmatprep.subr.mxu0 %v1109
    %4001 = vmatpush1.msra.mxu0 %v1108
    %4002 = vmatprep.subr.mxu0 %v1117
    %4003 = vmatpush1.msra.mxu0 %v1116
    %4004 = vmatprep.subr.mxu0 %v1125
    %4005 = vmatpush1.msra.mxu0 %v1124
    %4006 = vmatprep.subr.mxu0 %v1133
    %4007 = vmatpush1.msra.mxu0 %v1132
    %4008 = vmatprep.subr.mxu0 %v1141
    %4009 = vmatpush1.msra.mxu0 %v1140
    %4010 = vmatprep.subr.mxu0 %v1149
    %4011 = vmatpush1.msra.mxu0 %v1148
    %4012 = vmatprep.subr.mxu0 %v1157
    %4013 = vmatpush1.msra.mxu0 %v1156
    %4014 = vmatprep.subr.mxu0 %v1165
    %4015 = vmatpush1.msra.mxu0 %v1164
    %4016 = vmatprep.subr.mxu0 %v1173
    %4017 = vmatpush1.msra.mxu0 %v1172
    %4018 = vmatprep.subr.mxu0 %v1181
    %4019 = vmatpush1.msra.mxu0 %v1180
    %4020 = vmatprep.mubr.f32.mxu0 %v3949
    %4021 = vmatmul.mubr.f32.gmra.mrb[0].mxu0 %v3948
    %v4022 = vpop.f32.mrb[0].mxu0
    %v4023 = vadd.f32 0.0, %v4022
    %v4024 = vpop.f32.mrb[0].mxu0
    %v4025 = vadd.f32 0.0, %v4024
    %4026 = vdwg.mxu0
    %4027 = vmatprep.subr.mxu0 %v935
    %4028 = vmatpush1.msra.mxu0 %v934
    %4029 = vmatprep.subr.mxu0 %v943
    %4030 = vmatpush1.msra.mxu0 %v942
    %4031 = vmatprep.subr.mxu0 %v951
    %4032 = vmatpush1.msra.mxu0 %v950
    %4033 = vmatprep.subr.mxu0 %v959
    %4034 = vmatpush1.msra.mxu0 %v958
    %4035 = vmatprep.subr.mxu0 %v967
    %4036 = vmatpush1.msra.mxu0 %v966
    %4037 = vmatprep.subr.mxu0 %v975
    %4038 = vmatpush1.msra.mxu0 %v974
    %4039 = vmatprep.subr.mxu0 %v983
    %4040 = vmatpush1.msra.mxu0 %v982
    %4041 = vmatprep.subr.mxu0 %v991
    %4042 = vmatpush1.msra.mxu0 %v990
    %4043 = vmatprep.subr.mxu0 %v999
    %4044 = vmatpush1.msra.mxu0 %v998
    %4045 = vmatprep.subr.mxu0 %v1007
    %4046 = vmatpush1.msra.mxu0 %v1006
    %4047 = vmatprep.subr.mxu0 %v1015
    %4048 = vmatpush1.msra.mxu0 %v1014
    %4049 = vmatprep.subr.mxu0 %v1023
    %4050 = vmatpush1.msra.mxu0 %v1022
    %4051 = vmatprep.subr.mxu0 %v1031
    %4052 = vmatpush1.msra.mxu0 %v1030
    %4053 = vmatprep.subr.mxu0 %v1039
    %4054 = vmatpush1.msra.mxu0 %v1038
    %4055 = vmatprep.subr.mxu0 %v1047
    %4056 = vmatpush1.msra.mxu0 %v1046
    %4057 = vmatprep.subr.mxu0 %v1055
    %4058 = vmatpush1.msra.mxu0 %v1054
    %4059 = vmatprep.subr.mxu0 %v1063
    %4060 = vmatpush1.msra.mxu0 %v1062
    %4061 = vmatprep.subr.mxu0 %v1071
    %4062 = vmatpush1.msra.mxu0 %v1070
    %4063 = vmatprep.subr.mxu0 %v1079
    %4064 = vmatpush1.msra.mxu0 %v1078
    %4065 = vmatprep.subr.mxu0 %v1087
    %4066 = vmatpush1.msra.mxu0 %v1086
    %4067 = vmatprep.subr.mxu0 %v1095
    %4068 = vmatpush1.msra.mxu0 %v1094
    %4069 = vmatprep.subr.mxu0 %v1103
    %4070 = vmatpush1.msra.mxu0 %v1102
    %4071 = vmatprep.subr.mxu0 %v1111
    %4072 = vmatpush1.msra.mxu0 %v1110
    %4073 = vmatprep.subr.mxu0 %v1119
    %4074 = vmatpush1.msra.mxu0 %v1118
    %4075 = vmatprep.subr.mxu0 %v1127
    %4076 = vmatpush1.msra.mxu0 %v1126
    %4077 = vmatprep.subr.mxu0 %v1135
    %4078 = vmatpush1.msra.mxu0 %v1134
    %4079 = vmatprep.subr.mxu0 %v1143
    %4080 = vmatpush1.msra.mxu0 %v1142
    %4081 = vmatprep.subr.mxu0 %v1151
    %4082 = vmatpush1.msra.mxu0 %v1150
    %4083 = vmatprep.subr.mxu0 %v1159
    %4084 = vmatpush1.msra.mxu0 %v1158
    %4085 = vmatprep.subr.mxu0 %v1167
    %4086 = vmatpush1.msra.mxu0 %v1166
    %4087 = vmatprep.subr.mxu0 %v1175
    %4088 = vmatpush1.msra.mxu0 %v1174
    %4089 = vmatprep.subr.mxu0 %v1183
    %4090 = vmatpush1.msra.mxu0 %v1182
    %4091 = vmatprep.mubr.f32.mxu0 %v3949
    %4092 = vmatmul.mubr.f32.gmra.mrb[0].mxu0 %v3948
    %v4093 = vpop.f32.mrb[0].mxu0
    %v4094 = vadd.f32 0.0, %v4093
    %v4095 = vpop.f32.mrb[0].mxu0
    %v4096 = vadd.f32 0.0, %v4095
    %4097 = vdwg.mxu0
    %4098 = vmatprep.subr.mxu0 %v937
    %4099 = vmatpush1.msra.mxu0 %v936
    %4100 = vmatprep.subr.mxu0 %v945
    %4101 = vmatpush1.msra.mxu0 %v944
    %4102 = vmatprep.subr.mxu0 %v953
    %4103 = vmatpush1.msra.mxu0 %v952
    %4104 = vmatprep.subr.mxu0 %v961
    %4105 = vmatpush1.msra.mxu0 %v960
    %4106 = vmatprep.subr.mxu0 %v969
    %4107 = vmatpush1.msra.mxu0 %v968
    %4108 = vmatprep.subr.mxu0 %v977
    %4109 = vmatpush1.msra.mxu0 %v976
    %4110 = vmatprep.subr.mxu0 %v985
    %4111 = vmatpush1.msra.mxu0 %v984
    %4112 = vmatprep.subr.mxu0 %v993
    %4113 = vmatpush1.msra.mxu0 %v992
    %4114 = vmatprep.subr.mxu0 %v1001
    %4115 = vmatpush1.msra.mxu0 %v1000
    %4116 = vmatprep.subr.mxu0 %v1009
    %4117 = vmatpush1.msra.mxu0 %v1008
    %4118 = vmatprep.subr.mxu0 %v1017
    %4119 = vmatpush1.msra.mxu0 %v1016
    %4120 = vmatprep.subr.mxu0 %v1025
    %4121 = vmatpush1.msra.mxu0 %v1024
    %4122 = vmatprep.subr.mxu0 %v1033
    %4123 = vmatpush1.msra.mxu0 %v1032
    %4124 = vmatprep.subr.mxu0 %v1041
    %4125 = vmatpush1.msra.mxu0 %v1040
    %4126 = vmatprep.subr.mxu0 %v1049
    %4127 = vmatpush1.msra.mxu0 %v1048
    %4128 = vmatprep.subr.mxu0 %v1057
    %4129 = vmatpush1.msra.mxu0 %v1056
    %4130 = vmatprep.subr.mxu0 %v1065
    %4131 = vmatpush1.msra.mxu0 %v1064
    %4132 = vmatprep.subr.mxu0 %v1073
    %4133 = vmatpush1.msra.mxu0 %v1072
    %4134 = vmatprep.subr.mxu0 %v1081
    %4135 = vmatpush1.msra.mxu0 %v1080
    %4136 = vmatprep.subr.mxu0 %v1089
    %4137 = vmatpush1.msra.mxu0 %v1088
    %4138 = vmatprep.subr.mxu0 %v1097
    %4139 = vmatpush1.msra.mxu0 %v1096
    %4140 = vmatprep.subr.mxu0 %v1105
    %4141 = vmatpush1.msra.mxu0 %v1104
    %4142 = vmatprep.subr.mxu0 %v1113
    %4143 = vmatpush1.msra.mxu0 %v1112
    %4144 = vmatprep.subr.mxu0 %v1121
    %4145 = vmatpush1.msra.mxu0 %v1120
    %4146 = vmatprep.subr.mxu0 %v1129
    %4147 = vmatpush1.msra.mxu0 %v1128
    %4148 = vmatprep.subr.mxu0 %v1137
    %4149 = vmatpush1.msra.mxu0 %v1136
    %4150 = vmatprep.subr.mxu0 %v1145
    %4151 = vmatpush1.msra.mxu0 %v1144
    %4152 = vmatprep.subr.mxu0 %v1153
    %4153 = vmatpush1.msra.mxu0 %v1152
    %4154 = vmatprep.subr.mxu0 %v1161
    %4155 = vmatpush1.msra.mxu0 %v1160
    %4156 = vmatprep.subr.mxu0 %v1169
    %4157 = vmatpush1.msra.mxu0 %v1168
    %4158 = vmatprep.subr.mxu0 %v1177
    %4159 = vmatpush1.msra.mxu0 %v1176
    %4160 = vmatprep.subr.mxu0 %v1185
    %4161 = vmatpush1.msra.mxu0 %v1184
    %4162 = vmatprep.mubr.f32.mxu0 %v3949
    %4163 = vmatmul.mubr.f32.gmra.mrb[0].mxu0 %v3948
    %v4164 = vpop.f32.mrb[0].mxu0
    %v4165 = vadd.f32 0.0, %v4164
    %v4166 = vpop.f32.mrb[0].mxu0
    %v4167 = vadd.f32 0.0, %v4166
    %4168 = vdwg.mxu0
    %4169 = vmatprep.subr.mxu0 %v939
    %4170 = vmatpush1.msra.mxu0 %v938
    %4171 = vmatprep.subr.mxu0 %v947
    %4172 = vmatpush1.msra.mxu0 %v946
    %4173 = vmatprep.subr.mxu0 %v955
    %4174 = vmatpush1.msra.mxu0 %v954
    %4175 = vmatprep.subr.mxu0 %v963
    %4176 = vmatpush1.msra.mxu0 %v962
    %4177 = vmatprep.subr.mxu0 %v971
    %4178 = vmatpush1.msra.mxu0 %v970
    %4179 = vmatprep.subr.mxu0 %v979
    %4180 = vmatpush1.msra.mxu0 %v978
    %4181 = vmatprep.subr.mxu0 %v987
    %4182 = vmatpush1.msra.mxu0 %v986
    %4183 = vmatprep.subr.mxu0 %v995
    %4184 = vmatpush1.msra.mxu0 %v994
    %4185 = vmatprep.subr.mxu0 %v1003
    %4186 = vmatpush1.msra.mxu0 %v1002
    %4187 = vmatprep.subr.mxu0 %v1011
    %4188 = vmatpush1.msra.mxu0 %v1010
    %4189 = vmatprep.subr.mxu0 %v1019
    %4190 = vmatpush1.msra.mxu0 %v1018
    %4191 = vmatprep.subr.mxu0 %v1027
    %4192 = vmatpush1.msra.mxu0 %v1026
    %4193 = vmatprep.subr.mxu0 %v1035
    %4194 = vmatpush1.msra.mxu0 %v1034
    %4195 = vmatprep.subr.mxu0 %v1043
    %4196 = vmatpush1.msra.mxu0 %v1042
    %4197 = vmatprep.subr.mxu0 %v1051
    %4198 = vmatpush1.msra.mxu0 %v1050
    %4199 = vmatprep.subr.mxu0 %v1059
    %4200 = vmatpush1.msra.mxu0 %v1058
    %4201 = vmatprep.subr.mxu0 %v1067
    %4202 = vmatpush1.msra.mxu0 %v1066
    %4203 = vmatprep.subr.mxu0 %v1075
    %4204 = vmatpush1.msra.mxu0 %v1074
    %4205 = vmatprep.subr.mxu0 %v1083
    %4206 = vmatpush1.msra.mxu0 %v1082
    %4207 = vmatprep.subr.mxu0 %v1091
    %4208 = vmatpush1.msra.mxu0 %v1090
    %4209 = vmatprep.subr.mxu0 %v1099
    %4210 = vmatpush1.msra.mxu0 %v1098
    %4211 = vmatprep.subr.mxu0 %v1107
    %4212 = vmatpush1.msra.mxu0 %v1106
    %4213 = vmatprep.subr.mxu0 %v1115
    %4214 = vmatpush1.msra.mxu0 %v1114
    %4215 = vmatprep.subr.mxu0 %v1123
    %4216 = vmatpush1.msra.mxu0 %v1122
    %4217 = vmatprep.subr.mxu0 %v1131
    %4218 = vmatpush1.msra.mxu0 %v1130
    %4219 = vmatprep.subr.mxu0 %v1139
    %4220 = vmatpush1.msra.mxu0 %v1138
    %4221 = vmatprep.subr.mxu0 %v1147
    %4222 = vmatpush1.msra.mxu0 %v1146
    %4223 = vmatprep.subr.mxu0 %v1155
    %4224 = vmatpush1.msra.mxu0 %v1154
    %4225 = vmatprep.subr.mxu0 %v1163
    %4226 = vmatpush1.msra.mxu0 %v1162
    %4227 = vmatprep.subr.mxu0 %v1171
    %4228 = vmatpush1.msra.mxu0 %v1170
    %4229 = vmatprep.subr.mxu0 %v1179
    %4230 = vmatpush1.msra.mxu0 %v1178
    %4231 = vmatprep.subr.mxu0 %v1187
    %4232 = vmatpush1.msra.mxu0 %v1186
    %4233 = vmatprep.mubr.f32.mxu0 %v3949
    %4234 = vmatmul.mubr.f32.gmra.mrb[0].mxu0 %v3948
    %v4235 = vpop.f32.mrb[0].mxu0
    %v4236 = vadd.f32 0.0, %v4235
    %v4237 = vpop.f32.mrb[0].mxu0
    %v4238 = vadd.f32 0.0, %v4237
    %4239 = vdwg.mxu0
    %v4240 = vadd.f32 %v281, %v4023
    %v4241 = vadd.f32 %v283, %v4025
    %v4242 = vadd.f32 %v406, %v4094
    %v4243 = vadd.f32 %v408, %v4096
    %v4244 = vadd.f32 %v531, %v4165
    %v4245 = vadd.f32 %v533, %v4167
    %v4246 = vadd.f32 %v656, %v4236
    %v4247 = vadd.f32 %v658, %v4238
    %v4248 = vxor.u32 %v4240, 2147483648
    %v4249 = vxor.u32 %v4241, 2147483648
    %v4250 = vmul.f32 %v4248, 1.442695
    %v4251 = vpow.pop %v4250
    %v4252 = vmul.f32 %v4249, 1.442695
    %v4253 = vpow.pop %v4252
    %v4254 = vadd.f32 %v4251, 1.0
    %v4255 = vadd.f32 %v4253, 1.0
    %v4256 = vrcp.pop %v4254
    %v4257 = vmul.f32 1.0, %v4256
    %v4258 = vrcp.pop %v4255
    %v4259 = vmul.f32 1.0, %v4258
    %v4260 = vxor.u32 %v4242, 2147483648
    %v4261 = vxor.u32 %v4243, 2147483648
    %v4262 = vmul.f32 %v4260, 1.442695
    %v4263 = vpow.pop %v4262
    %v4264 = vmul.f32 %v4261, 1.442695
    %v4265 = vpow.pop %v4264
    %v4266 = vadd.f32 %v4263, 1.0
    %v4267 = vadd.f32 %v4265, 1.0
    %v4268 = vrcp.pop %v4266
    %v4269 = vmul.f32 1.0, %v4268
    %v4270 = vrcp.pop %v4267
    %v4271 = vmul.f32 1.0, %v4270
    %v4272 = vtanh.pop %v4244
    %v4273 = vtanh.pop %v4245
    %v4274 = vxor.u32 %v4246, 2147483648
    %v4275 = vxor.u32 %v4247, 2147483648
    %v4276 = vmul.f32 %v4274, 1.442695
    %v4277 = vpow.pop %v4276
    %v4278 = vmul.f32 %v4275, 1.442695
    %v4279 = vpow.pop %v4278
    %v4280 = vadd.f32 %v4277, 1.0
    %v4281 = vadd.f32 %v4279, 1.0
    %v4282 = vrcp.pop %v4280
    %v4283 = vmul.f32 1.0, %v4282
    %v4284 = vrcp.pop %v4281
    %v4285 = vmul.f32 1.0, %v4284
    %v4286 = vmul.f32 %v4269, %v3944
    %v4287 = vmul.f32 %v4271, %v3945
    %v4288 = vmul.f32 %v4257, %v4272
    %v4289 = vmul.f32 %v4259, %v4273
    %v4290 = vadd.f32 %v4286, %v4288
    %v4291 = vadd.f32 %v4287, %v4289
    %v4292 = vtanh.pop %v4290
    %v4293 = vtanh.pop %v4291
    %v4294 = vmul.f32 %v4283, %v4292
    %v4295 = vmul.f32 %v4285, %v4293
    %v4296 = vsel %vm926, 8, 1
    %v4297 = vsel %vm927, 8, 1
    %vm4298 = vcmp.eq.s32.totalorder %v931, %v4296
    %vm4299 = vcmp.eq.s32.totalorder %v931, %v4297
    %v4300 = vsel %vm4298, %v4294, %v3954
    %v4301 = vsel %vm4299, %v4295, %v3955
    %4302 = vmatprep.subr.mxu0 %v933
    %4303 = vmatpush1.msra.mxu0 %v932
    %4304 = vmatprep.subr.mxu0 %v941
    %4305 = vmatpush1.msra.mxu0 %v940
    %4306 = vmatprep.subr.mxu0 %v949
    %4307 = vmatpush1.msra.mxu0 %v948
    %4308 = vmatprep.subr.mxu0 %v957
    %4309 = vmatpush1.msra.mxu0 %v956
    %4310 = vmatprep.subr.mxu0 %v965
    %4311 = vmatpush1.msra.mxu0 %v964
    %4312 = vmatprep.subr.mxu0 %v973
    %4313 = vmatpush1.msra.mxu0 %v972
    %4314 = vmatprep.subr.mxu0 %v981
    %4315 = vmatpush1.msra.mxu0 %v980
    %4316 = vmatprep.subr.mxu0 %v989
    %4317 = vmatpush1.msra.mxu0 %v988
    %4318 = vmatprep.subr.mxu0 %v997
    %4319 = vmatpush1.msra.mxu0 %v996
    %4320 = vmatprep.subr.mxu0 %v1005
    %4321 = vmatpush1.msra.mxu0 %v1004
    %4322 = vmatprep.subr.mxu0 %v1013
    %4323 = vmatpush1.msra.mxu0 %v1012
    %4324 = vmatprep.subr.mxu0 %v1021
    %4325 = vmatpush1.msra.mxu0 %v1020
    %4326 = vmatprep.subr.mxu0 %v1029
    %4327 = vmatpush1.msra.mxu0 %v1028
    %4328 = vmatprep.subr.mxu0 %v1037
    %4329 = vmatpush1.msra.mxu0 %v1036
    %4330 = vmatprep.subr.mxu0 %v1045
    %4331 = vmatpush1.msra.mxu0 %v1044
    %4332 = vmatprep.subr.mxu0 %v1053
    %4333 = vmatpush1.msra.mxu0 %v1052
    %4334 = vmatprep.subr.mxu0 %v1061
    %4335 = vmatpush1.msra.mxu0 %v1060
    %4336 = vmatprep.subr.mxu0 %v1069
    %4337 = vmatpush1.msra.mxu0 %v1068
    %4338 = vmatprep.subr.mxu0 %v1077
    %4339 = vmatpush1.msra.mxu0 %v1076
    %4340 = vmatprep.subr.mxu0 %v1085
    %4341 = vmatpush1.msra.mxu0 %v1084
    %4342 = vmatprep.subr.mxu0 %v1093
    %4343 = vmatpush1.msra.mxu0 %v1092
    %4344 = vmatprep.subr.mxu0 %v1101
    %4345 = vmatpush1.msra.mxu0 %v1100
    %4346 = vmatprep.subr.mxu0 %v1109
    %4347 = vmatpush1.msra.mxu0 %v1108
    %4348 = vmatprep.subr.mxu0 %v1117
    %4349 = vmatpush1.msra.mxu0 %v1116
    %4350 = vmatprep.subr.mxu0 %v1125
    %4351 = vmatpush1.msra.mxu0 %v1124
    %4352 = vmatprep.subr.mxu0 %v1133
    %4353 = vmatpush1.msra.mxu0 %v1132
    %4354 = vmatprep.subr.mxu0 %v1141
    %4355 = vmatpush1.msra.mxu0 %v1140
    %4356 = vmatprep.subr.mxu0 %v1149
    %4357 = vmatpush1.msra.mxu0 %v1148
    %4358 = vmatprep.subr.mxu0 %v1157
    %4359 = vmatpush1.msra.mxu0 %v1156
    %4360 = vmatprep.subr.mxu0 %v1165
    %4361 = vmatpush1.msra.mxu0 %v1164
    %4362 = vmatprep.subr.mxu0 %v1173
    %4363 = vmatpush1.msra.mxu0 %v1172
    %4364 = vmatprep.subr.mxu0 %v1181
    %4365 = vmatpush1.msra.mxu0 %v1180
    %4366 = vmatprep.mubr.f32.mxu0 %v4295
    %4367 = vmatmul.mubr.f32.gmra.mrb[0].mxu0 %v4294
    %v4368 = vpop.f32.mrb[0].mxu0
    %v4369 = vadd.f32 0.0, %v4368
    %v4370 = vpop.f32.mrb[0].mxu0
    %v4371 = vadd.f32 0.0, %v4370
    %4372 = vdwg.mxu0
    %4373 = vmatprep.subr.mxu0 %v935
    %4374 = vmatpush1.msra.mxu0 %v934
    %4375 = vmatprep.subr.mxu0 %v943
    %4376 = vmatpush1.msra.mxu0 %v942
    %4377 = vmatprep.subr.mxu0 %v951
    %4378 = vmatpush1.msra.mxu0 %v950
    %4379 = vmatprep.subr.mxu0 %v959
    %4380 = vmatpush1.msra.mxu0 %v958
    %4381 = vmatprep.subr.mxu0 %v967
    %4382 = vmatpush1.msra.mxu0 %v966
    %4383 = vmatprep.subr.mxu0 %v975
    %4384 = vmatpush1.msra.mxu0 %v974
    %4385 = vmatprep.subr.mxu0 %v983
    %4386 = vmatpush1.msra.mxu0 %v982
    %4387 = vmatprep.subr.mxu0 %v991
    %4388 = vmatpush1.msra.mxu0 %v990
    %4389 = vmatprep.subr.mxu0 %v999
    %4390 = vmatpush1.msra.mxu0 %v998
    %4391 = vmatprep.subr.mxu0 %v1007
    %4392 = vmatpush1.msra.mxu0 %v1006
    %4393 = vmatprep.subr.mxu0 %v1015
    %4394 = vmatpush1.msra.mxu0 %v1014
    %4395 = vmatprep.subr.mxu0 %v1023
    %4396 = vmatpush1.msra.mxu0 %v1022
    %4397 = vmatprep.subr.mxu0 %v1031
    %4398 = vmatpush1.msra.mxu0 %v1030
    %4399 = vmatprep.subr.mxu0 %v1039
    %4400 = vmatpush1.msra.mxu0 %v1038
    %4401 = vmatprep.subr.mxu0 %v1047
    %4402 = vmatpush1.msra.mxu0 %v1046
    %4403 = vmatprep.subr.mxu0 %v1055
    %4404 = vmatpush1.msra.mxu0 %v1054
    %4405 = vmatprep.subr.mxu0 %v1063
    %4406 = vmatpush1.msra.mxu0 %v1062
    %4407 = vmatprep.subr.mxu0 %v1071
    %4408 = vmatpush1.msra.mxu0 %v1070
    %4409 = vmatprep.subr.mxu0 %v1079
    %4410 = vmatpush1.msra.mxu0 %v1078
    %4411 = vmatprep.subr.mxu0 %v1087
    %4412 = vmatpush1.msra.mxu0 %v1086
    %4413 = vmatprep.subr.mxu0 %v1095
    %4414 = vmatpush1.msra.mxu0 %v1094
    %4415 = vmatprep.subr.mxu0 %v1103
    %4416 = vmatpush1.msra.mxu0 %v1102
    %4417 = vmatprep.subr.mxu0 %v1111
    %4418 = vmatpush1.msra.mxu0 %v1110
    %4419 = vmatprep.subr.mxu0 %v1119
    %4420 = vmatpush1.msra.mxu0 %v1118
    %4421 = vmatprep.subr.mxu0 %v1127
    %4422 = vmatpush1.msra.mxu0 %v1126
    %4423 = vmatprep.subr.mxu0 %v1135
    %4424 = vmatpush1.msra.mxu0 %v1134
    %4425 = vmatprep.subr.mxu0 %v1143
    %4426 = vmatpush1.msra.mxu0 %v1142
    %4427 = vmatprep.subr.mxu0 %v1151
    %4428 = vmatpush1.msra.mxu0 %v1150
    %4429 = vmatprep.subr.mxu0 %v1159
    %4430 = vmatpush1.msra.mxu0 %v1158
    %4431 = vmatprep.subr.mxu0 %v1167
    %4432 = vmatpush1.msra.mxu0 %v1166
    %4433 = vmatprep.subr.mxu0 %v1175
    %4434 = vmatpush1.msra.mxu0 %v1174
    %4435 = vmatprep.subr.mxu0 %v1183
    %4436 = vmatpush1.msra.mxu0 %v1182
    %4437 = vmatprep.mubr.f32.mxu0 %v4295
    %4438 = vmatmul.mubr.f32.gmra.mrb[0].mxu0 %v4294
    %v4439 = vpop.f32.mrb[0].mxu0
    %v4440 = vadd.f32 0.0, %v4439
    %v4441 = vpop.f32.mrb[0].mxu0
    %v4442 = vadd.f32 0.0, %v4441
    %4443 = vdwg.mxu0
    %4444 = vmatprep.subr.mxu0 %v937
    %4445 = vmatpush1.msra.mxu0 %v936
    %4446 = vmatprep.subr.mxu0 %v945
    %4447 = vmatpush1.msra.mxu0 %v944
    %4448 = vmatprep.subr.mxu0 %v953
    %4449 = vmatpush1.msra.mxu0 %v952
    %4450 = vmatprep.subr.mxu0 %v961
    %4451 = vmatpush1.msra.mxu0 %v960
    %4452 = vmatprep.subr.mxu0 %v969
    %4453 = vmatpush1.msra.mxu0 %v968
    %4454 = vmatprep.subr.mxu0 %v977
    %4455 = vmatpush1.msra.mxu0 %v976
    %4456 = vmatprep.subr.mxu0 %v985
    %4457 = vmatpush1.msra.mxu0 %v984
    %4458 = vmatprep.subr.mxu0 %v993
    %4459 = vmatpush1.msra.mxu0 %v992
    %4460 = vmatprep.subr.mxu0 %v1001
    %4461 = vmatpush1.msra.mxu0 %v1000
    %4462 = vmatprep.subr.mxu0 %v1009
    %4463 = vmatpush1.msra.mxu0 %v1008
    %4464 = vmatprep.subr.mxu0 %v1017
    %4465 = vmatpush1.msra.mxu0 %v1016
    %4466 = vmatprep.subr.mxu0 %v1025
    %4467 = vmatpush1.msra.mxu0 %v1024
    %4468 = vmatprep.subr.mxu0 %v1033
    %4469 = vmatpush1.msra.mxu0 %v1032
    %4470 = vmatprep.subr.mxu0 %v1041
    %4471 = vmatpush1.msra.mxu0 %v1040
    %4472 = vmatprep.subr.mxu0 %v1049
    %4473 = vmatpush1.msra.mxu0 %v1048
    %4474 = vmatprep.subr.mxu0 %v1057
    %4475 = vmatpush1.msra.mxu0 %v1056
    %4476 = vmatprep.subr.mxu0 %v1065
    %4477 = vmatpush1.msra.mxu0 %v1064
    %4478 = vmatprep.subr.mxu0 %v1073
    %4479 = vmatpush1.msra.mxu0 %v1072
    %4480 = vmatprep.subr.mxu0 %v1081
    %4481 = vmatpush1.msra.mxu0 %v1080
    %4482 = vmatprep.subr.mxu0 %v1089
    %4483 = vmatpush1.msra.mxu0 %v1088
    %4484 = vmatprep.subr.mxu0 %v1097
    %4485 = vmatpush1.msra.mxu0 %v1096
    %4486 = vmatprep.subr.mxu0 %v1105
    %4487 = vmatpush1.msra.mxu0 %v1104
    %4488 = vmatprep.subr.mxu0 %v1113
    %4489 = vmatpush1.msra.mxu0 %v1112
    %4490 = vmatprep.subr.mxu0 %v1121
    %4491 = vmatpush1.msra.mxu0 %v1120
    %4492 = vmatprep.subr.mxu0 %v1129
    %4493 = vmatpush1.msra.mxu0 %v1128
    %4494 = vmatprep.subr.mxu0 %v1137
    %4495 = vmatpush1.msra.mxu0 %v1136
    %4496 = vmatprep.subr.mxu0 %v1145
    %4497 = vmatpush1.msra.mxu0 %v1144
    %4498 = vmatprep.subr.mxu0 %v1153
    %4499 = vmatpush1.msra.mxu0 %v1152
    %4500 = vmatprep.subr.mxu0 %v1161
    %4501 = vmatpush1.msra.mxu0 %v1160
    %4502 = vmatprep.subr.mxu0 %v1169
    %4503 = vmatpush1.msra.mxu0 %v1168
    %4504 = vmatprep.subr.mxu0 %v1177
    %4505 = vmatpush1.msra.mxu0 %v1176
    %4506 = vmatprep.subr.mxu0 %v1185
    %4507 = vmatpush1.msra.mxu0 %v1184
    %4508 = vmatprep.mubr.f32.mxu0 %v4295
    %4509 = vmatmul.mubr.f32.gmra.mrb[0].mxu0 %v4294
    %v4510 = vpop.f32.mrb[0].mxu0
    %v4511 = vadd.f32 0.0, %v4510
    %v4512 = vpop.f32.mrb[0].mxu0
    %v4513 = vadd.f32 0.0, %v4512
    %4514 = vdwg.mxu0
    %4515 = vmatprep.subr.mxu0 %v939
    %4516 = vmatpush1.msra.mxu0 %v938
    %4517 = vmatprep.subr.mxu0 %v947
    %4518 = vmatpush1.msra.mxu0 %v946
    %4519 = vmatprep.subr.mxu0 %v955
    %4520 = vmatpush1.msra.mxu0 %v954
    %4521 = vmatprep.subr.mxu0 %v963
    %4522 = vmatpush1.msra.mxu0 %v962
    %4523 = vmatprep.subr.mxu0 %v971
    %4524 = vmatpush1.msra.mxu0 %v970
    %4525 = vmatprep.subr.mxu0 %v979
    %4526 = vmatpush1.msra.mxu0 %v978
    %4527 = vmatprep.subr.mxu0 %v987
    %4528 = vmatpush1.msra.mxu0 %v986
    %4529 = vmatprep.subr.mxu0 %v995
    %4530 = vmatpush1.msra.mxu0 %v994
    %4531 = vmatprep.subr.mxu0 %v1003
    %4532 = vmatpush1.msra.mxu0 %v1002
    %4533 = vmatprep.subr.mxu0 %v1011
    %4534 = vmatpush1.msra.mxu0 %v1010
    %4535 = vmatprep.subr.mxu0 %v1019
    %4536 = vmatpush1.msra.mxu0 %v1018
    %4537 = vmatprep.subr.mxu0 %v1027
    %4538 = vmatpush1.msra.mxu0 %v1026
    %4539 = vmatprep.subr.mxu0 %v1035
    %4540 = vmatpush1.msra.mxu0 %v1034
    %4541 = vmatprep.subr.mxu0 %v1043
    %4542 = vmatpush1.msra.mxu0 %v1042
    %4543 = vmatprep.subr.mxu0 %v1051
    %4544 = vmatpush1.msra.mxu0 %v1050
    %4545 = vmatprep.subr.mxu0 %v1059
    %4546 = vmatpush1.msra.mxu0 %v1058
    %4547 = vmatprep.subr.mxu0 %v1067
    %4548 = vmatpush1.msra.mxu0 %v1066
    %4549 = vmatprep.subr.mxu0 %v1075
    %4550 = vmatpush1.msra.mxu0 %v1074
    %4551 = vmatprep.subr.mxu0 %v1083
    %4552 = vmatpush1.msra.mxu0 %v1082
    %4553 = vmatprep.subr.mxu0 %v1091
    %4554 = vmatpush1.msra.mxu0 %v1090
    %4555 = vmatprep.subr.mxu0 %v1099
    %4556 = vmatpush1.msra.mxu0 %v1098
    %4557 = vmatprep.subr.mxu0 %v1107
    %4558 = vmatpush1.msra.mxu0 %v1106
    %4559 = vmatprep.subr.mxu0 %v1115
    %4560 = vmatpush1.msra.mxu0 %v1114
    %4561 = vmatprep.subr.mxu0 %v1123
    %4562 = vmatpush1.msra.mxu0 %v1122
    %4563 = vmatprep.subr.mxu0 %v1131
    %4564 = vmatpush1.msra.mxu0 %v1130
    %4565 = vmatprep.subr.mxu0 %v1139
    %4566 = vmatpush1.msra.mxu0 %v1138
    %4567 = vmatprep.subr.mxu0 %v1147
    %4568 = vmatpush1.msra.mxu0 %v1146
    %4569 = vmatprep.subr.mxu0 %v1155
    %4570 = vmatpush1.msra.mxu0 %v1154
    %4571 = vmatprep.subr.mxu0 %v1163
    %4572 = vmatpush1.msra.mxu0 %v1162
    %4573 = vmatprep.subr.mxu0 %v1171
    %4574 = vmatpush1.msra.mxu0 %v1170
    %4575 = vmatprep.subr.mxu0 %v1179
    %4576 = vmatpush1.msra.mxu0 %v1178
    %4577 = vmatprep.subr.mxu0 %v1187
    %4578 = vmatpush1.msra.mxu0 %v1186
    %4579 = vmatprep.mubr.f32.mxu0 %v4295
    %4580 = vmatmul.mubr.f32.gmra.mrb[0].mxu0 %v4294
    %v4581 = vpop.f32.mrb[0].mxu0
    %v4582 = vadd.f32 0.0, %v4581
    %v4583 = vpop.f32.mrb[0].mxu0
    %v4584 = vadd.f32 0.0, %v4583
    %4585 = vdwg.mxu0
    %v4586 = vadd.f32 %v287, %v4369
    %v4587 = vadd.f32 %v289, %v4371
    %v4588 = vadd.f32 %v412, %v4440
    %v4589 = vadd.f32 %v414, %v4442
    %v4590 = vadd.f32 %v537, %v4511
    %v4591 = vadd.f32 %v539, %v4513
    %v4592 = vadd.f32 %v662, %v4582
    %v4593 = vadd.f32 %v664, %v4584
    %v4594 = vxor.u32 %v4586, 2147483648
    %v4595 = vxor.u32 %v4587, 2147483648
    %v4596 = vmul.f32 %v4594, 1.442695
    %v4597 = vpow.pop %v4596
    %v4598 = vmul.f32 %v4595, 1.442695
    %v4599 = vpow.pop %v4598
    %v4600 = vadd.f32 %v4597, 1.0
    %v4601 = vadd.f32 %v4599, 1.0
    %v4602 = vrcp.pop %v4600
    %v4603 = vmul.f32 1.0, %v4602
    %v4604 = vrcp.pop %v4601
    %v4605 = vmul.f32 1.0, %v4604
    %v4606 = vxor.u32 %v4588, 2147483648
    %v4607 = vxor.u32 %v4589, 2147483648
    %v4608 = vmul.f32 %v4606, 1.442695
    %v4609 = vpow.pop %v4608
    %v4610 = vmul.f32 %v4607, 1.442695
    %v4611 = vpow.pop %v4610
    %v4612 = vadd.f32 %v4609, 1.0
    %v4613 = vadd.f32 %v4611, 1.0
    %v4614 = vrcp.pop %v4612
    %v4615 = vmul.f32 1.0, %v4614
    %v4616 = vrcp.pop %v4613
    %v4617 = vmul.f32 1.0, %v4616
    %v4618 = vtanh.pop %v4590
    %v4619 = vtanh.pop %v4591
    %v4620 = vxor.u32 %v4592, 2147483648
    %v4621 = vxor.u32 %v4593, 2147483648
    %v4622 = vmul.f32 %v4620, 1.442695
    %v4623 = vpow.pop %v4622
    %v4624 = vmul.f32 %v4621, 1.442695
    %v4625 = vpow.pop %v4624
    %v4626 = vadd.f32 %v4623, 1.0
    %v4627 = vadd.f32 %v4625, 1.0
    %v4628 = vrcp.pop %v4626
    %v4629 = vmul.f32 1.0, %v4628
    %v4630 = vrcp.pop %v4627
    %v4631 = vmul.f32 1.0, %v4630
    %v4632 = vmul.f32 %v4615, %v4290
    %v4633 = vmul.f32 %v4617, %v4291
    %v4634 = vmul.f32 %v4603, %v4618
    %v4635 = vmul.f32 %v4605, %v4619
    %v4636 = vadd.f32 %v4632, %v4634
    %v4637 = vadd.f32 %v4633, %v4635
    %v4638 = vtanh.pop %v4636
    %v4639 = vtanh.pop %v4637
    %v4640 = vmul.f32 %v4629, %v4638
    %v4641 = vmul.f32 %v4631, %v4639
    %v4642 = vsel %vm926, 9, 0
    %v4643 = vsel %vm927, 9, 0
    %vm4644 = vcmp.eq.s32.totalorder %v931, %v4642
    %vm4645 = vcmp.eq.s32.totalorder %v931, %v4643
    %v4646 = vsel %vm4644, %v4640, %v4300
    %v4647 = vsel %vm4645, %v4641, %v4301
    %v4648 = vld [vmem:[%s5] sm:$0xff]
    %v4649 = vld [vmem:[%s5 + $0x8] sm:$0xff]
    %v4650 = vld [vmem:[%s5 + $0x10] sm:$0xff]
    %v4651 = vld [vmem:[%s5 + $0x18] sm:$0xff]
    %v4652 = vld [vmem:[%s5 + $0x20] sm:$0xff]
    %v4653 = vld [vmem:[%s5 + $0x28] sm:$0xff]
    %v4654 = vld [vmem:[%s5 + $0x30] sm:$0xff]
    %v4655 = vld [vmem:[%s5 + $0x38] sm:$0xff]
    %v4656 = vld [vmem:[%s5 + $0x40] sm:$0xff]
    %v4657 = vld [vmem:[%s5 + $0x48] sm:$0xff]
    %v4658 = vld [vmem:[%s5 + $0x50] sm:$0xff]
    %v4659 = vld [vmem:[%s5 + $0x58] sm:$0xff]
    %v4660 = vld [vmem:[%s5 + $0x60] sm:$0xff]
    %v4661 = vld [vmem:[%s5 + $0x68] sm:$0xff]
    %v4662 = vld [vmem:[%s5 + $0x70] sm:$0xff]
    %v4663 = vld [vmem:[%s5 + $0x78] sm:$0xff]
    %v4664 = vld [vmem:[%s5 + $0x80] sm:$0xff]
    %v4665 = vld [vmem:[%s5 + $0x88] sm:$0xff]
    %v4666 = vld [vmem:[%s5 + $0x90] sm:$0xff]
    %v4667 = vld [vmem:[%s5 + $0x98] sm:$0xff]
    %v4668 = vld [vmem:[%s5 + $0xa0] sm:$0xff]
    %v4669 = vld [vmem:[%s5 + $0xa8] sm:$0xff]
    %v4670 = vld [vmem:[%s5 + $0xb0] sm:$0xff]
    %v4671 = vld [vmem:[%s5 + $0xb8] sm:$0xff]
    %v4672 = vld [vmem:[%s5 + $0xc0] sm:$0xff]
    %v4673 = vld [vmem:[%s5 + $0xc8] sm:$0xff]
    %v4674 = vld [vmem:[%s5 + $0xd0] sm:$0xff]
    %v4675 = vld [vmem:[%s5 + $0xd8] sm:$0xff]
    %v4676 = vld [vmem:[%s5 + $0xe0] sm:$0xff]
    %v4677 = vld [vmem:[%s5 + $0xe8] sm:$0xff]
    %v4678 = vld [vmem:[%s5 + $0xf0] sm:$0xff]
    %v4679 = vld [vmem:[%s5 + $0xf8] sm:$0xff]
    %v4680 = vld [vmem:[%s6] sm:$0x1]
    %v4682 = vlaneseq
    %v4683 = vshrl.u32 %v4682, 7
    %v4684 = vsub.s32 0, %v4683
    %v4685 = vrot.slane %v4680, %v4684
    %4687 = vmatprep.subr.mxu0 0.0
    %4688 = vmatpush1.msra.mxu0 %v4648
    %4689 = vmatprep.subr.mxu0 0.0
    %4690 = vmatpush1.msra.mxu0 %v4649
    %4691 = vmatprep.subr.mxu0 0.0
    %4692 = vmatpush1.msra.mxu0 %v4650
    %4693 = vmatprep.subr.mxu0 0.0
    %4694 = vmatpush1.msra.mxu0 %v4651
    %4695 = vmatprep.subr.mxu0 0.0
    %4696 = vmatpush1.msra.mxu0 %v4652
    %4697 = vmatprep.subr.mxu0 0.0
    %4698 = vmatpush1.msra.mxu0 %v4653
    %4699 = vmatprep.subr.mxu0 0.0
    %4700 = vmatpush1.msra.mxu0 %v4654
    %4701 = vmatprep.subr.mxu0 0.0
    %4702 = vmatpush1.msra.mxu0 %v4655
    %4703 = vmatprep.subr.mxu0 0.0
    %4704 = vmatpush1.msra.mxu0 %v4656
    %4705 = vmatprep.subr.mxu0 0.0
    %4706 = vmatpush1.msra.mxu0 %v4657
    %4707 = vmatprep.subr.mxu0 0.0
    %4708 = vmatpush1.msra.mxu0 %v4658
    %4709 = vmatprep.subr.mxu0 0.0
    %4710 = vmatpush1.msra.mxu0 %v4659
    %4711 = vmatprep.subr.mxu0 0.0
    %4712 = vmatpush1.msra.mxu0 %v4660
    %4713 = vmatprep.subr.mxu0 0.0
    %4714 = vmatpush1.msra.mxu0 %v4661
    %4715 = vmatprep.subr.mxu0 0.0
    %4716 = vmatpush1.msra.mxu0 %v4662
    %4717 = vmatprep.subr.mxu0 0.0
    %4718 = vmatpush1.msra.mxu0 %v4663
    %4719 = vmatprep.subr.mxu0 0.0
    %4720 = vmatpush1.msra.mxu0 %v4664
    %4721 = vmatprep.subr.mxu0 0.0
    %4722 = vmatpush1.msra.mxu0 %v4665
    %4723 = vmatprep.subr.mxu0 0.0
    %4724 = vmatpush1.msra.mxu0 %v4666
    %4725 = vmatprep.subr.mxu0 0.0
    %4726 = vmatpush1.msra.mxu0 %v4667
    %4727 = vmatprep.subr.mxu0 0.0
    %4728 = vmatpush1.msra.mxu0 %v4668
    %4729 = vmatprep.subr.mxu0 0.0
    %4730 = vmatpush1.msra.mxu0 %v4669
    %4731 = vmatprep.subr.mxu0 0.0
    %4732 = vmatpush1.msra.mxu0 %v4670
    %4733 = vmatprep.subr.mxu0 0.0
    %4734 = vmatpush1.msra.mxu0 %v4671
    %4735 = vmatprep.subr.mxu0 0.0
    %4736 = vmatpush1.msra.mxu0 %v4672
    %4737 = vmatprep.subr.mxu0 0.0
    %4738 = vmatpush1.msra.mxu0 %v4673
    %4739 = vmatprep.subr.mxu0 0.0
    %4740 = vmatpush1.msra.mxu0 %v4674
    %4741 = vmatprep.subr.mxu0 0.0
    %4742 = vmatpush1.msra.mxu0 %v4675
    %4743 = vmatprep.subr.mxu0 0.0
    %4744 = vmatpush1.msra.mxu0 %v4676
    %4745 = vmatprep.subr.mxu0 0.0
    %4746 = vmatpush1.msra.mxu0 %v4677
    %4747 = vmatprep.subr.mxu0 0.0
    %4748 = vmatpush1.msra.mxu0 %v4678
    %4749 = vmatprep.subr.mxu0 0.0
    %4750 = vmatpush1.msra.mxu0 %v4679
    %4751 = vmatprep.mubr.f32.mxu0 %v4647
    %4752 = vmatmul.mubr.f32.gmra.mrb[0].mxu0 %v4646
    %v4753 = vpop.f32.mrb[0].mxu0
    %v4754 = vadd.f32 %v4685, %v4753
    %v4755 = vpop.f32.mrb[0].mxu0
    %4756 = vdwg.mxu0
    %v4757 = vld [vmem:[%s11] sm:$0xff]
    %v4758 = vld [vmem:[%s11 + $0x8] sm:$0xff]
    %v4759 = vld [vmem:[%s11 + $0x10] sm:$0xff]
    %v4760 = vld [vmem:[%s11 + $0x18] sm:$0xff]
    %v4761 = vld [vmem:[%s11 + $0x20] sm:$0xff]
    %v4762 = vld [vmem:[%s11 + $0x28] sm:$0xff]
    %v4763 = vld [vmem:[%s11 + $0x30] sm:$0xff]
    %v4764 = vld [vmem:[%s11 + $0x38] sm:$0xff]
    %v4765 = vld [vmem:[%s11 + $0x40] sm:$0xff]
    %v4766 = vld [vmem:[%s11 + $0x48] sm:$0xff]
    %v4767 = vld [vmem:[%s11 + $0x50] sm:$0xff]
    %v4768 = vld [vmem:[%s11 + $0x58] sm:$0xff]
    %v4769 = vld [vmem:[%s11 + $0x60] sm:$0xff]
    %v4770 = vld [vmem:[%s11 + $0x68] sm:$0xff]
    %v4771 = vld [vmem:[%s11 + $0x70] sm:$0xff]
    %v4772 = vld [vmem:[%s11 + $0x78] sm:$0xff]
    %v4773 = vld [vmem:[%s11 + $0x80] sm:$0xff]
    %v4774 = vld [vmem:[%s11 + $0x88] sm:$0xff]
    %v4775 = vld [vmem:[%s11 + $0x90] sm:$0xff]
    %v4776 = vld [vmem:[%s11 + $0x98] sm:$0xff]
    %v4777 = vld [vmem:[%s11 + $0xa0] sm:$0xff]
    %v4778 = vld [vmem:[%s11 + $0xa8] sm:$0xff]
    %v4779 = vld [vmem:[%s11 + $0xb0] sm:$0xff]
    %v4780 = vld [vmem:[%s11 + $0xb8] sm:$0xff]
    %v4781 = vld [vmem:[%s11 + $0xc0] sm:$0xff]
    %v4782 = vld [vmem:[%s11 + $0xc8] sm:$0xff]
    %v4783 = vld [vmem:[%s11 + $0xd0] sm:$0xff]
    %v4784 = vld [vmem:[%s11 + $0xd8] sm:$0xff]
    %v4785 = vld [vmem:[%s11 + $0xe0] sm:$0xff]
    %v4786 = vld [vmem:[%s11 + $0xe8] sm:$0xff]
    %v4787 = vld [vmem:[%s11 + $0xf0] sm:$0xff]
    %v4788 = vld [vmem:[%s11 + $0xf8] sm:$0xff]
    %v4789 = vld [vmem:[%s11 + $0x100] sm:$0xff]
    %v4790 = vld [vmem:[%s11 + $0x108] sm:$0xff]
    %v4791 = vld [vmem:[%s11 + $0x110] sm:$0xff]
    %v4792 = vld [vmem:[%s11 + $0x118] sm:$0xff]
    %v4793 = vld [vmem:[%s11 + $0x120] sm:$0xff]
    %v4794 = vld [vmem:[%s11 + $0x128] sm:$0xff]
    %v4795 = vld [vmem:[%s11 + $0x130] sm:$0xff]
    %v4796 = vld [vmem:[%s11 + $0x138] sm:$0xff]
    %v4797 = vld [vmem:[%s11 + $0x140] sm:$0xff]
    %v4798 = vld [vmem:[%s11 + $0x148] sm:$0xff]
    %v4799 = vld [vmem:[%s11 + $0x150] sm:$0xff]
    %v4800 = vld [vmem:[%s11 + $0x158] sm:$0xff]
    %v4801 = vld [vmem:[%s11 + $0x160] sm:$0xff]
    %v4802 = vld [vmem:[%s11 + $0x168] sm:$0xff]
    %v4803 = vld [vmem:[%s11 + $0x170] sm:$0xff]
    %v4804 = vld [vmem:[%s11 + $0x178] sm:$0xff]
    %v4805 = vld [vmem:[%s11 + $0x180] sm:$0xff]
    %v4806 = vld [vmem:[%s11 + $0x188] sm:$0xff]
    %v4807 = vld [vmem:[%s11 + $0x190] sm:$0xff]
    %v4808 = vld [vmem:[%s11 + $0x198] sm:$0xff]
    %v4809 = vld [vmem:[%s11 + $0x1a0] sm:$0xff]
    %v4810 = vld [vmem:[%s11 + $0x1a8] sm:$0xff]
    %v4811 = vld [vmem:[%s11 + $0x1b0] sm:$0xff]
    %v4812 = vld [vmem:[%s11 + $0x1b8] sm:$0xff]
    %v4813 = vld [vmem:[%s11 + $0x1c0] sm:$0xff]
    %v4814 = vld [vmem:[%s11 + $0x1c8] sm:$0xff]
    %v4815 = vld [vmem:[%s11 + $0x1d0] sm:$0xff]
    %v4816 = vld [vmem:[%s11 + $0x1d8] sm:$0xff]
    %v4817 = vld [vmem:[%s11 + $0x1e0] sm:$0xff]
    %v4818 = vld [vmem:[%s11 + $0x1e8] sm:$0xff]
    %v4819 = vld [vmem:[%s11 + $0x1f0] sm:$0xff]
    %v4820 = vld [vmem:[%s11 + $0x1f8] sm:$0xff]
    %4821 = vmatprep.subr.mxu0 %v4758
    %4822 = vmatpush1.msra.mxu0 %v4757
    %4823 = vmatprep.subr.mxu0 %v4762
    %4824 = vmatpush1.msra.mxu0 %v4761
    %4825 = vmatprep.subr.mxu0 %v4766
    %4826 = vmatpush1.msra.mxu0 %v4765
    %4827 = vmatprep.subr.mxu0 %v4770
    %4828 = vmatpush1.msra.mxu0 %v4769
    %4829 = vmatprep.subr.mxu0 %v4774
    %4830 = vmatpush1.msra.mxu0 %v4773
    %4831 = vmatprep.subr.mxu0 %v4778
    %4832 = vmatpush1.msra.mxu0 %v4777
    %4833 = vmatprep.subr.mxu0 %v4782
    %4834 = vmatpush1.msra.mxu0 %v4781
    %4835 = vmatprep.subr.mxu0 %v4786
    %4836 = vmatpush1.msra.mxu0 %v4785
    %4837 = vmatprep.subr.mxu0 %v4790
    %4838 = vmatpush1.msra.mxu0 %v4789
    %4839 = vmatprep.subr.mxu0 %v4794
    %4840 = vmatpush1.msra.mxu0 %v4793
    %4841 = vmatprep.subr.mxu0 %v4798
    %4842 = vmatpush1.msra.mxu0 %v4797
    %4843 = vmatprep.subr.mxu0 %v4802
    %4844 = vmatpush1.msra.mxu0 %v4801
    %4845 = vmatprep.subr.mxu0 %v4806
    %4846 = vmatpush1.msra.mxu0 %v4805
    %4847 = vmatprep.subr.mxu0 %v4810
    %4848 = vmatpush1.msra.mxu0 %v4809
    %4849 = vmatprep.subr.mxu0 %v4814
    %4850 = vmatpush1.msra.mxu0 %v4813
    %4851 = vmatprep.subr.mxu0 %v4818
    %4852 = vmatpush1.msra.mxu0 %v4817
    %4853 = vmatprep.subr.mxu0 0.0
    %4854 = vmatpush1.msra.mxu0 0.0
    %4855 = vmatprep.subr.mxu0 0.0
    %4856 = vmatpush1.msra.mxu0 0.0
    %4857 = vmatprep.subr.mxu0 0.0
    %4858 = vmatpush1.msra.mxu0 0.0
    %4859 = vmatprep.subr.mxu0 0.0
    %4860 = vmatpush1.msra.mxu0 0.0
    %4861 = vmatprep.subr.mxu0 0.0
    %4862 = vmatpush1.msra.mxu0 0.0
    %4863 = vmatprep.subr.mxu0 0.0
    %4864 = vmatpush1.msra.mxu0 0.0
    %4865 = vmatprep.subr.mxu0 0.0
    %4866 = vmatpush1.msra.mxu0 0.0
    %4867 = vmatprep.subr.mxu0 0.0
    %4868 = vmatpush1.msra.mxu0 0.0
    %4869 = vmatprep.subr.mxu0 0.0
    %4870 = vmatpush1.msra.mxu0 0.0
    %4871 = vmatprep.subr.mxu0 0.0
    %4872 = vmatpush1.msra.mxu0 0.0
    %4873 = vmatprep.subr.mxu0 0.0
    %4874 = vmatpush1.msra.mxu0 0.0
    %4875 = vmatprep.subr.mxu0 0.0
    %4876 = vmatpush1.msra.mxu0 0.0
    %4877 = vmatprep.subr.mxu0 0.0
    %4878 = vmatpush1.msra.mxu0 0.0
    %4879 = vmatprep.subr.mxu0 0.0
    %4880 = vmatpush1.msra.mxu0 0.0
    %4881 = vmatprep.subr.mxu0 0.0
    %4882 = vmatpush1.msra.mxu0 0.0
    %4883 = vmatprep.subr.mxu0 0.0
    %4884 = vmatpush1.msra.mxu0 0.0
    %4885 = vmatprep.mubr.f32.mxu0 0.0
    %4886 = vmatmul.mubr.f32.gmra.mrb[0].mxu0 %v4754
    %v4887 = vpop.f32.mrb[0].mxu0
    %v4888 = vadd.f32 0.0, %v4887
    %v4889 = vpop.f32.mrb[0].mxu0
    %v4890 = vadd.f32 0.0, %v4889
    %4891 = vdwg.mxu0
    %4892 = vmatprep.subr.mxu0 %v4760
    %4893 = vmatpush1.msra.mxu0 %v4759
    %4894 = vmatprep.subr.mxu0 %v4764
    %4895 = vmatpush1.msra.mxu0 %v4763
    %4896 = vmatprep.subr.mxu0 %v4768
    %4897 = vmatpush1.msra.mxu0 %v4767
    %4898 = vmatprep.subr.mxu0 %v4772
    %4899 = vmatpush1.msra.mxu0 %v4771
    %4900 = vmatprep.subr.mxu0 %v4776
    %4901 = vmatpush1.msra.mxu0 %v4775
    %4902 = vmatprep.subr.mxu0 %v4780
    %4903 = vmatpush1.msra.mxu0 %v4779
    %4904 = vmatprep.subr.mxu0 %v4784
    %4905 = vmatpush1.msra.mxu0 %v4783
    %4906 = vmatprep.subr.mxu0 %v4788
    %4907 = vmatpush1.msra.mxu0 %v4787
    %4908 = vmatprep.subr.mxu0 %v4792
    %4909 = vmatpush1.msra.mxu0 %v4791
    %4910 = vmatprep.subr.mxu0 %v4796
    %4911 = vmatpush1.msra.mxu0 %v4795
    %4912 = vmatprep.subr.mxu0 %v4800
    %4913 = vmatpush1.msra.mxu0 %v4799
    %4914 = vmatprep.subr.mxu0 %v4804
    %4915 = vmatpush1.msra.mxu0 %v4803
    %4916 = vmatprep.subr.mxu0 %v4808
    %4917 = vmatpush1.msra.mxu0 %v4807
    %4918 = vmatprep.subr.mxu0 %v4812
    %4919 = vmatpush1.msra.mxu0 %v4811
    %4920 = vmatprep.subr.mxu0 %v4816
    %4921 = vmatpush1.msra.mxu0 %v4815
    %4922 = vmatprep.subr.mxu0 %v4820
    %4923 = vmatpush1.msra.mxu0 %v4819
    %4924 = vmatprep.subr.mxu0 0.0
    %4925 = vmatpush1.msra.mxu0 0.0
    %4926 = vmatprep.subr.mxu0 0.0
    %4927 = vmatpush1.msra.mxu0 0.0
    %4928 = vmatprep.subr.mxu0 0.0
    %4929 = vmatpush1.msra.mxu0 0.0
    %4930 = vmatprep.subr.mxu0 0.0
    %4931 = vmatpush1.msra.mxu0 0.0
    %4932 = vmatprep.subr.mxu0 0.0
    %4933 = vmatpush1.msra.mxu0 0.0
    %4934 = vmatprep.subr.mxu0 0.0
    %4935 = vmatpush1.msra.mxu0 0.0
    %4936 = vmatprep.subr.mxu0 0.0
    %4937 = vmatpush1.msra.mxu0 0.0
    %4938 = vmatprep.subr.mxu0 0.0
    %4939 = vmatpush1.msra.mxu0 0.0
    %4940 = vmatprep.subr.mxu0 0.0
    %4941 = vmatpush1.msra.mxu0 0.0
    %4942 = vmatprep.subr.mxu0 0.0
    %4943 = vmatpush1.msra.mxu0 0.0
    %4944 = vmatprep.subr.mxu0 0.0
    %4945 = vmatpush1.msra.mxu0 0.0
    %4946 = vmatprep.subr.mxu0 0.0
    %4947 = vmatpush1.msra.mxu0 0.0
    %4948 = vmatprep.subr.mxu0 0.0
    %4949 = vmatpush1.msra.mxu0 0.0
    %4950 = vmatprep.subr.mxu0 0.0
    %4951 = vmatpush1.msra.mxu0 0.0
    %4952 = vmatprep.subr.mxu0 0.0
    %4953 = vmatpush1.msra.mxu0 0.0
    %4954 = vmatprep.subr.mxu0 0.0
    %4955 = vmatpush1.msra.mxu0 0.0
    %4956 = vmatprep.mubr.f32.mxu0 0.0
    %4957 = vmatmul.mubr.f32.gmra.mrb[0].mxu0 %v4754
    %v4958 = vpop.f32.mrb[0].mxu0
    %v4959 = vadd.f32 0.0, %v4958
    %v4960 = vpop.f32.mrb[0].mxu0
    %v4961 = vadd.f32 0.0, %v4960
    %4962 = vdwg.mxu0
    %v4963 = vadd.f32 %v788, %v4888
    %v4964 = vadd.f32 %v790, %v4890
    %v4965 = vadd.f32 %v889, %v4959
    %v4966 = vadd.f32 %v891, %v4961
    %v4967 = vxor.u32 %v4963, 2147483648
    %v4968 = vmul.f32 %v4967, 1.442695
    %v4969 = vpow.pop %v4968
    %v4970 = vadd.f32 %v4969, 1.0
    %v4971 = vrcp.pop %v4970
    %v4972 = vmul.f32 1.0, %v4971
    %v4973 = vxor.u32 %v4964, 2147483648
    %v4974 = vmul.f32 %v4973, 1.442695
    %v4975 = vpow.pop %v4974
    %v4976 = vadd.f32 %v4975, 1.0
    %v4977 = vrcp.pop %v4976
    %v4978 = vmul.f32 1.0, %v4977
    %v4979 = vtanh.pop %v4965
    %v4980 = vxor.u32 %v4966, 2147483648
    %v4981 = vmul.f32 %v4980, 1.442695
    %v4982 = vpow.pop %v4981
    %v4983 = vadd.f32 %v4982, 1.0
    %v4984 = vrcp.pop %v4983
    %v4985 = vmul.f32 1.0, %v4984
    %v4986 = vmul.f32 %v4978, 0.0
    %v4987 = vmul.f32 %v4972, %v4979
    %v4988 = vadd.f32 %v4986, %v4987
    %v4989 = vtanh.pop %v4988
    %v4990 = vmul.f32 %v4985, %v4989
    %4991 = vmatprep.subr.mxu0 %v4758
    %4992 = vmatpush1.msra.mxu0 %v4757
    %4993 = vmatprep.subr.mxu0 %v4762
    %4994 = vmatpush1.msra.mxu0 %v4761
    %4995 = vmatprep.subr.mxu0 %v4766
    %4996 = vmatpush1.msra.mxu0 %v4765
    %4997 = vmatprep.subr.mxu0 %v4770
    %4998 = vmatpush1.msra.mxu0 %v4769
    %4999 = vmatprep.subr.mxu0 %v4774
    %5000 = vmatpush1.msra.mxu0 %v4773
    %5001 = vmatprep.subr.mxu0 %v4778
    %5002 = vmatpush1.msra.mxu0 %v4777
    %5003 = vmatprep.subr.mxu0 %v4782
    %5004 = vmatpush1.msra.mxu0 %v4781
    %5005 = vmatprep.subr.mxu0 %v4786
    %5006 = vmatpush1.msra.mxu0 %v4785
    %5007 = vmatprep.subr.mxu0 %v4790
    %5008 = vmatpush1.msra.mxu0 %v4789
    %5009 = vmatprep.subr.mxu0 %v4794
    %5010 = vmatpush1.msra.mxu0 %v4793
    %5011 = vmatprep.subr.mxu0 %v4798
    %5012 = vmatpush1.msra.mxu0 %v4797
    %5013 = vmatprep.subr.mxu0 %v4802
    %5014 = vmatpush1.msra.mxu0 %v4801
    %5015 = vmatprep.subr.mxu0 %v4806
    %5016 = vmatpush1.msra.mxu0 %v4805
    %5017 = vmatprep.subr.mxu0 %v4810
    %5018 = vmatpush1.msra.mxu0 %v4809
    %5019 = vmatprep.subr.mxu0 %v4814
    %5020 = vmatpush1.msra.mxu0 %v4813
    %5021 = vmatprep.subr.mxu0 %v4818
    %5022 = vmatpush1.msra.mxu0 %v4817
    %5023 = vmatprep.subr.mxu0 0.0
    %5024 = vmatpush1.msra.mxu0 0.0
    %5025 = vmatprep.subr.mxu0 0.0
    %5026 = vmatpush1.msra.mxu0 0.0
    %5027 = vmatprep.subr.mxu0 0.0
    %5028 = vmatpush1.msra.mxu0 0.0
    %5029 = vmatprep.subr.mxu0 0.0
    %5030 = vmatpush1.msra.mxu0 0.0
    %5031 = vmatprep.subr.mxu0 0.0
    %5032 = vmatpush1.msra.mxu0 0.0
    %5033 = vmatprep.subr.mxu0 0.0
    %5034 = vmatpush1.msra.mxu0 0.0
    %5035 = vmatprep.subr.mxu0 0.0
    %5036 = vmatpush1.msra.mxu0 0.0
    %5037 = vmatprep.subr.mxu0 0.0
    %5038 = vmatpush1.msra.mxu0 0.0
    %5039 = vmatprep.subr.mxu0 0.0
    %5040 = vmatpush1.msra.mxu0 0.0
    %5041 = vmatprep.subr.mxu0 0.0
    %5042 = vmatpush1.msra.mxu0 0.0
    %5043 = vmatprep.subr.mxu0 0.0
    %5044 = vmatpush1.msra.mxu0 0.0
    %5045 = vmatprep.subr.mxu0 0.0
    %5046 = vmatpush1.msra.mxu0 0.0
    %5047 = vmatprep.subr.mxu0 0.0
    %5048 = vmatpush1.msra.mxu0 0.0
    %5049 = vmatprep.subr.mxu0 0.0
    %5050 = vmatpush1.msra.mxu0 0.0
    %5051 = vmatprep.subr.mxu0 0.0
    %5052 = vmatpush1.msra.mxu0 0.0
    %5053 = vmatprep.subr.mxu0 0.0
    %5054 = vmatpush1.msra.mxu0 0.0
    %5055 = vmatprep.mubr.f32.mxu0 0.0
    %5056 = vmatmul.mubr.f32.gmra.mrb[0].mxu0 %v4990
    %v5057 = vpop.f32.mrb[0].mxu0
    %v5058 = vadd.f32 0.0, %v5057
    %v5059 = vpop.f32.mrb[0].mxu0
    %v5060 = vadd.f32 0.0, %v5059
    %5061 = vdwg.mxu0
    %5062 = vmatprep.subr.mxu0 %v4760
    %5063 = vmatpush1.msra.mxu0 %v4759
    %5064 = vmatprep.subr.mxu0 %v4764
    %5065 = vmatpush1.msra.mxu0 %v4763
    %5066 = vmatprep.subr.mxu0 %v4768
    %5067 = vmatpush1.msra.mxu0 %v4767
    %5068 = vmatprep.subr.mxu0 %v4772
    %5069 = vmatpush1.msra.mxu0 %v4771
    %5070 = vmatprep.subr.mxu0 %v4776
    %5071 = vmatpush1.msra.mxu0 %v4775
    %5072 = vmatprep.subr.mxu0 %v4780
    %5073 = vmatpush1.msra.mxu0 %v4779
    %5074 = vmatprep.subr.mxu0 %v4784
    %5075 = vmatpush1.msra.mxu0 %v4783
    %5076 = vmatprep.subr.mxu0 %v4788
    %5077 = vmatpush1.msra.mxu0 %v4787
    %5078 = vmatprep.subr.mxu0 %v4792
    %5079 = vmatpush1.msra.mxu0 %v4791
    %5080 = vmatprep.subr.mxu0 %v4796
    %5081 = vmatpush1.msra.mxu0 %v4795
    %5082 = vmatprep.subr.mxu0 %v4800
    %5083 = vmatpush1.msra.mxu0 %v4799
    %5084 = vmatprep.subr.mxu0 %v4804
    %5085 = vmatpush1.msra.mxu0 %v4803
    %5086 = vmatprep.subr.mxu0 %v4808
    %5087 = vmatpush1.msra.mxu0 %v4807
    %5088 = vmatprep.subr.mxu0 %v4812
    %5089 = vmatpush1.msra.mxu0 %v4811
    %5090 = vmatprep.subr.mxu0 %v4816
    %5091 = vmatpush1.msra.mxu0 %v4815
    %5092 = vmatprep.subr.mxu0 %v4820
    %5093 = vmatpush1.msra.mxu0 %v4819
    %5094 = vmatprep.subr.mxu0 0.0
    %5095 = vmatpush1.msra.mxu0 0.0
    %5096 = vmatprep.subr.mxu0 0.0
    %5097 = vmatpush1.msra.mxu0 0.0
    %5098 = vmatprep.subr.mxu0 0.0
    %5099 = vmatpush1.msra.mxu0 0.0
    %5100 = vmatprep.subr.mxu0 0.0
    %5101 = vmatpush1.msra.mxu0 0.0
    %5102 = vmatprep.subr.mxu0 0.0
    %5103 = vmatpush1.msra.mxu0 0.0
    %5104 = vmatprep.subr.mxu0 0.0
    %5105 = vmatpush1.msra.mxu0 0.0
    %5106 = vmatprep.subr.mxu0 0.0
    %5107 = vmatpush1.msra.mxu0 0.0
    %5108 = vmatprep.subr.mxu0 0.0
    %5109 = vmatpush1.msra.mxu0 0.0
    %5110 = vmatprep.subr.mxu0 0.0
    %5111 = vmatpush1.msra.mxu0 0.0
    %5112 = vmatprep.subr.mxu0 0.0
    %5113 = vmatpush1.msra.mxu0 0.0
    %5114 = vmatprep.subr.mxu0 0.0
    %5115 = vmatpush1.msra.mxu0 0.0
    %5116 = vmatprep.subr.mxu0 0.0
    %5117 = vmatpush1.msra.mxu0 0.0
    %5118 = vmatprep.subr.mxu0 0.0
    %5119 = vmatpush1.msra.mxu0 0.0
    %5120 = vmatprep.subr.mxu0 0.0
    %5121 = vmatpush1.msra.mxu0 0.0
    %5122 = vmatprep.subr.mxu0 0.0
    %5123 = vmatpush1.msra.mxu0 0.0
    %5124 = vmatprep.subr.mxu0 0.0
    %5125 = vmatpush1.msra.mxu0 0.0
    %5126 = vmatprep.mubr.f32.mxu0 0.0
    %5127 = vmatmul.mubr.f32.gmra.mrb[0].mxu0 %v4990
    %v5128 = vpop.f32.mrb[0].mxu0
    %v5129 = vadd.f32 0.0, %v5128
    %v5130 = vpop.f32.mrb[0].mxu0
    %v5131 = vadd.f32 0.0, %v5130
    %5132 = vdwg.mxu0
    %v5133 = vadd.f32 %v794, %v5058
    %v5134 = vadd.f32 %v796, %v5060
    %v5135 = vadd.f32 %v895, %v5129
    %v5136 = vadd.f32 %v897, %v5131
    %v5137 = vxor.u32 %v5133, 2147483648
    %v5138 = vmul.f32 %v5137, 1.442695
    %v5139 = vpow.pop %v5138
    %v5140 = vadd.f32 %v5139, 1.0
    %v5141 = vrcp.pop %v5140
    %v5142 = vmul.f32 1.0, %v5141
    %v5143 = vxor.u32 %v5134, 2147483648
    %v5144 = vmul.f32 %v5143, 1.442695
    %v5145 = vpow.pop %v5144
    %v5146 = vadd.f32 %v5145, 1.0
    %v5147 = vrcp.pop %v5146
    %v5148 = vmul.f32 1.0, %v5147
    %v5149 = vtanh.pop %v5135
    %v5150 = vxor.u32 %v5136, 2147483648
    %v5151 = vmul.f32 %v5150, 1.442695
    %v5152 = vpow.pop %v5151
    %v5153 = vadd.f32 %v5152, 1.0
    %v5154 = vrcp.pop %v5153
    %v5155 = vmul.f32 1.0, %v5154
    %v5156 = vmul.f32 %v5148, %v4988
    %v5157 = vmul.f32 %v5142, %v5149
    %v5158 = vadd.f32 %v5156, %v5157
    %v5159 = vtanh.pop %v5158
    %v5160 = vmul.f32 %v5155, %v5159
    %5161 = vmatprep.subr.mxu0 %v4758
    %5162 = vmatpush1.msra.mxu0 %v4757
    %5163 = vmatprep.subr.mxu0 %v4762
    %5164 = vmatpush1.msra.mxu0 %v4761
    %5165 = vmatprep.subr.mxu0 %v4766
    %5166 = vmatpush1.msra.mxu0 %v4765
    %5167 = vmatprep.subr.mxu0 %v4770
    %5168 = vmatpush1.msra.mxu0 %v4769
    %5169 = vmatprep.subr.mxu0 %v4774
    %5170 = vmatpush1.msra.mxu0 %v4773
    %5171 = vmatprep.subr.mxu0 %v4778
    %5172 = vmatpush1.msra.mxu0 %v4777
    %5173 = vmatprep.subr.mxu0 %v4782
    %5174 = vmatpush1.msra.mxu0 %v4781
    %5175 = vmatprep.subr.mxu0 %v4786
    %5176 = vmatpush1.msra.mxu0 %v4785
    %5177 = vmatprep.subr.mxu0 %v4790
    %5178 = vmatpush1.msra.mxu0 %v4789
    %5179 = vmatprep.subr.mxu0 %v4794
    %5180 = vmatpush1.msra.mxu0 %v4793
    %5181 = vmatprep.subr.mxu0 %v4798
    %5182 = vmatpush1.msra.mxu0 %v4797
    %5183 = vmatprep.subr.mxu0 %v4802
    %5184 = vmatpush1.msra.mxu0 %v4801
    %5185 = vmatprep.subr.mxu0 %v4806
    %5186 = vmatpush1.msra.mxu0 %v4805
    %5187 = vmatprep.subr.mxu0 %v4810
    %5188 = vmatpush1.msra.mxu0 %v4809
    %5189 = vmatprep.subr.mxu0 %v4814
    %5190 = vmatpush1.msra.mxu0 %v4813
    %5191 = vmatprep.subr.mxu0 %v4818
    %5192 = vmatpush1.msra.mxu0 %v4817
    %5193 = vmatprep.subr.mxu0 0.0
    %5194 = vmatpush1.msra.mxu0 0.0
    %5195 = vmatprep.subr.mxu0 0.0
    %5196 = vmatpush1.msra.mxu0 0.0
    %5197 = vmatprep.subr.mxu0 0.0
    %5198 = vmatpush1.msra.mxu0 0.0
    %5199 = vmatprep.subr.mxu0 0.0
    %5200 = vmatpush1.msra.mxu0 0.0
    %5201 = vmatprep.subr.mxu0 0.0
    %5202 = vmatpush1.msra.mxu0 0.0
    %5203 = vmatprep.subr.mxu0 0.0
    %5204 = vmatpush1.msra.mxu0 0.0
    %5205 = vmatprep.subr.mxu0 0.0
    %5206 = vmatpush1.msra.mxu0 0.0
    %5207 = vmatprep.subr.mxu0 0.0
    %5208 = vmatpush1.msra.mxu0 0.0
    %5209 = vmatprep.subr.mxu0 0.0
    %5210 = vmatpush1.msra.mxu0 0.0
    %5211 = vmatprep.subr.mxu0 0.0
    %5212 = vmatpush1.msra.mxu0 0.0
    %5213 = vmatprep.subr.mxu0 0.0
    %5214 = vmatpush1.msra.mxu0 0.0
    %5215 = vmatprep.subr.mxu0 0.0
    %5216 = vmatpush1.msra.mxu0 0.0
    %5217 = vmatprep.subr.mxu0 0.0
    %5218 = vmatpush1.msra.mxu0 0.0
    %5219 = vmatprep.subr.mxu0 0.0
    %5220 = vmatpush1.msra.mxu0 0.0
    %5221 = vmatprep.subr.mxu0 0.0
    %5222 = vmatpush1.msra.mxu0 0.0
    %5223 = vmatprep.subr.mxu0 0.0
    %5224 = vmatpush1.msra.mxu0 0.0
    %5225 = vmatprep.mubr.f32.mxu0 0.0
    %5226 = vmatmul.mubr.f32.gmra.mrb[0].mxu0 %v5160
    %v5227 = vpop.f32.mrb[0].mxu0
    %v5228 = vadd.f32 0.0, %v5227
    %v5229 = vpop.f32.mrb[0].mxu0
    %v5230 = vadd.f32 0.0, %v5229
    %5231 = vdwg.mxu0
    %5232 = vmatprep.subr.mxu0 %v4760
    %5233 = vmatpush1.msra.mxu0 %v4759
    %5234 = vmatprep.subr.mxu0 %v4764
    %5235 = vmatpush1.msra.mxu0 %v4763
    %5236 = vmatprep.subr.mxu0 %v4768
    %5237 = vmatpush1.msra.mxu0 %v4767
    %5238 = vmatprep.subr.mxu0 %v4772
    %5239 = vmatpush1.msra.mxu0 %v4771
    %5240 = vmatprep.subr.mxu0 %v4776
    %5241 = vmatpush1.msra.mxu0 %v4775
    %5242 = vmatprep.subr.mxu0 %v4780
    %5243 = vmatpush1.msra.mxu0 %v4779
    %5244 = vmatprep.subr.mxu0 %v4784
    %5245 = vmatpush1.msra.mxu0 %v4783
    %5246 = vmatprep.subr.mxu0 %v4788
    %5247 = vmatpush1.msra.mxu0 %v4787
    %5248 = vmatprep.subr.mxu0 %v4792
    %5249 = vmatpush1.msra.mxu0 %v4791
    %5250 = vmatprep.subr.mxu0 %v4796
    %5251 = vmatpush1.msra.mxu0 %v4795
    %5252 = vmatprep.subr.mxu0 %v4800
    %5253 = vmatpush1.msra.mxu0 %v4799
    %5254 = vmatprep.subr.mxu0 %v4804
    %5255 = vmatpush1.msra.mxu0 %v4803
    %5256 = vmatprep.subr.mxu0 %v4808
    %5257 = vmatpush1.msra.mxu0 %v4807
    %5258 = vmatprep.subr.mxu0 %v4812
    %5259 = vmatpush1.msra.mxu0 %v4811
    %5260 = vmatprep.subr.mxu0 %v4816
    %5261 = vmatpush1.msra.mxu0 %v4815
    %5262 = vmatprep.subr.mxu0 %v4820
    %5263 = vmatpush1.msra.mxu0 %v4819
    %5264 = vmatprep.subr.mxu0 0.0
    %5265 = vmatpush1.msra.mxu0 0.0
    %5266 = vmatprep.subr.mxu0 0.0
    %5267 = vmatpush1.msra.mxu0 0.0
    %5268 = vmatprep.subr.mxu0 0.0
    %5269 = vmatpush1.msra.mxu0 0.0
    %5270 = vmatprep.subr.mxu0 0.0
    %5271 = vmatpush1.msra.mxu0 0.0
    %5272 = vmatprep.subr.mxu0 0.0
    %5273 = vmatpush1.msra.mxu0 0.0
    %5274 = vmatprep.subr.mxu0 0.0
    %5275 = vmatpush1.msra.mxu0 0.0
    %5276 = vmatprep.subr.mxu0 0.0
    %5277 = vmatpush1.msra.mxu0 0.0
    %5278 = vmatprep.subr.mxu0 0.0
    %5279 = vmatpush1.msra.mxu0 0.0
    %5280 = vmatprep.subr.mxu0 0.0
    %5281 = vmatpush1.msra.mxu0 0.0
    %5282 = vmatprep.subr.mxu0 0.0
    %5283 = vmatpush1.msra.mxu0 0.0
    %5284 = vmatprep.subr.mxu0 0.0
    %5285 = vmatpush1.msra.mxu0 0.0
    %5286 = vmatprep.subr.mxu0 0.0
    %5287 = vmatpush1.msra.mxu0 0.0
    %5288 = vmatprep.subr.mxu0 0.0
    %5289 = vmatpush1.msra.mxu0 0.0
    %5290 = vmatprep.subr.mxu0 0.0
    %5291 = vmatpush1.msra.mxu0 0.0
    %5292 = vmatprep.subr.mxu0 0.0
    %5293 = vmatpush1.msra.mxu0 0.0
    %5294 = vmatprep.subr.mxu0 0.0
    %5295 = vmatpush1.msra.mxu0 0.0
    %5296 = vmatprep.mubr.f32.mxu0 0.0
    %5297 = vmatmul.mubr.f32.gmra.mrb[0].mxu0 %v5160
    %v5298 = vpop.f32.mrb[0].mxu0
    %v5299 = vadd.f32 0.0, %v5298
    %v5300 = vpop.f32.mrb[0].mxu0
    %v5301 = vadd.f32 0.0, %v5300
    %5302 = vdwg.mxu0
    %v5303 = vadd.f32 %v800, %v5228
    %v5304 = vadd.f32 %v802, %v5230
    %v5305 = vadd.f32 %v901, %v5299
    %v5306 = vadd.f32 %v903, %v5301
    %v5307 = vxor.u32 %v5303, 2147483648
    %v5308 = vmul.f32 %v5307, 1.442695
    %v5309 = vpow.pop %v5308
    %v5310 = vadd.f32 %v5309, 1.0
    %v5311 = vrcp.pop %v5310
    %v5312 = vmul.f32 1.0, %v5311
    %v5313 = vxor.u32 %v5304, 2147483648
    %v5314 = vmul.f32 %v5313, 1.442695
    %v5315 = vpow.pop %v5314
    %v5316 = vadd.f32 %v5315, 1.0
    %v5317 = vrcp.pop %v5316
    %v5318 = vmul.f32 1.0, %v5317
    %v5319 = vtanh.pop %v5305
    %v5320 = vxor.u32 %v5306, 2147483648
    %v5321 = vmul.f32 %v5320, 1.442695
    %v5322 = vpow.pop %v5321
    %v5323 = vadd.f32 %v5322, 1.0
    %v5324 = vrcp.pop %v5323
    %v5325 = vmul.f32 1.0, %v5324
    %v5326 = vmul.f32 %v5318, %v5158
    %v5327 = vmul.f32 %v5312, %v5319
    %v5328 = vadd.f32 %v5326, %v5327
    %v5329 = vtanh.pop %v5328
    %v5330 = vmul.f32 %v5325, %v5329
    %5331 = vmatprep.subr.mxu0 %v4758
    %5332 = vmatpush1.msra.mxu0 %v4757
    %5333 = vmatprep.subr.mxu0 %v4762
    %5334 = vmatpush1.msra.mxu0 %v4761
    %5335 = vmatprep.subr.mxu0 %v4766
    %5336 = vmatpush1.msra.mxu0 %v4765
    %5337 = vmatprep.subr.mxu0 %v4770
    %5338 = vmatpush1.msra.mxu0 %v4769
    %5339 = vmatprep.subr.mxu0 %v4774
    %5340 = vmatpush1.msra.mxu0 %v4773
    %5341 = vmatprep.subr.mxu0 %v4778
    %5342 = vmatpush1.msra.mxu0 %v4777
    %5343 = vmatprep.subr.mxu0 %v4782
    %5344 = vmatpush1.msra.mxu0 %v4781
    %5345 = vmatprep.subr.mxu0 %v4786
    %5346 = vmatpush1.msra.mxu0 %v4785
    %5347 = vmatprep.subr.mxu0 %v4790
    %5348 = vmatpush1.msra.mxu0 %v4789
    %5349 = vmatprep.subr.mxu0 %v4794
    %5350 = vmatpush1.msra.mxu0 %v4793
    %5351 = vmatprep.subr.mxu0 %v4798
    %5352 = vmatpush1.msra.mxu0 %v4797
    %5353 = vmatprep.subr.mxu0 %v4802
    %5354 = vmatpush1.msra.mxu0 %v4801
    %5355 = vmatprep.subr.mxu0 %v4806
    %5356 = vmatpush1.msra.mxu0 %v4805
    %5357 = vmatprep.subr.mxu0 %v4810
    %5358 = vmatpush1.msra.mxu0 %v4809
    %5359 = vmatprep.subr.mxu0 %v4814
    %5360 = vmatpush1.msra.mxu0 %v4813
    %5361 = vmatprep.subr.mxu0 %v4818
    %5362 = vmatpush1.msra.mxu0 %v4817
    %5363 = vmatprep.subr.mxu0 0.0
    %5364 = vmatpush1.msra.mxu0 0.0
    %5365 = vmatprep.subr.mxu0 0.0
    %5366 = vmatpush1.msra.mxu0 0.0
    %5367 = vmatprep.subr.mxu0 0.0
    %5368 = vmatpush1.msra.mxu0 0.0
    %5369 = vmatprep.subr.mxu0 0.0
    %5370 = vmatpush1.msra.mxu0 0.0
    %5371 = vmatprep.subr.mxu0 0.0
    %5372 = vmatpush1.msra.mxu0 0.0
    %5373 = vmatprep.subr.mxu0 0.0
    %5374 = vmatpush1.msra.mxu0 0.0
    %5375 = vmatprep.subr.mxu0 0.0
    %5376 = vmatpush1.msra.mxu0 0.0
    %5377 = vmatprep.subr.mxu0 0.0
    %5378 = vmatpush1.msra.mxu0 0.0
    %5379 = vmatprep.subr.mxu0 0.0
    %5380 = vmatpush1.msra.mxu0 0.0
    %5381 = vmatprep.subr.mxu0 0.0
    %5382 = vmatpush1.msra.mxu0 0.0
    %5383 = vmatprep.subr.mxu0 0.0
    %5384 = vmatpush1.msra.mxu0 0.0
    %5385 = vmatprep.subr.mxu0 0.0
    %5386 = vmatpush1.msra.mxu0 0.0
    %5387 = vmatprep.subr.mxu0 0.0
    %5388 = vmatpush1.msra.mxu0 0.0
    %5389 = vmatprep.subr.mxu0 0.0
    %5390 = vmatpush1.msra.mxu0 0.0
    %5391 = vmatprep.subr.mxu0 0.0
    %5392 = vmatpush1.msra.mxu0 0.0
    %5393 = vmatprep.subr.mxu0 0.0
    %5394 = vmatpush1.msra.mxu0 0.0
    %5395 = vmatprep.mubr.f32.mxu0 0.0
    %5396 = vmatmul.mubr.f32.gmra.mrb[0].mxu0 %v5330
    %v5397 = vpop.f32.mrb[0].mxu0
    %v5398 = vadd.f32 0.0, %v5397
    %v5399 = vpop.f32.mrb[0].mxu0
    %v5400 = vadd.f32 0.0, %v5399
    %5401 = vdwg.mxu0
    %5402 = vmatprep.subr.mxu0 %v4760
    %5403 = vmatpush1.msra.mxu0 %v4759
    %5404 = vmatprep.subr.mxu0 %v4764
    %5405 = vmatpush1.msra.mxu0 %v4763
    %5406 = vmatprep.subr.mxu0 %v4768
    %5407 = vmatpush1.msra.mxu0 %v4767
    %5408 = vmatprep.subr.mxu0 %v4772
    %5409 = vmatpush1.msra.mxu0 %v4771
    %5410 = vmatprep.subr.mxu0 %v4776
    %5411 = vmatpush1.msra.mxu0 %v4775
    %5412 = vmatprep.subr.mxu0 %v4780
    %5413 = vmatpush1.msra.mxu0 %v4779
    %5414 = vmatprep.subr.mxu0 %v4784
    %5415 = vmatpush1.msra.mxu0 %v4783
    %5416 = vmatprep.subr.mxu0 %v4788
    %5417 = vmatpush1.msra.mxu0 %v4787
    %5418 = vmatprep.subr.mxu0 %v4792
    %5419 = vmatpush1.msra.mxu0 %v4791
    %5420 = vmatprep.subr.mxu0 %v4796
    %5421 = vmatpush1.msra.mxu0 %v4795
    %5422 = vmatprep.subr.mxu0 %v4800
    %5423 = vmatpush1.msra.mxu0 %v4799
    %5424 = vmatprep.subr.mxu0 %v4804
    %5425 = vmatpush1.msra.mxu0 %v4803
    %5426 = vmatprep.subr.mxu0 %v4808
    %5427 = vmatpush1.msra.mxu0 %v4807
    %5428 = vmatprep.subr.mxu0 %v4812
    %5429 = vmatpush1.msra.mxu0 %v4811
    %5430 = vmatprep.subr.mxu0 %v4816
    %5431 = vmatpush1.msra.mxu0 %v4815
    %5432 = vmatprep.subr.mxu0 %v4820
    %5433 = vmatpush1.msra.mxu0 %v4819
    %5434 = vmatprep.subr.mxu0 0.0
    %5435 = vmatpush1.msra.mxu0 0.0
    %5436 = vmatprep.subr.mxu0 0.0
    %5437 = vmatpush1.msra.mxu0 0.0
    %5438 = vmatprep.subr.mxu0 0.0
    %5439 = vmatpush1.msra.mxu0 0.0
    %5440 = vmatprep.subr.mxu0 0.0
    %5441 = vmatpush1.msra.mxu0 0.0
    %5442 = vmatprep.subr.mxu0 0.0
    %5443 = vmatpush1.msra.mxu0 0.0
    %5444 = vmatprep.subr.mxu0 0.0
    %5445 = vmatpush1.msra.mxu0 0.0
    %5446 = vmatprep.subr.mxu0 0.0
    %5447 = vmatpush1.msra.mxu0 0.0
    %5448 = vmatprep.subr.mxu0 0.0
    %5449 = vmatpush1.msra.mxu0 0.0
    %5450 = vmatprep.subr.mxu0 0.0
    %5451 = vmatpush1.msra.mxu0 0.0
    %5452 = vmatprep.subr.mxu0 0.0
    %5453 = vmatpush1.msra.mxu0 0.0
    %5454 = vmatprep.subr.mxu0 0.0
    %5455 = vmatpush1.msra.mxu0 0.0
    %5456 = vmatprep.subr.mxu0 0.0
    %5457 = vmatpush1.msra.mxu0 0.0
    %5458 = vmatprep.subr.mxu0 0.0
    %5459 = vmatpush1.msra.mxu0 0.0
    %5460 = vmatprep.subr.mxu0 0.0
    %5461 = vmatpush1.msra.mxu0 0.0
    %5462 = vmatprep.subr.mxu0 0.0
    %5463 = vmatpush1.msra.mxu0 0.0
    %5464 = vmatprep.subr.mxu0 0.0
    %5465 = vmatpush1.msra.mxu0 0.0
    %5466 = vmatprep.mubr.f32.mxu0 0.0
    %5467 = vmatmul.mubr.f32.gmra.mrb[0].mxu0 %v5330
    %v5468 = vpop.f32.mrb[0].mxu0
    %v5469 = vadd.f32 0.0, %v5468
    %v5470 = vpop.f32.mrb[0].mxu0
    %v5471 = vadd.f32 0.0, %v5470
    %5472 = vdwg.mxu0
    %v5473 = vadd.f32 %v806, %v5398
    %v5474 = vadd.f32 %v808, %v5400
    %v5475 = vadd.f32 %v907, %v5469
    %v5476 = vadd.f32 %v909, %v5471
    %v5477 = vxor.u32 %v5473, 2147483648
    %v5478 = vmul.f32 %v5477, 1.442695
    %v5479 = vpow.pop %v5478
    %v5480 = vadd.f32 %v5479, 1.0
    %v5481 = vrcp.pop %v5480
    %v5482 = vmul.f32 1.0, %v5481
    %v5483 = vxor.u32 %v5474, 2147483648
    %v5484 = vmul.f32 %v5483, 1.442695
    %v5485 = vpow.pop %v5484
    %v5486 = vadd.f32 %v5485, 1.0
    %v5487 = vrcp.pop %v5486
    %v5488 = vmul.f32 1.0, %v5487
    %v5489 = vtanh.pop %v5475
    %v5490 = vxor.u32 %v5476, 2147483648
    %v5491 = vmul.f32 %v5490, 1.442695
    %v5492 = vpow.pop %v5491
    %v5493 = vadd.f32 %v5492, 1.0
    %v5494 = vrcp.pop %v5493
    %v5495 = vmul.f32 1.0, %v5494
    %v5496 = vmul.f32 %v5488, %v5328
    %v5497 = vmul.f32 %v5482, %v5489
    %v5498 = vadd.f32 %v5496, %v5497
    %v5499 = vtanh.pop %v5498
    %v5500 = vmul.f32 %v5495, %v5499
    %5501 = vmatprep.subr.mxu0 %v4758
    %5502 = vmatpush1.msra.mxu0 %v4757
    %5503 = vmatprep.subr.mxu0 %v4762
    %5504 = vmatpush1.msra.mxu0 %v4761
    %5505 = vmatprep.subr.mxu0 %v4766
    %5506 = vmatpush1.msra.mxu0 %v4765
    %5507 = vmatprep.subr.mxu0 %v4770
    %5508 = vmatpush1.msra.mxu0 %v4769
    %5509 = vmatprep.subr.mxu0 %v4774
    %5510 = vmatpush1.msra.mxu0 %v4773
    %5511 = vmatprep.subr.mxu0 %v4778
    %5512 = vmatpush1.msra.mxu0 %v4777
    %5513 = vmatprep.subr.mxu0 %v4782
    %5514 = vmatpush1.msra.mxu0 %v4781
    %5515 = vmatprep.subr.mxu0 %v4786
    %5516 = vmatpush1.msra.mxu0 %v4785
    %5517 = vmatprep.subr.mxu0 %v4790
    %5518 = vmatpush1.msra.mxu0 %v4789
    %5519 = vmatprep.subr.mxu0 %v4794
    %5520 = vmatpush1.msra.mxu0 %v4793
    %5521 = vmatprep.subr.mxu0 %v4798
    %5522 = vmatpush1.msra.mxu0 %v4797
    %5523 = vmatprep.subr.mxu0 %v4802
    %5524 = vmatpush1.msra.mxu0 %v4801
    %5525 = vmatprep.subr.mxu0 %v4806
    %5526 = vmatpush1.msra.mxu0 %v4805
    %5527 = vmatprep.subr.mxu0 %v4810
    %5528 = vmatpush1.msra.mxu0 %v4809
    %5529 = vmatprep.subr.mxu0 %v4814
    %5530 = vmatpush1.msra.mxu0 %v4813
    %5531 = vmatprep.subr.mxu0 %v4818
    %5532 = vmatpush1.msra.mxu0 %v4817
    %5533 = vmatprep.subr.mxu0 0.0
    %5534 = vmatpush1.msra.mxu0 0.0
    %5535 = vmatprep.subr.mxu0 0.0
    %5536 = vmatpush1.msra.mxu0 0.0
    %5537 = vmatprep.subr.mxu0 0.0
    %5538 = vmatpush1.msra.mxu0 0.0
    %5539 = vmatprep.subr.mxu0 0.0
    %5540 = vmatpush1.msra.mxu0 0.0
    %5541 = vmatprep.subr.mxu0 0.0
    %5542 = vmatpush1.msra.mxu0 0.0
    %5543 = vmatprep.subr.mxu0 0.0
    %5544 = vmatpush1.msra.mxu0 0.0
    %5545 = vmatprep.subr.mxu0 0.0
    %5546 = vmatpush1.msra.mxu0 0.0
    %5547 = vmatprep.subr.mxu0 0.0
    %5548 = vmatpush1.msra.mxu0 0.0
    %5549 = vmatprep.subr.mxu0 0.0
    %5550 = vmatpush1.msra.mxu0 0.0
    %5551 = vmatprep.subr.mxu0 0.0
    %5552 = vmatpush1.msra.mxu0 0.0
    %5553 = vmatprep.subr.mxu0 0.0
    %5554 = vmatpush1.msra.mxu0 0.0
    %5555 = vmatprep.subr.mxu0 0.0
    %5556 = vmatpush1.msra.mxu0 0.0
    %5557 = vmatprep.subr.mxu0 0.0
    %5558 = vmatpush1.msra.mxu0 0.0
    %5559 = vmatprep.subr.mxu0 0.0
    %5560 = vmatpush1.msra.mxu0 0.0
    %5561 = vmatprep.subr.mxu0 0.0
    %5562 = vmatpush1.msra.mxu0 0.0
    %5563 = vmatprep.subr.mxu0 0.0
    %5564 = vmatpush1.msra.mxu0 0.0
    %5565 = vmatprep.mubr.f32.mxu0 0.0
    %5566 = vmatmul.mubr.f32.gmra.mrb[0].mxu0 %v5500
    %v5567 = vpop.f32.mrb[0].mxu0
    %v5568 = vadd.f32 0.0, %v5567
    %v5569 = vpop.f32.mrb[0].mxu0
    %v5570 = vadd.f32 0.0, %v5569
    %5571 = vdwg.mxu0
    %5572 = vmatprep.subr.mxu0 %v4760
    %5573 = vmatpush1.msra.mxu0 %v4759
    %5574 = vmatprep.subr.mxu0 %v4764
    %5575 = vmatpush1.msra.mxu0 %v4763
    %5576 = vmatprep.subr.mxu0 %v4768
    %5577 = vmatpush1.msra.mxu0 %v4767
    %5578 = vmatprep.subr.mxu0 %v4772
    %5579 = vmatpush1.msra.mxu0 %v4771
    %5580 = vmatprep.subr.mxu0 %v4776
    %5581 = vmatpush1.msra.mxu0 %v4775
    %5582 = vmatprep.subr.mxu0 %v4780
    %5583 = vmatpush1.msra.mxu0 %v4779
    %5584 = vmatprep.subr.mxu0 %v4784
    %5585 = vmatpush1.msra.mxu0 %v4783
    %5586 = vmatprep.subr.mxu0 %v4788
    %5587 = vmatpush1.msra.mxu0 %v4787
    %5588 = vmatprep.subr.mxu0 %v4792
    %5589 = vmatpush1.msra.mxu0 %v4791
    %5590 = vmatprep.subr.mxu0 %v4796
    %5591 = vmatpush1.msra.mxu0 %v4795
    %5592 = vmatprep.subr.mxu0 %v4800
    %5593 = vmatpush1.msra.mxu0 %v4799
    %5594 = vmatprep.subr.mxu0 %v4804
    %5595 = vmatpush1.msra.mxu0 %v4803
    %5596 = vmatprep.subr.mxu0 %v4808
    %5597 = vmatpush1.msra.mxu0 %v4807
    %5598 = vmatprep.subr.mxu0 %v4812
    %5599 = vmatpush1.msra.mxu0 %v4811
    %5600 = vmatprep.subr.mxu0 %v4816
    %5601 = vmatpush1.msra.mxu0 %v4815
    %5602 = vmatprep.subr.mxu0 %v4820
    %5603 = vmatpush1.msra.mxu0 %v4819
    %5604 = vmatprep.subr.mxu0 0.0
    %5605 = vmatpush1.msra.mxu0 0.0
    %5606 = vmatprep.subr.mxu0 0.0
    %5607 = vmatpush1.msra.mxu0 0.0
    %5608 = vmatprep.subr.mxu0 0.0
    %5609 = vmatpush1.msra.mxu0 0.0
    %5610 = vmatprep.subr.mxu0 0.0
    %5611 = vmatpush1.msra.mxu0 0.0
    %5612 = vmatprep.subr.mxu0 0.0
    %5613 = vmatpush1.msra.mxu0 0.0
    %5614 = vmatprep.subr.mxu0 0.0
    %5615 = vmatpush1.msra.mxu0 0.0
    %5616 = vmatprep.subr.mxu0 0.0
    %5617 = vmatpush1.msra.mxu0 0.0
    %5618 = vmatprep.subr.mxu0 0.0
    %5619 = vmatpush1.msra.mxu0 0.0
    %5620 = vmatprep.subr.mxu0 0.0
    %5621 = vmatpush1.msra.mxu0 0.0
    %5622 = vmatprep.subr.mxu0 0.0
    %5623 = vmatpush1.msra.mxu0 0.0
    %5624 = vmatprep.subr.mxu0 0.0
    %5625 = vmatpush1.msra.mxu0 0.0
    %5626 = vmatprep.subr.mxu0 0.0
    %5627 = vmatpush1.msra.mxu0 0.0
    %5628 = vmatprep.subr.mxu0 0.0
    %5629 = vmatpush1.msra.mxu0 0.0
    %5630 = vmatprep.subr.mxu0 0.0
    %5631 = vmatpush1.msra.mxu0 0.0
    %5632 = vmatprep.subr.mxu0 0.0
    %5633 = vmatpush1.msra.mxu0 0.0
    %5634 = vmatprep.subr.mxu0 0.0
    %5635 = vmatpush1.msra.mxu0 0.0
    %5636 = vmatprep.mubr.f32.mxu0 0.0
    %5637 = vmatmul.mubr.f32.gmra.mrb[0].mxu0 %v5500
    %v5638 = vpop.f32.mrb[0].mxu0
    %v5639 = vadd.f32 0.0, %v5638
    %v5640 = vpop.f32.mrb[0].mxu0
    %v5641 = vadd.f32 0.0, %v5640
    %5642 = vdwg.mxu0
    %v5643 = vadd.f32 %v812, %v5568
    %v5644 = vadd.f32 %v814, %v5570
    %v5645 = vadd.f32 %v913, %v5639
    %v5646 = vadd.f32 %v915, %v5641
    %v5647 = vxor.u32 %v5643, 2147483648
    %v5648 = vmul.f32 %v5647, 1.442695
    %v5649 = vpow.pop %v5648
    %v5650 = vadd.f32 %v5649, 1.0
    %v5651 = vrcp.pop %v5650
    %v5652 = vmul.f32 1.0, %v5651
    %v5653 = vxor.u32 %v5644, 2147483648
    %v5654 = vmul.f32 %v5653, 1.442695
    %v5655 = vpow.pop %v5654
    %v5656 = vadd.f32 %v5655, 1.0
    %v5657 = vrcp.pop %v5656
    %v5658 = vmul.f32 1.0, %v5657
    %v5659 = vtanh.pop %v5645
    %v5660 = vxor.u32 %v5646, 2147483648
    %v5661 = vmul.f32 %v5660, 1.442695
    %v5662 = vpow.pop %v5661
    %v5663 = vadd.f32 %v5662, 1.0
    %v5664 = vrcp.pop %v5663
    %v5665 = vmul.f32 1.0, %v5664
    %v5666 = vmul.f32 %v5658, %v5498
    %v5667 = vmul.f32 %v5652, %v5659
    %v5668 = vadd.f32 %v5666, %v5667
    %v5669 = vtanh.pop %v5668
    %v5670 = vmul.f32 %v5665, %v5669
    %5671 = vmatprep.subr.mxu0 %v4758
    %5672 = vmatpush1.msra.mxu0 %v4757
    %5673 = vmatprep.subr.mxu0 %v4762
    %5674 = vmatpush1.msra.mxu0 %v4761
    %5675 = vmatprep.subr.mxu0 %v4766
    %5676 = vmatpush1.msra.mxu0 %v4765
    %5677 = vmatprep.subr.mxu0 %v4770
    %5678 = vmatpush1.msra.mxu0 %v4769
    %5679 = vmatprep.subr.mxu0 %v4774
    %5680 = vmatpush1.msra.mxu0 %v4773
    %5681 = vmatprep.subr.mxu0 %v4778
    %5682 = vmatpush1.msra.mxu0 %v4777
    %5683 = vmatprep.subr.mxu0 %v4782
    %5684 = vmatpush1.msra.mxu0 %v4781
    %5685 = vmatprep.subr.mxu0 %v4786
    %5686 = vmatpush1.msra.mxu0 %v4785
    %5687 = vmatprep.subr.mxu0 %v4790
    %5688 = vmatpush1.msra.mxu0 %v4789
    %5689 = vmatprep.subr.mxu0 %v4794
    %5690 = vmatpush1.msra.mxu0 %v4793
    %5691 = vmatprep.subr.mxu0 %v4798
    %5692 = vmatpush1.msra.mxu0 %v4797
    %5693 = vmatprep.subr.mxu0 %v4802
    %5694 = vmatpush1.msra.mxu0 %v4801
    %5695 = vmatprep.subr.mxu0 %v4806
    %5696 = vmatpush1.msra.mxu0 %v4805
    %5697 = vmatprep.subr.mxu0 %v4810
    %5698 = vmatpush1.msra.mxu0 %v4809
    %5699 = vmatprep.subr.mxu0 %v4814
    %5700 = vmatpush1.msra.mxu0 %v4813
    %5701 = vmatprep.subr.mxu0 %v4818
    %5702 = vmatpush1.msra.mxu0 %v4817
    %5703 = vmatprep.subr.mxu0 0.0
    %5704 = vmatpush1.msra.mxu0 0.0
    %5705 = vmatprep.subr.mxu0 0.0
    %5706 = vmatpush1.msra.mxu0 0.0
    %5707 = vmatprep.subr.mxu0 0.0
    %5708 = vmatpush1.msra.mxu0 0.0
    %5709 = vmatprep.subr.mxu0 0.0
    %5710 = vmatpush1.msra.mxu0 0.0
    %5711 = vmatprep.subr.mxu0 0.0
    %5712 = vmatpush1.msra.mxu0 0.0
    %5713 = vmatprep.subr.mxu0 0.0
    %5714 = vmatpush1.msra.mxu0 0.0
    %5715 = vmatprep.subr.mxu0 0.0
    %5716 = vmatpush1.msra.mxu0 0.0
    %5717 = vmatprep.subr.mxu0 0.0
    %5718 = vmatpush1.msra.mxu0 0.0
    %5719 = vmatprep.subr.mxu0 0.0
    %5720 = vmatpush1.msra.mxu0 0.0
    %5721 = vmatprep.subr.mxu0 0.0
    %5722 = vmatpush1.msra.mxu0 0.0
    %5723 = vmatprep.subr.mxu0 0.0
    %5724 = vmatpush1.msra.mxu0 0.0
    %5725 = vmatprep.subr.mxu0 0.0
    %5726 = vmatpush1.msra.mxu0 0.0
    %5727 = vmatprep.subr.mxu0 0.0
    %5728 = vmatpush1.msra.mxu0 0.0
    %5729 = vmatprep.subr.mxu0 0.0
    %5730 = vmatpush1.msra.mxu0 0.0
    %5731 = vmatprep.subr.mxu0 0.0
    %5732 = vmatpush1.msra.mxu0 0.0
    %5733 = vmatprep.subr.mxu0 0.0
    %5734 = vmatpush1.msra.mxu0 0.0
    %5735 = vmatprep.mubr.f32.mxu0 0.0
    %5736 = vmatmul.mubr.f32.gmra.mrb[0].mxu0 %v5670
    %v5737 = vpop.f32.mrb[0].mxu0
    %v5738 = vadd.f32 0.0, %v5737
    %v5739 = vpop.f32.mrb[0].mxu0
    %v5740 = vadd.f32 0.0, %v5739
    %5741 = vdwg.mxu0
    %5742 = vmatprep.subr.mxu0 %v4760
    %5743 = vmatpush1.msra.mxu0 %v4759
    %5744 = vmatprep.subr.mxu0 %v4764
    %5745 = vmatpush1.msra.mxu0 %v4763
    %5746 = vmatprep.subr.mxu0 %v4768
    %5747 = vmatpush1.msra.mxu0 %v4767
    %5748 = vmatprep.subr.mxu0 %v4772
    %5749 = vmatpush1.msra.mxu0 %v4771
    %5750 = vmatprep.subr.mxu0 %v4776
    %5751 = vmatpush1.msra.mxu0 %v4775
    %5752 = vmatprep.subr.mxu0 %v4780
    %5753 = vmatpush1.msra.mxu0 %v4779
    %5754 = vmatprep.subr.mxu0 %v4784
    %5755 = vmatpush1.msra.mxu0 %v4783
    %5756 = vmatprep.subr.mxu0 %v4788
    %5757 = vmatpush1.msra.mxu0 %v4787
    %5758 = vmatprep.subr.mxu0 %v4792
    %5759 = vmatpush1.msra.mxu0 %v4791
    %5760 = vmatprep.subr.mxu0 %v4796
    %5761 = vmatpush1.msra.mxu0 %v4795
    %5762 = vmatprep.subr.mxu0 %v4800
    %5763 = vmatpush1.msra.mxu0 %v4799
    %5764 = vmatprep.subr.mxu0 %v4804
    %5765 = vmatpush1.msra.mxu0 %v4803
    %5766 = vmatprep.subr.mxu0 %v4808
    %5767 = vmatpush1.msra.mxu0 %v4807
    %5768 = vmatprep.subr.mxu0 %v4812
    %5769 = vmatpush1.msra.mxu0 %v4811
    %5770 = vmatprep.subr.mxu0 %v4816
    %5771 = vmatpush1.msra.mxu0 %v4815
    %5772 = vmatprep.subr.mxu0 %v4820
    %5773 = vmatpush1.msra.mxu0 %v4819
    %5774 = vmatprep.subr.mxu0 0.0
    %5775 = vmatpush1.msra.mxu0 0.0
    %5776 = vmatprep.subr.mxu0 0.0
    %5777 = vmatpush1.msra.mxu0 0.0
    %5778 = vmatprep.subr.mxu0 0.0
    %5779 = vmatpush1.msra.mxu0 0.0
    %5780 = vmatprep.subr.mxu0 0.0
    %5781 = vmatpush1.msra.mxu0 0.0
    %5782 = vmatprep.subr.mxu0 0.0
    %5783 = vmatpush1.msra.mxu0 0.0
    %5784 = vmatprep.subr.mxu0 0.0
    %5785 = vmatpush1.msra.mxu0 0.0
    %5786 = vmatprep.subr.mxu0 0.0
    %5787 = vmatpush1.msra.mxu0 0.0
    %5788 = vmatprep.subr.mxu0 0.0
    %5789 = vmatpush1.msra.mxu0 0.0
    %5790 = vmatprep.subr.mxu0 0.0
    %5791 = vmatpush1.msra.mxu0 0.0
    %5792 = vmatprep.subr.mxu0 0.0
    %5793 = vmatpush1.msra.mxu0 0.0
    %5794 = vmatprep.subr.mxu0 0.0
    %5795 = vmatpush1.msra.mxu0 0.0
    %5796 = vmatprep.subr.mxu0 0.0
    %5797 = vmatpush1.msra.mxu0 0.0
    %5798 = vmatprep.subr.mxu0 0.0
    %5799 = vmatpush1.msra.mxu0 0.0
    %5800 = vmatprep.subr.mxu0 0.0
    %5801 = vmatpush1.msra.mxu0 0.0
    %5802 = vmatprep.subr.mxu0 0.0
    %5803 = vmatpush1.msra.mxu0 0.0
    %5804 = vmatprep.subr.mxu0 0.0
    %5805 = vmatpush1.msra.mxu0 0.0
    %5806 = vmatprep.mubr.f32.mxu0 0.0
    %5807 = vmatmul.mubr.f32.gmra.mrb[0].mxu0 %v5670
    %v5808 = vpop.f32.mrb[0].mxu0
    %v5809 = vadd.f32 0.0, %v5808
    %v5810 = vpop.f32.mrb[0].mxu0
    %v5811 = vadd.f32 0.0, %v5810
    %5812 = vdwg.mxu0
    %v5813 = vadd.f32 %v818, %v5738
    %v5814 = vadd.f32 %v820, %v5740
    %v5815 = vadd.f32 %v919, %v5809
    %v5816 = vadd.f32 %v921, %v5811
    %v5817 = vxor.u32 %v5813, 2147483648
    %v5818 = vmul.f32 %v5817, 1.442695
    %v5819 = vpow.pop %v5818
    %v5820 = vadd.f32 %v5819, 1.0
    %v5821 = vrcp.pop %v5820
    %v5822 = vmul.f32 1.0, %v5821
    %v5823 = vxor.u32 %v5814, 2147483648
    %v5824 = vmul.f32 %v5823, 1.442695
    %v5825 = vpow.pop %v5824
    %v5826 = vadd.f32 %v5825, 1.0
    %v5827 = vrcp.pop %v5826
    %v5828 = vmul.f32 1.0, %v5827
    %v5829 = vtanh.pop %v5815
    %v5830 = vxor.u32 %v5816, 2147483648
    %v5831 = vmul.f32 %v5830, 1.442695
    %v5832 = vpow.pop %v5831
    %v5833 = vadd.f32 %v5832, 1.0
    %v5834 = vrcp.pop %v5833
    %v5835 = vmul.f32 1.0, %v5834
    %v5836 = vmul.f32 %v5828, %v5668
    %v5837 = vmul.f32 %v5822, %v5829
    %v5838 = vadd.f32 %v5836, %v5837
    %v5839 = vtanh.pop %v5838
    %v5840 = vmul.f32 %v5835, %v5839
    %v5841 = vld [vmem:[%s13] sm:$0xff]
    %v5842 = vld [vmem:[%s13 + $0x8] sm:$0xff]
    %v5843 = vld [vmem:[%s13 + $0x10] sm:$0xff]
    %v5844 = vld [vmem:[%s13 + $0x18] sm:$0xff]
    %v5845 = vld [vmem:[%s13 + $0x20] sm:$0xff]
    %v5846 = vld [vmem:[%s13 + $0x28] sm:$0xff]
    %v5847 = vld [vmem:[%s13 + $0x30] sm:$0xff]
    %v5848 = vld [vmem:[%s13 + $0x38] sm:$0xff]
    %v5849 = vld [vmem:[%s13 + $0x40] sm:$0xff]
    %v5850 = vld [vmem:[%s13 + $0x48] sm:$0xff]
    %v5851 = vld [vmem:[%s13 + $0x50] sm:$0xff]
    %v5852 = vld [vmem:[%s13 + $0x58] sm:$0xff]
    %v5853 = vld [vmem:[%s13 + $0x60] sm:$0xff]
    %v5854 = vld [vmem:[%s13 + $0x68] sm:$0xff]
    %v5855 = vld [vmem:[%s13 + $0x70] sm:$0xff]
    %v5856 = vld [vmem:[%s13 + $0x78] sm:$0xff]
    %v5857 = vld [vmem:[%s14] sm:$0x1]
    %v5859 = vlaneseq
    %v5860 = vshrl.u32 %v5859, 7
    %v5861 = vsub.s32 0, %v5860
    %v5862 = vrot.slane %v5857, %v5861
    %5864 = vmatprep.subr.mxu0 0.0
    %5865 = vmatpush1.msra.mxu0 %v5841
    %5866 = vmatprep.subr.mxu0 0.0
    %5867 = vmatpush1.msra.mxu0 %v5842
    %5868 = vmatprep.subr.mxu0 0.0
    %5869 = vmatpush1.msra.mxu0 %v5843
    %5870 = vmatprep.subr.mxu0 0.0
    %5871 = vmatpush1.msra.mxu0 %v5844
    %5872 = vmatprep.subr.mxu0 0.0
    %5873 = vmatpush1.msra.mxu0 %v5845
    %5874 = vmatprep.subr.mxu0 0.0
    %5875 = vmatpush1.msra.mxu0 %v5846
    %5876 = vmatprep.subr.mxu0 0.0
    %5877 = vmatpush1.msra.mxu0 %v5847
    %5878 = vmatprep.subr.mxu0 0.0
    %5879 = vmatpush1.msra.mxu0 %v5848
    %5880 = vmatprep.subr.mxu0 0.0
    %5881 = vmatpush1.msra.mxu0 %v5849
    %5882 = vmatprep.subr.mxu0 0.0
    %5883 = vmatpush1.msra.mxu0 %v5850
    %5884 = vmatprep.subr.mxu0 0.0
    %5885 = vmatpush1.msra.mxu0 %v5851
    %5886 = vmatprep.subr.mxu0 0.0
    %5887 = vmatpush1.msra.mxu0 %v5852
    %5888 = vmatprep.subr.mxu0 0.0
    %5889 = vmatpush1.msra.mxu0 %v5853
    %5890 = vmatprep.subr.mxu0 0.0
    %5891 = vmatpush1.msra.mxu0 %v5854
    %5892 = vmatprep.subr.mxu0 0.0
    %5893 = vmatpush1.msra.mxu0 %v5855
    %5894 = vmatprep.subr.mxu0 0.0
    %5895 = vmatpush1.msra.mxu0 %v5856
    %5896 = vmatprep.subr.mxu0 0.0
    %5897 = vmatpush1.msra.mxu0 0.0
    %5898 = vmatprep.subr.mxu0 0.0
    %5899 = vmatpush1.msra.mxu0 0.0
    %5900 = vmatprep.subr.mxu0 0.0
    %5901 = vmatpush1.msra.mxu0 0.0
    %5902 = vmatprep.subr.mxu0 0.0
    %5903 = vmatpush1.msra.mxu0 0.0
    %5904 = vmatprep.subr.mxu0 0.0
    %5905 = vmatpush1.msra.mxu0 0.0
    %5906 = vmatprep.subr.mxu0 0.0
    %5907 = vmatpush1.msra.mxu0 0.0
    %5908 = vmatprep.subr.mxu0 0.0
    %5909 = vmatpush1.msra.mxu0 0.0
    %5910 = vmatprep.subr.mxu0 0.0
    %5911 = vmatpush1.msra.mxu0 0.0
    %5912 = vmatprep.subr.mxu0 0.0
    %5913 = vmatpush1.msra.mxu0 0.0
    %5914 = vmatprep.subr.mxu0 0.0
    %5915 = vmatpush1.msra.mxu0 0.0
    %5916 = vmatprep.subr.mxu0 0.0
    %5917 = vmatpush1.msra.mxu0 0.0
    %5918 = vmatprep.subr.mxu0 0.0
    %5919 = vmatpush1.msra.mxu0 0.0
    %5920 = vmatprep.subr.mxu0 0.0
    %5921 = vmatpush1.msra.mxu0 0.0
    %5922 = vmatprep.subr.mxu0 0.0
    %5923 = vmatpush1.msra.mxu0 0.0
    %5924 = vmatprep.subr.mxu0 0.0
    %5925 = vmatpush1.msra.mxu0 0.0
    %5926 = vmatprep.subr.mxu0 0.0
    %5927 = vmatpush1.msra.mxu0 0.0
    %5928 = vmatprep.mubr.f32.mxu0 0.0
    %5929 = vmatmul.mubr.f32.gmra.mrb[0].mxu0 %v4990
    %v5930 = vpop.f32.mrb[0].mxu0
    %v5931 = vadd.f32 %v5862, %v5930
    %v5932 = vpop.f32.mrb[0].mxu0
    %5933 = vmatprep.mubr.f32.mxu0 0.0
    %5934 = vmatmul.mubr.f32.gmra.mrb[0].mxu0 %v5160
    %v5935 = vpop.f32.mrb[0].mxu0
    %v5936 = vadd.f32 %v5862, %v5935
    %v5937 = vpop.f32.mrb[0].mxu0
    %5938 = vmatprep.mubr.f32.mxu0 0.0
    %5939 = vmatmul.mubr.f32.gmra.mrb[0].mxu0 %v5330
    %v5940 = vpop.f32.mrb[0].mxu0
    %v5941 = vadd.f32 %v5862, %v5940
    %v5942 = vpop.f32.mrb[0].mxu0
    %5943 = vmatprep.mubr.f32.mxu0 0.0
    %5944 = vmatmul.mubr.f32.gmra.mrb[0].mxu0 %v5500
    %v5945 = vpop.f32.mrb[0].mxu0
    %v5946 = vadd.f32 %v5862, %v5945
    %v5947 = vpop.f32.mrb[0].mxu0
    %5948 = vmatprep.mubr.f32.mxu0 0.0
    %5949 = vmatmul.mubr.f32.gmra.mrb[0].mxu0 %v5670
    %v5950 = vpop.f32.mrb[0].mxu0
    %v5951 = vadd.f32 %v5862, %v5950
    %v5952 = vpop.f32.mrb[0].mxu0
    %5953 = vmatprep.mubr.f32.mxu0 0.0
    %5954 = vmatmul.mubr.f32.gmra.mrb[0].mxu0 %v5840
    %v5955 = vpop.f32.mrb[0].mxu0
    %v5956 = vadd.f32 %v5862, %v5955
    %v5957 = vpop.f32.mrb[0].mxu0
    %5958 = vdwg.mxu0
    %vm5959 = vcmp.lt.s32.totalorder %v924, 32
    %v5960 = vsel %vm5959, %v5931, -1e+30
    %v5961 = vsel %vm5959, %v5936, -1e+30
    %v5962 = vsel %vm5959, %v5941, -1e+30
    %v5963 = vsel %vm5959, %v5946, -1e+30
    %v5964 = vsel %vm5959, %v5951, -1e+30
    %v5965 = vsel %vm5959, %v5956, -1e+30
    %5966 = vmax.xlane.f32.xlu0 %v5960
    %v5967 = vpop.xlane.xlu0 %5966
    %5968 = vmax.xlane.f32.xlu0 %v5961
    %v5969 = vpop.xlane.xlu0 %5968
    %5970 = vmax.xlane.f32.xlu0 %v5962
    %v5971 = vpop.xlane.xlu0 %5970
    %5972 = vmax.xlane.f32.xlu0 %v5963
    %v5973 = vpop.xlane.xlu0 %5972
    %5974 = vmax.xlane.f32.xlu0 %v5964
    %v5975 = vpop.xlane.xlu0 %5974
    %5976 = vmax.xlane.f32.xlu0 %v5965
    %v5977 = vpop.xlane.xlu0 %5976
    %v5978 = vsub.f32 %v5931, %v5967
    %v5979 = vsub.f32 %v5936, %v5969
    %v5980 = vsub.f32 %v5941, %v5971
    %v5981 = vsub.f32 %v5946, %v5973
    %v5982 = vsub.f32 %v5951, %v5975
    %v5983 = vsub.f32 %v5956, %v5977
    %v5984 = vmul.f32 %v5978, 1.442695
    %v5985 = vpow.pop %v5984
    %v5986 = vmul.f32 %v5979, 1.442695
    %v5987 = vpow.pop %v5986
    %v5988 = vmul.f32 %v5980, 1.442695
    %v5989 = vpow.pop %v5988
    %v5990 = vmul.f32 %v5981, 1.442695
    %v5991 = vpow.pop %v5990
    %v5992 = vmul.f32 %v5982, 1.442695
    %v5993 = vpow.pop %v5992
    %v5994 = vmul.f32 %v5983, 1.442695
    %v5995 = vpow.pop %v5994
    %v5996 = vsel %vm5959, %v5985, 0.0
    %v5997 = vsel %vm5959, %v5987, 0.0
    %v5998 = vsel %vm5959, %v5989, 0.0
    %v5999 = vsel %vm5959, %v5991, 0.0
    %v6000 = vsel %vm5959, %v5993, 0.0
    %v6001 = vsel %vm5959, %v5995, 0.0
    %6002 = vadd.xlane.f32.xlu0 %v5996
    %v6003 = vpop.xlane.xlu0 %6002
    %6004 = vadd.xlane.f32.xlu0 %v5997
    %v6005 = vpop.xlane.xlu0 %6004
    %6006 = vadd.xlane.f32.xlu0 %v5998
    %v6007 = vpop.xlane.xlu0 %6006
    %6008 = vadd.xlane.f32.xlu0 %v5999
    %v6009 = vpop.xlane.xlu0 %6008
    %6010 = vadd.xlane.f32.xlu0 %v6000
    %v6011 = vpop.xlane.xlu0 %6010
    %6012 = vadd.xlane.f32.xlu0 %v6001
    %v6013 = vpop.xlane.xlu0 %6012
    %v6014 = vlog2.pop %v6003
    %v6015 = vmul.f32 %v6014, 0.6931472
    %v6016 = vlog2.pop %v6005
    %v6017 = vmul.f32 %v6016, 0.6931472
    %v6018 = vlog2.pop %v6007
    %v6019 = vmul.f32 %v6018, 0.6931472
    %v6020 = vlog2.pop %v6009
    %v6021 = vmul.f32 %v6020, 0.6931472
    %v6022 = vlog2.pop %v6011
    %v6023 = vmul.f32 %v6022, 0.6931472
    %v6024 = vlog2.pop %v6013
    %v6025 = vmul.f32 %v6024, 0.6931472
    %v6026 = vadd.f32 %v6015, %v5967
    %v6027 = vadd.f32 %v6017, %v5969
    %v6028 = vadd.f32 %v6019, %v5971
    %v6029 = vadd.f32 %v6021, %v5973
    %v6030 = vadd.f32 %v6023, %v5975
    %v6031 = vadd.f32 %v6025, %v5977
    %v6032 = vld [vmem:[%s8] sm:$0xff]
    %v6033 = vld [vmem:[%s8 + $0x8] sm:$0xff]
    %v6034 = vld [vmem:[%s8 + $0x10] sm:$0xff]
    %v6035 = vld [vmem:[%s8 + $0x18] sm:$0xff]
    %v6036 = vld [vmem:[%s8 + $0x20] sm:$0xff]
    %v6037 = vld [vmem:[%s8 + $0x28] sm:$0xff]
    %6038 = vset.pattern.permute.xlu0 0
    %6039 = vperm.xlu0 %6038, %v6032
    %v6040 = vpop.permute.xlu0 %6039
    %6041 = vset.pattern.permute.xlu0 0
    %6042 = vperm.xlu0 %6041, %v6033
    %v6043 = vpop.permute.xlu0 %6042
    %6044 = vset.pattern.permute.xlu0 0
    %6045 = vperm.xlu0 %6044, %v6034
    %v6046 = vpop.permute.xlu0 %6045
    %6047 = vset.pattern.permute.xlu0 0
    %6048 = vperm.xlu0 %6047, %v6035
    %v6049 = vpop.permute.xlu0 %6048
    %6050 = vset.pattern.permute.xlu0 0
    %6051 = vperm.xlu0 %6050, %v6036
    %v6052 = vpop.permute.xlu0 %6051
    %6053 = vset.pattern.permute.xlu0 0
    %6054 = vperm.xlu0 %6053, %v6037
    %v6055 = vpop.permute.xlu0 %6054
    %vm6056 = vcmp.eq.s32.totalorder %v924, %v6040
    %vm6057 = vcmp.eq.s32.totalorder %v924, %v6043
    %vm6058 = vcmp.eq.s32.totalorder %v924, %v6046
    %vm6059 = vcmp.eq.s32.totalorder %v924, %v6049
    %vm6060 = vcmp.eq.s32.totalorder %v924, %v6052
    %vm6061 = vcmp.eq.s32.totalorder %v924, %v6055
    %v6062 = vsel %vm6056, 1, 0
    %v6063 = vsel %vm6057, 1, 0
    %v6064 = vsel %vm6058, 1, 0
    %v6065 = vsel %vm6059, 1, 0
    %v6066 = vsel %vm6060, 1, 0
    %v6067 = vsel %vm6061, 1, 0
    %v6068 = vcvt.s32.f32 %v6062
    %v6069 = vcvt.s32.f32 %v6063
    %v6070 = vcvt.s32.f32 %v6064
    %v6071 = vcvt.s32.f32 %v6065
    %v6072 = vcvt.s32.f32 %v6066
    %v6073 = vcvt.s32.f32 %v6067
    %v6074 = vmul.f32 %v5931, %v6068
    %v6075 = vmul.f32 %v5936, %v6069
    %v6076 = vmul.f32 %v5941, %v6070
    %v6077 = vmul.f32 %v5946, %v6071
    %v6078 = vmul.f32 %v5951, %v6072
    %v6079 = vmul.f32 %v5956, %v6073
    %6080 = vadd.xlane.f32.xlu0 %v6074
    %v6081 = vpop.xlane.xlu0 %6080
    %6082 = vadd.xlane.f32.xlu0 %v6075
    %v6083 = vpop.xlane.xlu0 %6082
    %6084 = vadd.xlane.f32.xlu0 %v6076
    %v6085 = vpop.xlane.xlu0 %6084
    %6086 = vadd.xlane.f32.xlu0 %v6077
    %v6087 = vpop.xlane.xlu0 %6086
    %6088 = vadd.xlane.f32.xlu0 %v6078
    %v6089 = vpop.xlane.xlu0 %6088
    %6090 = vadd.xlane.f32.xlu0 %v6079
    %v6091 = vpop.xlane.xlu0 %6090
    %v6092 = vsub.f32 %v6026, %v6081
    %v6093 = vsub.f32 %v6027, %v6083
    %v6094 = vsub.f32 %v6028, %v6085
    %v6095 = vsub.f32 %v6029, %v6087
    %v6096 = vsub.f32 %v6030, %v6089
    %v6097 = vsub.f32 %v6031, %v6091
    %v6098 = vld [vmem:[%s9] sm:$0xff]
    %v6099 = vld [vmem:[%s9 + $0x8] sm:$0xff]
    %v6100 = vld [vmem:[%s9 + $0x10] sm:$0xff]
    %v6101 = vld [vmem:[%s9 + $0x18] sm:$0xff]
    %v6102 = vld [vmem:[%s9 + $0x20] sm:$0xff]
    %v6103 = vld [vmem:[%s9 + $0x28] sm:$0xff]
    %v6104 = vmul.f32 %v6092, %v6098
    %v6105 = vmul.f32 %v6093, %v6099
    %v6106 = vmul.f32 %v6094, %v6100
    %v6107 = vmul.f32 %v6095, %v6101
    %v6108 = vmul.f32 %v6096, %v6102
    %v6109 = vmul.f32 %v6097, %v6103
    %vm6110 = vcmask 7168
    %v6111 = vsel %vm6110, %v6104, 0.0
    %v6112 = vsel %vm6110, %v6105, 0.0
    %v6113 = vadd.f32 %v6111, %v6112
    %v6114 = vsel %vm6110, %v6106, 0.0
    %v6115 = vadd.f32 %v6113, %v6114
    %v6116 = vsel %vm6110, %v6107, 0.0
    %v6117 = vadd.f32 %v6115, %v6116
    %v6118 = vsel %vm6110, %v6108, 0.0
    %v6119 = vadd.f32 %v6117, %v6118
    %v6120 = vsel %vm6110, %v6109, 0.0
    %v6121 = vadd.f32 %v6119, %v6120
    %v6122 = vrot.slane %v6121, 4
    %v6123 = vadd.f32 %v6121, %v6122
    %v6124 = vrot.slane %v6123, 2
    %v6125 = vadd.f32 %v6123, %v6124
    %v6126 = vrot.slane %v6125, 1
    %v6127 = vadd.f32 %v6125, %v6126
    %v6128 = vmul.f32 %v6127, 0.041666668
    %vm6129 = vcmask 0
    %6130 = vst.msk [vmem:[#allocation2] sm:$0x1] %vm6129, %v6128
    // Predicated region
    $region62: #{context_model_loss.1} parent=1 // pred_check
      _
    $region63: #{context_model_loss.1} parent=1 // pred_check_branch
      %6132 = sbr.rel (0) target = $region65
    $region64: #{context_model_loss.1} parent=1 // pred_region
      %s6134 = ssub.s32 16, 16
      %6135 = vsyncadd [#allocation3], %s6134
      %s6137 = sshll.u32 [#allocation2], 4
      %s6138 = int_to_ptr.vmem [resolvable:$true] %s6137
      %6140 = dma.vmem_to_hbm [thread:$0]  %s6138, 16, %s15, [#allocation3]
    $region65: #{context_model_loss.1} parent=1 // pred_fallthru
      _
    // Predicated region
    $region66: #{context_model_loss.1} parent=1 // pred_check
      _
    $region67: #{context_model_loss.1} parent=1 // pred_check_branch
      %6142 = sbr.rel (0) target = $region69
    $region68: #{context_model_loss.1} parent=1 // pred_region
      %6143 = dma.done [#allocation3], 16
    $region69: #{context_model_loss.1} parent=1 // pred_fallthru
      _
    %6144 = vsyncpa [#allocation3], 1

</llo_original>
